<compile_context>
chip_gen: v5e
topology: v5e:2x2
jax: 0.10.0
libtpu: 0.0.40
codegen_flags: <defaults>
</compile_context>

<pallas_src>
import functools
import math

import jax
import jax.numpy as jnp
from jax.experimental import pallas as pl
from jax.experimental.pallas import tpu as pltpu

LOG_MAX_SCALE = math.log(1.0 / 0.01)   # clamp ceiling for logit_scale (SwinV2)
NORM_EPS = 1e-12                       # F.normalize eps


# ---------------------------------------------------------------------------
# Kernel
# ---------------------------------------------------------------------------
def _window_attention_kernel(*refs, num_heads, head_dim, bw, seq, has_mask):
    """Fused W-MSA for `bw` windows: QKV proj -> cosine attention -> out proj.

    x:     (Bw, N, C)          wqkv:  (C, 3C) bf16     bqkv:  (1, 3C) f32
    scale: (1, nh) f32 = exp(clamp(logit_scale))       rpb:   (nh, N, N) f32
    mask:  (Bw, N, N) f32 (optional, statically specialized)
    wproj: (C, C) bf16         bproj: (1, C) f32       out:   (Bw, N, C)
    """
    if has_mask:
        (x_ref, wqkv_ref, bqkv_ref, scale_ref, rpb_ref, mask_ref,
         wproj_ref, bproj_ref, o_ref) = refs
    else:
        (x_ref, wqkv_ref, bqkv_ref, scale_ref, rpb_ref,
         wproj_ref, bproj_ref, o_ref) = refs
        mask_ref = None

    C = num_heads * head_dim
    M = bw * seq
    bf16 = jnp.bfloat16

    # (1) Fused QKV projection: one lane-dense (Bw*N, C) @ (C, 3C) bf16 MXU
    #     matmul with f32 accumulation.
    x = x_ref[...].reshape(M, C).astype(bf16)
    qkv = jnp.dot(x, wqkv_ref[...], preferred_element_type=jnp.float32)
    qkv = (qkv + bqkv_ref[...]).reshape(bw, seq, 3 * C)

    # (2) Per-head F.normalize(dim=-1) with the clamped logit scale folded into
    #     q; heads are stacked into the *leading* batch dim so the attention
    #     matmuls below run as single batched dot_generals.
    scales = scale_ref[...]                          # (1, nh)

    def inv_norm(t):                                 # 1 / max(||t||_2, eps) on the EUP
        s = jnp.sum(t * t, axis=-1, keepdims=True)
        return jax.lax.rsqrt(jnp.maximum(s, NORM_EPS * NORM_EPS))

    q_parts, k_parts, v_parts = [], [], []
    for h in range(num_heads):                       # static unroll; read-only slices
        c0 = h * head_dim
        qh = qkv[:, :, c0:c0 + head_dim]                             # (Bw, N, hd)
        kh = qkv[:, :, C + c0:C + c0 + head_dim]
        vh = qkv[:, :, 2 * C + c0:2 * C + c0 + head_dim]
        qh = qh * (inv_norm(qh) * scales[0, h])      # scale folded into q
        kh = kh * inv_norm(kh)
        q_parts.append(qh.astype(bf16))
        k_parts.append(kh.astype(bf16))
        v_parts.append(vh.astype(bf16))
    q = jnp.concatenate(q_parts, axis=0)             # (nh*Bw, N, hd), head-major batch
    k = jnp.concatenate(k_parts, axis=0)
    v = jnp.concatenate(v_parts, axis=0)

    # (3) Cosine-attention logits for every (head, window) pair in one batched
    #     MXU matmul; bias / mask added via major-dim broadcasts.
    attn = jnp.einsum('bqd,bkd->bqk', q, k,
                      preferred_element_type=jnp.float32)            # (nh*Bw, N, N)
    attn = attn.reshape(num_heads, bw, seq, seq)
    attn = attn + rpb_ref[...][:, None]                              # (nh, 1, N, N)
    if has_mask:
        attn = attn + mask_ref[...][None]                            # (1, Bw, N, N)
    attn = attn.reshape(num_heads * bw, seq, seq)

    # (4) Softmax (attn_drop = 0 in eval -> identity); EUP reciprocal for the
    #     denominator instead of a full (N, N) divide.
    attn = attn - jnp.max(attn, axis=-1, keepdims=True)
    p = jnp.exp(attn)
    p = p * pl.reciprocal(jnp.sum(p, axis=-1, keepdims=True), approx=True)

    # (5) attn @ v, batched over every (head, window) pair.
    o = jnp.einsum('bqk,bkd->bqd', p.astype(bf16), v,
                   preferred_element_type=jnp.float32)               # (nh*Bw, N, hd)

    # (6) Merge heads back lane-dense in registers (no per-head masked scratch
    #     stores) and apply the output projection; one contiguous store.
    y = jnp.concatenate([o[h * bw:(h + 1) * bw] for h in range(num_heads)],
                        axis=-1)                                     # (Bw, N, C)
    out = jnp.dot(y.reshape(M, C).astype(bf16), wproj_ref[...],
                  preferred_element_type=jnp.float32)
    out = out + bproj_ref[...]
    o_ref[...] = out.reshape(bw, seq, C).astype(o_ref.dtype)
    # TODO(synk): attn_drop / proj_drop with p > 0 (training-mode dropout) are
    # not implemented; the module defaults (0.0) make them identity in eval.


# ---------------------------------------------------------------------------
# Wrappers
# ---------------------------------------------------------------------------
def _pick_window_batch(B_, N, C, nh, has_mask, budget_bytes=24 * 1024 * 1024):
    """Largest divisor of B_ whose per-step working set fits the VMEM budget
    while keeping >= 2 grid steps (so both v7x TensorCores get work)."""
    best = 1
    for bw in range(1, B_ + 1):
        if B_ % bw:
            continue
        if B_ >= 2 and B_ // bw < 2:
            break
        per = 2 * 2 * 4 * bw * N * C                  # x + out blocks, double-buffered
        if has_mask:
            per += 2 * 4 * bw * N * N                 # mask block, double-buffered
        per += 2 * 4 * bw * N * 4 * C                 # qkv / q / k / v / merged temps
        per += 3 * 4 * nh * bw * N * N                # logits / exp / prob temps
        if per <= budget_bytes:
            best = bw
    return best


def prepare_inference_params(params):
    """Fold all weight-only work out of the per-call path: cpb MLP + gather
    (the rpb table depends only on weights), exp(clamp(logit_scale)), the
    concatenated qkv bias, and bf16 casts of the MXU weight operands."""
    nh = params["num_heads"]
    Wh, Ww = params["window_size"]
    N = Wh * Ww
    C = params["wqkv_t"].shape[0]

    # Continuous position bias: tiny (L,2)@(2,512)@(512,nh) MLP + static gather.
    # K=2 / nh-wide matmuls are MXU-hostile and x-independent, so this stays in
    # plain XLA and runs once per weight update instead of every forward.
    h = jnp.maximum(params["coords_table"] @ params["cpb_w1_t"]
                    + params["cpb_b1"], 0.0)
    tbl = 16.0 * jax.nn.sigmoid(h @ params["cpb_w2_t"])              # (L, nh)
    idx = params["rel_pos_index"].reshape(-1)
    rpb = tbl[idx].reshape(N, N, nh).transpose(2, 0, 1)              # (nh, N, N)

    # qkv bias = cat(q_bias, zeros_like(v_bias), v_bias)  (k has no bias)
    qkv_bias = jnp.concatenate(
        [params["q_bias"], jnp.zeros_like(params["v_bias"]), params["v_bias"]]
    ).reshape(1, 3 * C)

    return {
        "num_heads": nh,
        "window_size": (Wh, Ww),
        "wqkv_t": params["wqkv_t"].astype(jnp.bfloat16),
        "wproj_t": params["wproj_t"].astype(jnp.bfloat16),
        "qkv_bias": qkv_bias.astype(jnp.float32),
        "proj_bias": params["proj_bias"].astype(jnp.float32),
        "scales": jnp.exp(jnp.minimum(params["logit_scale"],
                                      LOG_MAX_SCALE)).astype(jnp.float32),
        "rpb": rpb.astype(jnp.float32),
    }


def window_attention(x, prep, mask=None):
    """x: (B_, N, C) = (num_windows*B, Wh*Ww, dim).  mask: (nW, N, N) or None."""
    B_, N, C = x.shape
    nh = prep["num_heads"]
    hd = C // nh
    has_mask = mask is not None
    bw = _pick_window_batch(B_, N, C, nh, has_mask)

    inputs = [x, prep["wqkv_t"], prep["qkv_bias"], prep["scales"], prep["rpb"]]
    in_specs = [
        pl.BlockSpec((bw, N, C), lambda b: (b, 0, 0)),       # bw windows / grid step
        pl.BlockSpec((C, 3 * C), lambda b: (0, 0)),          # Wqkv^T (bf16, resident)
        pl.BlockSpec((1, 3 * C), lambda b: (0, 0)),          # qkv bias
        pl.BlockSpec((1, nh), lambda b: (0, 0)),             # exp(clamp(logit_scale))
        pl.BlockSpec((nh, N, N), lambda b: (0, 0, 0)),       # rel-pos bias (resident)
    ]
    if has_mask:
        nW = mask.shape[0]
        # Expand to one mask per window so any window batch bw is valid; torch
        # layout is batch-major / window-minor, i.e. mask for window g is
        # mask[g % nW].
        mask_full = jnp.broadcast_to(mask.astype(jnp.float32)[None],
                                     (B_ // nW, nW, N, N)).reshape(B_, N, N)
        inputs.append(mask_full)
        in_specs.append(pl.BlockSpec((bw, N, N), lambda b: (b, 0, 0)))
    inputs += [prep["wproj_t"], prep["proj_bias"]]
    in_specs += [pl.BlockSpec((C, C), lambda b: (0, 0)),     # Wproj^T (bf16, resident)
                 pl.BlockSpec((1, C), lambda b: (0, 0))]     # proj bias

    kern = functools.partial(_window_attention_kernel, num_heads=nh,
                             head_dim=hd, bw=bw, seq=N, has_mask=has_mask)

    flops = B_ * (2 * N * C * 3 * C + 4 * nh * N * N * hd + 2 * N * C * C)
    bytes_accessed = (4 * 2 * B_ * N * C + 2 * (3 * C * C + C * C)
                      + 4 * nh * N * N + (4 * B_ * N * N if has_mask else 0))
    cost = pl.CostEstimate(flops=int(flops),
                           transcendentals=int(B_ * nh * N * N),
                           bytes_accessed=int(bytes_accessed))

    return pl.pallas_call(
        kern,
        out_shape=jax.ShapeDtypeStruct((B_, N, C), x.dtype),
        grid_spec=pltpu.PrefetchScalarGridSpec(
            num_scalar_prefetch=0,
            grid=(B_ // bw,),
            in_specs=in_specs,
            out_specs=pl.BlockSpec((bw, N, C), lambda b: (b, 0, 0)),
        ),
        compiler_params=pltpu.CompilerParams(
            dimension_semantics=("parallel",),       # window batches independent
            vmem_limit_bytes=48 * 1024 * 1024,       # safe on v7x's 64 MiB VMEM
        ),
        cost_estimate=cost,
    )(*inputs)


# ---------------------------------------------------------------------------
# Deterministic parameter / buffer construction (mirrors the module __init__)
# ---------------------------------------------------------------------------
def init_params(key, dim, window_size, num_heads, pretrained_window_size=(0, 0)):
    Wh, Ww = window_size
    k1, k2, k3, k4 = jax.random.split(key, 4)

    # relative_coords_table buffer (log-spaced continuous coordinates)
    ch = jnp.arange(-(Wh - 1), Wh, dtype=jnp.float32)
    cw = jnp.arange(-(Ww - 1), Ww, dtype=jnp.float32)
    gh, gw = jnp.meshgrid(ch, cw, indexing="ij")
    table = jnp.stack([gh, gw], axis=-1)                    # (2Wh-1, 2Ww-1, 2)
    if pretrained_window_size[0] > 0:
        denom = jnp.array([pretrained_window_size[0] - 1,
                           pretrained_window_size[1] - 1], jnp.float32)
    else:
        denom = jnp.array([Wh - 1, Ww - 1], jnp.float32)
    table = (table / denom) * 8.0
    table = jnp.sign(table) * jnp.log2(jnp.abs(table) + 1.0) / math.log2(8.0)
    coords_table = table.reshape(-1, 2)                     # (L, 2)

    # relative_position_index buffer
    coords = jnp.stack(jnp.meshgrid(jnp.arange(Wh), jnp.arange(Ww), indexing="ij"))
    coords_flat = coords.reshape(2, -1)                      # (2, N)
    rel = coords_flat[:, :, None] - coords_flat[:, None, :]  # (2, N, N)
    rel = rel.transpose(1, 2, 0)                             # (N, N, 2)
    rel_idx = (rel[..., 0] + Wh - 1) * (2 * Ww - 1) + (rel[..., 1] + Ww - 1)

    def tn(k, shape, std=0.02):
        return std * jax.random.normal(k, shape, jnp.float32)

    return {
        "num_heads": num_heads,
        "window_size": (Wh, Ww),
        "coords_table": coords_table,
        "rel_pos_index": rel_idx.astype(jnp.int32),
        "logit_scale": jnp.full((1, num_heads), math.log(10.0), jnp.float32),
        # cpb_mlp: Linear(2, 512, bias=True) -> ReLU -> Linear(512, nh, bias=False)
        "cpb_w1_t": tn(k1, (2, 512)),
        "cpb_b1": jnp.zeros((1, 512), jnp.float32),
        "cpb_w2_t": tn(k2, (512, num_heads)),
        # qkv: Linear(dim, 3*dim, bias=False) + separate q/v biases (zeros init)
        "wqkv_t": tn(k3, (dim, 3 * dim)),
        "q_bias": jnp.zeros((dim,), jnp.float32),
        "v_bias": jnp.zeros((dim,), jnp.float32),
        # proj: Linear(dim, dim) with bias
        "wproj_t": tn(k4, (dim, dim)),
        "proj_bias": jnp.zeros((1, dim), jnp.float32),
    }


# ---------------------------------------------------------------------------
if __name__ == "__main__":
    key = jax.random.PRNGKey(0)
    dim = 32
    num_heads = 4
    window_size = (8, 8)
    N = window_size[0] * window_size[1]   # 64 tokens per window
    B_ = 8                                # num_windows * batch

    kx, kp = jax.random.split(key)
    x = jax.random.normal(kx, (B_, N, dim), jnp.float32)
    params = init_params(kp, dim, window_size, num_heads)
    prep = prepare_inference_params(params)   # weight-only work, outside the jit

    fwd = jax.jit(lambda inp: window_attention(inp, prep, mask=None))
    out = fwd(x)
    jax.block_until_ready(out)
    assert out.shape == (B_, N, dim)
    print("KERNEL_OK")
</pallas_src>

<mosaic_0001>
module attributes {stable_mosaic.version = 11 : i64} {
  func.func @_window_attention_kernel(%arg0: i32, %arg1: memref<4x64x32xf32, #tpu.memory_space<vmem>>, %arg2: memref<32x96xbf16, #tpu.memory_space<vmem>>, %arg3: memref<1x96xf32, #tpu.memory_space<vmem>>, %arg4: memref<1x4xf32, #tpu.memory_space<vmem>>, %arg5: memref<4x64x64xf32, #tpu.memory_space<vmem>>, %arg6: memref<32x32xbf16, #tpu.memory_space<vmem>>, %arg7: memref<1x32xf32, #tpu.memory_space<vmem>>, %arg8: memref<4x64x32xf32, #tpu.memory_space<vmem>>) attributes {dimension_semantics = [#tpu.dimension_semantics<parallel>], iteration_bounds = array<i64: 2>, scalar_prefetch = 0 : i64, scratch_operands = 0 : i64, tpu.core_type = #tpu.core_type<tc>, window_params = [{transform_indices = @transform_0, window_bounds = array<i64: 4, 64, 32>}, {pipeline_mode = #tpu.pipeline_mode<synchronous>, transform_indices = @transform_1, window_bounds = array<i64: 32, 96>}, {pipeline_mode = #tpu.pipeline_mode<synchronous>, transform_indices = @transform_2, window_bounds = array<i64: 1, 96>}, {pipeline_mode = #tpu.pipeline_mode<synchronous>, transform_indices = @transform_3, window_bounds = array<i64: 1, 4>}, {pipeline_mode = #tpu.pipeline_mode<synchronous>, transform_indices = @transform_4, window_bounds = array<i64: 4, 64, 64>}, {pipeline_mode = #tpu.pipeline_mode<synchronous>, transform_indices = @transform_5, window_bounds = array<i64: 32, 32>}, {pipeline_mode = #tpu.pipeline_mode<synchronous>, transform_indices = @transform_6, window_bounds = array<i64: 1, 32>}, {transform_indices = @transform_7, window_bounds = array<i64: 4, 64, 32>}]} {
    %c0 = arith.constant 0 : index
    %c0_0 = arith.constant 0 : index
    %c0_1 = arith.constant 0 : index
    %0 = vector.load %arg1[%c0, %c0_0, %c0_1] : memref<4x64x32xf32, #tpu.memory_space<vmem>>, vector<4x64x32xf32>
    %1 = vector.shape_cast %0 : vector<4x64x32xf32> to vector<256x32xf32>
    %2 = arith.truncf %1 : vector<256x32xf32> to vector<256x32xbf16>
    %c0_2 = arith.constant 0 : index
    %c0_3 = arith.constant 0 : index
    %3 = vector.load %arg2[%c0_2, %c0_3] : memref<32x96xbf16, #tpu.memory_space<vmem>>, vector<32x96xbf16>
    %cst = arith.constant dense<0.000000e+00> : vector<256x96xf32>
    %4 = tpu.matmul %2, %3, %cst {dimension_numbers = #tpu.dot_dimension_numbers<[1], [0], [0], [1], [0, 0, 1, 1], [], []>} : vector<256x32xbf16>, vector<32x96xbf16>, vector<256x96xf32> -> vector<256x96xf32>
    %c0_4 = arith.constant 0 : index
    %c0_5 = arith.constant 0 : index
    %5 = vector.load %arg3[%c0_4, %c0_5] : memref<1x96xf32, #tpu.memory_space<vmem>>, vector<1x96xf32>
    %6 = vector.broadcast %5 : vector<1x96xf32> to vector<256x96xf32>
    %7 = arith.addf %4, %6 : vector<256x96xf32>
    %8 = vector.shape_cast %7 : vector<256x96xf32> to vector<4x64x96xf32>
    %c0_6 = arith.constant 0 : index
    %c0_7 = arith.constant 0 : index
    %9 = vector.load %arg4[%c0_6, %c0_7] : memref<1x4xf32, #tpu.memory_space<vmem>>, vector<1x4xf32>
    %10 = vector.extract_strided_slice %8 {offsets = [0, 0, 0], sizes = [4, 64, 8], strides = [1, 1, 1]} : vector<4x64x96xf32> to vector<4x64x8xf32>
    %11 = vector.extract_strided_slice %8 {offsets = [0, 0, 32], sizes = [4, 64, 8], strides = [1, 1, 1]} : vector<4x64x96xf32> to vector<4x64x8xf32>
    %12 = vector.extract_strided_slice %8 {offsets = [0, 0, 64], sizes = [4, 64, 8], strides = [1, 1, 1]} : vector<4x64x96xf32> to vector<4x64x8xf32>
    %13 = arith.mulf %10, %10 : vector<4x64x8xf32>
    %cst_8 = arith.constant dense<0.000000e+00> : vector<4x64xf32>
    %14 = vector.multi_reduction <add>, %13, %cst_8 [2] : vector<4x64x8xf32> to vector<4x64xf32>
    %15 = vector.shape_cast %14 : vector<4x64xf32> to vector<4x64x1xf32>
    %cst_9 = arith.constant 1.000000e-24 : f32
    %16 = vector.broadcast %cst_9 : f32 to vector<4x64x1xf32>
    %17 = arith.maximumf %15, %16 : vector<4x64x1xf32>
    %18 = math.rsqrt %17 : vector<4x64x1xf32>
    %19 = vector.extract_strided_slice %9 {offsets = [0, 0], sizes = [1, 1], strides = [1, 1]} : vector<1x4xf32> to vector<1x1xf32>
    %20 = vector.extract %19[0, 0] : f32 from vector<1x1xf32>
    %21 = vector.broadcast %20 : f32 to vector<4x64x1xf32>
    %22 = arith.mulf %18, %21 : vector<4x64x1xf32>
    %23 = vector.broadcast %22 : vector<4x64x1xf32> to vector<4x64x8xf32>
    %24 = arith.mulf %10, %23 : vector<4x64x8xf32>
    %25 = arith.mulf %11, %11 : vector<4x64x8xf32>
    %cst_10 = arith.constant dense<0.000000e+00> : vector<4x64xf32>
    %26 = vector.multi_reduction <add>, %25, %cst_10 [2] : vector<4x64x8xf32> to vector<4x64xf32>
    %27 = vector.shape_cast %26 : vector<4x64xf32> to vector<4x64x1xf32>
    %cst_11 = arith.constant 1.000000e-24 : f32
    %28 = vector.broadcast %cst_11 : f32 to vector<4x64x1xf32>
    %29 = arith.maximumf %27, %28 : vector<4x64x1xf32>
    %30 = math.rsqrt %29 : vector<4x64x1xf32>
    %31 = vector.broadcast %30 : vector<4x64x1xf32> to vector<4x64x8xf32>
    %32 = arith.mulf %11, %31 : vector<4x64x8xf32>
    %33 = arith.truncf %24 : vector<4x64x8xf32> to vector<4x64x8xbf16>
    %34 = arith.truncf %32 : vector<4x64x8xf32> to vector<4x64x8xbf16>
    %35 = arith.truncf %12 : vector<4x64x8xf32> to vector<4x64x8xbf16>
    %36 = vector.extract_strided_slice %8 {offsets = [0, 0, 8], sizes = [4, 64, 8], strides = [1, 1, 1]} : vector<4x64x96xf32> to vector<4x64x8xf32>
    %37 = vector.extract_strided_slice %8 {offsets = [0, 0, 40], sizes = [4, 64, 8], strides = [1, 1, 1]} : vector<4x64x96xf32> to vector<4x64x8xf32>
    %38 = vector.extract_strided_slice %8 {offsets = [0, 0, 72], sizes = [4, 64, 8], strides = [1, 1, 1]} : vector<4x64x96xf32> to vector<4x64x8xf32>
    %39 = arith.mulf %36, %36 : vector<4x64x8xf32>
    %cst_12 = arith.constant dense<0.000000e+00> : vector<4x64xf32>
    %40 = vector.multi_reduction <add>, %39, %cst_12 [2] : vector<4x64x8xf32> to vector<4x64xf32>
    %41 = vector.shape_cast %40 : vector<4x64xf32> to vector<4x64x1xf32>
    %cst_13 = arith.constant 1.000000e-24 : f32
    %42 = vector.broadcast %cst_13 : f32 to vector<4x64x1xf32>
    %43 = arith.maximumf %41, %42 : vector<4x64x1xf32>
    %44 = math.rsqrt %43 : vector<4x64x1xf32>
    %45 = vector.extract_strided_slice %9 {offsets = [0, 1], sizes = [1, 1], strides = [1, 1]} : vector<1x4xf32> to vector<1x1xf32>
    %46 = vector.extract %45[0, 0] : f32 from vector<1x1xf32>
    %47 = vector.broadcast %46 : f32 to vector<4x64x1xf32>
    %48 = arith.mulf %44, %47 : vector<4x64x1xf32>
    %49 = vector.broadcast %48 : vector<4x64x1xf32> to vector<4x64x8xf32>
    %50 = arith.mulf %36, %49 : vector<4x64x8xf32>
    %51 = arith.mulf %37, %37 : vector<4x64x8xf32>
    %cst_14 = arith.constant dense<0.000000e+00> : vector<4x64xf32>
    %52 = vector.multi_reduction <add>, %51, %cst_14 [2] : vector<4x64x8xf32> to vector<4x64xf32>
    %53 = vector.shape_cast %52 : vector<4x64xf32> to vector<4x64x1xf32>
    %cst_15 = arith.constant 1.000000e-24 : f32
    %54 = vector.broadcast %cst_15 : f32 to vector<4x64x1xf32>
    %55 = arith.maximumf %53, %54 : vector<4x64x1xf32>
    %56 = math.rsqrt %55 : vector<4x64x1xf32>
    %57 = vector.broadcast %56 : vector<4x64x1xf32> to vector<4x64x8xf32>
    %58 = arith.mulf %37, %57 : vector<4x64x8xf32>
    %59 = arith.truncf %50 : vector<4x64x8xf32> to vector<4x64x8xbf16>
    %60 = arith.truncf %58 : vector<4x64x8xf32> to vector<4x64x8xbf16>
    %61 = arith.truncf %38 : vector<4x64x8xf32> to vector<4x64x8xbf16>
    %62 = vector.extract_strided_slice %8 {offsets = [0, 0, 16], sizes = [4, 64, 8], strides = [1, 1, 1]} : vector<4x64x96xf32> to vector<4x64x8xf32>
    %63 = vector.extract_strided_slice %8 {offsets = [0, 0, 48], sizes = [4, 64, 8], strides = [1, 1, 1]} : vector<4x64x96xf32> to vector<4x64x8xf32>
    %64 = vector.extract_strided_slice %8 {offsets = [0, 0, 80], sizes = [4, 64, 8], strides = [1, 1, 1]} : vector<4x64x96xf32> to vector<4x64x8xf32>
    %65 = arith.mulf %62, %62 : vector<4x64x8xf32>
    %cst_16 = arith.constant dense<0.000000e+00> : vector<4x64xf32>
    %66 = vector.multi_reduction <add>, %65, %cst_16 [2] : vector<4x64x8xf32> to vector<4x64xf32>
    %67 = vector.shape_cast %66 : vector<4x64xf32> to vector<4x64x1xf32>
    %cst_17 = arith.constant 1.000000e-24 : f32
    %68 = vector.broadcast %cst_17 : f32 to vector<4x64x1xf32>
    %69 = arith.maximumf %67, %68 : vector<4x64x1xf32>
    %70 = math.rsqrt %69 : vector<4x64x1xf32>
    %71 = vector.extract_strided_slice %9 {offsets = [0, 2], sizes = [1, 1], strides = [1, 1]} : vector<1x4xf32> to vector<1x1xf32>
    %72 = vector.extract %71[0, 0] : f32 from vector<1x1xf32>
    %73 = vector.broadcast %72 : f32 to vector<4x64x1xf32>
    %74 = arith.mulf %70, %73 : vector<4x64x1xf32>
    %75 = vector.broadcast %74 : vector<4x64x1xf32> to vector<4x64x8xf32>
    %76 = arith.mulf %62, %75 : vector<4x64x8xf32>
    %77 = arith.mulf %63, %63 : vector<4x64x8xf32>
    %cst_18 = arith.constant dense<0.000000e+00> : vector<4x64xf32>
    %78 = vector.multi_reduction <add>, %77, %cst_18 [2] : vector<4x64x8xf32> to vector<4x64xf32>
    %79 = vector.shape_cast %78 : vector<4x64xf32> to vector<4x64x1xf32>
    %cst_19 = arith.constant 1.000000e-24 : f32
    %80 = vector.broadcast %cst_19 : f32 to vector<4x64x1xf32>
    %81 = arith.maximumf %79, %80 : vector<4x64x1xf32>
    %82 = math.rsqrt %81 : vector<4x64x1xf32>
    %83 = vector.broadcast %82 : vector<4x64x1xf32> to vector<4x64x8xf32>
    %84 = arith.mulf %63, %83 : vector<4x64x8xf32>
    %85 = arith.truncf %76 : vector<4x64x8xf32> to vector<4x64x8xbf16>
    %86 = arith.truncf %84 : vector<4x64x8xf32> to vector<4x64x8xbf16>
    %87 = arith.truncf %64 : vector<4x64x8xf32> to vector<4x64x8xbf16>
    %88 = vector.extract_strided_slice %8 {offsets = [0, 0, 24], sizes = [4, 64, 8], strides = [1, 1, 1]} : vector<4x64x96xf32> to vector<4x64x8xf32>
    %89 = vector.extract_strided_slice %8 {offsets = [0, 0, 56], sizes = [4, 64, 8], strides = [1, 1, 1]} : vector<4x64x96xf32> to vector<4x64x8xf32>
    %90 = vector.extract_strided_slice %8 {offsets = [0, 0, 88], sizes = [4, 64, 8], strides = [1, 1, 1]} : vector<4x64x96xf32> to vector<4x64x8xf32>
    %91 = arith.mulf %88, %88 : vector<4x64x8xf32>
    %cst_20 = arith.constant dense<0.000000e+00> : vector<4x64xf32>
    %92 = vector.multi_reduction <add>, %91, %cst_20 [2] : vector<4x64x8xf32> to vector<4x64xf32>
    %93 = vector.shape_cast %92 : vector<4x64xf32> to vector<4x64x1xf32>
    %cst_21 = arith.constant 1.000000e-24 : f32
    %94 = vector.broadcast %cst_21 : f32 to vector<4x64x1xf32>
    %95 = arith.maximumf %93, %94 : vector<4x64x1xf32>
    %96 = math.rsqrt %95 : vector<4x64x1xf32>
    %97 = vector.extract_strided_slice %9 {offsets = [0, 3], sizes = [1, 1], strides = [1, 1]} : vector<1x4xf32> to vector<1x1xf32>
    %98 = vector.extract %97[0, 0] : f32 from vector<1x1xf32>
    %99 = vector.broadcast %98 : f32 to vector<4x64x1xf32>
    %100 = arith.mulf %96, %99 : vector<4x64x1xf32>
    %101 = vector.broadcast %100 : vector<4x64x1xf32> to vector<4x64x8xf32>
    %102 = arith.mulf %88, %101 : vector<4x64x8xf32>
    %103 = arith.mulf %89, %89 : vector<4x64x8xf32>
    %cst_22 = arith.constant dense<0.000000e+00> : vector<4x64xf32>
    %104 = vector.multi_reduction <add>, %103, %cst_22 [2] : vector<4x64x8xf32> to vector<4x64xf32>
    %105 = vector.shape_cast %104 : vector<4x64xf32> to vector<4x64x1xf32>
    %cst_23 = arith.constant 1.000000e-24 : f32
    %106 = vector.broadcast %cst_23 : f32 to vector<4x64x1xf32>
    %107 = arith.maximumf %105, %106 : vector<4x64x1xf32>
    %108 = math.rsqrt %107 : vector<4x64x1xf32>
    %109 = vector.broadcast %108 : vector<4x64x1xf32> to vector<4x64x8xf32>
    %110 = arith.mulf %89, %109 : vector<4x64x8xf32>
    %111 = arith.truncf %102 : vector<4x64x8xf32> to vector<4x64x8xbf16>
    %112 = arith.truncf %110 : vector<4x64x8xf32> to vector<4x64x8xbf16>
    %113 = arith.truncf %90 : vector<4x64x8xf32> to vector<4x64x8xbf16>
    %114 = tpu.concatenate %33, %59, %85, %111 in 0 : vector<4x64x8xbf16>, vector<4x64x8xbf16>, vector<4x64x8xbf16>, vector<4x64x8xbf16> -> vector<16x64x8xbf16>
    %115 = tpu.concatenate %34, %60, %86, %112 in 0 : vector<4x64x8xbf16>, vector<4x64x8xbf16>, vector<4x64x8xbf16>, vector<4x64x8xbf16> -> vector<16x64x8xbf16>
    %116 = tpu.concatenate %35, %61, %87, %113 in 0 : vector<4x64x8xbf16>, vector<4x64x8xbf16>, vector<4x64x8xbf16>, vector<4x64x8xbf16> -> vector<16x64x8xbf16>
    "tpu.trace_start"() <{level = 10 : i32, message = "bqd,bkd->bqk"}> : () -> ()
    %cst_24 = arith.constant dense<0.000000e+00> : vector<16x64x64xf32>
    %117 = tpu.matmul %114, %115, %cst_24 {dimension_numbers = #tpu.dot_dimension_numbers<[2], [2], [1], [1], [0, 0, 0, 1, 1, 1], [0], [0]>} : vector<16x64x8xbf16>, vector<16x64x8xbf16>, vector<16x64x64xf32> -> vector<16x64x64xf32>
    "tpu.trace_stop"() : () -> ()
    %118 = vector.shape_cast %117 : vector<16x64x64xf32> to vector<4x4x64x64xf32>
    %c0_25 = arith.constant 0 : index
    %c0_26 = arith.constant 0 : index
    %c0_27 = arith.constant 0 : index
    %119 = vector.load %arg5[%c0_25, %c0_26, %c0_27] : memref<4x64x64xf32, #tpu.memory_space<vmem>>, vector<4x64x64xf32>
    %120 = vector.shape_cast %119 : vector<4x64x64xf32> to vector<4x1x64x64xf32>
    %121 = vector.broadcast %120 : vector<4x1x64x64xf32> to vector<4x4x64x64xf32>
    %122 = arith.addf %118, %121 : vector<4x4x64x64xf32>
    %123 = vector.shape_cast %122 : vector<4x4x64x64xf32> to vector<16x64x64xf32>
    %cst_28 = arith.constant dense<0xFF800000> : vector<16x64xf32>
    %124 = vector.multi_reduction <maximumf>, %123, %cst_28 [2] : vector<16x64x64xf32> to vector<16x64xf32>
    %125 = vector.shape_cast %124 : vector<16x64xf32> to vector<16x64x1xf32>
    %126 = vector.broadcast %125 : vector<16x64x1xf32> to vector<16x64x64xf32>
    %127 = arith.subf %123, %126 : vector<16x64x64xf32>
    %128 = math.exp %127 : vector<16x64x64xf32>
    %cst_29 = arith.constant dense<0.000000e+00> : vector<16x64xf32>
    %129 = vector.multi_reduction <add>, %128, %cst_29 [2] : vector<16x64x64xf32> to vector<16x64xf32>
    %130 = vector.shape_cast %129 : vector<16x64xf32> to vector<16x64x1xf32>
    %131 = tpu.reciprocal %130 {approx = true} : vector<16x64x1xf32> -> vector<16x64x1xf32>
    %132 = vector.broadcast %131 : vector<16x64x1xf32> to vector<16x64x64xf32>
    %133 = arith.mulf %128, %132 : vector<16x64x64xf32>
    %134 = arith.truncf %133 : vector<16x64x64xf32> to vector<16x64x64xbf16>
    "tpu.trace_start"() <{level = 10 : i32, message = "bqk,bkd->bqd"}> : () -> ()
    %cst_30 = arith.constant dense<0.000000e+00> : vector<16x64x8xf32>
    %135 = tpu.matmul %134, %116, %cst_30 {dimension_numbers = #tpu.dot_dimension_numbers<[2], [1], [1], [2], [0, 0, 0, 1, 1, 2], [0], [0]>} : vector<16x64x64xbf16>, vector<16x64x8xbf16>, vector<16x64x8xf32> -> vector<16x64x8xf32>
    "tpu.trace_stop"() : () -> ()
    %136 = vector.extract_strided_slice %135 {offsets = [0, 0, 0], sizes = [4, 64, 8], strides = [1, 1, 1]} : vector<16x64x8xf32> to vector<4x64x8xf32>
    %137 = vector.extract_strided_slice %135 {offsets = [4, 0, 0], sizes = [4, 64, 8], strides = [1, 1, 1]} : vector<16x64x8xf32> to vector<4x64x8xf32>
    %138 = vector.extract_strided_slice %135 {offsets = [8, 0, 0], sizes = [4, 64, 8], strides = [1, 1, 1]} : vector<16x64x8xf32> to vector<4x64x8xf32>
    %139 = vector.extract_strided_slice %135 {offsets = [12, 0, 0], sizes = [4, 64, 8], strides = [1, 1, 1]} : vector<16x64x8xf32> to vector<4x64x8xf32>
    %140 = tpu.concatenate %136, %137, %138, %139 in 2 : vector<4x64x8xf32>, vector<4x64x8xf32>, vector<4x64x8xf32>, vector<4x64x8xf32> -> vector<4x64x32xf32>
    %141 = vector.shape_cast %140 : vector<4x64x32xf32> to vector<256x32xf32>
    %142 = arith.truncf %141 : vector<256x32xf32> to vector<256x32xbf16>
    %c0_31 = arith.constant 0 : index
    %c0_32 = arith.constant 0 : index
    %143 = vector.load %arg6[%c0_31, %c0_32] : memref<32x32xbf16, #tpu.memory_space<vmem>>, vector<32x32xbf16>
    %cst_33 = arith.constant dense<0.000000e+00> : vector<256x32xf32>
    %144 = tpu.matmul %142, %143, %cst_33 {dimension_numbers = #tpu.dot_dimension_numbers<[1], [0], [0], [1], [0, 0, 1, 1], [], []>} : vector<256x32xbf16>, vector<32x32xbf16>, vector<256x32xf32> -> vector<256x32xf32>
    %c0_34 = arith.constant 0 : index
    %c0_35 = arith.constant 0 : index
    %145 = vector.load %arg7[%c0_34, %c0_35] : memref<1x32xf32, #tpu.memory_space<vmem>>, vector<1x32xf32>
    %146 = vector.broadcast %145 : vector<1x32xf32> to vector<256x32xf32>
    %147 = arith.addf %144, %146 : vector<256x32xf32>
    %148 = vector.shape_cast %147 : vector<256x32xf32> to vector<4x64x32xf32>
    %c0_36 = arith.constant 0 : index
    %c0_37 = arith.constant 0 : index
    %c0_38 = arith.constant 0 : index
    %149 = vector.load %arg8[%c0_36, %c0_37, %c0_38] : memref<4x64x32xf32, #tpu.memory_space<vmem>>, vector<4x64x32xf32>
    tpu.vector_store %arg8[%c0_36, %c0_37, %c0_38], %148 {strides = array<i32>} : memref<4x64x32xf32, #tpu.memory_space<vmem>>, vector<4x64x32xf32>,
    return
  }
  func.func @transform_0(%arg0: i32) -> (i32, i32, i32) {
    %c0_i32 = arith.constant 0 : i32
    %c0_i32_0 = arith.constant 0 : i32
    %c0_i32_1 = arith.constant 0 : i32
    return %arg0, %c0_i32, %c0_i32_0 : i32, i32, i32
  }
  func.func @transform_1(%arg0: i32) -> (i32, i32) {
    %c0_i32 = arith.constant 0 : i32
    %c0_i32_0 = arith.constant 0 : i32
    %c0_i32_1 = arith.constant 0 : i32
    return %c0_i32, %c0_i32_0 : i32, i32
  }
  func.func @transform_2(%arg0: i32) -> (i32, i32) {
    %c0_i32 = arith.constant 0 : i32
    %c0_i32_0 = arith.constant 0 : i32
    %c0_i32_1 = arith.constant 0 : i32
    return %c0_i32, %c0_i32_0 : i32, i32
  }
  func.func @transform_3(%arg0: i32) -> (i32, i32) {
    %c0_i32 = arith.constant 0 : i32
    %c0_i32_0 = arith.constant 0 : i32
    %c0_i32_1 = arith.constant 0 : i32
    return %c0_i32, %c0_i32_0 : i32, i32
  }
  func.func @transform_4(%arg0: i32) -> (i32, i32, i32) {
    %c0_i32 = arith.constant 0 : i32
    %c0_i32_0 = arith.constant 0 : i32
    %c0_i32_1 = arith.constant 0 : i32
    %c0_i32_2 = arith.constant 0 : i32
    return %c0_i32, %c0_i32_0, %c0_i32_1 : i32, i32, i32
  }
  func.func @transform_5(%arg0: i32) -> (i32, i32) {
    %c0_i32 = arith.constant 0 : i32
    %c0_i32_0 = arith.constant 0 : i32
    %c0_i32_1 = arith.constant 0 : i32
    return %c0_i32, %c0_i32_0 : i32, i32
  }
  func.func @transform_6(%arg0: i32) -> (i32, i32) {
    %c0_i32 = arith.constant 0 : i32
    %c0_i32_0 = arith.constant 0 : i32
    %c0_i32_1 = arith.constant 0 : i32
    return %c0_i32, %c0_i32_0 : i32, i32
  }
  func.func @transform_7(%arg0: i32) -> (i32, i32, i32) {
    %c0_i32 = arith.constant 0 : i32
    %c0_i32_0 = arith.constant 0 : i32
    %c0_i32_1 = arith.constant 0 : i32
    return %arg0, %c0_i32, %c0_i32_0 : i32, i32, i32
  }
}

</mosaic_0001>

<llo_original>
// kernel: _lambda_.1
$region0: #{_lambda_.1}
  #allocation0 [shape = 'u32[]', space=smem, size = 0x4, offset = 0x4, fixed_abs, tag = 'smem constant byte address 0x4 - core index']
  #allocation1 [shape = 'u32[72,128]{1,0:T(1,128)}', space=vmem, size = 0x9000, scoped, tag = 'internal scratch']
  %s0 = inlined_call_operand.vmem [shape: f32[8,64,32], index: 0, kind: input, shape index: {}]
  %s1 = inlined_call_operand.vmem [shape: bf16[32,96], index: 1, kind: input, shape index: {}]
  %s2 = inlined_call_operand.vmem [shape: f32[1,96], index: 2, kind: input, shape index: {}]
  %s3 = inlined_call_operand.vmem [shape: f32[1,4], index: 3, kind: input, shape index: {}]
  %s4 = inlined_call_operand.vmem [shape: f32[4,64,64], index: 4, kind: input, shape index: {}]
  %s5 = inlined_call_operand.vmem [shape: bf16[32,32], index: 5, kind: input, shape index: {}]
  %s6 = inlined_call_operand.vmem [shape: f32[1,32], index: 6, kind: input, shape index: {}]
  %s7 = inlined_call_operand.vmem [shape: f32[8,64,32], index: 7, kind: output, shape index: {}]
  %s8 = sld [smem:[#allocation0]]
  $region61: #{_lambda_.1} parent=0
    _
  %s10 = ssub.s32 1, %s8
  %s11 = scalar_select 0, %s10, %s8
  loop: start=0, step=1, limit=4
  $region2: #{_lambda_.1} parent=0 // loop_pre_header
    _
  $region3: #{_lambda_.1} parent=0 // loop_header
    %s13 = sphi 0, %s17
    %p14 = scmp.ge.s32.totalorder %s13, 4
    %s23 = sphi 0, %s25
    %s26 = sphi 0, %s23
    %s27 = sphi 0, %s26
    %s43 = sphi 0, %s27
    %s47 = sphi 0, %s47
    %s49 = sphi 0, %s47
    %s50 = sphi 0, %s49
    %s64 = sphi 0, %s50
    %s68 = sphi 0, %s68
    %s70 = sphi 0, %s68
    %s71 = sphi 0, %s70
    %s85 = sphi 0, %s71
    %s89 = sphi 0, %s89
    %s91 = sphi 0, %s89
    %s92 = sphi 0, %s91
    %s106 = sphi 0, %s92
    %s110 = sphi 0, %s110
    %s112 = sphi 0, %s110
    %s113 = sphi 0, %s112
    %s127 = sphi 0, %s113
    %s131 = sphi 0, %s131
    %s133 = sphi 0, %s131
    %s134 = sphi 0, %s133
    %s148 = sphi 0, %s134
    %s152 = sphi 0, %s152
    %s154 = sphi 0, %s152
    %s155 = sphi 0, %s154
    %s169 = sphi 0, %s155
    %s175 = sphi 0, %s177
    %s178 = sphi 0, %s175
    %s179 = sphi 0, %s178
    %s195 = sphi 0, %s179
  $region4: #{_lambda_.1} parent=0 // loop_header_branch
    %16 = sbr.rel (%p14) target = $region8
  $region5: #{_lambda_.1} parent=0 // loop_body
    %s18 = ssub.s32 %s13, 1
    %s19 = ssub.s32 %s13, 2
    %s20 = sadd.s32 %s13, 1
    %s21 = ssub.s32 %s13, %s20
    %p22 = scmp.eq.s32.totalorder %s21, 0
    %s24 = sadd.s32 %s23, 1
    %s25 = scalar_select %p22, %s23, %s24
    %p28 = pneg %p22
    %p29 = scmp.eq.s32.totalorder %s13, 1
    %p30 = por %p28, %p29
    %p31 = scmp.ne.s32.totalorder %s23, %s26
    %p32 = scmp.eq.s32.totalorder %s13, 0
    %p33 = por %p31, %p32
    %p34 = scmp.ne.s32.totalorder %s23, %s26
    %p35 = scmp.eq.s32.totalorder %s18, 1
    %p36 = por %p34, %p35
    %p37 = scmp.ne.s32.totalorder %s26, %s27
    %p38 = scmp.eq.s32.totalorder %s18, 0
    %p39 = por %p37, %p38
    %p40 = scmp.ne.s32.totalorder %s26, %s27
    %p41 = scmp.eq.s32.totalorder %s19, 1
    %p42 = por %p40, %p41
    %p44 = scmp.ne.s32.totalorder %s27, %s43
    %p45 = scmp.eq.s32.totalorder %s19, 0
    %p46 = por %p44, %p45
    %s48 = sadd.s32 %s47, 1
    %p51 = scmp.eq.s32.totalorder %s13, 1
    %p52 = scmp.ne.s32.totalorder %s47, %s49
    %p53 = scmp.eq.s32.totalorder %s13, 0
    %p54 = por %p52, %p53
    %p55 = scmp.ne.s32.totalorder %s47, %s49
    %p56 = scmp.eq.s32.totalorder %s18, 1
    %p57 = por %p55, %p56
    %p58 = scmp.ne.s32.totalorder %s49, %s50
    %p59 = scmp.eq.s32.totalorder %s18, 0
    %p60 = por %p58, %p59
    %p61 = scmp.ne.s32.totalorder %s49, %s50
    %p62 = scmp.eq.s32.totalorder %s19, 1
    %p63 = por %p61, %p62
    %p65 = scmp.ne.s32.totalorder %s50, %s64
    %p66 = scmp.eq.s32.totalorder %s19, 0
    %p67 = por %p65, %p66
    %s69 = sadd.s32 %s68, 1
    %p72 = scmp.eq.s32.totalorder %s13, 1
    %p73 = scmp.ne.s32.totalorder %s68, %s70
    %p74 = scmp.eq.s32.totalorder %s13, 0
    %p75 = por %p73, %p74
    %p76 = scmp.ne.s32.totalorder %s68, %s70
    %p77 = scmp.eq.s32.totalorder %s18, 1
    %p78 = por %p76, %p77
    %p79 = scmp.ne.s32.totalorder %s70, %s71
    %p80 = scmp.eq.s32.totalorder %s18, 0
    %p81 = por %p79, %p80
    %p82 = scmp.ne.s32.totalorder %s70, %s71
    %p83 = scmp.eq.s32.totalorder %s19, 1
    %p84 = por %p82, %p83
    %p86 = scmp.ne.s32.totalorder %s71, %s85
    %p87 = scmp.eq.s32.totalorder %s19, 0
    %p88 = por %p86, %p87
    %s90 = sadd.s32 %s89, 1
    %p93 = scmp.eq.s32.totalorder %s13, 1
    %p94 = scmp.ne.s32.totalorder %s89, %s91
    %p95 = scmp.eq.s32.totalorder %s13, 0
    %p96 = por %p94, %p95
    %p97 = scmp.ne.s32.totalorder %s89, %s91
    %p98 = scmp.eq.s32.totalorder %s18, 1
    %p99 = por %p97, %p98
    %p100 = scmp.ne.s32.totalorder %s91, %s92
    %p101 = scmp.eq.s32.totalorder %s18, 0
    %p102 = por %p100, %p101
    %p103 = scmp.ne.s32.totalorder %s91, %s92
    %p104 = scmp.eq.s32.totalorder %s19, 1
    %p105 = por %p103, %p104
    %p107 = scmp.ne.s32.totalorder %s92, %s106
    %p108 = scmp.eq.s32.totalorder %s19, 0
    %p109 = por %p107, %p108
    %s111 = sadd.s32 %s110, 1
    %p114 = scmp.eq.s32.totalorder %s13, 1
    %p115 = scmp.ne.s32.totalorder %s110, %s112
    %p116 = scmp.eq.s32.totalorder %s13, 0
    %p117 = por %p115, %p116
    %p118 = scmp.ne.s32.totalorder %s110, %s112
    %p119 = scmp.eq.s32.totalorder %s18, 1
    %p120 = por %p118, %p119
    %p121 = scmp.ne.s32.totalorder %s112, %s113
    %p122 = scmp.eq.s32.totalorder %s18, 0
    %p123 = por %p121, %p122
    %p124 = scmp.ne.s32.totalorder %s112, %s113
    %p125 = scmp.eq.s32.totalorder %s19, 1
    %p126 = por %p124, %p125
    %p128 = scmp.ne.s32.totalorder %s113, %s127
    %p129 = scmp.eq.s32.totalorder %s19, 0
    %p130 = por %p128, %p129
    %s132 = sadd.s32 %s131, 1
    %p135 = scmp.eq.s32.totalorder %s13, 1
    %p136 = scmp.ne.s32.totalorder %s131, %s133
    %p137 = scmp.eq.s32.totalorder %s13, 0
    %p138 = por %p136, %p137
    %p139 = scmp.ne.s32.totalorder %s131, %s133
    %p140 = scmp.eq.s32.totalorder %s18, 1
    %p141 = por %p139, %p140
    %p142 = scmp.ne.s32.totalorder %s133, %s134
    %p143 = scmp.eq.s32.totalorder %s18, 0
    %p144 = por %p142, %p143
    %p145 = scmp.ne.s32.totalorder %s133, %s134
    %p146 = scmp.eq.s32.totalorder %s19, 1
    %p147 = por %p145, %p146
    %p149 = scmp.ne.s32.totalorder %s134, %s148
    %p150 = scmp.eq.s32.totalorder %s19, 0
    %p151 = por %p149, %p150
    %s153 = sadd.s32 %s152, 1
    %p156 = scmp.eq.s32.totalorder %s13, 1
    %p157 = scmp.ne.s32.totalorder %s152, %s154
    %p158 = scmp.eq.s32.totalorder %s13, 0
    %p159 = por %p157, %p158
    %p160 = scmp.ne.s32.totalorder %s152, %s154
    %p161 = scmp.eq.s32.totalorder %s18, 1
    %p162 = por %p160, %p161
    %p163 = scmp.ne.s32.totalorder %s154, %s155
    %p164 = scmp.eq.s32.totalorder %s18, 0
    %p165 = por %p163, %p164
    %p166 = scmp.ne.s32.totalorder %s154, %s155
    %p167 = scmp.eq.s32.totalorder %s19, 1
    %p168 = por %p166, %p167
    %p170 = scmp.ne.s32.totalorder %s155, %s169
    %p171 = scmp.eq.s32.totalorder %s19, 0
    %p172 = por %p170, %p171
    %s173 = ssub.s32 %s13, %s20
    %p174 = scmp.eq.s32.totalorder %s173, 0
    %s176 = sadd.s32 %s175, 1
    %s177 = scalar_select %p174, %s175, %s176
    %p180 = pneg %p174
    %p181 = scmp.eq.s32.totalorder %s13, 1
    %p182 = por %p180, %p181
    %p183 = scmp.ne.s32.totalorder %s175, %s178
    %p184 = scmp.eq.s32.totalorder %s13, 0
    %p185 = por %p183, %p184
    %p186 = scmp.ne.s32.totalorder %s175, %s178
    %p187 = scmp.eq.s32.totalorder %s18, 1
    %p188 = por %p186, %p187
    %p189 = scmp.ne.s32.totalorder %s178, %s179
    %p190 = scmp.eq.s32.totalorder %s18, 0
    %p191 = por %p189, %p190
    %p192 = scmp.ne.s32.totalorder %s178, %s179
    %p193 = scmp.eq.s32.totalorder %s19, 1
    %p194 = por %p192, %p193
    %p196 = scmp.ne.s32.totalorder %s179, %s195
    %p197 = scmp.eq.s32.totalorder %s19, 0
    %p198 = por %p196, %p197
    %p199 = scmp.le.s32.totalorder 1, %s13
    %p200 = scmp.lt.s32.totalorder %s13, 3
    %p201 = pnand %p199, %p200
    %p202 = pneg %p201
    // Predicated region
    $region9: #{_lambda_.1} parent=5 // pred_check
      _
    $region10: #{_lambda_.1} parent=5 // pred_check_branch
      %204 = sbr.rel (%p201) target = $region12
    $region11: #{_lambda_.1} parent=5 // pred_region
      %s205 = ssub.s32 %s13, 1
      // Predicated region
      $region13: #{_lambda_.1} parent=11 // pred_check
        %p206 = pneg %p60
      $region14: #{_lambda_.1} parent=11 // pred_check_branch
        %208 = sbr.rel (%p206) target = $region16
      $region15: #{_lambda_.1} parent=11 // pred_region
        _
      $region16: #{_lambda_.1} parent=11 // pred_fallthru
        _
      // Predicated region
      $region17: #{_lambda_.1} parent=11 // pred_check
        %p209 = pneg %p81
      $region18: #{_lambda_.1} parent=11 // pred_check_branch
        %211 = sbr.rel (%p209) target = $region20
      $region19: #{_lambda_.1} parent=11 // pred_region
        _
      $region20: #{_lambda_.1} parent=11 // pred_fallthru
        _
      // Predicated region
      $region21: #{_lambda_.1} parent=11 // pred_check
        %p212 = pneg %p102
      $region22: #{_lambda_.1} parent=11 // pred_check_branch
        %214 = sbr.rel (%p212) target = $region24
      $region23: #{_lambda_.1} parent=11 // pred_region
        _
      $region24: #{_lambda_.1} parent=11 // pred_fallthru
        _
      // Predicated region
      $region25: #{_lambda_.1} parent=11 // pred_check
        %p215 = pneg %p123
      $region26: #{_lambda_.1} parent=11 // pred_check_branch
        %217 = sbr.rel (%p215) target = $region28
      $region27: #{_lambda_.1} parent=11 // pred_region
        _
      $region28: #{_lambda_.1} parent=11 // pred_fallthru
        _
      // Predicated region
      $region29: #{_lambda_.1} parent=11 // pred_check
        %p218 = pneg %p144
      $region30: #{_lambda_.1} parent=11 // pred_check_branch
        %220 = sbr.rel (%p218) target = $region32
      $region31: #{_lambda_.1} parent=11 // pred_region
        _
      $region32: #{_lambda_.1} parent=11 // pred_fallthru
        _
      // Predicated region
      $region33: #{_lambda_.1} parent=11 // pred_check
        %p221 = pneg %p165
      $region34: #{_lambda_.1} parent=11 // pred_check_branch
        %223 = sbr.rel (%p221) target = $region36
      $region35: #{_lambda_.1} parent=11 // pred_region
        _
      $region36: #{_lambda_.1} parent=11 // pred_fallthru
        _
    $region12: #{_lambda_.1} parent=5 // pred_fallthru
      _
    %p224 = scmp.lt.s32.totalorder %s13, 2
    // Predicated region
    $region37: #{_lambda_.1} parent=5 // pred_check
      %p225 = pneg %p224
    $region38: #{_lambda_.1} parent=5 // pred_check_branch
      %227 = sbr.rel (%p225) target = $region40
    $region39: #{_lambda_.1} parent=5 // pred_region
      // Predicated region
      $region41: #{_lambda_.1} parent=39 // pred_check
        %p228 = pneg %p33
      $region42: #{_lambda_.1} parent=39 // pred_check_branch
        %230 = sbr.rel (%p228) target = $region44
      $region43: #{_lambda_.1} parent=39 // pred_region
        %s231 = smul.u32 4, %s13
        %p232 = scmp.lt.s32.totalorder %s231, 7
        %s233 = scalar_select %p232, %s231, 7
        %s234 = smul.addr %s233, 8
        %s235 = smul.addr %s234, 8
        %s236 = scalar_lea.vmem %s0, %s235
        %s237 = smul.u32 4, %s13
      $region44: #{_lambda_.1} parent=39 // pred_fallthru
        _
    $region40: #{_lambda_.1} parent=5 // pred_fallthru
      _
    %p238 = scmp.le.s32.totalorder 1, %s13
    %p239 = scmp.lt.s32.totalorder %s13, 3
    %p240 = pnand %p238, %p239
    %p241 = pneg %p240
    // Predicated region
    $region45: #{_lambda_.1} parent=5 // pred_check
      _
    $region46: #{_lambda_.1} parent=5 // pred_check_branch
      %243 = sbr.rel (%p240) target = $region48
    $region47: #{_lambda_.1} parent=5 // pred_region
      %s244 = ssub.s32 %s13, 1
      %s245 = smul.u32 4, %s18
      %p246 = scmp.lt.s32.totalorder %s245, 7
      %s247 = scalar_select %p246, %s245, 7
      %s248 = smul.addr %s247, 8
      %s249 = smul.addr %s248, 8
      %s250 = scalar_lea.vmem %s0, %s249
      %p251 = pneg %p39
      %p252 = pneg %p36
      %p253 = pneg %p60
      %p254 = pneg %p57
      %p255 = pneg %p81
      %p256 = pneg %p78
      %p257 = pneg %p102
      %p258 = pneg %p99
      %p259 = pneg %p123
      %p260 = pneg %p120
      %p261 = pneg %p144
      %p262 = pneg %p141
      %p263 = pneg %p165
      %p264 = pneg %p162
      %p265 = pneg %p191
      %p266 = pneg %p188
      %s267 = smul.u32 4, %s18
      %p268 = scmp.lt.s32.totalorder %s267, 7
      %s269 = scalar_select %p268, %s267, 7
      %s270 = smul.addr %s269, 8
      %s271 = smul.addr %s270, 8
      %s272 = scalar_lea.vmem %s7, %s271
      %s273 = smul.u32 4, %s18
      %p274 = scmp.lt.s32.totalorder %s273, 7
      %s275 = scalar_select %p274, %s273, 7
      %s276 = smul.addr %s275, 8
      %s277 = smul.addr %s276, 8
      %s278 = scalar_lea.vmem %s0, %s277
      %s279 = smul.u32 4, %s18
      %s280 = smul.u32 4, %s18
      %p281 = scmp.lt.s32.totalorder %s280, 7
      %s282 = scalar_select %p281, %s280, 7
      %s283 = smul.addr %s282, 8
      %s284 = smul.addr %s283, 8
      %s285 = scalar_lea.vmem %s7, %s284
      %s286 = smul.u32 4, %s18
      %v288 = vld [vmem:[%s278] sm:$0xff]
      %v289 = vld [vmem:[%s278 + $0x8] sm:$0xff]
      %v290 = vld [vmem:[%s278 + $0x10] sm:$0xff]
      %v291 = vld [vmem:[%s278 + $0x18] sm:$0xff]
      %v292 = vld [vmem:[%s278 + $0x20] sm:$0xff]
      %v293 = vld [vmem:[%s278 + $0x28] sm:$0xff]
      %v294 = vld [vmem:[%s278 + $0x30] sm:$0xff]
      %v295 = vld [vmem:[%s278 + $0x38] sm:$0xff]
      %v296 = vld [vmem:[%s278 + $0x40] sm:$0xff]
      %v297 = vld [vmem:[%s278 + $0x48] sm:$0xff]
      %v298 = vld [vmem:[%s278 + $0x50] sm:$0xff]
      %v299 = vld [vmem:[%s278 + $0x58] sm:$0xff]
      %v300 = vld [vmem:[%s278 + $0x60] sm:$0xff]
      %v301 = vld [vmem:[%s278 + $0x68] sm:$0xff]
      %v302 = vld [vmem:[%s278 + $0x70] sm:$0xff]
      %v303 = vld [vmem:[%s278 + $0x78] sm:$0xff]
      %v304 = vld [vmem:[%s278 + $0x80] sm:$0xff]
      %v305 = vld [vmem:[%s278 + $0x88] sm:$0xff]
      %v306 = vld [vmem:[%s278 + $0x90] sm:$0xff]
      %v307 = vld [vmem:[%s278 + $0x98] sm:$0xff]
      %v308 = vld [vmem:[%s278 + $0xa0] sm:$0xff]
      %v309 = vld [vmem:[%s278 + $0xa8] sm:$0xff]
      %v310 = vld [vmem:[%s278 + $0xb0] sm:$0xff]
      %v311 = vld [vmem:[%s278 + $0xb8] sm:$0xff]
      %v312 = vld [vmem:[%s278 + $0xc0] sm:$0xff]
      %v313 = vld [vmem:[%s278 + $0xc8] sm:$0xff]
      %v314 = vld [vmem:[%s278 + $0xd0] sm:$0xff]
      %v315 = vld [vmem:[%s278 + $0xd8] sm:$0xff]
      %v316 = vld [vmem:[%s278 + $0xe0] sm:$0xff]
      %v317 = vld [vmem:[%s278 + $0xe8] sm:$0xff]
      %v318 = vld [vmem:[%s278 + $0xf0] sm:$0xff]
      %v319 = vld [vmem:[%s278 + $0xf8] sm:$0xff]
      %v320 = vpack.c.bf16 %v289, %v288
      %v321 = vpack.c.bf16 %v291, %v290
      %v322 = vpack.c.bf16 %v293, %v292
      %v323 = vpack.c.bf16 %v295, %v294
      %v324 = vpack.c.bf16 %v297, %v296
      %v325 = vpack.c.bf16 %v299, %v298
      %v326 = vpack.c.bf16 %v301, %v300
      %v327 = vpack.c.bf16 %v303, %v302
      %v328 = vpack.c.bf16 %v305, %v304
      %v329 = vpack.c.bf16 %v307, %v306
      %v330 = vpack.c.bf16 %v309, %v308
      %v331 = vpack.c.bf16 %v311, %v310
      %v332 = vpack.c.bf16 %v313, %v312
      %v333 = vpack.c.bf16 %v315, %v314
      %v334 = vpack.c.bf16 %v317, %v316
      %v335 = vpack.c.bf16 %v319, %v318
      %v336 = vld [vmem:[%s1] sm:$0xf]
      %v337 = vld [vmem:[%s1 + $0x4] sm:$0xf]
      %v338 = vld [vmem:[%s1 + $0x8] sm:$0xf]
      %v339 = vld [vmem:[%s1 + $0xc] sm:$0xf]
      %v340 = vld [vmem:[%s2] sm:$0x1]
      %v342 = vperm.slane %v340, 0
      %v348 = vunpack.c.l.b16 %v336
      %v349 = vunpack.c.l.b16 %v337
      %v350 = vunpack.c.l.b16 %v338
      %v351 = vunpack.c.l.b16 %v339
      %v352 = vpack.c.b16 %v349, %v348
      %v353 = vpack.c.b16 %v351, %v350
      %vm356 = vcmask 261120
      %v358 = vsel %vm356, %v320, 0
      %v361 = vsel %vm356, %v321, 0
      %v364 = vsel %vm356, %v322, 0
      %v367 = vsel %vm356, %v323, 0
      %v370 = vsel %vm356, %v324, 0
      %v373 = vsel %vm356, %v325, 0
      %v376 = vsel %vm356, %v326, 0
      %v379 = vsel %vm356, %v327, 0
      %v382 = vsel %vm356, %v328, 0
      %v385 = vsel %vm356, %v329, 0
      %v388 = vsel %vm356, %v330, 0
      %v391 = vsel %vm356, %v331, 0
      %v394 = vsel %vm356, %v332, 0
      %v397 = vsel %vm356, %v333, 0
      %v400 = vsel %vm356, %v334, 0
      %v403 = vsel %vm356, %v335, 0
      %405 = vmatpush.bf16.msra.mxu0 0
      %406 = vmatpush.bf16.msra.mxu0 0
      %407 = vmatpush.bf16.msra.mxu0 0
      %408 = vmatpush.bf16.msra.mxu0 0
      %409 = vmatpush.bf16.msra.mxu0 0
      %410 = vmatpush.bf16.msra.mxu0 0
      %411 = vmatpush.bf16.msra.mxu0 %v353
      %412 = vmatpush.bf16.msra.mxu0 %v352
      %413 = vmatmul.bf16.gmra.mxu0 %v358
      %v414 = vpop.f32.mrf.mxu0
      %v415 = vadd.f32 %v342, %v414
      %v416 = vpop.f32.mrf.mxu0
      %v417 = vadd.f32 %v342, %v416
      %418 = vmatmul.bf16.gmra.mxu0 %v361
      %v419 = vpop.f32.mrf.mxu0
      %v420 = vadd.f32 %v342, %v419
      %v421 = vpop.f32.mrf.mxu0
      %v422 = vadd.f32 %v342, %v421
      %423 = vmatmul.bf16.gmra.mxu0 %v364
      %v424 = vpop.f32.mrf.mxu0
      %v425 = vadd.f32 %v342, %v424
      %v426 = vpop.f32.mrf.mxu0
      %v427 = vadd.f32 %v342, %v426
      %428 = vmatmul.bf16.gmra.mxu0 %v367
      %v429 = vpop.f32.mrf.mxu0
      %v430 = vadd.f32 %v342, %v429
      %v431 = vpop.f32.mrf.mxu0
      %v432 = vadd.f32 %v342, %v431
      %433 = vmatmul.bf16.gmra.mxu0 %v370
      %v434 = vpop.f32.mrf.mxu0
      %v435 = vadd.f32 %v342, %v434
      %v436 = vpop.f32.mrf.mxu0
      %v437 = vadd.f32 %v342, %v436
      %438 = vmatmul.bf16.gmra.mxu0 %v373
      %v439 = vpop.f32.mrf.mxu0
      %v440 = vadd.f32 %v342, %v439
      %v441 = vpop.f32.mrf.mxu0
      %v442 = vadd.f32 %v342, %v441
      %443 = vmatmul.bf16.gmra.mxu0 %v376
      %v444 = vpop.f32.mrf.mxu0
      %v445 = vadd.f32 %v342, %v444
      %v446 = vpop.f32.mrf.mxu0
      %v447 = vadd.f32 %v342, %v446
      %448 = vmatmul.bf16.gmra.mxu0 %v379
      %v449 = vpop.f32.mrf.mxu0
      %v450 = vadd.f32 %v342, %v449
      %v451 = vpop.f32.mrf.mxu0
      %v452 = vadd.f32 %v342, %v451
      %453 = vmatmul.bf16.gmra.mxu0 %v382
      %v454 = vpop.f32.mrf.mxu0
      %v455 = vadd.f32 %v342, %v454
      %v456 = vpop.f32.mrf.mxu0
      %v457 = vadd.f32 %v342, %v456
      %458 = vmatmul.bf16.gmra.mxu0 %v385
      %v459 = vpop.f32.mrf.mxu0
      %v460 = vadd.f32 %v342, %v459
      %v461 = vpop.f32.mrf.mxu0
      %v462 = vadd.f32 %v342, %v461
      %463 = vmatmul.bf16.gmra.mxu0 %v388
      %v464 = vpop.f32.mrf.mxu0
      %v465 = vadd.f32 %v342, %v464
      %v466 = vpop.f32.mrf.mxu0
      %v467 = vadd.f32 %v342, %v466
      %468 = vmatmul.bf16.gmra.mxu0 %v391
      %v469 = vpop.f32.mrf.mxu0
      %v470 = vadd.f32 %v342, %v469
      %v471 = vpop.f32.mrf.mxu0
      %v472 = vadd.f32 %v342, %v471
      %473 = vmatmul.bf16.gmra.mxu0 %v394
      %v474 = vpop.f32.mrf.mxu0
      %v475 = vadd.f32 %v342, %v474
      %v476 = vpop.f32.mrf.mxu0
      %v477 = vadd.f32 %v342, %v476
      %478 = vmatmul.bf16.gmra.mxu0 %v397
      %v479 = vpop.f32.mrf.mxu0
      %v480 = vadd.f32 %v342, %v479
      %v481 = vpop.f32.mrf.mxu0
      %v482 = vadd.f32 %v342, %v481
      %483 = vmatmul.bf16.gmra.mxu0 %v400
      %v484 = vpop.f32.mrf.mxu0
      %v485 = vadd.f32 %v342, %v484
      %v486 = vpop.f32.mrf.mxu0
      %v487 = vadd.f32 %v342, %v486
      %488 = vmatmul.bf16.gmra.mxu0 %v403
      %v489 = vpop.f32.mrf.mxu0
      %v490 = vadd.f32 %v342, %v489
      %v491 = vpop.f32.mrf.mxu0
      %v492 = vadd.f32 %v342, %v491
      %493 = vdwg.mxu0
      %v494 = vld [vmem:[%s3] sm:$0x1]
      %v495 = vmul.f32 %v415, %v415
      %v496 = vmul.f32 %v417, %v417
      %v497 = vmul.f32 %v420, %v420
      %v498 = vmul.f32 %v422, %v422
      %v499 = vmul.f32 %v425, %v425
      %v500 = vmul.f32 %v427, %v427
      %v501 = vmul.f32 %v430, %v430
      %v502 = vmul.f32 %v432, %v432
      %v503 = vmul.f32 %v435, %v435
      %v504 = vmul.f32 %v437, %v437
      %v505 = vmul.f32 %v440, %v440
      %v506 = vmul.f32 %v442, %v442
      %v507 = vmul.f32 %v445, %v445
      %v508 = vmul.f32 %v447, %v447
      %v509 = vmul.f32 %v450, %v450
      %v510 = vmul.f32 %v452, %v452
      %v511 = vmul.f32 %v455, %v455
      %v512 = vmul.f32 %v457, %v457
      %v513 = vmul.f32 %v460, %v460
      %v514 = vmul.f32 %v462, %v462
      %v515 = vmul.f32 %v465, %v465
      %v516 = vmul.f32 %v467, %v467
      %v517 = vmul.f32 %v470, %v470
      %v518 = vmul.f32 %v472, %v472
      %v519 = vmul.f32 %v475, %v475
      %v520 = vmul.f32 %v477, %v477
      %v521 = vmul.f32 %v480, %v480
      %v522 = vmul.f32 %v482, %v482
      %v523 = vmul.f32 %v485, %v485
      %v524 = vmul.f32 %v487, %v487
      %v525 = vmul.f32 %v490, %v490
      %v526 = vmul.f32 %v492, %v492
      %vm527 = vcmask 64512
      %v528 = vsel %vm527, %v495, 0.0
      %529 = vadd.xlane.f32.xlu0 %v528
      %v530 = vpop.xlane.xlu0 %529
      %v531 = vsel %vm527, %v496, 0.0
      %532 = vadd.xlane.f32.xlu0 %v531
      %v533 = vpop.xlane.xlu0 %532
      %v534 = vsel %vm527, %v497, 0.0
      %535 = vadd.xlane.f32.xlu0 %v534
      %v536 = vpop.xlane.xlu0 %535
      %v537 = vsel %vm527, %v498, 0.0
      %538 = vadd.xlane.f32.xlu0 %v537
      %v539 = vpop.xlane.xlu0 %538
      %v540 = vsel %vm527, %v499, 0.0
      %541 = vadd.xlane.f32.xlu0 %v540
      %v542 = vpop.xlane.xlu0 %541
      %v543 = vsel %vm527, %v500, 0.0
      %544 = vadd.xlane.f32.xlu0 %v543
      %v545 = vpop.xlane.xlu0 %544
      %v546 = vsel %vm527, %v501, 0.0
      %547 = vadd.xlane.f32.xlu0 %v546
      %v548 = vpop.xlane.xlu0 %547
      %v549 = vsel %vm527, %v502, 0.0
      %550 = vadd.xlane.f32.xlu0 %v549
      %v551 = vpop.xlane.xlu0 %550
      %v552 = vsel %vm527, %v503, 0.0
      %553 = vadd.xlane.f32.xlu0 %v552
      %v554 = vpop.xlane.xlu0 %553
      %v555 = vsel %vm527, %v504, 0.0
      %556 = vadd.xlane.f32.xlu0 %v555
      %v557 = vpop.xlane.xlu0 %556
      %v558 = vsel %vm527, %v505, 0.0
      %559 = vadd.xlane.f32.xlu0 %v558
      %v560 = vpop.xlane.xlu0 %559
      %v561 = vsel %vm527, %v506, 0.0
      %562 = vadd.xlane.f32.xlu0 %v561
      %v563 = vpop.xlane.xlu0 %562
      %v564 = vsel %vm527, %v507, 0.0
      %565 = vadd.xlane.f32.xlu0 %v564
      %v566 = vpop.xlane.xlu0 %565
      %v567 = vsel %vm527, %v508, 0.0
      %568 = vadd.xlane.f32.xlu0 %v567
      %v569 = vpop.xlane.xlu0 %568
      %v570 = vsel %vm527, %v509, 0.0
      %571 = vadd.xlane.f32.xlu0 %v570
      %v572 = vpop.xlane.xlu0 %571
      %v573 = vsel %vm527, %v510, 0.0
      %574 = vadd.xlane.f32.xlu0 %v573
      %v575 = vpop.xlane.xlu0 %574
      %v576 = vsel %vm527, %v511, 0.0
      %577 = vadd.xlane.f32.xlu0 %v576
      %v578 = vpop.xlane.xlu0 %577
      %v579 = vsel %vm527, %v512, 0.0
      %580 = vadd.xlane.f32.xlu0 %v579
      %v581 = vpop.xlane.xlu0 %580
      %v582 = vsel %vm527, %v513, 0.0
      %583 = vadd.xlane.f32.xlu0 %v582
      %v584 = vpop.xlane.xlu0 %583
      %v585 = vsel %vm527, %v514, 0.0
      %586 = vadd.xlane.f32.xlu0 %v585
      %v587 = vpop.xlane.xlu0 %586
      %v588 = vsel %vm527, %v515, 0.0
      %589 = vadd.xlane.f32.xlu0 %v588
      %v590 = vpop.xlane.xlu0 %589
      %v591 = vsel %vm527, %v516, 0.0
      %592 = vadd.xlane.f32.xlu0 %v591
      %v593 = vpop.xlane.xlu0 %592
      %v594 = vsel %vm527, %v517, 0.0
      %595 = vadd.xlane.f32.xlu0 %v594
      %v596 = vpop.xlane.xlu0 %595
      %v597 = vsel %vm527, %v518, 0.0
      %598 = vadd.xlane.f32.xlu0 %v597
      %v599 = vpop.xlane.xlu0 %598
      %v600 = vsel %vm527, %v519, 0.0
      %601 = vadd.xlane.f32.xlu0 %v600
      %v602 = vpop.xlane.xlu0 %601
      %v603 = vsel %vm527, %v520, 0.0
      %604 = vadd.xlane.f32.xlu0 %v603
      %v605 = vpop.xlane.xlu0 %604
      %v606 = vsel %vm527, %v521, 0.0
      %607 = vadd.xlane.f32.xlu0 %v606
      %v608 = vpop.xlane.xlu0 %607
      %v609 = vsel %vm527, %v522, 0.0
      %610 = vadd.xlane.f32.xlu0 %v609
      %v611 = vpop.xlane.xlu0 %610
      %v612 = vsel %vm527, %v523, 0.0
      %613 = vadd.xlane.f32.xlu0 %v612
      %v614 = vpop.xlane.xlu0 %613
      %v615 = vsel %vm527, %v524, 0.0
      %616 = vadd.xlane.f32.xlu0 %v615
      %v617 = vpop.xlane.xlu0 %616
      %v618 = vsel %vm527, %v525, 0.0
      %619 = vadd.xlane.f32.xlu0 %v618
      %v620 = vpop.xlane.xlu0 %619
      %v621 = vsel %vm527, %v526, 0.0
      %622 = vadd.xlane.f32.xlu0 %v621
      %v623 = vpop.xlane.xlu0 %622
      %v624 = vmax.f32 %v530, 1e-24
      %v625 = vmax.f32 %v533, 1e-24
      %v626 = vmax.f32 %v536, 1e-24
      %v627 = vmax.f32 %v539, 1e-24
      %v628 = vmax.f32 %v542, 1e-24
      %v629 = vmax.f32 %v545, 1e-24
      %v630 = vmax.f32 %v548, 1e-24
      %v631 = vmax.f32 %v551, 1e-24
      %v632 = vmax.f32 %v554, 1e-24
      %v633 = vmax.f32 %v557, 1e-24
      %v634 = vmax.f32 %v560, 1e-24
      %v635 = vmax.f32 %v563, 1e-24
      %v636 = vmax.f32 %v566, 1e-24
      %v637 = vmax.f32 %v569, 1e-24
      %v638 = vmax.f32 %v572, 1e-24
      %v639 = vmax.f32 %v575, 1e-24
      %v640 = vmax.f32 %v578, 1e-24
      %v641 = vmax.f32 %v581, 1e-24
      %v642 = vmax.f32 %v584, 1e-24
      %v643 = vmax.f32 %v587, 1e-24
      %v644 = vmax.f32 %v590, 1e-24
      %v645 = vmax.f32 %v593, 1e-24
      %v646 = vmax.f32 %v596, 1e-24
      %v647 = vmax.f32 %v599, 1e-24
      %v648 = vmax.f32 %v602, 1e-24
      %v649 = vmax.f32 %v605, 1e-24
      %v650 = vmax.f32 %v608, 1e-24
      %v651 = vmax.f32 %v611, 1e-24
      %v652 = vmax.f32 %v614, 1e-24
      %v653 = vmax.f32 %v617, 1e-24
      %v654 = vmax.f32 %v620, 1e-24
      %v655 = vmax.f32 %v623, 1e-24
      %v656 = vrsqrt.pop %v624
      %v657 = vmul.f32 %v656, %v624
      %v658 = vmul.f32 %v657, %v656
      %v659 = vmul.f32 0.5, %v658
      %v660 = vsub.f32 1.5, %v659
      %v661 = vmul.f32 %v656, %v660
      %vm662 = vweird.f32 %v624
      %vm663 = vweird.f32 %v656
      %vm664 = vmor %vm662, %vm663
      %v665 = vsel %vm664, %v656, %v661
      %v666 = vrsqrt.pop %v625
      %v667 = vmul.f32 %v666, %v625
      %v668 = vmul.f32 %v667, %v666
      %v669 = vmul.f32 0.5, %v668
      %v670 = vsub.f32 1.5, %v669
      %v671 = vmul.f32 %v666, %v670
      %vm672 = vweird.f32 %v625
      %vm673 = vweird.f32 %v666
      %vm674 = vmor %vm672, %vm673
      %v675 = vsel %vm674, %v666, %v671
      %v676 = vrsqrt.pop %v626
      %v677 = vmul.f32 %v676, %v626
      %v678 = vmul.f32 %v677, %v676
      %v679 = vmul.f32 0.5, %v678
      %v680 = vsub.f32 1.5, %v679
      %v681 = vmul.f32 %v676, %v680
      %vm682 = vweird.f32 %v626
      %vm683 = vweird.f32 %v676
      %vm684 = vmor %vm682, %vm683
      %v685 = vsel %vm684, %v676, %v681
      %v686 = vrsqrt.pop %v627
      %v687 = vmul.f32 %v686, %v627
      %v688 = vmul.f32 %v687, %v686
      %v689 = vmul.f32 0.5, %v688
      %v690 = vsub.f32 1.5, %v689
      %v691 = vmul.f32 %v686, %v690
      %vm692 = vweird.f32 %v627
      %vm693 = vweird.f32 %v686
      %vm694 = vmor %vm692, %vm693
      %v695 = vsel %vm694, %v686, %v691
      %v696 = vrsqrt.pop %v628
      %v697 = vmul.f32 %v696, %v628
      %v698 = vmul.f32 %v697, %v696
      %v699 = vmul.f32 0.5, %v698
      %v700 = vsub.f32 1.5, %v699
      %v701 = vmul.f32 %v696, %v700
      %vm702 = vweird.f32 %v628
      %vm703 = vweird.f32 %v696
      %vm704 = vmor %vm702, %vm703
      %v705 = vsel %vm704, %v696, %v701
      %v706 = vrsqrt.pop %v629
      %v707 = vmul.f32 %v706, %v629
      %v708 = vmul.f32 %v707, %v706
      %v709 = vmul.f32 0.5, %v708
      %v710 = vsub.f32 1.5, %v709
      %v711 = vmul.f32 %v706, %v710
      %vm712 = vweird.f32 %v629
      %vm713 = vweird.f32 %v706
      %vm714 = vmor %vm712, %vm713
      %v715 = vsel %vm714, %v706, %v711
      %v716 = vrsqrt.pop %v630
      %v717 = vmul.f32 %v716, %v630
      %v718 = vmul.f32 %v717, %v716
      %v719 = vmul.f32 0.5, %v718
      %v720 = vsub.f32 1.5, %v719
      %v721 = vmul.f32 %v716, %v720
      %vm722 = vweird.f32 %v630
      %vm723 = vweird.f32 %v716
      %vm724 = vmor %vm722, %vm723
      %v725 = vsel %vm724, %v716, %v721
      %v726 = vrsqrt.pop %v631
      %v727 = vmul.f32 %v726, %v631
      %v728 = vmul.f32 %v727, %v726
      %v729 = vmul.f32 0.5, %v728
      %v730 = vsub.f32 1.5, %v729
      %v731 = vmul.f32 %v726, %v730
      %vm732 = vweird.f32 %v631
      %vm733 = vweird.f32 %v726
      %vm734 = vmor %vm732, %vm733
      %v735 = vsel %vm734, %v726, %v731
      %v736 = vrsqrt.pop %v632
      %v737 = vmul.f32 %v736, %v632
      %v738 = vmul.f32 %v737, %v736
      %v739 = vmul.f32 0.5, %v738
      %v740 = vsub.f32 1.5, %v739
      %v741 = vmul.f32 %v736, %v740
      %vm742 = vweird.f32 %v632
      %vm743 = vweird.f32 %v736
      %vm744 = vmor %vm742, %vm743
      %v745 = vsel %vm744, %v736, %v741
      %v746 = vrsqrt.pop %v633
      %v747 = vmul.f32 %v746, %v633
      %v748 = vmul.f32 %v747, %v746
      %v749 = vmul.f32 0.5, %v748
      %v750 = vsub.f32 1.5, %v749
      %v751 = vmul.f32 %v746, %v750
      %vm752 = vweird.f32 %v633
      %vm753 = vweird.f32 %v746
      %vm754 = vmor %vm752, %vm753
      %v755 = vsel %vm754, %v746, %v751
      %v756 = vrsqrt.pop %v634
      %v757 = vmul.f32 %v756, %v634
      %v758 = vmul.f32 %v757, %v756
      %v759 = vmul.f32 0.5, %v758
      %v760 = vsub.f32 1.5, %v759
      %v761 = vmul.f32 %v756, %v760
      %vm762 = vweird.f32 %v634
      %vm763 = vweird.f32 %v756
      %vm764 = vmor %vm762, %vm763
      %v765 = vsel %vm764, %v756, %v761
      %v766 = vrsqrt.pop %v635
      %v767 = vmul.f32 %v766, %v635
      %v768 = vmul.f32 %v767, %v766
      %v769 = vmul.f32 0.5, %v768
      %v770 = vsub.f32 1.5, %v769
      %v771 = vmul.f32 %v766, %v770
      %vm772 = vweird.f32 %v635
      %vm773 = vweird.f32 %v766
      %vm774 = vmor %vm772, %vm773
      %v775 = vsel %vm774, %v766, %v771
      %v776 = vrsqrt.pop %v636
      %v777 = vmul.f32 %v776, %v636
      %v778 = vmul.f32 %v777, %v776
      %v779 = vmul.f32 0.5, %v778
      %v780 = vsub.f32 1.5, %v779
      %v781 = vmul.f32 %v776, %v780
      %vm782 = vweird.f32 %v636
      %vm783 = vweird.f32 %v776
      %vm784 = vmor %vm782, %vm783
      %v785 = vsel %vm784, %v776, %v781
      %v786 = vrsqrt.pop %v637
      %v787 = vmul.f32 %v786, %v637
      %v788 = vmul.f32 %v787, %v786
      %v789 = vmul.f32 0.5, %v788
      %v790 = vsub.f32 1.5, %v789
      %v791 = vmul.f32 %v786, %v790
      %vm792 = vweird.f32 %v637
      %vm793 = vweird.f32 %v786
      %vm794 = vmor %vm792, %vm793
      %v795 = vsel %vm794, %v786, %v791
      %v796 = vrsqrt.pop %v638
      %v797 = vmul.f32 %v796, %v638
      %v798 = vmul.f32 %v797, %v796
      %v799 = vmul.f32 0.5, %v798
      %v800 = vsub.f32 1.5, %v799
      %v801 = vmul.f32 %v796, %v800
      %vm802 = vweird.f32 %v638
      %vm803 = vweird.f32 %v796
      %vm804 = vmor %vm802, %vm803
      %v805 = vsel %vm804, %v796, %v801
      %v806 = vrsqrt.pop %v639
      %v807 = vmul.f32 %v806, %v639
      %v808 = vmul.f32 %v807, %v806
      %v809 = vmul.f32 0.5, %v808
      %v810 = vsub.f32 1.5, %v809
      %v811 = vmul.f32 %v806, %v810
      %vm812 = vweird.f32 %v639
      %vm813 = vweird.f32 %v806
      %vm814 = vmor %vm812, %vm813
      %v815 = vsel %vm814, %v806, %v811
      %v816 = vrsqrt.pop %v640
      %v817 = vmul.f32 %v816, %v640
      %v818 = vmul.f32 %v817, %v816
      %v819 = vmul.f32 0.5, %v818
      %v820 = vsub.f32 1.5, %v819
      %v821 = vmul.f32 %v816, %v820
      %vm822 = vweird.f32 %v640
      %vm823 = vweird.f32 %v816
      %vm824 = vmor %vm822, %vm823
      %v825 = vsel %vm824, %v816, %v821
      %v826 = vrsqrt.pop %v641
      %v827 = vmul.f32 %v826, %v641
      %v828 = vmul.f32 %v827, %v826
      %v829 = vmul.f32 0.5, %v828
      %v830 = vsub.f32 1.5, %v829
      %v831 = vmul.f32 %v826, %v830
      %vm832 = vweird.f32 %v641
      %vm833 = vweird.f32 %v826
      %vm834 = vmor %vm832, %vm833
      %v835 = vsel %vm834, %v826, %v831
      %v836 = vrsqrt.pop %v642
      %v837 = vmul.f32 %v836, %v642
      %v838 = vmul.f32 %v837, %v836
      %v839 = vmul.f32 0.5, %v838
      %v840 = vsub.f32 1.5, %v839
      %v841 = vmul.f32 %v836, %v840
      %vm842 = vweird.f32 %v642
      %vm843 = vweird.f32 %v836
      %vm844 = vmor %vm842, %vm843
      %v845 = vsel %vm844, %v836, %v841
      %v846 = vrsqrt.pop %v643
      %v847 = vmul.f32 %v846, %v643
      %v848 = vmul.f32 %v847, %v846
      %v849 = vmul.f32 0.5, %v848
      %v850 = vsub.f32 1.5, %v849
      %v851 = vmul.f32 %v846, %v850
      %vm852 = vweird.f32 %v643
      %vm853 = vweird.f32 %v846
      %vm854 = vmor %vm852, %vm853
      %v855 = vsel %vm854, %v846, %v851
      %v856 = vrsqrt.pop %v644
      %v857 = vmul.f32 %v856, %v644
      %v858 = vmul.f32 %v857, %v856
      %v859 = vmul.f32 0.5, %v858
      %v860 = vsub.f32 1.5, %v859
      %v861 = vmul.f32 %v856, %v860
      %vm862 = vweird.f32 %v644
      %vm863 = vweird.f32 %v856
      %vm864 = vmor %vm862, %vm863
      %v865 = vsel %vm864, %v856, %v861
      %v866 = vrsqrt.pop %v645
      %v867 = vmul.f32 %v866, %v645
      %v868 = vmul.f32 %v867, %v866
      %v869 = vmul.f32 0.5, %v868
      %v870 = vsub.f32 1.5, %v869
      %v871 = vmul.f32 %v866, %v870
      %vm872 = vweird.f32 %v645
      %vm873 = vweird.f32 %v866
      %vm874 = vmor %vm872, %vm873
      %v875 = vsel %vm874, %v866, %v871
      %v876 = vrsqrt.pop %v646
      %v877 = vmul.f32 %v876, %v646
      %v878 = vmul.f32 %v877, %v876
      %v879 = vmul.f32 0.5, %v878
      %v880 = vsub.f32 1.5, %v879
      %v881 = vmul.f32 %v876, %v880
      %vm882 = vweird.f32 %v646
      %vm883 = vweird.f32 %v876
      %vm884 = vmor %vm882, %vm883
      %v885 = vsel %vm884, %v876, %v881
      %v886 = vrsqrt.pop %v647
      %v887 = vmul.f32 %v886, %v647
      %v888 = vmul.f32 %v887, %v886
      %v889 = vmul.f32 0.5, %v888
      %v890 = vsub.f32 1.5, %v889
      %v891 = vmul.f32 %v886, %v890
      %vm892 = vweird.f32 %v647
      %vm893 = vweird.f32 %v886
      %vm894 = vmor %vm892, %vm893
      %v895 = vsel %vm894, %v886, %v891
      %v896 = vrsqrt.pop %v648
      %v897 = vmul.f32 %v896, %v648
      %v898 = vmul.f32 %v897, %v896
      %v899 = vmul.f32 0.5, %v898
      %v900 = vsub.f32 1.5, %v899
      %v901 = vmul.f32 %v896, %v900
      %vm902 = vweird.f32 %v648
      %vm903 = vweird.f32 %v896
      %vm904 = vmor %vm902, %vm903
      %v905 = vsel %vm904, %v896, %v901
      %v906 = vrsqrt.pop %v649
      %v907 = vmul.f32 %v906, %v649
      %v908 = vmul.f32 %v907, %v906
      %v909 = vmul.f32 0.5, %v908
      %v910 = vsub.f32 1.5, %v909
      %v911 = vmul.f32 %v906, %v910
      %vm912 = vweird.f32 %v649
      %vm913 = vweird.f32 %v906
      %vm914 = vmor %vm912, %vm913
      %v915 = vsel %vm914, %v906, %v911
      %v916 = vrsqrt.pop %v650
      %v917 = vmul.f32 %v916, %v650
      %v918 = vmul.f32 %v917, %v916
      %v919 = vmul.f32 0.5, %v918
      %v920 = vsub.f32 1.5, %v919
      %v921 = vmul.f32 %v916, %v920
      %vm922 = vweird.f32 %v650
      %vm923 = vweird.f32 %v916
      %vm924 = vmor %vm922, %vm923
      %v925 = vsel %vm924, %v916, %v921
      %v926 = vrsqrt.pop %v651
      %v927 = vmul.f32 %v926, %v651
      %v928 = vmul.f32 %v927, %v926
      %v929 = vmul.f32 0.5, %v928
      %v930 = vsub.f32 1.5, %v929
      %v931 = vmul.f32 %v926, %v930
      %vm932 = vweird.f32 %v651
      %vm933 = vweird.f32 %v926
      %vm934 = vmor %vm932, %vm933
      %v935 = vsel %vm934, %v926, %v931
      %v936 = vrsqrt.pop %v652
      %v937 = vmul.f32 %v936, %v652
      %v938 = vmul.f32 %v937, %v936
      %v939 = vmul.f32 0.5, %v938
      %v940 = vsub.f32 1.5, %v939
      %v941 = vmul.f32 %v936, %v940
      %vm942 = vweird.f32 %v652
      %vm943 = vweird.f32 %v936
      %vm944 = vmor %vm942, %vm943
      %v945 = vsel %vm944, %v936, %v941
      %v946 = vrsqrt.pop %v653
      %v947 = vmul.f32 %v946, %v653
      %v948 = vmul.f32 %v947, %v946
      %v949 = vmul.f32 0.5, %v948
      %v950 = vsub.f32 1.5, %v949
      %v951 = vmul.f32 %v946, %v950
      %vm952 = vweird.f32 %v653
      %vm953 = vweird.f32 %v946
      %vm954 = vmor %vm952, %vm953
      %v955 = vsel %vm954, %v946, %v951
      %v956 = vrsqrt.pop %v654
      %v957 = vmul.f32 %v956, %v654
      %v958 = vmul.f32 %v957, %v956
      %v959 = vmul.f32 0.5, %v958
      %v960 = vsub.f32 1.5, %v959
      %v961 = vmul.f32 %v956, %v960
      %vm962 = vweird.f32 %v654
      %vm963 = vweird.f32 %v956
      %vm964 = vmor %vm962, %vm963
      %v965 = vsel %vm964, %v956, %v961
      %v966 = vrsqrt.pop %v655
      %v967 = vmul.f32 %v966, %v655
      %v968 = vmul.f32 %v967, %v966
      %v969 = vmul.f32 0.5, %v968
      %v970 = vsub.f32 1.5, %v969
      %v971 = vmul.f32 %v966, %v970
      %vm972 = vweird.f32 %v655
      %vm973 = vweird.f32 %v966
      %vm974 = vmor %vm972, %vm973
      %v975 = vsel %vm974, %v966, %v971
      %s976 = vtos %v494
      %v977 = vstv %s976
      %v978 = vmul.f32 %v665, %v977
      %v979 = vmul.f32 %v675, %v977
      %v980 = vmul.f32 %v685, %v977
      %v981 = vmul.f32 %v695, %v977
      %v982 = vmul.f32 %v705, %v977
      %v983 = vmul.f32 %v715, %v977
      %v984 = vmul.f32 %v725, %v977
      %v985 = vmul.f32 %v735, %v977
      %v986 = vmul.f32 %v745, %v977
      %v987 = vmul.f32 %v755, %v977
      %v988 = vmul.f32 %v765, %v977
      %v989 = vmul.f32 %v775, %v977
      %v990 = vmul.f32 %v785, %v977
      %v991 = vmul.f32 %v795, %v977
      %v992 = vmul.f32 %v805, %v977
      %v993 = vmul.f32 %v815, %v977
      %v994 = vmul.f32 %v825, %v977
      %v995 = vmul.f32 %v835, %v977
      %v996 = vmul.f32 %v845, %v977
      %v997 = vmul.f32 %v855, %v977
      %v998 = vmul.f32 %v865, %v977
      %v999 = vmul.f32 %v875, %v977
      %v1000 = vmul.f32 %v885, %v977
      %v1001 = vmul.f32 %v895, %v977
      %v1002 = vmul.f32 %v905, %v977
      %v1003 = vmul.f32 %v915, %v977
      %v1004 = vmul.f32 %v925, %v977
      %v1005 = vmul.f32 %v935, %v977
      %v1006 = vmul.f32 %v945, %v977
      %v1007 = vmul.f32 %v955, %v977
      %v1008 = vmul.f32 %v965, %v977
      %v1009 = vmul.f32 %v975, %v977
      %v1010 = vmul.f32 %v415, %v978
      %v1011 = vmul.f32 %v417, %v979
      %v1012 = vmul.f32 %v420, %v980
      %v1013 = vmul.f32 %v422, %v981
      %v1014 = vmul.f32 %v425, %v982
      %v1015 = vmul.f32 %v427, %v983
      %v1016 = vmul.f32 %v430, %v984
      %v1017 = vmul.f32 %v432, %v985
      %v1018 = vmul.f32 %v435, %v986
      %v1019 = vmul.f32 %v437, %v987
      %v1020 = vmul.f32 %v440, %v988
      %v1021 = vmul.f32 %v442, %v989
      %v1022 = vmul.f32 %v445, %v990
      %v1023 = vmul.f32 %v447, %v991
      %v1024 = vmul.f32 %v450, %v992
      %v1025 = vmul.f32 %v452, %v993
      %v1026 = vmul.f32 %v455, %v994
      %v1027 = vmul.f32 %v457, %v995
      %v1028 = vmul.f32 %v460, %v996
      %v1029 = vmul.f32 %v462, %v997
      %v1030 = vmul.f32 %v465, %v998
      %v1031 = vmul.f32 %v467, %v999
      %v1032 = vmul.f32 %v470, %v1000
      %v1033 = vmul.f32 %v472, %v1001
      %v1034 = vmul.f32 %v475, %v1002
      %v1035 = vmul.f32 %v477, %v1003
      %v1036 = vmul.f32 %v480, %v1004
      %v1037 = vmul.f32 %v482, %v1005
      %v1038 = vmul.f32 %v485, %v1006
      %v1039 = vmul.f32 %v487, %v1007
      %v1040 = vmul.f32 %v490, %v1008
      %v1041 = vmul.f32 %v492, %v1009
      %1074 = vrot.lane.b32.xlu0 %v495, 96
      %v1075 = vpop.permute.xlu0 %1074
      %1076 = vrot.lane.b32.xlu0 %v496, 96
      %v1077 = vpop.permute.xlu0 %1076
      %1078 = vrot.lane.b32.xlu0 %v497, 96
      %v1079 = vpop.permute.xlu0 %1078
      %1080 = vrot.lane.b32.xlu0 %v498, 96
      %v1081 = vpop.permute.xlu0 %1080
      %1082 = vrot.lane.b32.xlu0 %v499, 96
      %v1083 = vpop.permute.xlu0 %1082
      %1084 = vrot.lane.b32.xlu0 %v500, 96
      %v1085 = vpop.permute.xlu0 %1084
      %1086 = vrot.lane.b32.xlu0 %v501, 96
      %v1087 = vpop.permute.xlu0 %1086
      %1088 = vrot.lane.b32.xlu0 %v502, 96
      %v1089 = vpop.permute.xlu0 %1088
      %1090 = vrot.lane.b32.xlu0 %v503, 96
      %v1091 = vpop.permute.xlu0 %1090
      %1092 = vrot.lane.b32.xlu0 %v504, 96
      %v1093 = vpop.permute.xlu0 %1092
      %1094 = vrot.lane.b32.xlu0 %v505, 96
      %v1095 = vpop.permute.xlu0 %1094
      %1096 = vrot.lane.b32.xlu0 %v506, 96
      %v1097 = vpop.permute.xlu0 %1096
      %1098 = vrot.lane.b32.xlu0 %v507, 96
      %v1099 = vpop.permute.xlu0 %1098
      %1100 = vrot.lane.b32.xlu0 %v508, 96
      %v1101 = vpop.permute.xlu0 %1100
      %1102 = vrot.lane.b32.xlu0 %v509, 96
      %v1103 = vpop.permute.xlu0 %1102
      %1104 = vrot.lane.b32.xlu0 %v510, 96
      %v1105 = vpop.permute.xlu0 %1104
      %1106 = vrot.lane.b32.xlu0 %v511, 96
      %v1107 = vpop.permute.xlu0 %1106
      %1108 = vrot.lane.b32.xlu0 %v512, 96
      %v1109 = vpop.permute.xlu0 %1108
      %1110 = vrot.lane.b32.xlu0 %v513, 96
      %v1111 = vpop.permute.xlu0 %1110
      %1112 = vrot.lane.b32.xlu0 %v514, 96
      %v1113 = vpop.permute.xlu0 %1112
      %1114 = vrot.lane.b32.xlu0 %v515, 96
      %v1115 = vpop.permute.xlu0 %1114
      %1116 = vrot.lane.b32.xlu0 %v516, 96
      %v1117 = vpop.permute.xlu0 %1116
      %1118 = vrot.lane.b32.xlu0 %v517, 96
      %v1119 = vpop.permute.xlu0 %1118
      %1120 = vrot.lane.b32.xlu0 %v518, 96
      %v1121 = vpop.permute.xlu0 %1120
      %1122 = vrot.lane.b32.xlu0 %v519, 96
      %v1123 = vpop.permute.xlu0 %1122
      %1124 = vrot.lane.b32.xlu0 %v520, 96
      %v1125 = vpop.permute.xlu0 %1124
      %1126 = vrot.lane.b32.xlu0 %v521, 96
      %v1127 = vpop.permute.xlu0 %1126
      %1128 = vrot.lane.b32.xlu0 %v522, 96
      %v1129 = vpop.permute.xlu0 %1128
      %1130 = vrot.lane.b32.xlu0 %v523, 96
      %v1131 = vpop.permute.xlu0 %1130
      %1132 = vrot.lane.b32.xlu0 %v524, 96
      %v1133 = vpop.permute.xlu0 %1132
      %1134 = vrot.lane.b32.xlu0 %v525, 96
      %v1135 = vpop.permute.xlu0 %1134
      %1136 = vrot.lane.b32.xlu0 %v526, 96
      %v1137 = vpop.permute.xlu0 %1136
      %v1170 = vsel %vm527, %v1075, 0.0
      %1171 = vadd.xlane.f32.xlu0 %v1170
      %v1172 = vpop.xlane.xlu0 %1171
      %v1173 = vsel %vm527, %v1077, 0.0
      %1174 = vadd.xlane.f32.xlu0 %v1173
      %v1175 = vpop.xlane.xlu0 %1174
      %v1176 = vsel %vm527, %v1079, 0.0
      %1177 = vadd.xlane.f32.xlu0 %v1176
      %v1178 = vpop.xlane.xlu0 %1177
      %v1179 = vsel %vm527, %v1081, 0.0
      %1180 = vadd.xlane.f32.xlu0 %v1179
      %v1181 = vpop.xlane.xlu0 %1180
      %v1182 = vsel %vm527, %v1083, 0.0
      %1183 = vadd.xlane.f32.xlu0 %v1182
      %v1184 = vpop.xlane.xlu0 %1183
      %v1185 = vsel %vm527, %v1085, 0.0
      %1186 = vadd.xlane.f32.xlu0 %v1185
      %v1187 = vpop.xlane.xlu0 %1186
      %v1188 = vsel %vm527, %v1087, 0.0
      %1189 = vadd.xlane.f32.xlu0 %v1188
      %v1190 = vpop.xlane.xlu0 %1189
      %v1191 = vsel %vm527, %v1089, 0.0
      %1192 = vadd.xlane.f32.xlu0 %v1191
      %v1193 = vpop.xlane.xlu0 %1192
      %v1194 = vsel %vm527, %v1091, 0.0
      %1195 = vadd.xlane.f32.xlu0 %v1194
      %v1196 = vpop.xlane.xlu0 %1195
      %v1197 = vsel %vm527, %v1093, 0.0
      %1198 = vadd.xlane.f32.xlu0 %v1197
      %v1199 = vpop.xlane.xlu0 %1198
      %v1200 = vsel %vm527, %v1095, 0.0
      %1201 = vadd.xlane.f32.xlu0 %v1200
      %v1202 = vpop.xlane.xlu0 %1201
      %v1203 = vsel %vm527, %v1097, 0.0
      %1204 = vadd.xlane.f32.xlu0 %v1203
      %v1205 = vpop.xlane.xlu0 %1204
      %v1206 = vsel %vm527, %v1099, 0.0
      %1207 = vadd.xlane.f32.xlu0 %v1206
      %v1208 = vpop.xlane.xlu0 %1207
      %v1209 = vsel %vm527, %v1101, 0.0
      %1210 = vadd.xlane.f32.xlu0 %v1209
      %v1211 = vpop.xlane.xlu0 %1210
      %v1212 = vsel %vm527, %v1103, 0.0
      %1213 = vadd.xlane.f32.xlu0 %v1212
      %v1214 = vpop.xlane.xlu0 %1213
      %v1215 = vsel %vm527, %v1105, 0.0
      %1216 = vadd.xlane.f32.xlu0 %v1215
      %v1217 = vpop.xlane.xlu0 %1216
      %v1218 = vsel %vm527, %v1107, 0.0
      %1219 = vadd.xlane.f32.xlu0 %v1218
      %v1220 = vpop.xlane.xlu0 %1219
      %v1221 = vsel %vm527, %v1109, 0.0
      %1222 = vadd.xlane.f32.xlu0 %v1221
      %v1223 = vpop.xlane.xlu0 %1222
      %v1224 = vsel %vm527, %v1111, 0.0
      %1225 = vadd.xlane.f32.xlu0 %v1224
      %v1226 = vpop.xlane.xlu0 %1225
      %v1227 = vsel %vm527, %v1113, 0.0
      %1228 = vadd.xlane.f32.xlu0 %v1227
      %v1229 = vpop.xlane.xlu0 %1228
      %v1230 = vsel %vm527, %v1115, 0.0
      %1231 = vadd.xlane.f32.xlu0 %v1230
      %v1232 = vpop.xlane.xlu0 %1231
      %v1233 = vsel %vm527, %v1117, 0.0
      %1234 = vadd.xlane.f32.xlu0 %v1233
      %v1235 = vpop.xlane.xlu0 %1234
      %v1236 = vsel %vm527, %v1119, 0.0
      %1237 = vadd.xlane.f32.xlu0 %v1236
      %v1238 = vpop.xlane.xlu0 %1237
      %v1239 = vsel %vm527, %v1121, 0.0
      %1240 = vadd.xlane.f32.xlu0 %v1239
      %v1241 = vpop.xlane.xlu0 %1240
      %v1242 = vsel %vm527, %v1123, 0.0
      %1243 = vadd.xlane.f32.xlu0 %v1242
      %v1244 = vpop.xlane.xlu0 %1243
      %v1245 = vsel %vm527, %v1125, 0.0
      %1246 = vadd.xlane.f32.xlu0 %v1245
      %v1247 = vpop.xlane.xlu0 %1246
      %v1248 = vsel %vm527, %v1127, 0.0
      %1249 = vadd.xlane.f32.xlu0 %v1248
      %v1250 = vpop.xlane.xlu0 %1249
      %v1251 = vsel %vm527, %v1129, 0.0
      %1252 = vadd.xlane.f32.xlu0 %v1251
      %v1253 = vpop.xlane.xlu0 %1252
      %v1254 = vsel %vm527, %v1131, 0.0
      %1255 = vadd.xlane.f32.xlu0 %v1254
      %v1256 = vpop.xlane.xlu0 %1255
      %v1257 = vsel %vm527, %v1133, 0.0
      %1258 = vadd.xlane.f32.xlu0 %v1257
      %v1259 = vpop.xlane.xlu0 %1258
      %v1260 = vsel %vm527, %v1135, 0.0
      %1261 = vadd.xlane.f32.xlu0 %v1260
      %v1262 = vpop.xlane.xlu0 %1261
      %v1263 = vsel %vm527, %v1137, 0.0
      %1264 = vadd.xlane.f32.xlu0 %v1263
      %v1265 = vpop.xlane.xlu0 %1264
      %v1266 = vmax.f32 %v1172, 1e-24
      %v1267 = vmax.f32 %v1175, 1e-24
      %v1268 = vmax.f32 %v1178, 1e-24
      %v1269 = vmax.f32 %v1181, 1e-24
      %v1270 = vmax.f32 %v1184, 1e-24
      %v1271 = vmax.f32 %v1187, 1e-24
      %v1272 = vmax.f32 %v1190, 1e-24
      %v1273 = vmax.f32 %v1193, 1e-24
      %v1274 = vmax.f32 %v1196, 1e-24
      %v1275 = vmax.f32 %v1199, 1e-24
      %v1276 = vmax.f32 %v1202, 1e-24
      %v1277 = vmax.f32 %v1205, 1e-24
      %v1278 = vmax.f32 %v1208, 1e-24
      %v1279 = vmax.f32 %v1211, 1e-24
      %v1280 = vmax.f32 %v1214, 1e-24
      %v1281 = vmax.f32 %v1217, 1e-24
      %v1282 = vmax.f32 %v1220, 1e-24
      %v1283 = vmax.f32 %v1223, 1e-24
      %v1284 = vmax.f32 %v1226, 1e-24
      %v1285 = vmax.f32 %v1229, 1e-24
      %v1286 = vmax.f32 %v1232, 1e-24
      %v1287 = vmax.f32 %v1235, 1e-24
      %v1288 = vmax.f32 %v1238, 1e-24
      %v1289 = vmax.f32 %v1241, 1e-24
      %v1290 = vmax.f32 %v1244, 1e-24
      %v1291 = vmax.f32 %v1247, 1e-24
      %v1292 = vmax.f32 %v1250, 1e-24
      %v1293 = vmax.f32 %v1253, 1e-24
      %v1294 = vmax.f32 %v1256, 1e-24
      %v1295 = vmax.f32 %v1259, 1e-24
      %v1296 = vmax.f32 %v1262, 1e-24
      %v1297 = vmax.f32 %v1265, 1e-24
      %v1298 = vrsqrt.pop %v1266
      %v1299 = vmul.f32 %v1298, %v1266
      %v1300 = vmul.f32 %v1299, %v1298
      %v1301 = vmul.f32 0.5, %v1300
      %v1302 = vsub.f32 1.5, %v1301
      %v1303 = vmul.f32 %v1298, %v1302
      %vm1304 = vweird.f32 %v1266
      %vm1305 = vweird.f32 %v1298
      %vm1306 = vmor %vm1304, %vm1305
      %v1307 = vsel %vm1306, %v1298, %v1303
      %v1308 = vrsqrt.pop %v1267
      %v1309 = vmul.f32 %v1308, %v1267
      %v1310 = vmul.f32 %v1309, %v1308
      %v1311 = vmul.f32 0.5, %v1310
      %v1312 = vsub.f32 1.5, %v1311
      %v1313 = vmul.f32 %v1308, %v1312
      %vm1314 = vweird.f32 %v1267
      %vm1315 = vweird.f32 %v1308
      %vm1316 = vmor %vm1314, %vm1315
      %v1317 = vsel %vm1316, %v1308, %v1313
      %v1318 = vrsqrt.pop %v1268
      %v1319 = vmul.f32 %v1318, %v1268
      %v1320 = vmul.f32 %v1319, %v1318
      %v1321 = vmul.f32 0.5, %v1320
      %v1322 = vsub.f32 1.5, %v1321
      %v1323 = vmul.f32 %v1318, %v1322
      %vm1324 = vweird.f32 %v1268
      %vm1325 = vweird.f32 %v1318
      %vm1326 = vmor %vm1324, %vm1325
      %v1327 = vsel %vm1326, %v1318, %v1323
      %v1328 = vrsqrt.pop %v1269
      %v1329 = vmul.f32 %v1328, %v1269
      %v1330 = vmul.f32 %v1329, %v1328
      %v1331 = vmul.f32 0.5, %v1330
      %v1332 = vsub.f32 1.5, %v1331
      %v1333 = vmul.f32 %v1328, %v1332
      %vm1334 = vweird.f32 %v1269
      %vm1335 = vweird.f32 %v1328
      %vm1336 = vmor %vm1334, %vm1335
      %v1337 = vsel %vm1336, %v1328, %v1333
      %v1338 = vrsqrt.pop %v1270
      %v1339 = vmul.f32 %v1338, %v1270
      %v1340 = vmul.f32 %v1339, %v1338
      %v1341 = vmul.f32 0.5, %v1340
      %v1342 = vsub.f32 1.5, %v1341
      %v1343 = vmul.f32 %v1338, %v1342
      %vm1344 = vweird.f32 %v1270
      %vm1345 = vweird.f32 %v1338
      %vm1346 = vmor %vm1344, %vm1345
      %v1347 = vsel %vm1346, %v1338, %v1343
      %v1348 = vrsqrt.pop %v1271
      %v1349 = vmul.f32 %v1348, %v1271
      %v1350 = vmul.f32 %v1349, %v1348
      %v1351 = vmul.f32 0.5, %v1350
      %v1352 = vsub.f32 1.5, %v1351
      %v1353 = vmul.f32 %v1348, %v1352
      %vm1354 = vweird.f32 %v1271
      %vm1355 = vweird.f32 %v1348
      %vm1356 = vmor %vm1354, %vm1355
      %v1357 = vsel %vm1356, %v1348, %v1353
      %v1358 = vrsqrt.pop %v1272
      %v1359 = vmul.f32 %v1358, %v1272
      %v1360 = vmul.f32 %v1359, %v1358
      %v1361 = vmul.f32 0.5, %v1360
      %v1362 = vsub.f32 1.5, %v1361
      %v1363 = vmul.f32 %v1358, %v1362
      %vm1364 = vweird.f32 %v1272
      %vm1365 = vweird.f32 %v1358
      %vm1366 = vmor %vm1364, %vm1365
      %v1367 = vsel %vm1366, %v1358, %v1363
      %v1368 = vrsqrt.pop %v1273
      %v1369 = vmul.f32 %v1368, %v1273
      %v1370 = vmul.f32 %v1369, %v1368
      %v1371 = vmul.f32 0.5, %v1370
      %v1372 = vsub.f32 1.5, %v1371
      %v1373 = vmul.f32 %v1368, %v1372
      %vm1374 = vweird.f32 %v1273
      %vm1375 = vweird.f32 %v1368
      %vm1376 = vmor %vm1374, %vm1375
      %v1377 = vsel %vm1376, %v1368, %v1373
      %v1378 = vrsqrt.pop %v1274
      %v1379 = vmul.f32 %v1378, %v1274
      %v1380 = vmul.f32 %v1379, %v1378
      %v1381 = vmul.f32 0.5, %v1380
      %v1382 = vsub.f32 1.5, %v1381
      %v1383 = vmul.f32 %v1378, %v1382
      %vm1384 = vweird.f32 %v1274
      %vm1385 = vweird.f32 %v1378
      %vm1386 = vmor %vm1384, %vm1385
      %v1387 = vsel %vm1386, %v1378, %v1383
      %v1388 = vrsqrt.pop %v1275
      %v1389 = vmul.f32 %v1388, %v1275
      %v1390 = vmul.f32 %v1389, %v1388
      %v1391 = vmul.f32 0.5, %v1390
      %v1392 = vsub.f32 1.5, %v1391
      %v1393 = vmul.f32 %v1388, %v1392
      %vm1394 = vweird.f32 %v1275
      %vm1395 = vweird.f32 %v1388
      %vm1396 = vmor %vm1394, %vm1395
      %v1397 = vsel %vm1396, %v1388, %v1393
      %v1398 = vrsqrt.pop %v1276
      %v1399 = vmul.f32 %v1398, %v1276
      %v1400 = vmul.f32 %v1399, %v1398
      %v1401 = vmul.f32 0.5, %v1400
      %v1402 = vsub.f32 1.5, %v1401
      %v1403 = vmul.f32 %v1398, %v1402
      %vm1404 = vweird.f32 %v1276
      %vm1405 = vweird.f32 %v1398
      %vm1406 = vmor %vm1404, %vm1405
      %v1407 = vsel %vm1406, %v1398, %v1403
      %v1408 = vrsqrt.pop %v1277
      %v1409 = vmul.f32 %v1408, %v1277
      %v1410 = vmul.f32 %v1409, %v1408
      %v1411 = vmul.f32 0.5, %v1410
      %v1412 = vsub.f32 1.5, %v1411
      %v1413 = vmul.f32 %v1408, %v1412
      %vm1414 = vweird.f32 %v1277
      %vm1415 = vweird.f32 %v1408
      %vm1416 = vmor %vm1414, %vm1415
      %v1417 = vsel %vm1416, %v1408, %v1413
      %v1418 = vrsqrt.pop %v1278
      %v1419 = vmul.f32 %v1418, %v1278
      %v1420 = vmul.f32 %v1419, %v1418
      %v1421 = vmul.f32 0.5, %v1420
      %v1422 = vsub.f32 1.5, %v1421
      %v1423 = vmul.f32 %v1418, %v1422
      %vm1424 = vweird.f32 %v1278
      %vm1425 = vweird.f32 %v1418
      %vm1426 = vmor %vm1424, %vm1425
      %v1427 = vsel %vm1426, %v1418, %v1423
      %v1428 = vrsqrt.pop %v1279
      %v1429 = vmul.f32 %v1428, %v1279
      %v1430 = vmul.f32 %v1429, %v1428
      %v1431 = vmul.f32 0.5, %v1430
      %v1432 = vsub.f32 1.5, %v1431
      %v1433 = vmul.f32 %v1428, %v1432
      %vm1434 = vweird.f32 %v1279
      %vm1435 = vweird.f32 %v1428
      %vm1436 = vmor %vm1434, %vm1435
      %v1437 = vsel %vm1436, %v1428, %v1433
      %v1438 = vrsqrt.pop %v1280
      %v1439 = vmul.f32 %v1438, %v1280
      %v1440 = vmul.f32 %v1439, %v1438
      %v1441 = vmul.f32 0.5, %v1440
      %v1442 = vsub.f32 1.5, %v1441
      %v1443 = vmul.f32 %v1438, %v1442
      %vm1444 = vweird.f32 %v1280
      %vm1445 = vweird.f32 %v1438
      %vm1446 = vmor %vm1444, %vm1445
      %v1447 = vsel %vm1446, %v1438, %v1443
      %v1448 = vrsqrt.pop %v1281
      %v1449 = vmul.f32 %v1448, %v1281
      %v1450 = vmul.f32 %v1449, %v1448
      %v1451 = vmul.f32 0.5, %v1450
      %v1452 = vsub.f32 1.5, %v1451
      %v1453 = vmul.f32 %v1448, %v1452
      %vm1454 = vweird.f32 %v1281
      %vm1455 = vweird.f32 %v1448
      %vm1456 = vmor %vm1454, %vm1455
      %v1457 = vsel %vm1456, %v1448, %v1453
      %v1458 = vrsqrt.pop %v1282
      %v1459 = vmul.f32 %v1458, %v1282
      %v1460 = vmul.f32 %v1459, %v1458
      %v1461 = vmul.f32 0.5, %v1460
      %v1462 = vsub.f32 1.5, %v1461
      %v1463 = vmul.f32 %v1458, %v1462
      %vm1464 = vweird.f32 %v1282
      %vm1465 = vweird.f32 %v1458
      %vm1466 = vmor %vm1464, %vm1465
      %v1467 = vsel %vm1466, %v1458, %v1463
      %v1468 = vrsqrt.pop %v1283
      %v1469 = vmul.f32 %v1468, %v1283
      %v1470 = vmul.f32 %v1469, %v1468
      %v1471 = vmul.f32 0.5, %v1470
      %v1472 = vsub.f32 1.5, %v1471
      %v1473 = vmul.f32 %v1468, %v1472
      %vm1474 = vweird.f32 %v1283
      %vm1475 = vweird.f32 %v1468
      %vm1476 = vmor %vm1474, %vm1475
      %v1477 = vsel %vm1476, %v1468, %v1473
      %v1478 = vrsqrt.pop %v1284
      %v1479 = vmul.f32 %v1478, %v1284
      %v1480 = vmul.f32 %v1479, %v1478
      %v1481 = vmul.f32 0.5, %v1480
      %v1482 = vsub.f32 1.5, %v1481
      %v1483 = vmul.f32 %v1478, %v1482
      %vm1484 = vweird.f32 %v1284
      %vm1485 = vweird.f32 %v1478
      %vm1486 = vmor %vm1484, %vm1485
      %v1487 = vsel %vm1486, %v1478, %v1483
      %v1488 = vrsqrt.pop %v1285
      %v1489 = vmul.f32 %v1488, %v1285
      %v1490 = vmul.f32 %v1489, %v1488
      %v1491 = vmul.f32 0.5, %v1490
      %v1492 = vsub.f32 1.5, %v1491
      %v1493 = vmul.f32 %v1488, %v1492
      %vm1494 = vweird.f32 %v1285
      %vm1495 = vweird.f32 %v1488
      %vm1496 = vmor %vm1494, %vm1495
      %v1497 = vsel %vm1496, %v1488, %v1493
      %v1498 = vrsqrt.pop %v1286
      %v1499 = vmul.f32 %v1498, %v1286
      %v1500 = vmul.f32 %v1499, %v1498
      %v1501 = vmul.f32 0.5, %v1500
      %v1502 = vsub.f32 1.5, %v1501
      %v1503 = vmul.f32 %v1498, %v1502
      %vm1504 = vweird.f32 %v1286
      %vm1505 = vweird.f32 %v1498
      %vm1506 = vmor %vm1504, %vm1505
      %v1507 = vsel %vm1506, %v1498, %v1503
      %v1508 = vrsqrt.pop %v1287
      %v1509 = vmul.f32 %v1508, %v1287
      %v1510 = vmul.f32 %v1509, %v1508
      %v1511 = vmul.f32 0.5, %v1510
      %v1512 = vsub.f32 1.5, %v1511
      %v1513 = vmul.f32 %v1508, %v1512
      %vm1514 = vweird.f32 %v1287
      %vm1515 = vweird.f32 %v1508
      %vm1516 = vmor %vm1514, %vm1515
      %v1517 = vsel %vm1516, %v1508, %v1513
      %v1518 = vrsqrt.pop %v1288
      %v1519 = vmul.f32 %v1518, %v1288
      %v1520 = vmul.f32 %v1519, %v1518
      %v1521 = vmul.f32 0.5, %v1520
      %v1522 = vsub.f32 1.5, %v1521
      %v1523 = vmul.f32 %v1518, %v1522
      %vm1524 = vweird.f32 %v1288
      %vm1525 = vweird.f32 %v1518
      %vm1526 = vmor %vm1524, %vm1525
      %v1527 = vsel %vm1526, %v1518, %v1523
      %v1528 = vrsqrt.pop %v1289
      %v1529 = vmul.f32 %v1528, %v1289
      %v1530 = vmul.f32 %v1529, %v1528
      %v1531 = vmul.f32 0.5, %v1530
      %v1532 = vsub.f32 1.5, %v1531
      %v1533 = vmul.f32 %v1528, %v1532
      %vm1534 = vweird.f32 %v1289
      %vm1535 = vweird.f32 %v1528
      %vm1536 = vmor %vm1534, %vm1535
      %v1537 = vsel %vm1536, %v1528, %v1533
      %v1538 = vrsqrt.pop %v1290
      %v1539 = vmul.f32 %v1538, %v1290
      %v1540 = vmul.f32 %v1539, %v1538
      %v1541 = vmul.f32 0.5, %v1540
      %v1542 = vsub.f32 1.5, %v1541
      %v1543 = vmul.f32 %v1538, %v1542
      %vm1544 = vweird.f32 %v1290
      %vm1545 = vweird.f32 %v1538
      %vm1546 = vmor %vm1544, %vm1545
      %v1547 = vsel %vm1546, %v1538, %v1543
      %v1548 = vrsqrt.pop %v1291
      %v1549 = vmul.f32 %v1548, %v1291
      %v1550 = vmul.f32 %v1549, %v1548
      %v1551 = vmul.f32 0.5, %v1550
      %v1552 = vsub.f32 1.5, %v1551
      %v1553 = vmul.f32 %v1548, %v1552
      %vm1554 = vweird.f32 %v1291
      %vm1555 = vweird.f32 %v1548
      %vm1556 = vmor %vm1554, %vm1555
      %v1557 = vsel %vm1556, %v1548, %v1553
      %v1558 = vrsqrt.pop %v1292
      %v1559 = vmul.f32 %v1558, %v1292
      %v1560 = vmul.f32 %v1559, %v1558
      %v1561 = vmul.f32 0.5, %v1560
      %v1562 = vsub.f32 1.5, %v1561
      %v1563 = vmul.f32 %v1558, %v1562
      %vm1564 = vweird.f32 %v1292
      %vm1565 = vweird.f32 %v1558
      %vm1566 = vmor %vm1564, %vm1565
      %v1567 = vsel %vm1566, %v1558, %v1563
      %v1568 = vrsqrt.pop %v1293
      %v1569 = vmul.f32 %v1568, %v1293
      %v1570 = vmul.f32 %v1569, %v1568
      %v1571 = vmul.f32 0.5, %v1570
      %v1572 = vsub.f32 1.5, %v1571
      %v1573 = vmul.f32 %v1568, %v1572
      %vm1574 = vweird.f32 %v1293
      %vm1575 = vweird.f32 %v1568
      %vm1576 = vmor %vm1574, %vm1575
      %v1577 = vsel %vm1576, %v1568, %v1573
      %v1578 = vrsqrt.pop %v1294
      %v1579 = vmul.f32 %v1578, %v1294
      %v1580 = vmul.f32 %v1579, %v1578
      %v1581 = vmul.f32 0.5, %v1580
      %v1582 = vsub.f32 1.5, %v1581
      %v1583 = vmul.f32 %v1578, %v1582
      %vm1584 = vweird.f32 %v1294
      %vm1585 = vweird.f32 %v1578
      %vm1586 = vmor %vm1584, %vm1585
      %v1587 = vsel %vm1586, %v1578, %v1583
      %v1588 = vrsqrt.pop %v1295
      %v1589 = vmul.f32 %v1588, %v1295
      %v1590 = vmul.f32 %v1589, %v1588
      %v1591 = vmul.f32 0.5, %v1590
      %v1592 = vsub.f32 1.5, %v1591
      %v1593 = vmul.f32 %v1588, %v1592
      %vm1594 = vweird.f32 %v1295
      %vm1595 = vweird.f32 %v1588
      %vm1596 = vmor %vm1594, %vm1595
      %v1597 = vsel %vm1596, %v1588, %v1593
      %v1598 = vrsqrt.pop %v1296
      %v1599 = vmul.f32 %v1598, %v1296
      %v1600 = vmul.f32 %v1599, %v1598
      %v1601 = vmul.f32 0.5, %v1600
      %v1602 = vsub.f32 1.5, %v1601
      %v1603 = vmul.f32 %v1598, %v1602
      %vm1604 = vweird.f32 %v1296
      %vm1605 = vweird.f32 %v1598
      %vm1606 = vmor %vm1604, %vm1605
      %v1607 = vsel %vm1606, %v1598, %v1603
      %v1608 = vrsqrt.pop %v1297
      %v1609 = vmul.f32 %v1608, %v1297
      %v1610 = vmul.f32 %v1609, %v1608
      %v1611 = vmul.f32 0.5, %v1610
      %v1612 = vsub.f32 1.5, %v1611
      %v1613 = vmul.f32 %v1608, %v1612
      %vm1614 = vweird.f32 %v1297
      %vm1615 = vweird.f32 %v1608
      %vm1616 = vmor %vm1614, %vm1615
      %v1617 = vsel %vm1616, %v1608, %v1613
      %v1618 = vmul.f32 %v415, %v1307
      %v1619 = vmul.f32 %v417, %v1317
      %v1620 = vmul.f32 %v420, %v1327
      %v1621 = vmul.f32 %v422, %v1337
      %v1622 = vmul.f32 %v425, %v1347
      %v1623 = vmul.f32 %v427, %v1357
      %v1624 = vmul.f32 %v430, %v1367
      %v1625 = vmul.f32 %v432, %v1377
      %v1626 = vmul.f32 %v435, %v1387
      %v1627 = vmul.f32 %v437, %v1397
      %v1628 = vmul.f32 %v440, %v1407
      %v1629 = vmul.f32 %v442, %v1417
      %v1630 = vmul.f32 %v445, %v1427
      %v1631 = vmul.f32 %v447, %v1437
      %v1632 = vmul.f32 %v450, %v1447
      %v1633 = vmul.f32 %v452, %v1457
      %v1634 = vmul.f32 %v455, %v1467
      %v1635 = vmul.f32 %v457, %v1477
      %v1636 = vmul.f32 %v460, %v1487
      %v1637 = vmul.f32 %v462, %v1497
      %v1638 = vmul.f32 %v465, %v1507
      %v1639 = vmul.f32 %v467, %v1517
      %v1640 = vmul.f32 %v470, %v1527
      %v1641 = vmul.f32 %v472, %v1537
      %v1642 = vmul.f32 %v475, %v1547
      %v1643 = vmul.f32 %v477, %v1557
      %v1644 = vmul.f32 %v480, %v1567
      %v1645 = vmul.f32 %v482, %v1577
      %v1646 = vmul.f32 %v485, %v1587
      %v1647 = vmul.f32 %v487, %v1597
      %v1648 = vmul.f32 %v490, %v1607
      %v1649 = vmul.f32 %v492, %v1617
      %v1650 = vpack.c.bf16 %v1010, %v1010
      %v1651 = vpack.c.bf16 %v1011, %v1011
      %v1652 = vpack.c.bf16 %v1012, %v1012
      %v1653 = vpack.c.bf16 %v1013, %v1013
      %v1654 = vpack.c.bf16 %v1014, %v1014
      %v1655 = vpack.c.bf16 %v1015, %v1015
      %v1656 = vpack.c.bf16 %v1016, %v1016
      %v1657 = vpack.c.bf16 %v1017, %v1017
      %v1658 = vpack.c.bf16 %v1018, %v1018
      %v1659 = vpack.c.bf16 %v1019, %v1019
      %v1660 = vpack.c.bf16 %v1020, %v1020
      %v1661 = vpack.c.bf16 %v1021, %v1021
      %v1662 = vpack.c.bf16 %v1022, %v1022
      %v1663 = vpack.c.bf16 %v1023, %v1023
      %v1664 = vpack.c.bf16 %v1024, %v1024
      %v1665 = vpack.c.bf16 %v1025, %v1025
      %v1666 = vpack.c.bf16 %v1026, %v1026
      %v1667 = vpack.c.bf16 %v1027, %v1027
      %v1668 = vpack.c.bf16 %v1028, %v1028
      %v1669 = vpack.c.bf16 %v1029, %v1029
      %v1670 = vpack.c.bf16 %v1030, %v1030
      %v1671 = vpack.c.bf16 %v1031, %v1031
      %v1672 = vpack.c.bf16 %v1032, %v1032
      %v1673 = vpack.c.bf16 %v1033, %v1033
      %v1674 = vpack.c.bf16 %v1034, %v1034
      %v1675 = vpack.c.bf16 %v1035, %v1035
      %v1676 = vpack.c.bf16 %v1036, %v1036
      %v1677 = vpack.c.bf16 %v1037, %v1037
      %v1678 = vpack.c.bf16 %v1038, %v1038
      %v1679 = vpack.c.bf16 %v1039, %v1039
      %v1680 = vpack.c.bf16 %v1040, %v1040
      %v1681 = vpack.c.bf16 %v1041, %v1041
      %v1682 = vpack.c.bf16 %v1618, %v1618
      %v1683 = vpack.c.bf16 %v1619, %v1619
      %v1684 = vpack.c.bf16 %v1620, %v1620
      %v1685 = vpack.c.bf16 %v1621, %v1621
      %v1686 = vpack.c.bf16 %v1622, %v1622
      %v1687 = vpack.c.bf16 %v1623, %v1623
      %v1688 = vpack.c.bf16 %v1624, %v1624
      %v1689 = vpack.c.bf16 %v1625, %v1625
      %v1690 = vpack.c.bf16 %v1626, %v1626
      %v1691 = vpack.c.bf16 %v1627, %v1627
      %v1692 = vpack.c.bf16 %v1628, %v1628
      %v1693 = vpack.c.bf16 %v1629, %v1629
      %v1694 = vpack.c.bf16 %v1630, %v1630
      %v1695 = vpack.c.bf16 %v1631, %v1631
      %v1696 = vpack.c.bf16 %v1632, %v1632
      %v1697 = vpack.c.bf16 %v1633, %v1633
      %v1698 = vpack.c.bf16 %v1634, %v1634
      %v1699 = vpack.c.bf16 %v1635, %v1635
      %v1700 = vpack.c.bf16 %v1636, %v1636
      %v1701 = vpack.c.bf16 %v1637, %v1637
      %v1702 = vpack.c.bf16 %v1638, %v1638
      %v1703 = vpack.c.bf16 %v1639, %v1639
      %v1704 = vpack.c.bf16 %v1640, %v1640
      %v1705 = vpack.c.bf16 %v1641, %v1641
      %v1706 = vpack.c.bf16 %v1642, %v1642
      %v1707 = vpack.c.bf16 %v1643, %v1643
      %v1708 = vpack.c.bf16 %v1644, %v1644
      %v1709 = vpack.c.bf16 %v1645, %v1645
      %v1710 = vpack.c.bf16 %v1646, %v1646
      %v1711 = vpack.c.bf16 %v1647, %v1647
      %v1712 = vpack.c.bf16 %v1648, %v1648
      %v1713 = vpack.c.bf16 %v1649, %v1649
      %v1714 = vpack.c.bf16 %v415, %v415
      %v1715 = vpack.c.bf16 %v417, %v417
      %v1716 = vpack.c.bf16 %v420, %v420
      %v1717 = vpack.c.bf16 %v422, %v422
      %v1718 = vpack.c.bf16 %v425, %v425
      %v1719 = vpack.c.bf16 %v427, %v427
      %v1720 = vpack.c.bf16 %v430, %v430
      %v1721 = vpack.c.bf16 %v432, %v432
      %v1722 = vpack.c.bf16 %v435, %v435
      %v1723 = vpack.c.bf16 %v437, %v437
      %v1724 = vpack.c.bf16 %v440, %v440
      %v1725 = vpack.c.bf16 %v442, %v442
      %v1726 = vpack.c.bf16 %v445, %v445
      %v1727 = vpack.c.bf16 %v447, %v447
      %v1728 = vpack.c.bf16 %v450, %v450
      %v1729 = vpack.c.bf16 %v452, %v452
      %v1730 = vpack.c.bf16 %v455, %v455
      %v1731 = vpack.c.bf16 %v457, %v457
      %v1732 = vpack.c.bf16 %v460, %v460
      %v1733 = vpack.c.bf16 %v462, %v462
      %v1734 = vpack.c.bf16 %v465, %v465
      %v1735 = vpack.c.bf16 %v467, %v467
      %v1736 = vpack.c.bf16 %v470, %v470
      %v1737 = vpack.c.bf16 %v472, %v472
      %v1738 = vpack.c.bf16 %v475, %v475
      %v1739 = vpack.c.bf16 %v477, %v477
      %v1740 = vpack.c.bf16 %v480, %v480
      %v1741 = vpack.c.bf16 %v482, %v482
      %v1742 = vpack.c.bf16 %v485, %v485
      %v1743 = vpack.c.bf16 %v487, %v487
      %v1744 = vpack.c.bf16 %v490, %v490
      %v1745 = vpack.c.bf16 %v492, %v492
      %1746 = vrot.lane.b32.xlu0 %v495, 120
      %v1747 = vpop.permute.xlu0 %1746
      %1748 = vrot.lane.b32.xlu0 %v496, 120
      %v1749 = vpop.permute.xlu0 %1748
      %1750 = vrot.lane.b32.xlu0 %v497, 120
      %v1751 = vpop.permute.xlu0 %1750
      %1752 = vrot.lane.b32.xlu0 %v498, 120
      %v1753 = vpop.permute.xlu0 %1752
      %1754 = vrot.lane.b32.xlu0 %v499, 120
      %v1755 = vpop.permute.xlu0 %1754
      %1756 = vrot.lane.b32.xlu0 %v500, 120
      %v1757 = vpop.permute.xlu0 %1756
      %1758 = vrot.lane.b32.xlu0 %v501, 120
      %v1759 = vpop.permute.xlu0 %1758
      %1760 = vrot.lane.b32.xlu0 %v502, 120
      %v1761 = vpop.permute.xlu0 %1760
      %1762 = vrot.lane.b32.xlu0 %v503, 120
      %v1763 = vpop.permute.xlu0 %1762
      %1764 = vrot.lane.b32.xlu0 %v504, 120
      %v1765 = vpop.permute.xlu0 %1764
      %1766 = vrot.lane.b32.xlu0 %v505, 120
      %v1767 = vpop.permute.xlu0 %1766
      %1768 = vrot.lane.b32.xlu0 %v506, 120
      %v1769 = vpop.permute.xlu0 %1768
      %1770 = vrot.lane.b32.xlu0 %v507, 120
      %v1771 = vpop.permute.xlu0 %1770
      %1772 = vrot.lane.b32.xlu0 %v508, 120
      %v1773 = vpop.permute.xlu0 %1772
      %1774 = vrot.lane.b32.xlu0 %v509, 120
      %v1775 = vpop.permute.xlu0 %1774
      %1776 = vrot.lane.b32.xlu0 %v510, 120
      %v1777 = vpop.permute.xlu0 %1776
      %1778 = vrot.lane.b32.xlu0 %v511, 120
      %v1779 = vpop.permute.xlu0 %1778
      %1780 = vrot.lane.b32.xlu0 %v512, 120
      %v1781 = vpop.permute.xlu0 %1780
      %1782 = vrot.lane.b32.xlu0 %v513, 120
      %v1783 = vpop.permute.xlu0 %1782
      %1784 = vrot.lane.b32.xlu0 %v514, 120
      %v1785 = vpop.permute.xlu0 %1784
      %1786 = vrot.lane.b32.xlu0 %v515, 120
      %v1787 = vpop.permute.xlu0 %1786
      %1788 = vrot.lane.b32.xlu0 %v516, 120
      %v1789 = vpop.permute.xlu0 %1788
      %1790 = vrot.lane.b32.xlu0 %v517, 120
      %v1791 = vpop.permute.xlu0 %1790
      %1792 = vrot.lane.b32.xlu0 %v518, 120
      %v1793 = vpop.permute.xlu0 %1792
      %1794 = vrot.lane.b32.xlu0 %v519, 120
      %v1795 = vpop.permute.xlu0 %1794
      %1796 = vrot.lane.b32.xlu0 %v520, 120
      %v1797 = vpop.permute.xlu0 %1796
      %1798 = vrot.lane.b32.xlu0 %v521, 120
      %v1799 = vpop.permute.xlu0 %1798
      %1800 = vrot.lane.b32.xlu0 %v522, 120
      %v1801 = vpop.permute.xlu0 %1800
      %1802 = vrot.lane.b32.xlu0 %v523, 120
      %v1803 = vpop.permute.xlu0 %1802
      %1804 = vrot.lane.b32.xlu0 %v524, 120
      %v1805 = vpop.permute.xlu0 %1804
      %1806 = vrot.lane.b32.xlu0 %v525, 120
      %v1807 = vpop.permute.xlu0 %1806
      %1808 = vrot.lane.b32.xlu0 %v526, 120
      %v1809 = vpop.permute.xlu0 %1808
      %v1842 = vsel %vm527, %v1747, 0.0
      %1843 = vadd.xlane.f32.xlu0 %v1842
      %v1844 = vpop.xlane.xlu0 %1843
      %v1845 = vsel %vm527, %v1749, 0.0
      %1846 = vadd.xlane.f32.xlu0 %v1845
      %v1847 = vpop.xlane.xlu0 %1846
      %v1848 = vsel %vm527, %v1751, 0.0
      %1849 = vadd.xlane.f32.xlu0 %v1848
      %v1850 = vpop.xlane.xlu0 %1849
      %v1851 = vsel %vm527, %v1753, 0.0
      %1852 = vadd.xlane.f32.xlu0 %v1851
      %v1853 = vpop.xlane.xlu0 %1852
      %v1854 = vsel %vm527, %v1755, 0.0
      %1855 = vadd.xlane.f32.xlu0 %v1854
      %v1856 = vpop.xlane.xlu0 %1855
      %v1857 = vsel %vm527, %v1757, 0.0
      %1858 = vadd.xlane.f32.xlu0 %v1857
      %v1859 = vpop.xlane.xlu0 %1858
      %v1860 = vsel %vm527, %v1759, 0.0
      %1861 = vadd.xlane.f32.xlu0 %v1860
      %v1862 = vpop.xlane.xlu0 %1861
      %v1863 = vsel %vm527, %v1761, 0.0
      %1864 = vadd.xlane.f32.xlu0 %v1863
      %v1865 = vpop.xlane.xlu0 %1864
      %v1866 = vsel %vm527, %v1763, 0.0
      %1867 = vadd.xlane.f32.xlu0 %v1866
      %v1868 = vpop.xlane.xlu0 %1867
      %v1869 = vsel %vm527, %v1765, 0.0
      %1870 = vadd.xlane.f32.xlu0 %v1869
      %v1871 = vpop.xlane.xlu0 %1870
      %v1872 = vsel %vm527, %v1767, 0.0
      %1873 = vadd.xlane.f32.xlu0 %v1872
      %v1874 = vpop.xlane.xlu0 %1873
      %v1875 = vsel %vm527, %v1769, 0.0
      %1876 = vadd.xlane.f32.xlu0 %v1875
      %v1877 = vpop.xlane.xlu0 %1876
      %v1878 = vsel %vm527, %v1771, 0.0
      %1879 = vadd.xlane.f32.xlu0 %v1878
      %v1880 = vpop.xlane.xlu0 %1879
      %v1881 = vsel %vm527, %v1773, 0.0
      %1882 = vadd.xlane.f32.xlu0 %v1881
      %v1883 = vpop.xlane.xlu0 %1882
      %v1884 = vsel %vm527, %v1775, 0.0
      %1885 = vadd.xlane.f32.xlu0 %v1884
      %v1886 = vpop.xlane.xlu0 %1885
      %v1887 = vsel %vm527, %v1777, 0.0
      %1888 = vadd.xlane.f32.xlu0 %v1887
      %v1889 = vpop.xlane.xlu0 %1888
      %v1890 = vsel %vm527, %v1779, 0.0
      %1891 = vadd.xlane.f32.xlu0 %v1890
      %v1892 = vpop.xlane.xlu0 %1891
      %v1893 = vsel %vm527, %v1781, 0.0
      %1894 = vadd.xlane.f32.xlu0 %v1893
      %v1895 = vpop.xlane.xlu0 %1894
      %v1896 = vsel %vm527, %v1783, 0.0
      %1897 = vadd.xlane.f32.xlu0 %v1896
      %v1898 = vpop.xlane.xlu0 %1897
      %v1899 = vsel %vm527, %v1785, 0.0
      %1900 = vadd.xlane.f32.xlu0 %v1899
      %v1901 = vpop.xlane.xlu0 %1900
      %v1902 = vsel %vm527, %v1787, 0.0
      %1903 = vadd.xlane.f32.xlu0 %v1902
      %v1904 = vpop.xlane.xlu0 %1903
      %v1905 = vsel %vm527, %v1789, 0.0
      %1906 = vadd.xlane.f32.xlu0 %v1905
      %v1907 = vpop.xlane.xlu0 %1906
      %v1908 = vsel %vm527, %v1791, 0.0
      %1909 = vadd.xlane.f32.xlu0 %v1908
      %v1910 = vpop.xlane.xlu0 %1909
      %v1911 = vsel %vm527, %v1793, 0.0
      %1912 = vadd.xlane.f32.xlu0 %v1911
      %v1913 = vpop.xlane.xlu0 %1912
      %v1914 = vsel %vm527, %v1795, 0.0
      %1915 = vadd.xlane.f32.xlu0 %v1914
      %v1916 = vpop.xlane.xlu0 %1915
      %v1917 = vsel %vm527, %v1797, 0.0
      %1918 = vadd.xlane.f32.xlu0 %v1917
      %v1919 = vpop.xlane.xlu0 %1918
      %v1920 = vsel %vm527, %v1799, 0.0
      %1921 = vadd.xlane.f32.xlu0 %v1920
      %v1922 = vpop.xlane.xlu0 %1921
      %v1923 = vsel %vm527, %v1801, 0.0
      %1924 = vadd.xlane.f32.xlu0 %v1923
      %v1925 = vpop.xlane.xlu0 %1924
      %v1926 = vsel %vm527, %v1803, 0.0
      %1927 = vadd.xlane.f32.xlu0 %v1926
      %v1928 = vpop.xlane.xlu0 %1927
      %v1929 = vsel %vm527, %v1805, 0.0
      %1930 = vadd.xlane.f32.xlu0 %v1929
      %v1931 = vpop.xlane.xlu0 %1930
      %v1932 = vsel %vm527, %v1807, 0.0
      %1933 = vadd.xlane.f32.xlu0 %v1932
      %v1934 = vpop.xlane.xlu0 %1933
      %v1935 = vsel %vm527, %v1809, 0.0
      %1936 = vadd.xlane.f32.xlu0 %v1935
      %v1937 = vpop.xlane.xlu0 %1936
      %v1938 = vmax.f32 %v1844, 1e-24
      %v1939 = vmax.f32 %v1847, 1e-24
      %v1940 = vmax.f32 %v1850, 1e-24
      %v1941 = vmax.f32 %v1853, 1e-24
      %v1942 = vmax.f32 %v1856, 1e-24
      %v1943 = vmax.f32 %v1859, 1e-24
      %v1944 = vmax.f32 %v1862, 1e-24
      %v1945 = vmax.f32 %v1865, 1e-24
      %v1946 = vmax.f32 %v1868, 1e-24
      %v1947 = vmax.f32 %v1871, 1e-24
      %v1948 = vmax.f32 %v1874, 1e-24
      %v1949 = vmax.f32 %v1877, 1e-24
      %v1950 = vmax.f32 %v1880, 1e-24
      %v1951 = vmax.f32 %v1883, 1e-24
      %v1952 = vmax.f32 %v1886, 1e-24
      %v1953 = vmax.f32 %v1889, 1e-24
      %v1954 = vmax.f32 %v1892, 1e-24
      %v1955 = vmax.f32 %v1895, 1e-24
      %v1956 = vmax.f32 %v1898, 1e-24
      %v1957 = vmax.f32 %v1901, 1e-24
      %v1958 = vmax.f32 %v1904, 1e-24
      %v1959 = vmax.f32 %v1907, 1e-24
      %v1960 = vmax.f32 %v1910, 1e-24
      %v1961 = vmax.f32 %v1913, 1e-24
      %v1962 = vmax.f32 %v1916, 1e-24
      %v1963 = vmax.f32 %v1919, 1e-24
      %v1964 = vmax.f32 %v1922, 1e-24
      %v1965 = vmax.f32 %v1925, 1e-24
      %v1966 = vmax.f32 %v1928, 1e-24
      %v1967 = vmax.f32 %v1931, 1e-24
      %v1968 = vmax.f32 %v1934, 1e-24
      %v1969 = vmax.f32 %v1937, 1e-24
      %v1970 = vrsqrt.pop %v1938
      %v1971 = vmul.f32 %v1970, %v1938
      %v1972 = vmul.f32 %v1971, %v1970
      %v1973 = vmul.f32 0.5, %v1972
      %v1974 = vsub.f32 1.5, %v1973
      %v1975 = vmul.f32 %v1970, %v1974
      %vm1976 = vweird.f32 %v1938
      %vm1977 = vweird.f32 %v1970
      %vm1978 = vmor %vm1976, %vm1977
      %v1979 = vsel %vm1978, %v1970, %v1975
      %v1980 = vrsqrt.pop %v1939
      %v1981 = vmul.f32 %v1980, %v1939
      %v1982 = vmul.f32 %v1981, %v1980
      %v1983 = vmul.f32 0.5, %v1982
      %v1984 = vsub.f32 1.5, %v1983
      %v1985 = vmul.f32 %v1980, %v1984
      %vm1986 = vweird.f32 %v1939
      %vm1987 = vweird.f32 %v1980
      %vm1988 = vmor %vm1986, %vm1987
      %v1989 = vsel %vm1988, %v1980, %v1985
      %v1990 = vrsqrt.pop %v1940
      %v1991 = vmul.f32 %v1990, %v1940
      %v1992 = vmul.f32 %v1991, %v1990
      %v1993 = vmul.f32 0.5, %v1992
      %v1994 = vsub.f32 1.5, %v1993
      %v1995 = vmul.f32 %v1990, %v1994
      %vm1996 = vweird.f32 %v1940
      %vm1997 = vweird.f32 %v1990
      %vm1998 = vmor %vm1996, %vm1997
      %v1999 = vsel %vm1998, %v1990, %v1995
      %v2000 = vrsqrt.pop %v1941
      %v2001 = vmul.f32 %v2000, %v1941
      %v2002 = vmul.f32 %v2001, %v2000
      %v2003 = vmul.f32 0.5, %v2002
      %v2004 = vsub.f32 1.5, %v2003
      %v2005 = vmul.f32 %v2000, %v2004
      %vm2006 = vweird.f32 %v1941
      %vm2007 = vweird.f32 %v2000
      %vm2008 = vmor %vm2006, %vm2007
      %v2009 = vsel %vm2008, %v2000, %v2005
      %v2010 = vrsqrt.pop %v1942
      %v2011 = vmul.f32 %v2010, %v1942
      %v2012 = vmul.f32 %v2011, %v2010
      %v2013 = vmul.f32 0.5, %v2012
      %v2014 = vsub.f32 1.5, %v2013
      %v2015 = vmul.f32 %v2010, %v2014
      %vm2016 = vweird.f32 %v1942
      %vm2017 = vweird.f32 %v2010
      %vm2018 = vmor %vm2016, %vm2017
      %v2019 = vsel %vm2018, %v2010, %v2015
      %v2020 = vrsqrt.pop %v1943
      %v2021 = vmul.f32 %v2020, %v1943
      %v2022 = vmul.f32 %v2021, %v2020
      %v2023 = vmul.f32 0.5, %v2022
      %v2024 = vsub.f32 1.5, %v2023
      %v2025 = vmul.f32 %v2020, %v2024
      %vm2026 = vweird.f32 %v1943
      %vm2027 = vweird.f32 %v2020
      %vm2028 = vmor %vm2026, %vm2027
      %v2029 = vsel %vm2028, %v2020, %v2025
      %v2030 = vrsqrt.pop %v1944
      %v2031 = vmul.f32 %v2030, %v1944
      %v2032 = vmul.f32 %v2031, %v2030
      %v2033 = vmul.f32 0.5, %v2032
      %v2034 = vsub.f32 1.5, %v2033
      %v2035 = vmul.f32 %v2030, %v2034
      %vm2036 = vweird.f32 %v1944
      %vm2037 = vweird.f32 %v2030
      %vm2038 = vmor %vm2036, %vm2037
      %v2039 = vsel %vm2038, %v2030, %v2035
      %v2040 = vrsqrt.pop %v1945
      %v2041 = vmul.f32 %v2040, %v1945
      %v2042 = vmul.f32 %v2041, %v2040
      %v2043 = vmul.f32 0.5, %v2042
      %v2044 = vsub.f32 1.5, %v2043
      %v2045 = vmul.f32 %v2040, %v2044
      %vm2046 = vweird.f32 %v1945
      %vm2047 = vweird.f32 %v2040
      %vm2048 = vmor %vm2046, %vm2047
      %v2049 = vsel %vm2048, %v2040, %v2045
      %v2050 = vrsqrt.pop %v1946
      %v2051 = vmul.f32 %v2050, %v1946
      %v2052 = vmul.f32 %v2051, %v2050
      %v2053 = vmul.f32 0.5, %v2052
      %v2054 = vsub.f32 1.5, %v2053
      %v2055 = vmul.f32 %v2050, %v2054
      %vm2056 = vweird.f32 %v1946
      %vm2057 = vweird.f32 %v2050
      %vm2058 = vmor %vm2056, %vm2057
      %v2059 = vsel %vm2058, %v2050, %v2055
      %v2060 = vrsqrt.pop %v1947
      %v2061 = vmul.f32 %v2060, %v1947
      %v2062 = vmul.f32 %v2061, %v2060
      %v2063 = vmul.f32 0.5, %v2062
      %v2064 = vsub.f32 1.5, %v2063
      %v2065 = vmul.f32 %v2060, %v2064
      %vm2066 = vweird.f32 %v1947
      %vm2067 = vweird.f32 %v2060
      %vm2068 = vmor %vm2066, %vm2067
      %v2069 = vsel %vm2068, %v2060, %v2065
      %v2070 = vrsqrt.pop %v1948
      %v2071 = vmul.f32 %v2070, %v1948
      %v2072 = vmul.f32 %v2071, %v2070
      %v2073 = vmul.f32 0.5, %v2072
      %v2074 = vsub.f32 1.5, %v2073
      %v2075 = vmul.f32 %v2070, %v2074
      %vm2076 = vweird.f32 %v1948
      %vm2077 = vweird.f32 %v2070
      %vm2078 = vmor %vm2076, %vm2077
      %v2079 = vsel %vm2078, %v2070, %v2075
      %v2080 = vrsqrt.pop %v1949
      %v2081 = vmul.f32 %v2080, %v1949
      %v2082 = vmul.f32 %v2081, %v2080
      %v2083 = vmul.f32 0.5, %v2082
      %v2084 = vsub.f32 1.5, %v2083
      %v2085 = vmul.f32 %v2080, %v2084
      %vm2086 = vweird.f32 %v1949
      %vm2087 = vweird.f32 %v2080
      %vm2088 = vmor %vm2086, %vm2087
      %v2089 = vsel %vm2088, %v2080, %v2085
      %v2090 = vrsqrt.pop %v1950
      %v2091 = vmul.f32 %v2090, %v1950
      %v2092 = vmul.f32 %v2091, %v2090
      %v2093 = vmul.f32 0.5, %v2092
      %v2094 = vsub.f32 1.5, %v2093
      %v2095 = vmul.f32 %v2090, %v2094
      %vm2096 = vweird.f32 %v1950
      %vm2097 = vweird.f32 %v2090
      %vm2098 = vmor %vm2096, %vm2097
      %v2099 = vsel %vm2098, %v2090, %v2095
      %v2100 = vrsqrt.pop %v1951
      %v2101 = vmul.f32 %v2100, %v1951
      %v2102 = vmul.f32 %v2101, %v2100
      %v2103 = vmul.f32 0.5, %v2102
      %v2104 = vsub.f32 1.5, %v2103
      %v2105 = vmul.f32 %v2100, %v2104
      %vm2106 = vweird.f32 %v1951
      %vm2107 = vweird.f32 %v2100
      %vm2108 = vmor %vm2106, %vm2107
      %v2109 = vsel %vm2108, %v2100, %v2105
      %v2110 = vrsqrt.pop %v1952
      %v2111 = vmul.f32 %v2110, %v1952
      %v2112 = vmul.f32 %v2111, %v2110
      %v2113 = vmul.f32 0.5, %v2112
      %v2114 = vsub.f32 1.5, %v2113
      %v2115 = vmul.f32 %v2110, %v2114
      %vm2116 = vweird.f32 %v1952
      %vm2117 = vweird.f32 %v2110
      %vm2118 = vmor %vm2116, %vm2117
      %v2119 = vsel %vm2118, %v2110, %v2115
      %v2120 = vrsqrt.pop %v1953
      %v2121 = vmul.f32 %v2120, %v1953
      %v2122 = vmul.f32 %v2121, %v2120
      %v2123 = vmul.f32 0.5, %v2122
      %v2124 = vsub.f32 1.5, %v2123
      %v2125 = vmul.f32 %v2120, %v2124
      %vm2126 = vweird.f32 %v1953
      %vm2127 = vweird.f32 %v2120
      %vm2128 = vmor %vm2126, %vm2127
      %v2129 = vsel %vm2128, %v2120, %v2125
      %v2130 = vrsqrt.pop %v1954
      %v2131 = vmul.f32 %v2130, %v1954
      %v2132 = vmul.f32 %v2131, %v2130
      %v2133 = vmul.f32 0.5, %v2132
      %v2134 = vsub.f32 1.5, %v2133
      %v2135 = vmul.f32 %v2130, %v2134
      %vm2136 = vweird.f32 %v1954
      %vm2137 = vweird.f32 %v2130
      %vm2138 = vmor %vm2136, %vm2137
      %v2139 = vsel %vm2138, %v2130, %v2135
      %v2140 = vrsqrt.pop %v1955
      %v2141 = vmul.f32 %v2140, %v1955
      %v2142 = vmul.f32 %v2141, %v2140
      %v2143 = vmul.f32 0.5, %v2142
      %v2144 = vsub.f32 1.5, %v2143
      %v2145 = vmul.f32 %v2140, %v2144
      %vm2146 = vweird.f32 %v1955
      %vm2147 = vweird.f32 %v2140
      %vm2148 = vmor %vm2146, %vm2147
      %v2149 = vsel %vm2148, %v2140, %v2145
      %v2150 = vrsqrt.pop %v1956
      %v2151 = vmul.f32 %v2150, %v1956
      %v2152 = vmul.f32 %v2151, %v2150
      %v2153 = vmul.f32 0.5, %v2152
      %v2154 = vsub.f32 1.5, %v2153
      %v2155 = vmul.f32 %v2150, %v2154
      %vm2156 = vweird.f32 %v1956
      %vm2157 = vweird.f32 %v2150
      %vm2158 = vmor %vm2156, %vm2157
      %v2159 = vsel %vm2158, %v2150, %v2155
      %v2160 = vrsqrt.pop %v1957
      %v2161 = vmul.f32 %v2160, %v1957
      %v2162 = vmul.f32 %v2161, %v2160
      %v2163 = vmul.f32 0.5, %v2162
      %v2164 = vsub.f32 1.5, %v2163
      %v2165 = vmul.f32 %v2160, %v2164
      %vm2166 = vweird.f32 %v1957
      %vm2167 = vweird.f32 %v2160
      %vm2168 = vmor %vm2166, %vm2167
      %v2169 = vsel %vm2168, %v2160, %v2165
      %v2170 = vrsqrt.pop %v1958
      %v2171 = vmul.f32 %v2170, %v1958
      %v2172 = vmul.f32 %v2171, %v2170
      %v2173 = vmul.f32 0.5, %v2172
      %v2174 = vsub.f32 1.5, %v2173
      %v2175 = vmul.f32 %v2170, %v2174
      %vm2176 = vweird.f32 %v1958
      %vm2177 = vweird.f32 %v2170
      %vm2178 = vmor %vm2176, %vm2177
      %v2179 = vsel %vm2178, %v2170, %v2175
      %v2180 = vrsqrt.pop %v1959
      %v2181 = vmul.f32 %v2180, %v1959
      %v2182 = vmul.f32 %v2181, %v2180
      %v2183 = vmul.f32 0.5, %v2182
      %v2184 = vsub.f32 1.5, %v2183
      %v2185 = vmul.f32 %v2180, %v2184
      %vm2186 = vweird.f32 %v1959
      %vm2187 = vweird.f32 %v2180
      %vm2188 = vmor %vm2186, %vm2187
      %v2189 = vsel %vm2188, %v2180, %v2185
      %v2190 = vrsqrt.pop %v1960
      %v2191 = vmul.f32 %v2190, %v1960
      %v2192 = vmul.f32 %v2191, %v2190
      %v2193 = vmul.f32 0.5, %v2192
      %v2194 = vsub.f32 1.5, %v2193
      %v2195 = vmul.f32 %v2190, %v2194
      %vm2196 = vweird.f32 %v1960
      %vm2197 = vweird.f32 %v2190
      %vm2198 = vmor %vm2196, %vm2197
      %v2199 = vsel %vm2198, %v2190, %v2195
      %v2200 = vrsqrt.pop %v1961
      %v2201 = vmul.f32 %v2200, %v1961
      %v2202 = vmul.f32 %v2201, %v2200
      %v2203 = vmul.f32 0.5, %v2202
      %v2204 = vsub.f32 1.5, %v2203
      %v2205 = vmul.f32 %v2200, %v2204
      %vm2206 = vweird.f32 %v1961
      %vm2207 = vweird.f32 %v2200
      %vm2208 = vmor %vm2206, %vm2207
      %v2209 = vsel %vm2208, %v2200, %v2205
      %v2210 = vrsqrt.pop %v1962
      %v2211 = vmul.f32 %v2210, %v1962
      %v2212 = vmul.f32 %v2211, %v2210
      %v2213 = vmul.f32 0.5, %v2212
      %v2214 = vsub.f32 1.5, %v2213
      %v2215 = vmul.f32 %v2210, %v2214
      %vm2216 = vweird.f32 %v1962
      %vm2217 = vweird.f32 %v2210
      %vm2218 = vmor %vm2216, %vm2217
      %v2219 = vsel %vm2218, %v2210, %v2215
      %v2220 = vrsqrt.pop %v1963
      %v2221 = vmul.f32 %v2220, %v1963
      %v2222 = vmul.f32 %v2221, %v2220
      %v2223 = vmul.f32 0.5, %v2222
      %v2224 = vsub.f32 1.5, %v2223
      %v2225 = vmul.f32 %v2220, %v2224
      %vm2226 = vweird.f32 %v1963
      %vm2227 = vweird.f32 %v2220
      %vm2228 = vmor %vm2226, %vm2227
      %v2229 = vsel %vm2228, %v2220, %v2225
      %v2230 = vrsqrt.pop %v1964
      %v2231 = vmul.f32 %v2230, %v1964
      %v2232 = vmul.f32 %v2231, %v2230
      %v2233 = vmul.f32 0.5, %v2232
      %v2234 = vsub.f32 1.5, %v2233
      %v2235 = vmul.f32 %v2230, %v2234
      %vm2236 = vweird.f32 %v1964
      %vm2237 = vweird.f32 %v2230
      %vm2238 = vmor %vm2236, %vm2237
      %v2239 = vsel %vm2238, %v2230, %v2235
      %v2240 = vrsqrt.pop %v1965
      %v2241 = vmul.f32 %v2240, %v1965
      %v2242 = vmul.f32 %v2241, %v2240
      %v2243 = vmul.f32 0.5, %v2242
      %v2244 = vsub.f32 1.5, %v2243
      %v2245 = vmul.f32 %v2240, %v2244
      %vm2246 = vweird.f32 %v1965
      %vm2247 = vweird.f32 %v2240
      %vm2248 = vmor %vm2246, %vm2247
      %v2249 = vsel %vm2248, %v2240, %v2245
      %v2250 = vrsqrt.pop %v1966
      %v2251 = vmul.f32 %v2250, %v1966
      %v2252 = vmul.f32 %v2251, %v2250
      %v2253 = vmul.f32 0.5, %v2252
      %v2254 = vsub.f32 1.5, %v2253
      %v2255 = vmul.f32 %v2250, %v2254
      %vm2256 = vweird.f32 %v1966
      %vm2257 = vweird.f32 %v2250
      %vm2258 = vmor %vm2256, %vm2257
      %v2259 = vsel %vm2258, %v2250, %v2255
      %v2260 = vrsqrt.pop %v1967
      %v2261 = vmul.f32 %v2260, %v1967
      %v2262 = vmul.f32 %v2261, %v2260
      %v2263 = vmul.f32 0.5, %v2262
      %v2264 = vsub.f32 1.5, %v2263
      %v2265 = vmul.f32 %v2260, %v2264
      %vm2266 = vweird.f32 %v1967
      %vm2267 = vweird.f32 %v2260
      %vm2268 = vmor %vm2266, %vm2267
      %v2269 = vsel %vm2268, %v2260, %v2265
      %v2270 = vrsqrt.pop %v1968
      %v2271 = vmul.f32 %v2270, %v1968
      %v2272 = vmul.f32 %v2271, %v2270
      %v2273 = vmul.f32 0.5, %v2272
      %v2274 = vsub.f32 1.5, %v2273
      %v2275 = vmul.f32 %v2270, %v2274
      %vm2276 = vweird.f32 %v1968
      %vm2277 = vweird.f32 %v2270
      %vm2278 = vmor %vm2276, %vm2277
      %v2279 = vsel %vm2278, %v2270, %v2275
      %v2280 = vrsqrt.pop %v1969
      %v2281 = vmul.f32 %v2280, %v1969
      %v2282 = vmul.f32 %v2281, %v2280
      %v2283 = vmul.f32 0.5, %v2282
      %v2284 = vsub.f32 1.5, %v2283
      %v2285 = vmul.f32 %v2280, %v2284
      %vm2286 = vweird.f32 %v1969
      %vm2287 = vweird.f32 %v2280
      %vm2288 = vmor %vm2286, %vm2287
      %v2289 = vsel %vm2288, %v2280, %v2285
      %2290 = vrot.lane.b32.xlu0 %v494, 127
      %v2291 = vpop.permute.xlu0 %2290
      %s2292 = vtos %v2291
      %v2293 = vstv %s2292
      %v2294 = vmul.f32 %v1979, %v2293
      %v2295 = vmul.f32 %v1989, %v2293
      %v2296 = vmul.f32 %v1999, %v2293
      %v2297 = vmul.f32 %v2009, %v2293
      %v2298 = vmul.f32 %v2019, %v2293
      %v2299 = vmul.f32 %v2029, %v2293
      %v2300 = vmul.f32 %v2039, %v2293
      %v2301 = vmul.f32 %v2049, %v2293
      %v2302 = vmul.f32 %v2059, %v2293
      %v2303 = vmul.f32 %v2069, %v2293
      %v2304 = vmul.f32 %v2079, %v2293
      %v2305 = vmul.f32 %v2089, %v2293
      %v2306 = vmul.f32 %v2099, %v2293
      %v2307 = vmul.f32 %v2109, %v2293
      %v2308 = vmul.f32 %v2119, %v2293
      %v2309 = vmul.f32 %v2129, %v2293
      %v2310 = vmul.f32 %v2139, %v2293
      %v2311 = vmul.f32 %v2149, %v2293
      %v2312 = vmul.f32 %v2159, %v2293
      %v2313 = vmul.f32 %v2169, %v2293
      %v2314 = vmul.f32 %v2179, %v2293
      %v2315 = vmul.f32 %v2189, %v2293
      %v2316 = vmul.f32 %v2199, %v2293
      %v2317 = vmul.f32 %v2209, %v2293
      %v2318 = vmul.f32 %v2219, %v2293
      %v2319 = vmul.f32 %v2229, %v2293
      %v2320 = vmul.f32 %v2239, %v2293
      %v2321 = vmul.f32 %v2249, %v2293
      %v2322 = vmul.f32 %v2259, %v2293
      %v2323 = vmul.f32 %v2269, %v2293
      %v2324 = vmul.f32 %v2279, %v2293
      %v2325 = vmul.f32 %v2289, %v2293
      %v2326 = vmul.f32 %v415, %v2294
      %v2327 = vmul.f32 %v417, %v2295
      %v2328 = vmul.f32 %v420, %v2296
      %v2329 = vmul.f32 %v422, %v2297
      %v2330 = vmul.f32 %v425, %v2298
      %v2331 = vmul.f32 %v427, %v2299
      %v2332 = vmul.f32 %v430, %v2300
      %v2333 = vmul.f32 %v432, %v2301
      %v2334 = vmul.f32 %v435, %v2302
      %v2335 = vmul.f32 %v437, %v2303
      %v2336 = vmul.f32 %v440, %v2304
      %v2337 = vmul.f32 %v442, %v2305
      %v2338 = vmul.f32 %v445, %v2306
      %v2339 = vmul.f32 %v447, %v2307
      %v2340 = vmul.f32 %v450, %v2308
      %v2341 = vmul.f32 %v452, %v2309
      %v2342 = vmul.f32 %v455, %v2310
      %v2343 = vmul.f32 %v457, %v2311
      %v2344 = vmul.f32 %v460, %v2312
      %v2345 = vmul.f32 %v462, %v2313
      %v2346 = vmul.f32 %v465, %v2314
      %v2347 = vmul.f32 %v467, %v2315
      %v2348 = vmul.f32 %v470, %v2316
      %v2349 = vmul.f32 %v472, %v2317
      %v2350 = vmul.f32 %v475, %v2318
      %v2351 = vmul.f32 %v477, %v2319
      %v2352 = vmul.f32 %v480, %v2320
      %v2353 = vmul.f32 %v482, %v2321
      %v2354 = vmul.f32 %v485, %v2322
      %v2355 = vmul.f32 %v487, %v2323
      %v2356 = vmul.f32 %v490, %v2324
      %v2357 = vmul.f32 %v492, %v2325
      %2358 = vrot.lane.b32.xlu0 %v495, 88
      %v2359 = vpop.permute.xlu0 %2358
      %2360 = vrot.lane.b32.xlu0 %v496, 88
      %v2361 = vpop.permute.xlu0 %2360
      %2362 = vrot.lane.b32.xlu0 %v497, 88
      %v2363 = vpop.permute.xlu0 %2362
      %2364 = vrot.lane.b32.xlu0 %v498, 88
      %v2365 = vpop.permute.xlu0 %2364
      %2366 = vrot.lane.b32.xlu0 %v499, 88
      %v2367 = vpop.permute.xlu0 %2366
      %2368 = vrot.lane.b32.xlu0 %v500, 88
      %v2369 = vpop.permute.xlu0 %2368
      %2370 = vrot.lane.b32.xlu0 %v501, 88
      %v2371 = vpop.permute.xlu0 %2370
      %2372 = vrot.lane.b32.xlu0 %v502, 88
      %v2373 = vpop.permute.xlu0 %2372
      %2374 = vrot.lane.b32.xlu0 %v503, 88
      %v2375 = vpop.permute.xlu0 %2374
      %2376 = vrot.lane.b32.xlu0 %v504, 88
      %v2377 = vpop.permute.xlu0 %2376
      %2378 = vrot.lane.b32.xlu0 %v505, 88
      %v2379 = vpop.permute.xlu0 %2378
      %2380 = vrot.lane.b32.xlu0 %v506, 88
      %v2381 = vpop.permute.xlu0 %2380
      %2382 = vrot.lane.b32.xlu0 %v507, 88
      %v2383 = vpop.permute.xlu0 %2382
      %2384 = vrot.lane.b32.xlu0 %v508, 88
      %v2385 = vpop.permute.xlu0 %2384
      %2386 = vrot.lane.b32.xlu0 %v509, 88
      %v2387 = vpop.permute.xlu0 %2386
      %2388 = vrot.lane.b32.xlu0 %v510, 88
      %v2389 = vpop.permute.xlu0 %2388
      %2390 = vrot.lane.b32.xlu0 %v511, 88
      %v2391 = vpop.permute.xlu0 %2390
      %2392 = vrot.lane.b32.xlu0 %v512, 88
      %v2393 = vpop.permute.xlu0 %2392
      %2394 = vrot.lane.b32.xlu0 %v513, 88
      %v2395 = vpop.permute.xlu0 %2394
      %2396 = vrot.lane.b32.xlu0 %v514, 88
      %v2397 = vpop.permute.xlu0 %2396
      %2398 = vrot.lane.b32.xlu0 %v515, 88
      %v2399 = vpop.permute.xlu0 %2398
      %2400 = vrot.lane.b32.xlu0 %v516, 88
      %v2401 = vpop.permute.xlu0 %2400
      %2402 = vrot.lane.b32.xlu0 %v517, 88
      %v2403 = vpop.permute.xlu0 %2402
      %2404 = vrot.lane.b32.xlu0 %v518, 88
      %v2405 = vpop.permute.xlu0 %2404
      %2406 = vrot.lane.b32.xlu0 %v519, 88
      %v2407 = vpop.permute.xlu0 %2406
      %2408 = vrot.lane.b32.xlu0 %v520, 88
      %v2409 = vpop.permute.xlu0 %2408
      %2410 = vrot.lane.b32.xlu0 %v521, 88
      %v2411 = vpop.permute.xlu0 %2410
      %2412 = vrot.lane.b32.xlu0 %v522, 88
      %v2413 = vpop.permute.xlu0 %2412
      %2414 = vrot.lane.b32.xlu0 %v523, 88
      %v2415 = vpop.permute.xlu0 %2414
      %2416 = vrot.lane.b32.xlu0 %v524, 88
      %v2417 = vpop.permute.xlu0 %2416
      %2418 = vrot.lane.b32.xlu0 %v525, 88
      %v2419 = vpop.permute.xlu0 %2418
      %2420 = vrot.lane.b32.xlu0 %v526, 88
      %v2421 = vpop.permute.xlu0 %2420
      %v2454 = vsel %vm527, %v2359, 0.0
      %2455 = vadd.xlane.f32.xlu0 %v2454
      %v2456 = vpop.xlane.xlu0 %2455
      %v2457 = vsel %vm527, %v2361, 0.0
      %2458 = vadd.xlane.f32.xlu0 %v2457
      %v2459 = vpop.xlane.xlu0 %2458
      %v2460 = vsel %vm527, %v2363, 0.0
      %2461 = vadd.xlane.f32.xlu0 %v2460
      %v2462 = vpop.xlane.xlu0 %2461
      %v2463 = vsel %vm527, %v2365, 0.0
      %2464 = vadd.xlane.f32.xlu0 %v2463
      %v2465 = vpop.xlane.xlu0 %2464
      %v2466 = vsel %vm527, %v2367, 0.0
      %2467 = vadd.xlane.f32.xlu0 %v2466
      %v2468 = vpop.xlane.xlu0 %2467
      %v2469 = vsel %vm527, %v2369, 0.0
      %2470 = vadd.xlane.f32.xlu0 %v2469
      %v2471 = vpop.xlane.xlu0 %2470
      %v2472 = vsel %vm527, %v2371, 0.0
      %2473 = vadd.xlane.f32.xlu0 %v2472
      %v2474 = vpop.xlane.xlu0 %2473
      %v2475 = vsel %vm527, %v2373, 0.0
      %2476 = vadd.xlane.f32.xlu0 %v2475
      %v2477 = vpop.xlane.xlu0 %2476
      %v2478 = vsel %vm527, %v2375, 0.0
      %2479 = vadd.xlane.f32.xlu0 %v2478
      %v2480 = vpop.xlane.xlu0 %2479
      %v2481 = vsel %vm527, %v2377, 0.0
      %2482 = vadd.xlane.f32.xlu0 %v2481
      %v2483 = vpop.xlane.xlu0 %2482
      %v2484 = vsel %vm527, %v2379, 0.0
      %2485 = vadd.xlane.f32.xlu0 %v2484
      %v2486 = vpop.xlane.xlu0 %2485
      %v2487 = vsel %vm527, %v2381, 0.0
      %2488 = vadd.xlane.f32.xlu0 %v2487
      %v2489 = vpop.xlane.xlu0 %2488
      %v2490 = vsel %vm527, %v2383, 0.0
      %2491 = vadd.xlane.f32.xlu0 %v2490
      %v2492 = vpop.xlane.xlu0 %2491
      %v2493 = vsel %vm527, %v2385, 0.0
      %2494 = vadd.xlane.f32.xlu0 %v2493
      %v2495 = vpop.xlane.xlu0 %2494
      %v2496 = vsel %vm527, %v2387, 0.0
      %2497 = vadd.xlane.f32.xlu0 %v2496
      %v2498 = vpop.xlane.xlu0 %2497
      %v2499 = vsel %vm527, %v2389, 0.0
      %2500 = vadd.xlane.f32.xlu0 %v2499
      %v2501 = vpop.xlane.xlu0 %2500
      %v2502 = vsel %vm527, %v2391, 0.0
      %2503 = vadd.xlane.f32.xlu0 %v2502
      %v2504 = vpop.xlane.xlu0 %2503
      %v2505 = vsel %vm527, %v2393, 0.0
      %2506 = vadd.xlane.f32.xlu0 %v2505
      %v2507 = vpop.xlane.xlu0 %2506
      %v2508 = vsel %vm527, %v2395, 0.0
      %2509 = vadd.xlane.f32.xlu0 %v2508
      %v2510 = vpop.xlane.xlu0 %2509
      %v2511 = vsel %vm527, %v2397, 0.0
      %2512 = vadd.xlane.f32.xlu0 %v2511
      %v2513 = vpop.xlane.xlu0 %2512
      %v2514 = vsel %vm527, %v2399, 0.0
      %2515 = vadd.xlane.f32.xlu0 %v2514
      %v2516 = vpop.xlane.xlu0 %2515
      %v2517 = vsel %vm527, %v2401, 0.0
      %2518 = vadd.xlane.f32.xlu0 %v2517
      %v2519 = vpop.xlane.xlu0 %2518
      %v2520 = vsel %vm527, %v2403, 0.0
      %2521 = vadd.xlane.f32.xlu0 %v2520
      %v2522 = vpop.xlane.xlu0 %2521
      %v2523 = vsel %vm527, %v2405, 0.0
      %2524 = vadd.xlane.f32.xlu0 %v2523
      %v2525 = vpop.xlane.xlu0 %2524
      %v2526 = vsel %vm527, %v2407, 0.0
      %2527 = vadd.xlane.f32.xlu0 %v2526
      %v2528 = vpop.xlane.xlu0 %2527
      %v2529 = vsel %vm527, %v2409, 0.0
      %2530 = vadd.xlane.f32.xlu0 %v2529
      %v2531 = vpop.xlane.xlu0 %2530
      %v2532 = vsel %vm527, %v2411, 0.0
      %2533 = vadd.xlane.f32.xlu0 %v2532
      %v2534 = vpop.xlane.xlu0 %2533
      %v2535 = vsel %vm527, %v2413, 0.0
      %2536 = vadd.xlane.f32.xlu0 %v2535
      %v2537 = vpop.xlane.xlu0 %2536
      %v2538 = vsel %vm527, %v2415, 0.0
      %2539 = vadd.xlane.f32.xlu0 %v2538
      %v2540 = vpop.xlane.xlu0 %2539
      %v2541 = vsel %vm527, %v2417, 0.0
      %2542 = vadd.xlane.f32.xlu0 %v2541
      %v2543 = vpop.xlane.xlu0 %2542
      %v2544 = vsel %vm527, %v2419, 0.0
      %2545 = vadd.xlane.f32.xlu0 %v2544
      %v2546 = vpop.xlane.xlu0 %2545
      %v2547 = vsel %vm527, %v2421, 0.0
      %2548 = vadd.xlane.f32.xlu0 %v2547
      %v2549 = vpop.xlane.xlu0 %2548
      %v2550 = vmax.f32 %v2456, 1e-24
      %v2551 = vmax.f32 %v2459, 1e-24
      %v2552 = vmax.f32 %v2462, 1e-24
      %v2553 = vmax.f32 %v2465, 1e-24
      %v2554 = vmax.f32 %v2468, 1e-24
      %v2555 = vmax.f32 %v2471, 1e-24
      %v2556 = vmax.f32 %v2474, 1e-24
      %v2557 = vmax.f32 %v2477, 1e-24
      %v2558 = vmax.f32 %v2480, 1e-24
      %v2559 = vmax.f32 %v2483, 1e-24
      %v2560 = vmax.f32 %v2486, 1e-24
      %v2561 = vmax.f32 %v2489, 1e-24
      %v2562 = vmax.f32 %v2492, 1e-24
      %v2563 = vmax.f32 %v2495, 1e-24
      %v2564 = vmax.f32 %v2498, 1e-24
      %v2565 = vmax.f32 %v2501, 1e-24
      %v2566 = vmax.f32 %v2504, 1e-24
      %v2567 = vmax.f32 %v2507, 1e-24
      %v2568 = vmax.f32 %v2510, 1e-24
      %v2569 = vmax.f32 %v2513, 1e-24
      %v2570 = vmax.f32 %v2516, 1e-24
      %v2571 = vmax.f32 %v2519, 1e-24
      %v2572 = vmax.f32 %v2522, 1e-24
      %v2573 = vmax.f32 %v2525, 1e-24
      %v2574 = vmax.f32 %v2528, 1e-24
      %v2575 = vmax.f32 %v2531, 1e-24
      %v2576 = vmax.f32 %v2534, 1e-24
      %v2577 = vmax.f32 %v2537, 1e-24
      %v2578 = vmax.f32 %v2540, 1e-24
      %v2579 = vmax.f32 %v2543, 1e-24
      %v2580 = vmax.f32 %v2546, 1e-24
      %v2581 = vmax.f32 %v2549, 1e-24
      %v2582 = vrsqrt.pop %v2550
      %v2583 = vmul.f32 %v2582, %v2550
      %v2584 = vmul.f32 %v2583, %v2582
      %v2585 = vmul.f32 0.5, %v2584
      %v2586 = vsub.f32 1.5, %v2585
      %v2587 = vmul.f32 %v2582, %v2586
      %vm2588 = vweird.f32 %v2550
      %vm2589 = vweird.f32 %v2582
      %vm2590 = vmor %vm2588, %vm2589
      %v2591 = vsel %vm2590, %v2582, %v2587
      %v2592 = vrsqrt.pop %v2551
      %v2593 = vmul.f32 %v2592, %v2551
      %v2594 = vmul.f32 %v2593, %v2592
      %v2595 = vmul.f32 0.5, %v2594
      %v2596 = vsub.f32 1.5, %v2595
      %v2597 = vmul.f32 %v2592, %v2596
      %vm2598 = vweird.f32 %v2551
      %vm2599 = vweird.f32 %v2592
      %vm2600 = vmor %vm2598, %vm2599
      %v2601 = vsel %vm2600, %v2592, %v2597
      %v2602 = vrsqrt.pop %v2552
      %v2603 = vmul.f32 %v2602, %v2552
      %v2604 = vmul.f32 %v2603, %v2602
      %v2605 = vmul.f32 0.5, %v2604
      %v2606 = vsub.f32 1.5, %v2605
      %v2607 = vmul.f32 %v2602, %v2606
      %vm2608 = vweird.f32 %v2552
      %vm2609 = vweird.f32 %v2602
      %vm2610 = vmor %vm2608, %vm2609
      %v2611 = vsel %vm2610, %v2602, %v2607
      %v2612 = vrsqrt.pop %v2553
      %v2613 = vmul.f32 %v2612, %v2553
      %v2614 = vmul.f32 %v2613, %v2612
      %v2615 = vmul.f32 0.5, %v2614
      %v2616 = vsub.f32 1.5, %v2615
      %v2617 = vmul.f32 %v2612, %v2616
      %vm2618 = vweird.f32 %v2553
      %vm2619 = vweird.f32 %v2612
      %vm2620 = vmor %vm2618, %vm2619
      %v2621 = vsel %vm2620, %v2612, %v2617
      %v2622 = vrsqrt.pop %v2554
      %v2623 = vmul.f32 %v2622, %v2554
      %v2624 = vmul.f32 %v2623, %v2622
      %v2625 = vmul.f32 0.5, %v2624
      %v2626 = vsub.f32 1.5, %v2625
      %v2627 = vmul.f32 %v2622, %v2626
      %vm2628 = vweird.f32 %v2554
      %vm2629 = vweird.f32 %v2622
      %vm2630 = vmor %vm2628, %vm2629
      %v2631 = vsel %vm2630, %v2622, %v2627
      %v2632 = vrsqrt.pop %v2555
      %v2633 = vmul.f32 %v2632, %v2555
      %v2634 = vmul.f32 %v2633, %v2632
      %v2635 = vmul.f32 0.5, %v2634
      %v2636 = vsub.f32 1.5, %v2635
      %v2637 = vmul.f32 %v2632, %v2636
      %vm2638 = vweird.f32 %v2555
      %vm2639 = vweird.f32 %v2632
      %vm2640 = vmor %vm2638, %vm2639
      %v2641 = vsel %vm2640, %v2632, %v2637
      %v2642 = vrsqrt.pop %v2556
      %v2643 = vmul.f32 %v2642, %v2556
      %v2644 = vmul.f32 %v2643, %v2642
      %v2645 = vmul.f32 0.5, %v2644
      %v2646 = vsub.f32 1.5, %v2645
      %v2647 = vmul.f32 %v2642, %v2646
      %vm2648 = vweird.f32 %v2556
      %vm2649 = vweird.f32 %v2642
      %vm2650 = vmor %vm2648, %vm2649
      %v2651 = vsel %vm2650, %v2642, %v2647
      %v2652 = vrsqrt.pop %v2557
      %v2653 = vmul.f32 %v2652, %v2557
      %v2654 = vmul.f32 %v2653, %v2652
      %v2655 = vmul.f32 0.5, %v2654
      %v2656 = vsub.f32 1.5, %v2655
      %v2657 = vmul.f32 %v2652, %v2656
      %vm2658 = vweird.f32 %v2557
      %vm2659 = vweird.f32 %v2652
      %vm2660 = vmor %vm2658, %vm2659
      %v2661 = vsel %vm2660, %v2652, %v2657
      %v2662 = vrsqrt.pop %v2558
      %v2663 = vmul.f32 %v2662, %v2558
      %v2664 = vmul.f32 %v2663, %v2662
      %v2665 = vmul.f32 0.5, %v2664
      %v2666 = vsub.f32 1.5, %v2665
      %v2667 = vmul.f32 %v2662, %v2666
      %vm2668 = vweird.f32 %v2558
      %vm2669 = vweird.f32 %v2662
      %vm2670 = vmor %vm2668, %vm2669
      %v2671 = vsel %vm2670, %v2662, %v2667
      %v2672 = vrsqrt.pop %v2559
      %v2673 = vmul.f32 %v2672, %v2559
      %v2674 = vmul.f32 %v2673, %v2672
      %v2675 = vmul.f32 0.5, %v2674
      %v2676 = vsub.f32 1.5, %v2675
      %v2677 = vmul.f32 %v2672, %v2676
      %vm2678 = vweird.f32 %v2559
      %vm2679 = vweird.f32 %v2672
      %vm2680 = vmor %vm2678, %vm2679
      %v2681 = vsel %vm2680, %v2672, %v2677
      %v2682 = vrsqrt.pop %v2560
      %v2683 = vmul.f32 %v2682, %v2560
      %v2684 = vmul.f32 %v2683, %v2682
      %v2685 = vmul.f32 0.5, %v2684
      %v2686 = vsub.f32 1.5, %v2685
      %v2687 = vmul.f32 %v2682, %v2686
      %vm2688 = vweird.f32 %v2560
      %vm2689 = vweird.f32 %v2682
      %vm2690 = vmor %vm2688, %vm2689
      %v2691 = vsel %vm2690, %v2682, %v2687
      %v2692 = vrsqrt.pop %v2561
      %v2693 = vmul.f32 %v2692, %v2561
      %v2694 = vmul.f32 %v2693, %v2692
      %v2695 = vmul.f32 0.5, %v2694
      %v2696 = vsub.f32 1.5, %v2695
      %v2697 = vmul.f32 %v2692, %v2696
      %vm2698 = vweird.f32 %v2561
      %vm2699 = vweird.f32 %v2692
      %vm2700 = vmor %vm2698, %vm2699
      %v2701 = vsel %vm2700, %v2692, %v2697
      %v2702 = vrsqrt.pop %v2562
      %v2703 = vmul.f32 %v2702, %v2562
      %v2704 = vmul.f32 %v2703, %v2702
      %v2705 = vmul.f32 0.5, %v2704
      %v2706 = vsub.f32 1.5, %v2705
      %v2707 = vmul.f32 %v2702, %v2706
      %vm2708 = vweird.f32 %v2562
      %vm2709 = vweird.f32 %v2702
      %vm2710 = vmor %vm2708, %vm2709
      %v2711 = vsel %vm2710, %v2702, %v2707
      %v2712 = vrsqrt.pop %v2563
      %v2713 = vmul.f32 %v2712, %v2563
      %v2714 = vmul.f32 %v2713, %v2712
      %v2715 = vmul.f32 0.5, %v2714
      %v2716 = vsub.f32 1.5, %v2715
      %v2717 = vmul.f32 %v2712, %v2716
      %vm2718 = vweird.f32 %v2563
      %vm2719 = vweird.f32 %v2712
      %vm2720 = vmor %vm2718, %vm2719
      %v2721 = vsel %vm2720, %v2712, %v2717
      %v2722 = vrsqrt.pop %v2564
      %v2723 = vmul.f32 %v2722, %v2564
      %v2724 = vmul.f32 %v2723, %v2722
      %v2725 = vmul.f32 0.5, %v2724
      %v2726 = vsub.f32 1.5, %v2725
      %v2727 = vmul.f32 %v2722, %v2726
      %vm2728 = vweird.f32 %v2564
      %vm2729 = vweird.f32 %v2722
      %vm2730 = vmor %vm2728, %vm2729
      %v2731 = vsel %vm2730, %v2722, %v2727
      %v2732 = vrsqrt.pop %v2565
      %v2733 = vmul.f32 %v2732, %v2565
      %v2734 = vmul.f32 %v2733, %v2732
      %v2735 = vmul.f32 0.5, %v2734
      %v2736 = vsub.f32 1.5, %v2735
      %v2737 = vmul.f32 %v2732, %v2736
      %vm2738 = vweird.f32 %v2565
      %vm2739 = vweird.f32 %v2732
      %vm2740 = vmor %vm2738, %vm2739
      %v2741 = vsel %vm2740, %v2732, %v2737
      %v2742 = vrsqrt.pop %v2566
      %v2743 = vmul.f32 %v2742, %v2566
      %v2744 = vmul.f32 %v2743, %v2742
      %v2745 = vmul.f32 0.5, %v2744
      %v2746 = vsub.f32 1.5, %v2745
      %v2747 = vmul.f32 %v2742, %v2746
      %vm2748 = vweird.f32 %v2566
      %vm2749 = vweird.f32 %v2742
      %vm2750 = vmor %vm2748, %vm2749
      %v2751 = vsel %vm2750, %v2742, %v2747
      %v2752 = vrsqrt.pop %v2567
      %v2753 = vmul.f32 %v2752, %v2567
      %v2754 = vmul.f32 %v2753, %v2752
      %v2755 = vmul.f32 0.5, %v2754
      %v2756 = vsub.f32 1.5, %v2755
      %v2757 = vmul.f32 %v2752, %v2756
      %vm2758 = vweird.f32 %v2567
      %vm2759 = vweird.f32 %v2752
      %vm2760 = vmor %vm2758, %vm2759
      %v2761 = vsel %vm2760, %v2752, %v2757
      %v2762 = vrsqrt.pop %v2568
      %v2763 = vmul.f32 %v2762, %v2568
      %v2764 = vmul.f32 %v2763, %v2762
      %v2765 = vmul.f32 0.5, %v2764
      %v2766 = vsub.f32 1.5, %v2765
      %v2767 = vmul.f32 %v2762, %v2766
      %vm2768 = vweird.f32 %v2568
      %vm2769 = vweird.f32 %v2762
      %vm2770 = vmor %vm2768, %vm2769
      %v2771 = vsel %vm2770, %v2762, %v2767
      %v2772 = vrsqrt.pop %v2569
      %v2773 = vmul.f32 %v2772, %v2569
      %v2774 = vmul.f32 %v2773, %v2772
      %v2775 = vmul.f32 0.5, %v2774
      %v2776 = vsub.f32 1.5, %v2775
      %v2777 = vmul.f32 %v2772, %v2776
      %vm2778 = vweird.f32 %v2569
      %vm2779 = vweird.f32 %v2772
      %vm2780 = vmor %vm2778, %vm2779
      %v2781 = vsel %vm2780, %v2772, %v2777
      %v2782 = vrsqrt.pop %v2570
      %v2783 = vmul.f32 %v2782, %v2570
      %v2784 = vmul.f32 %v2783, %v2782
      %v2785 = vmul.f32 0.5, %v2784
      %v2786 = vsub.f32 1.5, %v2785
      %v2787 = vmul.f32 %v2782, %v2786
      %vm2788 = vweird.f32 %v2570
      %vm2789 = vweird.f32 %v2782
      %vm2790 = vmor %vm2788, %vm2789
      %v2791 = vsel %vm2790, %v2782, %v2787
      %v2792 = vrsqrt.pop %v2571
      %v2793 = vmul.f32 %v2792, %v2571
      %v2794 = vmul.f32 %v2793, %v2792
      %v2795 = vmul.f32 0.5, %v2794
      %v2796 = vsub.f32 1.5, %v2795
      %v2797 = vmul.f32 %v2792, %v2796
      %vm2798 = vweird.f32 %v2571
      %vm2799 = vweird.f32 %v2792
      %vm2800 = vmor %vm2798, %vm2799
      %v2801 = vsel %vm2800, %v2792, %v2797
      %v2802 = vrsqrt.pop %v2572
      %v2803 = vmul.f32 %v2802, %v2572
      %v2804 = vmul.f32 %v2803, %v2802
      %v2805 = vmul.f32 0.5, %v2804
      %v2806 = vsub.f32 1.5, %v2805
      %v2807 = vmul.f32 %v2802, %v2806
      %vm2808 = vweird.f32 %v2572
      %vm2809 = vweird.f32 %v2802
      %vm2810 = vmor %vm2808, %vm2809
      %v2811 = vsel %vm2810, %v2802, %v2807
      %v2812 = vrsqrt.pop %v2573
      %v2813 = vmul.f32 %v2812, %v2573
      %v2814 = vmul.f32 %v2813, %v2812
      %v2815 = vmul.f32 0.5, %v2814
      %v2816 = vsub.f32 1.5, %v2815
      %v2817 = vmul.f32 %v2812, %v2816
      %vm2818 = vweird.f32 %v2573
      %vm2819 = vweird.f32 %v2812
      %vm2820 = vmor %vm2818, %vm2819
      %v2821 = vsel %vm2820, %v2812, %v2817
      %v2822 = vrsqrt.pop %v2574
      %v2823 = vmul.f32 %v2822, %v2574
      %v2824 = vmul.f32 %v2823, %v2822
      %v2825 = vmul.f32 0.5, %v2824
      %v2826 = vsub.f32 1.5, %v2825
      %v2827 = vmul.f32 %v2822, %v2826
      %vm2828 = vweird.f32 %v2574
      %vm2829 = vweird.f32 %v2822
      %vm2830 = vmor %vm2828, %vm2829
      %v2831 = vsel %vm2830, %v2822, %v2827
      %v2832 = vrsqrt.pop %v2575
      %v2833 = vmul.f32 %v2832, %v2575
      %v2834 = vmul.f32 %v2833, %v2832
      %v2835 = vmul.f32 0.5, %v2834
      %v2836 = vsub.f32 1.5, %v2835
      %v2837 = vmul.f32 %v2832, %v2836
      %vm2838 = vweird.f32 %v2575
      %vm2839 = vweird.f32 %v2832
      %vm2840 = vmor %vm2838, %vm2839
      %v2841 = vsel %vm2840, %v2832, %v2837
      %v2842 = vrsqrt.pop %v2576
      %v2843 = vmul.f32 %v2842, %v2576
      %v2844 = vmul.f32 %v2843, %v2842
      %v2845 = vmul.f32 0.5, %v2844
      %v2846 = vsub.f32 1.5, %v2845
      %v2847 = vmul.f32 %v2842, %v2846
      %vm2848 = vweird.f32 %v2576
      %vm2849 = vweird.f32 %v2842
      %vm2850 = vmor %vm2848, %vm2849
      %v2851 = vsel %vm2850, %v2842, %v2847
      %v2852 = vrsqrt.pop %v2577
      %v2853 = vmul.f32 %v2852, %v2577
      %v2854 = vmul.f32 %v2853, %v2852
      %v2855 = vmul.f32 0.5, %v2854
      %v2856 = vsub.f32 1.5, %v2855
      %v2857 = vmul.f32 %v2852, %v2856
      %vm2858 = vweird.f32 %v2577
      %vm2859 = vweird.f32 %v2852
      %vm2860 = vmor %vm2858, %vm2859
      %v2861 = vsel %vm2860, %v2852, %v2857
      %v2862 = vrsqrt.pop %v2578
      %v2863 = vmul.f32 %v2862, %v2578
      %v2864 = vmul.f32 %v2863, %v2862
      %v2865 = vmul.f32 0.5, %v2864
      %v2866 = vsub.f32 1.5, %v2865
      %v2867 = vmul.f32 %v2862, %v2866
      %vm2868 = vweird.f32 %v2578
      %vm2869 = vweird.f32 %v2862
      %vm2870 = vmor %vm2868, %vm2869
      %v2871 = vsel %vm2870, %v2862, %v2867
      %v2872 = vrsqrt.pop %v2579
      %v2873 = vmul.f32 %v2872, %v2579
      %v2874 = vmul.f32 %v2873, %v2872
      %v2875 = vmul.f32 0.5, %v2874
      %v2876 = vsub.f32 1.5, %v2875
      %v2877 = vmul.f32 %v2872, %v2876
      %vm2878 = vweird.f32 %v2579
      %vm2879 = vweird.f32 %v2872
      %vm2880 = vmor %vm2878, %vm2879
      %v2881 = vsel %vm2880, %v2872, %v2877
      %v2882 = vrsqrt.pop %v2580
      %v2883 = vmul.f32 %v2882, %v2580
      %v2884 = vmul.f32 %v2883, %v2882
      %v2885 = vmul.f32 0.5, %v2884
      %v2886 = vsub.f32 1.5, %v2885
      %v2887 = vmul.f32 %v2882, %v2886
      %vm2888 = vweird.f32 %v2580
      %vm2889 = vweird.f32 %v2882
      %vm2890 = vmor %vm2888, %vm2889
      %v2891 = vsel %vm2890, %v2882, %v2887
      %v2892 = vrsqrt.pop %v2581
      %v2893 = vmul.f32 %v2892, %v2581
      %v2894 = vmul.f32 %v2893, %v2892
      %v2895 = vmul.f32 0.5, %v2894
      %v2896 = vsub.f32 1.5, %v2895
      %v2897 = vmul.f32 %v2892, %v2896
      %vm2898 = vweird.f32 %v2581
      %vm2899 = vweird.f32 %v2892
      %vm2900 = vmor %vm2898, %vm2899
      %v2901 = vsel %vm2900, %v2892, %v2897
      %v2902 = vmul.f32 %v415, %v2591
      %v2903 = vmul.f32 %v417, %v2601
      %v2904 = vmul.f32 %v420, %v2611
      %v2905 = vmul.f32 %v422, %v2621
      %v2906 = vmul.f32 %v425, %v2631
      %v2907 = vmul.f32 %v427, %v2641
      %v2908 = vmul.f32 %v430, %v2651
      %v2909 = vmul.f32 %v432, %v2661
      %v2910 = vmul.f32 %v435, %v2671
      %v2911 = vmul.f32 %v437, %v2681
      %v2912 = vmul.f32 %v440, %v2691
      %v2913 = vmul.f32 %v442, %v2701
      %v2914 = vmul.f32 %v445, %v2711
      %v2915 = vmul.f32 %v447, %v2721
      %v2916 = vmul.f32 %v450, %v2731
      %v2917 = vmul.f32 %v452, %v2741
      %v2918 = vmul.f32 %v455, %v2751
      %v2919 = vmul.f32 %v457, %v2761
      %v2920 = vmul.f32 %v460, %v2771
      %v2921 = vmul.f32 %v462, %v2781
      %v2922 = vmul.f32 %v465, %v2791
      %v2923 = vmul.f32 %v467, %v2801
      %v2924 = vmul.f32 %v470, %v2811
      %v2925 = vmul.f32 %v472, %v2821
      %v2926 = vmul.f32 %v475, %v2831
      %v2927 = vmul.f32 %v477, %v2841
      %v2928 = vmul.f32 %v480, %v2851
      %v2929 = vmul.f32 %v482, %v2861
      %v2930 = vmul.f32 %v485, %v2871
      %v2931 = vmul.f32 %v487, %v2881
      %v2932 = vmul.f32 %v490, %v2891
      %v2933 = vmul.f32 %v492, %v2901
      %v2934 = vpack.c.bf16 %v2326, %v2326
      %v2935 = vpack.c.bf16 %v2327, %v2327
      %v2936 = vpack.c.bf16 %v2328, %v2328
      %v2937 = vpack.c.bf16 %v2329, %v2329
      %v2938 = vpack.c.bf16 %v2330, %v2330
      %v2939 = vpack.c.bf16 %v2331, %v2331
      %v2940 = vpack.c.bf16 %v2332, %v2332
      %v2941 = vpack.c.bf16 %v2333, %v2333
      %v2942 = vpack.c.bf16 %v2334, %v2334
      %v2943 = vpack.c.bf16 %v2335, %v2335
      %v2944 = vpack.c.bf16 %v2336, %v2336
      %v2945 = vpack.c.bf16 %v2337, %v2337
      %v2946 = vpack.c.bf16 %v2338, %v2338
      %v2947 = vpack.c.bf16 %v2339, %v2339
      %v2948 = vpack.c.bf16 %v2340, %v2340
      %v2949 = vpack.c.bf16 %v2341, %v2341
      %v2950 = vpack.c.bf16 %v2342, %v2342
      %v2951 = vpack.c.bf16 %v2343, %v2343
      %v2952 = vpack.c.bf16 %v2344, %v2344
      %v2953 = vpack.c.bf16 %v2345, %v2345
      %v2954 = vpack.c.bf16 %v2346, %v2346
      %v2955 = vpack.c.bf16 %v2347, %v2347
      %v2956 = vpack.c.bf16 %v2348, %v2348
      %v2957 = vpack.c.bf16 %v2349, %v2349
      %v2958 = vpack.c.bf16 %v2350, %v2350
      %v2959 = vpack.c.bf16 %v2351, %v2351
      %v2960 = vpack.c.bf16 %v2352, %v2352
      %v2961 = vpack.c.bf16 %v2353, %v2353
      %v2962 = vpack.c.bf16 %v2354, %v2354
      %v2963 = vpack.c.bf16 %v2355, %v2355
      %v2964 = vpack.c.bf16 %v2356, %v2356
      %v2965 = vpack.c.bf16 %v2357, %v2357
      %v2966 = vpack.c.bf16 %v2902, %v2902
      %v2967 = vpack.c.bf16 %v2903, %v2903
      %v2968 = vpack.c.bf16 %v2904, %v2904
      %v2969 = vpack.c.bf16 %v2905, %v2905
      %v2970 = vpack.c.bf16 %v2906, %v2906
      %v2971 = vpack.c.bf16 %v2907, %v2907
      %v2972 = vpack.c.bf16 %v2908, %v2908
      %v2973 = vpack.c.bf16 %v2909, %v2909
      %v2974 = vpack.c.bf16 %v2910, %v2910
      %v2975 = vpack.c.bf16 %v2911, %v2911
      %v2976 = vpack.c.bf16 %v2912, %v2912
      %v2977 = vpack.c.bf16 %v2913, %v2913
      %v2978 = vpack.c.bf16 %v2914, %v2914
      %v2979 = vpack.c.bf16 %v2915, %v2915
      %v2980 = vpack.c.bf16 %v2916, %v2916
      %v2981 = vpack.c.bf16 %v2917, %v2917
      %v2982 = vpack.c.bf16 %v2918, %v2918
      %v2983 = vpack.c.bf16 %v2919, %v2919
      %v2984 = vpack.c.bf16 %v2920, %v2920
      %v2985 = vpack.c.bf16 %v2921, %v2921
      %v2986 = vpack.c.bf16 %v2922, %v2922
      %v2987 = vpack.c.bf16 %v2923, %v2923
      %v2988 = vpack.c.bf16 %v2924, %v2924
      %v2989 = vpack.c.bf16 %v2925, %v2925
      %v2990 = vpack.c.bf16 %v2926, %v2926
      %v2991 = vpack.c.bf16 %v2927, %v2927
      %v2992 = vpack.c.bf16 %v2928, %v2928
      %v2993 = vpack.c.bf16 %v2929, %v2929
      %v2994 = vpack.c.bf16 %v2930, %v2930
      %v2995 = vpack.c.bf16 %v2931, %v2931
      %v2996 = vpack.c.bf16 %v2932, %v2932
      %v2997 = vpack.c.bf16 %v2933, %v2933
      %2998 = vrot.lane.b32.xlu0 %v495, 112
      %v2999 = vpop.permute.xlu0 %2998
      %3000 = vrot.lane.b32.xlu0 %v496, 112
      %v3001 = vpop.permute.xlu0 %3000
      %3002 = vrot.lane.b32.xlu0 %v497, 112
      %v3003 = vpop.permute.xlu0 %3002
      %3004 = vrot.lane.b32.xlu0 %v498, 112
      %v3005 = vpop.permute.xlu0 %3004
      %3006 = vrot.lane.b32.xlu0 %v499, 112
      %v3007 = vpop.permute.xlu0 %3006
      %3008 = vrot.lane.b32.xlu0 %v500, 112
      %v3009 = vpop.permute.xlu0 %3008
      %3010 = vrot.lane.b32.xlu0 %v501, 112
      %v3011 = vpop.permute.xlu0 %3010
      %3012 = vrot.lane.b32.xlu0 %v502, 112
      %v3013 = vpop.permute.xlu0 %3012
      %3014 = vrot.lane.b32.xlu0 %v503, 112
      %v3015 = vpop.permute.xlu0 %3014
      %3016 = vrot.lane.b32.xlu0 %v504, 112
      %v3017 = vpop.permute.xlu0 %3016
      %3018 = vrot.lane.b32.xlu0 %v505, 112
      %v3019 = vpop.permute.xlu0 %3018
      %3020 = vrot.lane.b32.xlu0 %v506, 112
      %v3021 = vpop.permute.xlu0 %3020
      %3022 = vrot.lane.b32.xlu0 %v507, 112
      %v3023 = vpop.permute.xlu0 %3022
      %3024 = vrot.lane.b32.xlu0 %v508, 112
      %v3025 = vpop.permute.xlu0 %3024
      %3026 = vrot.lane.b32.xlu0 %v509, 112
      %v3027 = vpop.permute.xlu0 %3026
      %3028 = vrot.lane.b32.xlu0 %v510, 112
      %v3029 = vpop.permute.xlu0 %3028
      %3030 = vrot.lane.b32.xlu0 %v511, 112
      %v3031 = vpop.permute.xlu0 %3030
      %3032 = vrot.lane.b32.xlu0 %v512, 112
      %v3033 = vpop.permute.xlu0 %3032
      %3034 = vrot.lane.b32.xlu0 %v513, 112
      %v3035 = vpop.permute.xlu0 %3034
      %3036 = vrot.lane.b32.xlu0 %v514, 112
      %v3037 = vpop.permute.xlu0 %3036
      %3038 = vrot.lane.b32.xlu0 %v515, 112
      %v3039 = vpop.permute.xlu0 %3038
      %3040 = vrot.lane.b32.xlu0 %v516, 112
      %v3041 = vpop.permute.xlu0 %3040
      %3042 = vrot.lane.b32.xlu0 %v517, 112
      %v3043 = vpop.permute.xlu0 %3042
      %3044 = vrot.lane.b32.xlu0 %v518, 112
      %v3045 = vpop.permute.xlu0 %3044
      %3046 = vrot.lane.b32.xlu0 %v519, 112
      %v3047 = vpop.permute.xlu0 %3046
      %3048 = vrot.lane.b32.xlu0 %v520, 112
      %v3049 = vpop.permute.xlu0 %3048
      %3050 = vrot.lane.b32.xlu0 %v521, 112
      %v3051 = vpop.permute.xlu0 %3050
      %3052 = vrot.lane.b32.xlu0 %v522, 112
      %v3053 = vpop.permute.xlu0 %3052
      %3054 = vrot.lane.b32.xlu0 %v523, 112
      %v3055 = vpop.permute.xlu0 %3054
      %3056 = vrot.lane.b32.xlu0 %v524, 112
      %v3057 = vpop.permute.xlu0 %3056
      %3058 = vrot.lane.b32.xlu0 %v525, 112
      %v3059 = vpop.permute.xlu0 %3058
      %3060 = vrot.lane.b32.xlu0 %v526, 112
      %v3061 = vpop.permute.xlu0 %3060
      %v3094 = vsel %vm527, %v2999, 0.0
      %3095 = vadd.xlane.f32.xlu0 %v3094
      %v3096 = vpop.xlane.xlu0 %3095
      %v3097 = vsel %vm527, %v3001, 0.0
      %3098 = vadd.xlane.f32.xlu0 %v3097
      %v3099 = vpop.xlane.xlu0 %3098
      %v3100 = vsel %vm527, %v3003, 0.0
      %3101 = vadd.xlane.f32.xlu0 %v3100
      %v3102 = vpop.xlane.xlu0 %3101
      %v3103 = vsel %vm527, %v3005, 0.0
      %3104 = vadd.xlane.f32.xlu0 %v3103
      %v3105 = vpop.xlane.xlu0 %3104
      %v3106 = vsel %vm527, %v3007, 0.0
      %3107 = vadd.xlane.f32.xlu0 %v3106
      %v3108 = vpop.xlane.xlu0 %3107
      %v3109 = vsel %vm527, %v3009, 0.0
      %3110 = vadd.xlane.f32.xlu0 %v3109
      %v3111 = vpop.xlane.xlu0 %3110
      %v3112 = vsel %vm527, %v3011, 0.0
      %3113 = vadd.xlane.f32.xlu0 %v3112
      %v3114 = vpop.xlane.xlu0 %3113
      %v3115 = vsel %vm527, %v3013, 0.0
      %3116 = vadd.xlane.f32.xlu0 %v3115
      %v3117 = vpop.xlane.xlu0 %3116
      %v3118 = vsel %vm527, %v3015, 0.0
      %3119 = vadd.xlane.f32.xlu0 %v3118
      %v3120 = vpop.xlane.xlu0 %3119
      %v3121 = vsel %vm527, %v3017, 0.0
      %3122 = vadd.xlane.f32.xlu0 %v3121
      %v3123 = vpop.xlane.xlu0 %3122
      %v3124 = vsel %vm527, %v3019, 0.0
      %3125 = vadd.xlane.f32.xlu0 %v3124
      %v3126 = vpop.xlane.xlu0 %3125
      %v3127 = vsel %vm527, %v3021, 0.0
      %3128 = vadd.xlane.f32.xlu0 %v3127
      %v3129 = vpop.xlane.xlu0 %3128
      %v3130 = vsel %vm527, %v3023, 0.0
      %3131 = vadd.xlane.f32.xlu0 %v3130
      %v3132 = vpop.xlane.xlu0 %3131
      %v3133 = vsel %vm527, %v3025, 0.0
      %3134 = vadd.xlane.f32.xlu0 %v3133
      %v3135 = vpop.xlane.xlu0 %3134
      %v3136 = vsel %vm527, %v3027, 0.0
      %3137 = vadd.xlane.f32.xlu0 %v3136
      %v3138 = vpop.xlane.xlu0 %3137
      %v3139 = vsel %vm527, %v3029, 0.0
      %3140 = vadd.xlane.f32.xlu0 %v3139
      %v3141 = vpop.xlane.xlu0 %3140
      %v3142 = vsel %vm527, %v3031, 0.0
      %3143 = vadd.xlane.f32.xlu0 %v3142
      %v3144 = vpop.xlane.xlu0 %3143
      %v3145 = vsel %vm527, %v3033, 0.0
      %3146 = vadd.xlane.f32.xlu0 %v3145
      %v3147 = vpop.xlane.xlu0 %3146
      %v3148 = vsel %vm527, %v3035, 0.0
      %3149 = vadd.xlane.f32.xlu0 %v3148
      %v3150 = vpop.xlane.xlu0 %3149
      %v3151 = vsel %vm527, %v3037, 0.0
      %3152 = vadd.xlane.f32.xlu0 %v3151
      %v3153 = vpop.xlane.xlu0 %3152
      %v3154 = vsel %vm527, %v3039, 0.0
      %3155 = vadd.xlane.f32.xlu0 %v3154
      %v3156 = vpop.xlane.xlu0 %3155
      %v3157 = vsel %vm527, %v3041, 0.0
      %3158 = vadd.xlane.f32.xlu0 %v3157
      %v3159 = vpop.xlane.xlu0 %3158
      %v3160 = vsel %vm527, %v3043, 0.0
      %3161 = vadd.xlane.f32.xlu0 %v3160
      %v3162 = vpop.xlane.xlu0 %3161
      %v3163 = vsel %vm527, %v3045, 0.0
      %3164 = vadd.xlane.f32.xlu0 %v3163
      %v3165 = vpop.xlane.xlu0 %3164
      %v3166 = vsel %vm527, %v3047, 0.0
      %3167 = vadd.xlane.f32.xlu0 %v3166
      %v3168 = vpop.xlane.xlu0 %3167
      %v3169 = vsel %vm527, %v3049, 0.0
      %3170 = vadd.xlane.f32.xlu0 %v3169
      %v3171 = vpop.xlane.xlu0 %3170
      %v3172 = vsel %vm527, %v3051, 0.0
      %3173 = vadd.xlane.f32.xlu0 %v3172
      %v3174 = vpop.xlane.xlu0 %3173
      %v3175 = vsel %vm527, %v3053, 0.0
      %3176 = vadd.xlane.f32.xlu0 %v3175
      %v3177 = vpop.xlane.xlu0 %3176
      %v3178 = vsel %vm527, %v3055, 0.0
      %3179 = vadd.xlane.f32.xlu0 %v3178
      %v3180 = vpop.xlane.xlu0 %3179
      %v3181 = vsel %vm527, %v3057, 0.0
      %3182 = vadd.xlane.f32.xlu0 %v3181
      %v3183 = vpop.xlane.xlu0 %3182
      %v3184 = vsel %vm527, %v3059, 0.0
      %3185 = vadd.xlane.f32.xlu0 %v3184
      %v3186 = vpop.xlane.xlu0 %3185
      %v3187 = vsel %vm527, %v3061, 0.0
      %3188 = vadd.xlane.f32.xlu0 %v3187
      %v3189 = vpop.xlane.xlu0 %3188
      %v3190 = vmax.f32 %v3096, 1e-24
      %v3191 = vmax.f32 %v3099, 1e-24
      %v3192 = vmax.f32 %v3102, 1e-24
      %v3193 = vmax.f32 %v3105, 1e-24
      %v3194 = vmax.f32 %v3108, 1e-24
      %v3195 = vmax.f32 %v3111, 1e-24
      %v3196 = vmax.f32 %v3114, 1e-24
      %v3197 = vmax.f32 %v3117, 1e-24
      %v3198 = vmax.f32 %v3120, 1e-24
      %v3199 = vmax.f32 %v3123, 1e-24
      %v3200 = vmax.f32 %v3126, 1e-24
      %v3201 = vmax.f32 %v3129, 1e-24
      %v3202 = vmax.f32 %v3132, 1e-24
      %v3203 = vmax.f32 %v3135, 1e-24
      %v3204 = vmax.f32 %v3138, 1e-24
      %v3205 = vmax.f32 %v3141, 1e-24
      %v3206 = vmax.f32 %v3144, 1e-24
      %v3207 = vmax.f32 %v3147, 1e-24
      %v3208 = vmax.f32 %v3150, 1e-24
      %v3209 = vmax.f32 %v3153, 1e-24
      %v3210 = vmax.f32 %v3156, 1e-24
      %v3211 = vmax.f32 %v3159, 1e-24
      %v3212 = vmax.f32 %v3162, 1e-24
      %v3213 = vmax.f32 %v3165, 1e-24
      %v3214 = vmax.f32 %v3168, 1e-24
      %v3215 = vmax.f32 %v3171, 1e-24
      %v3216 = vmax.f32 %v3174, 1e-24
      %v3217 = vmax.f32 %v3177, 1e-24
      %v3218 = vmax.f32 %v3180, 1e-24
      %v3219 = vmax.f32 %v3183, 1e-24
      %v3220 = vmax.f32 %v3186, 1e-24
      %v3221 = vmax.f32 %v3189, 1e-24
      %v3222 = vrsqrt.pop %v3190
      %v3223 = vmul.f32 %v3222, %v3190
      %v3224 = vmul.f32 %v3223, %v3222
      %v3225 = vmul.f32 0.5, %v3224
      %v3226 = vsub.f32 1.5, %v3225
      %v3227 = vmul.f32 %v3222, %v3226
      %vm3228 = vweird.f32 %v3190
      %vm3229 = vweird.f32 %v3222
      %vm3230 = vmor %vm3228, %vm3229
      %v3231 = vsel %vm3230, %v3222, %v3227
      %v3232 = vrsqrt.pop %v3191
      %v3233 = vmul.f32 %v3232, %v3191
      %v3234 = vmul.f32 %v3233, %v3232
      %v3235 = vmul.f32 0.5, %v3234
      %v3236 = vsub.f32 1.5, %v3235
      %v3237 = vmul.f32 %v3232, %v3236
      %vm3238 = vweird.f32 %v3191
      %vm3239 = vweird.f32 %v3232
      %vm3240 = vmor %vm3238, %vm3239
      %v3241 = vsel %vm3240, %v3232, %v3237
      %v3242 = vrsqrt.pop %v3192
      %v3243 = vmul.f32 %v3242, %v3192
      %v3244 = vmul.f32 %v3243, %v3242
      %v3245 = vmul.f32 0.5, %v3244
      %v3246 = vsub.f32 1.5, %v3245
      %v3247 = vmul.f32 %v3242, %v3246
      %vm3248 = vweird.f32 %v3192
      %vm3249 = vweird.f32 %v3242
      %vm3250 = vmor %vm3248, %vm3249
      %v3251 = vsel %vm3250, %v3242, %v3247
      %v3252 = vrsqrt.pop %v3193
      %v3253 = vmul.f32 %v3252, %v3193
      %v3254 = vmul.f32 %v3253, %v3252
      %v3255 = vmul.f32 0.5, %v3254
      %v3256 = vsub.f32 1.5, %v3255
      %v3257 = vmul.f32 %v3252, %v3256
      %vm3258 = vweird.f32 %v3193
      %vm3259 = vweird.f32 %v3252
      %vm3260 = vmor %vm3258, %vm3259
      %v3261 = vsel %vm3260, %v3252, %v3257
      %v3262 = vrsqrt.pop %v3194
      %v3263 = vmul.f32 %v3262, %v3194
      %v3264 = vmul.f32 %v3263, %v3262
      %v3265 = vmul.f32 0.5, %v3264
      %v3266 = vsub.f32 1.5, %v3265
      %v3267 = vmul.f32 %v3262, %v3266
      %vm3268 = vweird.f32 %v3194
      %vm3269 = vweird.f32 %v3262
      %vm3270 = vmor %vm3268, %vm3269
      %v3271 = vsel %vm3270, %v3262, %v3267
      %v3272 = vrsqrt.pop %v3195
      %v3273 = vmul.f32 %v3272, %v3195
      %v3274 = vmul.f32 %v3273, %v3272
      %v3275 = vmul.f32 0.5, %v3274
      %v3276 = vsub.f32 1.5, %v3275
      %v3277 = vmul.f32 %v3272, %v3276
      %vm3278 = vweird.f32 %v3195
      %vm3279 = vweird.f32 %v3272
      %vm3280 = vmor %vm3278, %vm3279
      %v3281 = vsel %vm3280, %v3272, %v3277
      %v3282 = vrsqrt.pop %v3196
      %v3283 = vmul.f32 %v3282, %v3196
      %v3284 = vmul.f32 %v3283, %v3282
      %v3285 = vmul.f32 0.5, %v3284
      %v3286 = vsub.f32 1.5, %v3285
      %v3287 = vmul.f32 %v3282, %v3286
      %vm3288 = vweird.f32 %v3196
      %vm3289 = vweird.f32 %v3282
      %vm3290 = vmor %vm3288, %vm3289
      %v3291 = vsel %vm3290, %v3282, %v3287
      %v3292 = vrsqrt.pop %v3197
      %v3293 = vmul.f32 %v3292, %v3197
      %v3294 = vmul.f32 %v3293, %v3292
      %v3295 = vmul.f32 0.5, %v3294
      %v3296 = vsub.f32 1.5, %v3295
      %v3297 = vmul.f32 %v3292, %v3296
      %vm3298 = vweird.f32 %v3197
      %vm3299 = vweird.f32 %v3292
      %vm3300 = vmor %vm3298, %vm3299
      %v3301 = vsel %vm3300, %v3292, %v3297
      %v3302 = vrsqrt.pop %v3198
      %v3303 = vmul.f32 %v3302, %v3198
      %v3304 = vmul.f32 %v3303, %v3302
      %v3305 = vmul.f32 0.5, %v3304
      %v3306 = vsub.f32 1.5, %v3305
      %v3307 = vmul.f32 %v3302, %v3306
      %vm3308 = vweird.f32 %v3198
      %vm3309 = vweird.f32 %v3302
      %vm3310 = vmor %vm3308, %vm3309
      %v3311 = vsel %vm3310, %v3302, %v3307
      %v3312 = vrsqrt.pop %v3199
      %v3313 = vmul.f32 %v3312, %v3199
      %v3314 = vmul.f32 %v3313, %v3312
      %v3315 = vmul.f32 0.5, %v3314
      %v3316 = vsub.f32 1.5, %v3315
      %v3317 = vmul.f32 %v3312, %v3316
      %vm3318 = vweird.f32 %v3199
      %vm3319 = vweird.f32 %v3312
      %vm3320 = vmor %vm3318, %vm3319
      %v3321 = vsel %vm3320, %v3312, %v3317
      %v3322 = vrsqrt.pop %v3200
      %v3323 = vmul.f32 %v3322, %v3200
      %v3324 = vmul.f32 %v3323, %v3322
      %v3325 = vmul.f32 0.5, %v3324
      %v3326 = vsub.f32 1.5, %v3325
      %v3327 = vmul.f32 %v3322, %v3326
      %vm3328 = vweird.f32 %v3200
      %vm3329 = vweird.f32 %v3322
      %vm3330 = vmor %vm3328, %vm3329
      %v3331 = vsel %vm3330, %v3322, %v3327
      %v3332 = vrsqrt.pop %v3201
      %v3333 = vmul.f32 %v3332, %v3201
      %v3334 = vmul.f32 %v3333, %v3332
      %v3335 = vmul.f32 0.5, %v3334
      %v3336 = vsub.f32 1.5, %v3335
      %v3337 = vmul.f32 %v3332, %v3336
      %vm3338 = vweird.f32 %v3201
      %vm3339 = vweird.f32 %v3332
      %vm3340 = vmor %vm3338, %vm3339
      %v3341 = vsel %vm3340, %v3332, %v3337
      %v3342 = vrsqrt.pop %v3202
      %v3343 = vmul.f32 %v3342, %v3202
      %v3344 = vmul.f32 %v3343, %v3342
      %v3345 = vmul.f32 0.5, %v3344
      %v3346 = vsub.f32 1.5, %v3345
      %v3347 = vmul.f32 %v3342, %v3346
      %vm3348 = vweird.f32 %v3202
      %vm3349 = vweird.f32 %v3342
      %vm3350 = vmor %vm3348, %vm3349
      %v3351 = vsel %vm3350, %v3342, %v3347
      %v3352 = vrsqrt.pop %v3203
      %v3353 = vmul.f32 %v3352, %v3203
      %v3354 = vmul.f32 %v3353, %v3352
      %v3355 = vmul.f32 0.5, %v3354
      %v3356 = vsub.f32 1.5, %v3355
      %v3357 = vmul.f32 %v3352, %v3356
      %vm3358 = vweird.f32 %v3203
      %vm3359 = vweird.f32 %v3352
      %vm3360 = vmor %vm3358, %vm3359
      %v3361 = vsel %vm3360, %v3352, %v3357
      %v3362 = vrsqrt.pop %v3204
      %v3363 = vmul.f32 %v3362, %v3204
      %v3364 = vmul.f32 %v3363, %v3362
      %v3365 = vmul.f32 0.5, %v3364
      %v3366 = vsub.f32 1.5, %v3365
      %v3367 = vmul.f32 %v3362, %v3366
      %vm3368 = vweird.f32 %v3204
      %vm3369 = vweird.f32 %v3362
      %vm3370 = vmor %vm3368, %vm3369
      %v3371 = vsel %vm3370, %v3362, %v3367
      %v3372 = vrsqrt.pop %v3205
      %v3373 = vmul.f32 %v3372, %v3205
      %v3374 = vmul.f32 %v3373, %v3372
      %v3375 = vmul.f32 0.5, %v3374
      %v3376 = vsub.f32 1.5, %v3375
      %v3377 = vmul.f32 %v3372, %v3376
      %vm3378 = vweird.f32 %v3205
      %vm3379 = vweird.f32 %v3372
      %vm3380 = vmor %vm3378, %vm3379
      %v3381 = vsel %vm3380, %v3372, %v3377
      %v3382 = vrsqrt.pop %v3206
      %v3383 = vmul.f32 %v3382, %v3206
      %v3384 = vmul.f32 %v3383, %v3382
      %v3385 = vmul.f32 0.5, %v3384
      %v3386 = vsub.f32 1.5, %v3385
      %v3387 = vmul.f32 %v3382, %v3386
      %vm3388 = vweird.f32 %v3206
      %vm3389 = vweird.f32 %v3382
      %vm3390 = vmor %vm3388, %vm3389
      %v3391 = vsel %vm3390, %v3382, %v3387
      %v3392 = vrsqrt.pop %v3207
      %v3393 = vmul.f32 %v3392, %v3207
      %v3394 = vmul.f32 %v3393, %v3392
      %v3395 = vmul.f32 0.5, %v3394
      %v3396 = vsub.f32 1.5, %v3395
      %v3397 = vmul.f32 %v3392, %v3396
      %vm3398 = vweird.f32 %v3207
      %vm3399 = vweird.f32 %v3392
      %vm3400 = vmor %vm3398, %vm3399
      %v3401 = vsel %vm3400, %v3392, %v3397
      %v3402 = vrsqrt.pop %v3208
      %v3403 = vmul.f32 %v3402, %v3208
      %v3404 = vmul.f32 %v3403, %v3402
      %v3405 = vmul.f32 0.5, %v3404
      %v3406 = vsub.f32 1.5, %v3405
      %v3407 = vmul.f32 %v3402, %v3406
      %vm3408 = vweird.f32 %v3208
      %vm3409 = vweird.f32 %v3402
      %vm3410 = vmor %vm3408, %vm3409
      %v3411 = vsel %vm3410, %v3402, %v3407
      %v3412 = vrsqrt.pop %v3209
      %v3413 = vmul.f32 %v3412, %v3209
      %v3414 = vmul.f32 %v3413, %v3412
      %v3415 = vmul.f32 0.5, %v3414
      %v3416 = vsub.f32 1.5, %v3415
      %v3417 = vmul.f32 %v3412, %v3416
      %vm3418 = vweird.f32 %v3209
      %vm3419 = vweird.f32 %v3412
      %vm3420 = vmor %vm3418, %vm3419
      %v3421 = vsel %vm3420, %v3412, %v3417
      %v3422 = vrsqrt.pop %v3210
      %v3423 = vmul.f32 %v3422, %v3210
      %v3424 = vmul.f32 %v3423, %v3422
      %v3425 = vmul.f32 0.5, %v3424
      %v3426 = vsub.f32 1.5, %v3425
      %v3427 = vmul.f32 %v3422, %v3426
      %vm3428 = vweird.f32 %v3210
      %vm3429 = vweird.f32 %v3422
      %vm3430 = vmor %vm3428, %vm3429
      %v3431 = vsel %vm3430, %v3422, %v3427
      %v3432 = vrsqrt.pop %v3211
      %v3433 = vmul.f32 %v3432, %v3211
      %v3434 = vmul.f32 %v3433, %v3432
      %v3435 = vmul.f32 0.5, %v3434
      %v3436 = vsub.f32 1.5, %v3435
      %v3437 = vmul.f32 %v3432, %v3436
      %vm3438 = vweird.f32 %v3211
      %vm3439 = vweird.f32 %v3432
      %vm3440 = vmor %vm3438, %vm3439
      %v3441 = vsel %vm3440, %v3432, %v3437
      %v3442 = vrsqrt.pop %v3212
      %v3443 = vmul.f32 %v3442, %v3212
      %v3444 = vmul.f32 %v3443, %v3442
      %v3445 = vmul.f32 0.5, %v3444
      %v3446 = vsub.f32 1.5, %v3445
      %v3447 = vmul.f32 %v3442, %v3446
      %vm3448 = vweird.f32 %v3212
      %vm3449 = vweird.f32 %v3442
      %vm3450 = vmor %vm3448, %vm3449
      %v3451 = vsel %vm3450, %v3442, %v3447
      %v3452 = vrsqrt.pop %v3213
      %v3453 = vmul.f32 %v3452, %v3213
      %v3454 = vmul.f32 %v3453, %v3452
      %v3455 = vmul.f32 0.5, %v3454
      %v3456 = vsub.f32 1.5, %v3455
      %v3457 = vmul.f32 %v3452, %v3456
      %vm3458 = vweird.f32 %v3213
      %vm3459 = vweird.f32 %v3452
      %vm3460 = vmor %vm3458, %vm3459
      %v3461 = vsel %vm3460, %v3452, %v3457
      %v3462 = vrsqrt.pop %v3214
      %v3463 = vmul.f32 %v3462, %v3214
      %v3464 = vmul.f32 %v3463, %v3462
      %v3465 = vmul.f32 0.5, %v3464
      %v3466 = vsub.f32 1.5, %v3465
      %v3467 = vmul.f32 %v3462, %v3466
      %vm3468 = vweird.f32 %v3214
      %vm3469 = vweird.f32 %v3462
      %vm3470 = vmor %vm3468, %vm3469
      %v3471 = vsel %vm3470, %v3462, %v3467
      %v3472 = vrsqrt.pop %v3215
      %v3473 = vmul.f32 %v3472, %v3215
      %v3474 = vmul.f32 %v3473, %v3472
      %v3475 = vmul.f32 0.5, %v3474
      %v3476 = vsub.f32 1.5, %v3475
      %v3477 = vmul.f32 %v3472, %v3476
      %vm3478 = vweird.f32 %v3215
      %vm3479 = vweird.f32 %v3472
      %vm3480 = vmor %vm3478, %vm3479
      %v3481 = vsel %vm3480, %v3472, %v3477
      %v3482 = vrsqrt.pop %v3216
      %v3483 = vmul.f32 %v3482, %v3216
      %v3484 = vmul.f32 %v3483, %v3482
      %v3485 = vmul.f32 0.5, %v3484
      %v3486 = vsub.f32 1.5, %v3485
      %v3487 = vmul.f32 %v3482, %v3486
      %vm3488 = vweird.f32 %v3216
      %vm3489 = vweird.f32 %v3482
      %vm3490 = vmor %vm3488, %vm3489
      %v3491 = vsel %vm3490, %v3482, %v3487
      %v3492 = vrsqrt.pop %v3217
      %v3493 = vmul.f32 %v3492, %v3217
      %v3494 = vmul.f32 %v3493, %v3492
      %v3495 = vmul.f32 0.5, %v3494
      %v3496 = vsub.f32 1.5, %v3495
      %v3497 = vmul.f32 %v3492, %v3496
      %vm3498 = vweird.f32 %v3217
      %vm3499 = vweird.f32 %v3492
      %vm3500 = vmor %vm3498, %vm3499
      %v3501 = vsel %vm3500, %v3492, %v3497
      %v3502 = vrsqrt.pop %v3218
      %v3503 = vmul.f32 %v3502, %v3218
      %v3504 = vmul.f32 %v3503, %v3502
      %v3505 = vmul.f32 0.5, %v3504
      %v3506 = vsub.f32 1.5, %v3505
      %v3507 = vmul.f32 %v3502, %v3506
      %vm3508 = vweird.f32 %v3218
      %vm3509 = vweird.f32 %v3502
      %vm3510 = vmor %vm3508, %vm3509
      %v3511 = vsel %vm3510, %v3502, %v3507
      %v3512 = vrsqrt.pop %v3219
      %v3513 = vmul.f32 %v3512, %v3219
      %v3514 = vmul.f32 %v3513, %v3512
      %v3515 = vmul.f32 0.5, %v3514
      %v3516 = vsub.f32 1.5, %v3515
      %v3517 = vmul.f32 %v3512, %v3516
      %vm3518 = vweird.f32 %v3219
      %vm3519 = vweird.f32 %v3512
      %vm3520 = vmor %vm3518, %vm3519
      %v3521 = vsel %vm3520, %v3512, %v3517
      %v3522 = vrsqrt.pop %v3220
      %v3523 = vmul.f32 %v3522, %v3220
      %v3524 = vmul.f32 %v3523, %v3522
      %v3525 = vmul.f32 0.5, %v3524
      %v3526 = vsub.f32 1.5, %v3525
      %v3527 = vmul.f32 %v3522, %v3526
      %vm3528 = vweird.f32 %v3220
      %vm3529 = vweird.f32 %v3522
      %vm3530 = vmor %vm3528, %vm3529
      %v3531 = vsel %vm3530, %v3522, %v3527
      %v3532 = vrsqrt.pop %v3221
      %v3533 = vmul.f32 %v3532, %v3221
      %v3534 = vmul.f32 %v3533, %v3532
      %v3535 = vmul.f32 0.5, %v3534
      %v3536 = vsub.f32 1.5, %v3535
      %v3537 = vmul.f32 %v3532, %v3536
      %vm3538 = vweird.f32 %v3221
      %vm3539 = vweird.f32 %v3532
      %vm3540 = vmor %vm3538, %vm3539
      %v3541 = vsel %vm3540, %v3532, %v3537
      %3542 = vrot.lane.b32.xlu0 %v494, 126
      %v3543 = vpop.permute.xlu0 %3542
      %s3544 = vtos %v3543
      %v3545 = vstv %s3544
      %v3546 = vmul.f32 %v3231, %v3545
      %v3547 = vmul.f32 %v3241, %v3545
      %v3548 = vmul.f32 %v3251, %v3545
      %v3549 = vmul.f32 %v3261, %v3545
      %v3550 = vmul.f32 %v3271, %v3545
      %v3551 = vmul.f32 %v3281, %v3545
      %v3552 = vmul.f32 %v3291, %v3545
      %v3553 = vmul.f32 %v3301, %v3545
      %v3554 = vmul.f32 %v3311, %v3545
      %v3555 = vmul.f32 %v3321, %v3545
      %v3556 = vmul.f32 %v3331, %v3545
      %v3557 = vmul.f32 %v3341, %v3545
      %v3558 = vmul.f32 %v3351, %v3545
      %v3559 = vmul.f32 %v3361, %v3545
      %v3560 = vmul.f32 %v3371, %v3545
      %v3561 = vmul.f32 %v3381, %v3545
      %v3562 = vmul.f32 %v3391, %v3545
      %v3563 = vmul.f32 %v3401, %v3545
      %v3564 = vmul.f32 %v3411, %v3545
      %v3565 = vmul.f32 %v3421, %v3545
      %v3566 = vmul.f32 %v3431, %v3545
      %v3567 = vmul.f32 %v3441, %v3545
      %v3568 = vmul.f32 %v3451, %v3545
      %v3569 = vmul.f32 %v3461, %v3545
      %v3570 = vmul.f32 %v3471, %v3545
      %v3571 = vmul.f32 %v3481, %v3545
      %v3572 = vmul.f32 %v3491, %v3545
      %v3573 = vmul.f32 %v3501, %v3545
      %v3574 = vmul.f32 %v3511, %v3545
      %v3575 = vmul.f32 %v3521, %v3545
      %v3576 = vmul.f32 %v3531, %v3545
      %v3577 = vmul.f32 %v3541, %v3545
      %v3578 = vmul.f32 %v415, %v3546
      %v3579 = vmul.f32 %v417, %v3547
      %v3580 = vmul.f32 %v420, %v3548
      %v3581 = vmul.f32 %v422, %v3549
      %v3582 = vmul.f32 %v425, %v3550
      %v3583 = vmul.f32 %v427, %v3551
      %v3584 = vmul.f32 %v430, %v3552
      %v3585 = vmul.f32 %v432, %v3553
      %v3586 = vmul.f32 %v435, %v3554
      %v3587 = vmul.f32 %v437, %v3555
      %v3588 = vmul.f32 %v440, %v3556
      %v3589 = vmul.f32 %v442, %v3557
      %v3590 = vmul.f32 %v445, %v3558
      %v3591 = vmul.f32 %v447, %v3559
      %v3592 = vmul.f32 %v450, %v3560
      %v3593 = vmul.f32 %v452, %v3561
      %v3594 = vmul.f32 %v455, %v3562
      %v3595 = vmul.f32 %v457, %v3563
      %v3596 = vmul.f32 %v460, %v3564
      %v3597 = vmul.f32 %v462, %v3565
      %v3598 = vmul.f32 %v465, %v3566
      %v3599 = vmul.f32 %v467, %v3567
      %v3600 = vmul.f32 %v470, %v3568
      %v3601 = vmul.f32 %v472, %v3569
      %v3602 = vmul.f32 %v475, %v3570
      %v3603 = vmul.f32 %v477, %v3571
      %v3604 = vmul.f32 %v480, %v3572
      %v3605 = vmul.f32 %v482, %v3573
      %v3606 = vmul.f32 %v485, %v3574
      %v3607 = vmul.f32 %v487, %v3575
      %v3608 = vmul.f32 %v490, %v3576
      %v3609 = vmul.f32 %v492, %v3577
      %3610 = vrot.lane.b32.xlu0 %v495, 80
      %v3611 = vpop.permute.xlu0 %3610
      %3612 = vrot.lane.b32.xlu0 %v496, 80
      %v3613 = vpop.permute.xlu0 %3612
      %3614 = vrot.lane.b32.xlu0 %v497, 80
      %v3615 = vpop.permute.xlu0 %3614
      %3616 = vrot.lane.b32.xlu0 %v498, 80
      %v3617 = vpop.permute.xlu0 %3616
      %3618 = vrot.lane.b32.xlu0 %v499, 80
      %v3619 = vpop.permute.xlu0 %3618
      %3620 = vrot.lane.b32.xlu0 %v500, 80
      %v3621 = vpop.permute.xlu0 %3620
      %3622 = vrot.lane.b32.xlu0 %v501, 80
      %v3623 = vpop.permute.xlu0 %3622
      %3624 = vrot.lane.b32.xlu0 %v502, 80
      %v3625 = vpop.permute.xlu0 %3624
      %3626 = vrot.lane.b32.xlu0 %v503, 80
      %v3627 = vpop.permute.xlu0 %3626
      %3628 = vrot.lane.b32.xlu0 %v504, 80
      %v3629 = vpop.permute.xlu0 %3628
      %3630 = vrot.lane.b32.xlu0 %v505, 80
      %v3631 = vpop.permute.xlu0 %3630
      %3632 = vrot.lane.b32.xlu0 %v506, 80
      %v3633 = vpop.permute.xlu0 %3632
      %3634 = vrot.lane.b32.xlu0 %v507, 80
      %v3635 = vpop.permute.xlu0 %3634
      %3636 = vrot.lane.b32.xlu0 %v508, 80
      %v3637 = vpop.permute.xlu0 %3636
      %3638 = vrot.lane.b32.xlu0 %v509, 80
      %v3639 = vpop.permute.xlu0 %3638
      %3640 = vrot.lane.b32.xlu0 %v510, 80
      %v3641 = vpop.permute.xlu0 %3640
      %3642 = vrot.lane.b32.xlu0 %v511, 80
      %v3643 = vpop.permute.xlu0 %3642
      %3644 = vrot.lane.b32.xlu0 %v512, 80
      %v3645 = vpop.permute.xlu0 %3644
      %3646 = vrot.lane.b32.xlu0 %v513, 80
      %v3647 = vpop.permute.xlu0 %3646
      %3648 = vrot.lane.b32.xlu0 %v514, 80
      %v3649 = vpop.permute.xlu0 %3648
      %3650 = vrot.lane.b32.xlu0 %v515, 80
      %v3651 = vpop.permute.xlu0 %3650
      %3652 = vrot.lane.b32.xlu0 %v516, 80
      %v3653 = vpop.permute.xlu0 %3652
      %3654 = vrot.lane.b32.xlu0 %v517, 80
      %v3655 = vpop.permute.xlu0 %3654
      %3656 = vrot.lane.b32.xlu0 %v518, 80
      %v3657 = vpop.permute.xlu0 %3656
      %3658 = vrot.lane.b32.xlu0 %v519, 80
      %v3659 = vpop.permute.xlu0 %3658
      %3660 = vrot.lane.b32.xlu0 %v520, 80
      %v3661 = vpop.permute.xlu0 %3660
      %3662 = vrot.lane.b32.xlu0 %v521, 80
      %v3663 = vpop.permute.xlu0 %3662
      %3664 = vrot.lane.b32.xlu0 %v522, 80
      %v3665 = vpop.permute.xlu0 %3664
      %3666 = vrot.lane.b32.xlu0 %v523, 80
      %v3667 = vpop.permute.xlu0 %3666
      %3668 = vrot.lane.b32.xlu0 %v524, 80
      %v3669 = vpop.permute.xlu0 %3668
      %3670 = vrot.lane.b32.xlu0 %v525, 80
      %v3671 = vpop.permute.xlu0 %3670
      %3672 = vrot.lane.b32.xlu0 %v526, 80
      %v3673 = vpop.permute.xlu0 %3672
      %v3706 = vsel %vm527, %v3611, 0.0
      %3707 = vadd.xlane.f32.xlu0 %v3706
      %v3708 = vpop.xlane.xlu0 %3707
      %v3709 = vsel %vm527, %v3613, 0.0
      %3710 = vadd.xlane.f32.xlu0 %v3709
      %v3711 = vpop.xlane.xlu0 %3710
      %v3712 = vsel %vm527, %v3615, 0.0
      %3713 = vadd.xlane.f32.xlu0 %v3712
      %v3714 = vpop.xlane.xlu0 %3713
      %v3715 = vsel %vm527, %v3617, 0.0
      %3716 = vadd.xlane.f32.xlu0 %v3715
      %v3717 = vpop.xlane.xlu0 %3716
      %v3718 = vsel %vm527, %v3619, 0.0
      %3719 = vadd.xlane.f32.xlu0 %v3718
      %v3720 = vpop.xlane.xlu0 %3719
      %v3721 = vsel %vm527, %v3621, 0.0
      %3722 = vadd.xlane.f32.xlu0 %v3721
      %v3723 = vpop.xlane.xlu0 %3722
      %v3724 = vsel %vm527, %v3623, 0.0
      %3725 = vadd.xlane.f32.xlu0 %v3724
      %v3726 = vpop.xlane.xlu0 %3725
      %v3727 = vsel %vm527, %v3625, 0.0
      %3728 = vadd.xlane.f32.xlu0 %v3727
      %v3729 = vpop.xlane.xlu0 %3728
      %v3730 = vsel %vm527, %v3627, 0.0
      %3731 = vadd.xlane.f32.xlu0 %v3730
      %v3732 = vpop.xlane.xlu0 %3731
      %v3733 = vsel %vm527, %v3629, 0.0
      %3734 = vadd.xlane.f32.xlu0 %v3733
      %v3735 = vpop.xlane.xlu0 %3734
      %v3736 = vsel %vm527, %v3631, 0.0
      %3737 = vadd.xlane.f32.xlu0 %v3736
      %v3738 = vpop.xlane.xlu0 %3737
      %v3739 = vsel %vm527, %v3633, 0.0
      %3740 = vadd.xlane.f32.xlu0 %v3739
      %v3741 = vpop.xlane.xlu0 %3740
      %v3742 = vsel %vm527, %v3635, 0.0
      %3743 = vadd.xlane.f32.xlu0 %v3742
      %v3744 = vpop.xlane.xlu0 %3743
      %v3745 = vsel %vm527, %v3637, 0.0
      %3746 = vadd.xlane.f32.xlu0 %v3745
      %v3747 = vpop.xlane.xlu0 %3746
      %v3748 = vsel %vm527, %v3639, 0.0
      %3749 = vadd.xlane.f32.xlu0 %v3748
      %v3750 = vpop.xlane.xlu0 %3749
      %v3751 = vsel %vm527, %v3641, 0.0
      %3752 = vadd.xlane.f32.xlu0 %v3751
      %v3753 = vpop.xlane.xlu0 %3752
      %v3754 = vsel %vm527, %v3643, 0.0
      %3755 = vadd.xlane.f32.xlu0 %v3754
      %v3756 = vpop.xlane.xlu0 %3755
      %v3757 = vsel %vm527, %v3645, 0.0
      %3758 = vadd.xlane.f32.xlu0 %v3757
      %v3759 = vpop.xlane.xlu0 %3758
      %v3760 = vsel %vm527, %v3647, 0.0
      %3761 = vadd.xlane.f32.xlu0 %v3760
      %v3762 = vpop.xlane.xlu0 %3761
      %v3763 = vsel %vm527, %v3649, 0.0
      %3764 = vadd.xlane.f32.xlu0 %v3763
      %v3765 = vpop.xlane.xlu0 %3764
      %v3766 = vsel %vm527, %v3651, 0.0
      %3767 = vadd.xlane.f32.xlu0 %v3766
      %v3768 = vpop.xlane.xlu0 %3767
      %v3769 = vsel %vm527, %v3653, 0.0
      %3770 = vadd.xlane.f32.xlu0 %v3769
      %v3771 = vpop.xlane.xlu0 %3770
      %v3772 = vsel %vm527, %v3655, 0.0
      %3773 = vadd.xlane.f32.xlu0 %v3772
      %v3774 = vpop.xlane.xlu0 %3773
      %v3775 = vsel %vm527, %v3657, 0.0
      %3776 = vadd.xlane.f32.xlu0 %v3775
      %v3777 = vpop.xlane.xlu0 %3776
      %v3778 = vsel %vm527, %v3659, 0.0
      %3779 = vadd.xlane.f32.xlu0 %v3778
      %v3780 = vpop.xlane.xlu0 %3779
      %v3781 = vsel %vm527, %v3661, 0.0
      %3782 = vadd.xlane.f32.xlu0 %v3781
      %v3783 = vpop.xlane.xlu0 %3782
      %v3784 = vsel %vm527, %v3663, 0.0
      %3785 = vadd.xlane.f32.xlu0 %v3784
      %v3786 = vpop.xlane.xlu0 %3785
      %v3787 = vsel %vm527, %v3665, 0.0
      %3788 = vadd.xlane.f32.xlu0 %v3787
      %v3789 = vpop.xlane.xlu0 %3788
      %v3790 = vsel %vm527, %v3667, 0.0
      %3791 = vadd.xlane.f32.xlu0 %v3790
      %v3792 = vpop.xlane.xlu0 %3791
      %v3793 = vsel %vm527, %v3669, 0.0
      %3794 = vadd.xlane.f32.xlu0 %v3793
      %v3795 = vpop.xlane.xlu0 %3794
      %v3796 = vsel %vm527, %v3671, 0.0
      %3797 = vadd.xlane.f32.xlu0 %v3796
      %v3798 = vpop.xlane.xlu0 %3797
      %v3799 = vsel %vm527, %v3673, 0.0
      %3800 = vadd.xlane.f32.xlu0 %v3799
      %v3801 = vpop.xlane.xlu0 %3800
      %v3802 = vmax.f32 %v3708, 1e-24
      %v3803 = vmax.f32 %v3711, 1e-24
      %v3804 = vmax.f32 %v3714, 1e-24
      %v3805 = vmax.f32 %v3717, 1e-24
      %v3806 = vmax.f32 %v3720, 1e-24
      %v3807 = vmax.f32 %v3723, 1e-24
      %v3808 = vmax.f32 %v3726, 1e-24
      %v3809 = vmax.f32 %v3729, 1e-24
      %v3810 = vmax.f32 %v3732, 1e-24
      %v3811 = vmax.f32 %v3735, 1e-24
      %v3812 = vmax.f32 %v3738, 1e-24
      %v3813 = vmax.f32 %v3741, 1e-24
      %v3814 = vmax.f32 %v3744, 1e-24
      %v3815 = vmax.f32 %v3747, 1e-24
      %v3816 = vmax.f32 %v3750, 1e-24
      %v3817 = vmax.f32 %v3753, 1e-24
      %v3818 = vmax.f32 %v3756, 1e-24
      %v3819 = vmax.f32 %v3759, 1e-24
      %v3820 = vmax.f32 %v3762, 1e-24
      %v3821 = vmax.f32 %v3765, 1e-24
      %v3822 = vmax.f32 %v3768, 1e-24
      %v3823 = vmax.f32 %v3771, 1e-24
      %v3824 = vmax.f32 %v3774, 1e-24
      %v3825 = vmax.f32 %v3777, 1e-24
      %v3826 = vmax.f32 %v3780, 1e-24
      %v3827 = vmax.f32 %v3783, 1e-24
      %v3828 = vmax.f32 %v3786, 1e-24
      %v3829 = vmax.f32 %v3789, 1e-24
      %v3830 = vmax.f32 %v3792, 1e-24
      %v3831 = vmax.f32 %v3795, 1e-24
      %v3832 = vmax.f32 %v3798, 1e-24
      %v3833 = vmax.f32 %v3801, 1e-24
      %v3834 = vrsqrt.pop %v3802
      %v3835 = vmul.f32 %v3834, %v3802
      %v3836 = vmul.f32 %v3835, %v3834
      %v3837 = vmul.f32 0.5, %v3836
      %v3838 = vsub.f32 1.5, %v3837
      %v3839 = vmul.f32 %v3834, %v3838
      %vm3840 = vweird.f32 %v3802
      %vm3841 = vweird.f32 %v3834
      %vm3842 = vmor %vm3840, %vm3841
      %v3843 = vsel %vm3842, %v3834, %v3839
      %v3844 = vrsqrt.pop %v3803
      %v3845 = vmul.f32 %v3844, %v3803
      %v3846 = vmul.f32 %v3845, %v3844
      %v3847 = vmul.f32 0.5, %v3846
      %v3848 = vsub.f32 1.5, %v3847
      %v3849 = vmul.f32 %v3844, %v3848
      %vm3850 = vweird.f32 %v3803
      %vm3851 = vweird.f32 %v3844
      %vm3852 = vmor %vm3850, %vm3851
      %v3853 = vsel %vm3852, %v3844, %v3849
      %v3854 = vrsqrt.pop %v3804
      %v3855 = vmul.f32 %v3854, %v3804
      %v3856 = vmul.f32 %v3855, %v3854
      %v3857 = vmul.f32 0.5, %v3856
      %v3858 = vsub.f32 1.5, %v3857
      %v3859 = vmul.f32 %v3854, %v3858
      %vm3860 = vweird.f32 %v3804
      %vm3861 = vweird.f32 %v3854
      %vm3862 = vmor %vm3860, %vm3861
      %v3863 = vsel %vm3862, %v3854, %v3859
      %v3864 = vrsqrt.pop %v3805
      %v3865 = vmul.f32 %v3864, %v3805
      %v3866 = vmul.f32 %v3865, %v3864
      %v3867 = vmul.f32 0.5, %v3866
      %v3868 = vsub.f32 1.5, %v3867
      %v3869 = vmul.f32 %v3864, %v3868
      %vm3870 = vweird.f32 %v3805
      %vm3871 = vweird.f32 %v3864
      %vm3872 = vmor %vm3870, %vm3871
      %v3873 = vsel %vm3872, %v3864, %v3869
      %v3874 = vrsqrt.pop %v3806
      %v3875 = vmul.f32 %v3874, %v3806
      %v3876 = vmul.f32 %v3875, %v3874
      %v3877 = vmul.f32 0.5, %v3876
      %v3878 = vsub.f32 1.5, %v3877
      %v3879 = vmul.f32 %v3874, %v3878
      %vm3880 = vweird.f32 %v3806
      %vm3881 = vweird.f32 %v3874
      %vm3882 = vmor %vm3880, %vm3881
      %v3883 = vsel %vm3882, %v3874, %v3879
      %v3884 = vrsqrt.pop %v3807
      %v3885 = vmul.f32 %v3884, %v3807
      %v3886 = vmul.f32 %v3885, %v3884
      %v3887 = vmul.f32 0.5, %v3886
      %v3888 = vsub.f32 1.5, %v3887
      %v3889 = vmul.f32 %v3884, %v3888
      %vm3890 = vweird.f32 %v3807
      %vm3891 = vweird.f32 %v3884
      %vm3892 = vmor %vm3890, %vm3891
      %v3893 = vsel %vm3892, %v3884, %v3889
      %v3894 = vrsqrt.pop %v3808
      %v3895 = vmul.f32 %v3894, %v3808
      %v3896 = vmul.f32 %v3895, %v3894
      %v3897 = vmul.f32 0.5, %v3896
      %v3898 = vsub.f32 1.5, %v3897
      %v3899 = vmul.f32 %v3894, %v3898
      %vm3900 = vweird.f32 %v3808
      %vm3901 = vweird.f32 %v3894
      %vm3902 = vmor %vm3900, %vm3901
      %v3903 = vsel %vm3902, %v3894, %v3899
      %v3904 = vrsqrt.pop %v3809
      %v3905 = vmul.f32 %v3904, %v3809
      %v3906 = vmul.f32 %v3905, %v3904
      %v3907 = vmul.f32 0.5, %v3906
      %v3908 = vsub.f32 1.5, %v3907
      %v3909 = vmul.f32 %v3904, %v3908
      %vm3910 = vweird.f32 %v3809
      %vm3911 = vweird.f32 %v3904
      %vm3912 = vmor %vm3910, %vm3911
      %v3913 = vsel %vm3912, %v3904, %v3909
      %v3914 = vrsqrt.pop %v3810
      %v3915 = vmul.f32 %v3914, %v3810
      %v3916 = vmul.f32 %v3915, %v3914
      %v3917 = vmul.f32 0.5, %v3916
      %v3918 = vsub.f32 1.5, %v3917
      %v3919 = vmul.f32 %v3914, %v3918
      %vm3920 = vweird.f32 %v3810
      %vm3921 = vweird.f32 %v3914
      %vm3922 = vmor %vm3920, %vm3921
      %v3923 = vsel %vm3922, %v3914, %v3919
      %v3924 = vrsqrt.pop %v3811
      %v3925 = vmul.f32 %v3924, %v3811
      %v3926 = vmul.f32 %v3925, %v3924
      %v3927 = vmul.f32 0.5, %v3926
      %v3928 = vsub.f32 1.5, %v3927
      %v3929 = vmul.f32 %v3924, %v3928
      %vm3930 = vweird.f32 %v3811
      %vm3931 = vweird.f32 %v3924
      %vm3932 = vmor %vm3930, %vm3931
      %v3933 = vsel %vm3932, %v3924, %v3929
      %v3934 = vrsqrt.pop %v3812
      %v3935 = vmul.f32 %v3934, %v3812
      %v3936 = vmul.f32 %v3935, %v3934
      %v3937 = vmul.f32 0.5, %v3936
      %v3938 = vsub.f32 1.5, %v3937
      %v3939 = vmul.f32 %v3934, %v3938
      %vm3940 = vweird.f32 %v3812
      %vm3941 = vweird.f32 %v3934
      %vm3942 = vmor %vm3940, %vm3941
      %v3943 = vsel %vm3942, %v3934, %v3939
      %v3944 = vrsqrt.pop %v3813
      %v3945 = vmul.f32 %v3944, %v3813
      %v3946 = vmul.f32 %v3945, %v3944
      %v3947 = vmul.f32 0.5, %v3946
      %v3948 = vsub.f32 1.5, %v3947
      %v3949 = vmul.f32 %v3944, %v3948
      %vm3950 = vweird.f32 %v3813
      %vm3951 = vweird.f32 %v3944
      %vm3952 = vmor %vm3950, %vm3951
      %v3953 = vsel %vm3952, %v3944, %v3949
      %v3954 = vrsqrt.pop %v3814
      %v3955 = vmul.f32 %v3954, %v3814
      %v3956 = vmul.f32 %v3955, %v3954
      %v3957 = vmul.f32 0.5, %v3956
      %v3958 = vsub.f32 1.5, %v3957
      %v3959 = vmul.f32 %v3954, %v3958
      %vm3960 = vweird.f32 %v3814
      %vm3961 = vweird.f32 %v3954
      %vm3962 = vmor %vm3960, %vm3961
      %v3963 = vsel %vm3962, %v3954, %v3959
      %v3964 = vrsqrt.pop %v3815
      %v3965 = vmul.f32 %v3964, %v3815
      %v3966 = vmul.f32 %v3965, %v3964
      %v3967 = vmul.f32 0.5, %v3966
      %v3968 = vsub.f32 1.5, %v3967
      %v3969 = vmul.f32 %v3964, %v3968
      %vm3970 = vweird.f32 %v3815
      %vm3971 = vweird.f32 %v3964
      %vm3972 = vmor %vm3970, %vm3971
      %v3973 = vsel %vm3972, %v3964, %v3969
      %v3974 = vrsqrt.pop %v3816
      %v3975 = vmul.f32 %v3974, %v3816
      %v3976 = vmul.f32 %v3975, %v3974
      %v3977 = vmul.f32 0.5, %v3976
      %v3978 = vsub.f32 1.5, %v3977
      %v3979 = vmul.f32 %v3974, %v3978
      %vm3980 = vweird.f32 %v3816
      %vm3981 = vweird.f32 %v3974
      %vm3982 = vmor %vm3980, %vm3981
      %v3983 = vsel %vm3982, %v3974, %v3979
      %v3984 = vrsqrt.pop %v3817
      %v3985 = vmul.f32 %v3984, %v3817
      %v3986 = vmul.f32 %v3985, %v3984
      %v3987 = vmul.f32 0.5, %v3986
      %v3988 = vsub.f32 1.5, %v3987
      %v3989 = vmul.f32 %v3984, %v3988
      %vm3990 = vweird.f32 %v3817
      %vm3991 = vweird.f32 %v3984
      %vm3992 = vmor %vm3990, %vm3991
      %v3993 = vsel %vm3992, %v3984, %v3989
      %v3994 = vrsqrt.pop %v3818
      %v3995 = vmul.f32 %v3994, %v3818
      %v3996 = vmul.f32 %v3995, %v3994
      %v3997 = vmul.f32 0.5, %v3996
      %v3998 = vsub.f32 1.5, %v3997
      %v3999 = vmul.f32 %v3994, %v3998
      %vm4000 = vweird.f32 %v3818
      %vm4001 = vweird.f32 %v3994
      %vm4002 = vmor %vm4000, %vm4001
      %v4003 = vsel %vm4002, %v3994, %v3999
      %v4004 = vrsqrt.pop %v3819
      %v4005 = vmul.f32 %v4004, %v3819
      %v4006 = vmul.f32 %v4005, %v4004
      %v4007 = vmul.f32 0.5, %v4006
      %v4008 = vsub.f32 1.5, %v4007
      %v4009 = vmul.f32 %v4004, %v4008
      %vm4010 = vweird.f32 %v3819
      %vm4011 = vweird.f32 %v4004
      %vm4012 = vmor %vm4010, %vm4011
      %v4013 = vsel %vm4012, %v4004, %v4009
      %v4014 = vrsqrt.pop %v3820
      %v4015 = vmul.f32 %v4014, %v3820
      %v4016 = vmul.f32 %v4015, %v4014
      %v4017 = vmul.f32 0.5, %v4016
      %v4018 = vsub.f32 1.5, %v4017
      %v4019 = vmul.f32 %v4014, %v4018
      %vm4020 = vweird.f32 %v3820
      %vm4021 = vweird.f32 %v4014
      %vm4022 = vmor %vm4020, %vm4021
      %v4023 = vsel %vm4022, %v4014, %v4019
      %v4024 = vrsqrt.pop %v3821
      %v4025 = vmul.f32 %v4024, %v3821
      %v4026 = vmul.f32 %v4025, %v4024
      %v4027 = vmul.f32 0.5, %v4026
      %v4028 = vsub.f32 1.5, %v4027
      %v4029 = vmul.f32 %v4024, %v4028
      %vm4030 = vweird.f32 %v3821
      %vm4031 = vweird.f32 %v4024
      %vm4032 = vmor %vm4030, %vm4031
      %v4033 = vsel %vm4032, %v4024, %v4029
      %v4034 = vrsqrt.pop %v3822
      %v4035 = vmul.f32 %v4034, %v3822
      %v4036 = vmul.f32 %v4035, %v4034
      %v4037 = vmul.f32 0.5, %v4036
      %v4038 = vsub.f32 1.5, %v4037
      %v4039 = vmul.f32 %v4034, %v4038
      %vm4040 = vweird.f32 %v3822
      %vm4041 = vweird.f32 %v4034
      %vm4042 = vmor %vm4040, %vm4041
      %v4043 = vsel %vm4042, %v4034, %v4039
      %v4044 = vrsqrt.pop %v3823
      %v4045 = vmul.f32 %v4044, %v3823
      %v4046 = vmul.f32 %v4045, %v4044
      %v4047 = vmul.f32 0.5, %v4046
      %v4048 = vsub.f32 1.5, %v4047
      %v4049 = vmul.f32 %v4044, %v4048
      %vm4050 = vweird.f32 %v3823
      %vm4051 = vweird.f32 %v4044
      %vm4052 = vmor %vm4050, %vm4051
      %v4053 = vsel %vm4052, %v4044, %v4049
      %v4054 = vrsqrt.pop %v3824
      %v4055 = vmul.f32 %v4054, %v3824
      %v4056 = vmul.f32 %v4055, %v4054
      %v4057 = vmul.f32 0.5, %v4056
      %v4058 = vsub.f32 1.5, %v4057
      %v4059 = vmul.f32 %v4054, %v4058
      %vm4060 = vweird.f32 %v3824
      %vm4061 = vweird.f32 %v4054
      %vm4062 = vmor %vm4060, %vm4061
      %v4063 = vsel %vm4062, %v4054, %v4059
      %v4064 = vrsqrt.pop %v3825
      %v4065 = vmul.f32 %v4064, %v3825
      %v4066 = vmul.f32 %v4065, %v4064
      %v4067 = vmul.f32 0.5, %v4066
      %v4068 = vsub.f32 1.5, %v4067
      %v4069 = vmul.f32 %v4064, %v4068
      %vm4070 = vweird.f32 %v3825
      %vm4071 = vweird.f32 %v4064
      %vm4072 = vmor %vm4070, %vm4071
      %v4073 = vsel %vm4072, %v4064, %v4069
      %v4074 = vrsqrt.pop %v3826
      %v4075 = vmul.f32 %v4074, %v3826
      %v4076 = vmul.f32 %v4075, %v4074
      %v4077 = vmul.f32 0.5, %v4076
      %v4078 = vsub.f32 1.5, %v4077
      %v4079 = vmul.f32 %v4074, %v4078
      %vm4080 = vweird.f32 %v3826
      %vm4081 = vweird.f32 %v4074
      %vm4082 = vmor %vm4080, %vm4081
      %v4083 = vsel %vm4082, %v4074, %v4079
      %v4084 = vrsqrt.pop %v3827
      %v4085 = vmul.f32 %v4084, %v3827
      %v4086 = vmul.f32 %v4085, %v4084
      %v4087 = vmul.f32 0.5, %v4086
      %v4088 = vsub.f32 1.5, %v4087
      %v4089 = vmul.f32 %v4084, %v4088
      %vm4090 = vweird.f32 %v3827
      %vm4091 = vweird.f32 %v4084
      %vm4092 = vmor %vm4090, %vm4091
      %v4093 = vsel %vm4092, %v4084, %v4089
      %v4094 = vrsqrt.pop %v3828
      %v4095 = vmul.f32 %v4094, %v3828
      %v4096 = vmul.f32 %v4095, %v4094
      %v4097 = vmul.f32 0.5, %v4096
      %v4098 = vsub.f32 1.5, %v4097
      %v4099 = vmul.f32 %v4094, %v4098
      %vm4100 = vweird.f32 %v3828
      %vm4101 = vweird.f32 %v4094
      %vm4102 = vmor %vm4100, %vm4101
      %v4103 = vsel %vm4102, %v4094, %v4099
      %v4104 = vrsqrt.pop %v3829
      %v4105 = vmul.f32 %v4104, %v3829
      %v4106 = vmul.f32 %v4105, %v4104
      %v4107 = vmul.f32 0.5, %v4106
      %v4108 = vsub.f32 1.5, %v4107
      %v4109 = vmul.f32 %v4104, %v4108
      %vm4110 = vweird.f32 %v3829
      %vm4111 = vweird.f32 %v4104
      %vm4112 = vmor %vm4110, %vm4111
      %v4113 = vsel %vm4112, %v4104, %v4109
      %v4114 = vrsqrt.pop %v3830
      %v4115 = vmul.f32 %v4114, %v3830
      %v4116 = vmul.f32 %v4115, %v4114
      %v4117 = vmul.f32 0.5, %v4116
      %v4118 = vsub.f32 1.5, %v4117
      %v4119 = vmul.f32 %v4114, %v4118
      %vm4120 = vweird.f32 %v3830
      %vm4121 = vweird.f32 %v4114
      %vm4122 = vmor %vm4120, %vm4121
      %v4123 = vsel %vm4122, %v4114, %v4119
      %v4124 = vrsqrt.pop %v3831
      %v4125 = vmul.f32 %v4124, %v3831
      %v4126 = vmul.f32 %v4125, %v4124
      %v4127 = vmul.f32 0.5, %v4126
      %v4128 = vsub.f32 1.5, %v4127
      %v4129 = vmul.f32 %v4124, %v4128
      %vm4130 = vweird.f32 %v3831
      %vm4131 = vweird.f32 %v4124
      %vm4132 = vmor %vm4130, %vm4131
      %v4133 = vsel %vm4132, %v4124, %v4129
      %v4134 = vrsqrt.pop %v3832
      %v4135 = vmul.f32 %v4134, %v3832
      %v4136 = vmul.f32 %v4135, %v4134
      %v4137 = vmul.f32 0.5, %v4136
      %v4138 = vsub.f32 1.5, %v4137
      %v4139 = vmul.f32 %v4134, %v4138
      %vm4140 = vweird.f32 %v3832
      %vm4141 = vweird.f32 %v4134
      %vm4142 = vmor %vm4140, %vm4141
      %v4143 = vsel %vm4142, %v4134, %v4139
      %v4144 = vrsqrt.pop %v3833
      %v4145 = vmul.f32 %v4144, %v3833
      %v4146 = vmul.f32 %v4145, %v4144
      %v4147 = vmul.f32 0.5, %v4146
      %v4148 = vsub.f32 1.5, %v4147
      %v4149 = vmul.f32 %v4144, %v4148
      %vm4150 = vweird.f32 %v3833
      %vm4151 = vweird.f32 %v4144
      %vm4152 = vmor %vm4150, %vm4151
      %v4153 = vsel %vm4152, %v4144, %v4149
      %v4154 = vmul.f32 %v415, %v3843
      %v4155 = vmul.f32 %v417, %v3853
      %v4156 = vmul.f32 %v420, %v3863
      %v4157 = vmul.f32 %v422, %v3873
      %v4158 = vmul.f32 %v425, %v3883
      %v4159 = vmul.f32 %v427, %v3893
      %v4160 = vmul.f32 %v430, %v3903
      %v4161 = vmul.f32 %v432, %v3913
      %v4162 = vmul.f32 %v435, %v3923
      %v4163 = vmul.f32 %v437, %v3933
      %v4164 = vmul.f32 %v440, %v3943
      %v4165 = vmul.f32 %v442, %v3953
      %v4166 = vmul.f32 %v445, %v3963
      %v4167 = vmul.f32 %v447, %v3973
      %v4168 = vmul.f32 %v450, %v3983
      %v4169 = vmul.f32 %v452, %v3993
      %v4170 = vmul.f32 %v455, %v4003
      %v4171 = vmul.f32 %v457, %v4013
      %v4172 = vmul.f32 %v460, %v4023
      %v4173 = vmul.f32 %v462, %v4033
      %v4174 = vmul.f32 %v465, %v4043
      %v4175 = vmul.f32 %v467, %v4053
      %v4176 = vmul.f32 %v470, %v4063
      %v4177 = vmul.f32 %v472, %v4073
      %v4178 = vmul.f32 %v475, %v4083
      %v4179 = vmul.f32 %v477, %v4093
      %v4180 = vmul.f32 %v480, %v4103
      %v4181 = vmul.f32 %v482, %v4113
      %v4182 = vmul.f32 %v485, %v4123
      %v4183 = vmul.f32 %v487, %v4133
      %v4184 = vmul.f32 %v490, %v4143
      %v4185 = vmul.f32 %v492, %v4153
      %v4186 = vpack.c.bf16 %v3578, %v3578
      %v4187 = vpack.c.bf16 %v3579, %v3579
      %v4188 = vpack.c.bf16 %v3580, %v3580
      %v4189 = vpack.c.bf16 %v3581, %v3581
      %v4190 = vpack.c.bf16 %v3582, %v3582
      %v4191 = vpack.c.bf16 %v3583, %v3583
      %v4192 = vpack.c.bf16 %v3584, %v3584
      %v4193 = vpack.c.bf16 %v3585, %v3585
      %v4194 = vpack.c.bf16 %v3586, %v3586
      %v4195 = vpack.c.bf16 %v3587, %v3587
      %v4196 = vpack.c.bf16 %v3588, %v3588
      %v4197 = vpack.c.bf16 %v3589, %v3589
      %v4198 = vpack.c.bf16 %v3590, %v3590
      %v4199 = vpack.c.bf16 %v3591, %v3591
      %v4200 = vpack.c.bf16 %v3592, %v3592
      %v4201 = vpack.c.bf16 %v3593, %v3593
      %v4202 = vpack.c.bf16 %v3594, %v3594
      %v4203 = vpack.c.bf16 %v3595, %v3595
      %v4204 = vpack.c.bf16 %v3596, %v3596
      %v4205 = vpack.c.bf16 %v3597, %v3597
      %v4206 = vpack.c.bf16 %v3598, %v3598
      %v4207 = vpack.c.bf16 %v3599, %v3599
      %v4208 = vpack.c.bf16 %v3600, %v3600
      %v4209 = vpack.c.bf16 %v3601, %v3601
      %v4210 = vpack.c.bf16 %v3602, %v3602
      %v4211 = vpack.c.bf16 %v3603, %v3603
      %v4212 = vpack.c.bf16 %v3604, %v3604
      %v4213 = vpack.c.bf16 %v3605, %v3605
      %v4214 = vpack.c.bf16 %v3606, %v3606
      %v4215 = vpack.c.bf16 %v3607, %v3607
      %v4216 = vpack.c.bf16 %v3608, %v3608
      %v4217 = vpack.c.bf16 %v3609, %v3609
      %v4218 = vpack.c.bf16 %v4154, %v4154
      %v4219 = vpack.c.bf16 %v4155, %v4155
      %v4220 = vpack.c.bf16 %v4156, %v4156
      %v4221 = vpack.c.bf16 %v4157, %v4157
      %v4222 = vpack.c.bf16 %v4158, %v4158
      %v4223 = vpack.c.bf16 %v4159, %v4159
      %v4224 = vpack.c.bf16 %v4160, %v4160
      %v4225 = vpack.c.bf16 %v4161, %v4161
      %v4226 = vpack.c.bf16 %v4162, %v4162
      %v4227 = vpack.c.bf16 %v4163, %v4163
      %v4228 = vpack.c.bf16 %v4164, %v4164
      %v4229 = vpack.c.bf16 %v4165, %v4165
      %v4230 = vpack.c.bf16 %v4166, %v4166
      %v4231 = vpack.c.bf16 %v4167, %v4167
      %v4232 = vpack.c.bf16 %v4168, %v4168
      %v4233 = vpack.c.bf16 %v4169, %v4169
      %v4234 = vpack.c.bf16 %v4170, %v4170
      %v4235 = vpack.c.bf16 %v4171, %v4171
      %v4236 = vpack.c.bf16 %v4172, %v4172
      %v4237 = vpack.c.bf16 %v4173, %v4173
      %v4238 = vpack.c.bf16 %v4174, %v4174
      %v4239 = vpack.c.bf16 %v4175, %v4175
      %v4240 = vpack.c.bf16 %v4176, %v4176
      %v4241 = vpack.c.bf16 %v4177, %v4177
      %v4242 = vpack.c.bf16 %v4178, %v4178
      %v4243 = vpack.c.bf16 %v4179, %v4179
      %v4244 = vpack.c.bf16 %v4180, %v4180
      %v4245 = vpack.c.bf16 %v4181, %v4181
      %v4246 = vpack.c.bf16 %v4182, %v4182
      %v4247 = vpack.c.bf16 %v4183, %v4183
      %v4248 = vpack.c.bf16 %v4184, %v4184
      %v4249 = vpack.c.bf16 %v4185, %v4185
      %4250 = vrot.lane.b32.xlu0 %v495, 104
      %v4251 = vpop.permute.xlu0 %4250
      %4252 = vrot.lane.b32.xlu0 %v496, 104
      %v4253 = vpop.permute.xlu0 %4252
      %4254 = vrot.lane.b32.xlu0 %v497, 104
      %v4255 = vpop.permute.xlu0 %4254
      %4256 = vrot.lane.b32.xlu0 %v498, 104
      %v4257 = vpop.permute.xlu0 %4256
      %4258 = vrot.lane.b32.xlu0 %v499, 104
      %v4259 = vpop.permute.xlu0 %4258
      %4260 = vrot.lane.b32.xlu0 %v500, 104
      %v4261 = vpop.permute.xlu0 %4260
      %4262 = vrot.lane.b32.xlu0 %v501, 104
      %v4263 = vpop.permute.xlu0 %4262
      %4264 = vrot.lane.b32.xlu0 %v502, 104
      %v4265 = vpop.permute.xlu0 %4264
      %4266 = vrot.lane.b32.xlu0 %v503, 104
      %v4267 = vpop.permute.xlu0 %4266
      %4268 = vrot.lane.b32.xlu0 %v504, 104
      %v4269 = vpop.permute.xlu0 %4268
      %4270 = vrot.lane.b32.xlu0 %v505, 104
      %v4271 = vpop.permute.xlu0 %4270
      %4272 = vrot.lane.b32.xlu0 %v506, 104
      %v4273 = vpop.permute.xlu0 %4272
      %4274 = vrot.lane.b32.xlu0 %v507, 104
      %v4275 = vpop.permute.xlu0 %4274
      %4276 = vrot.lane.b32.xlu0 %v508, 104
      %v4277 = vpop.permute.xlu0 %4276
      %4278 = vrot.lane.b32.xlu0 %v509, 104
      %v4279 = vpop.permute.xlu0 %4278
      %4280 = vrot.lane.b32.xlu0 %v510, 104
      %v4281 = vpop.permute.xlu0 %4280
      %4282 = vrot.lane.b32.xlu0 %v511, 104
      %v4283 = vpop.permute.xlu0 %4282
      %4284 = vrot.lane.b32.xlu0 %v512, 104
      %v4285 = vpop.permute.xlu0 %4284
      %4286 = vrot.lane.b32.xlu0 %v513, 104
      %v4287 = vpop.permute.xlu0 %4286
      %4288 = vrot.lane.b32.xlu0 %v514, 104
      %v4289 = vpop.permute.xlu0 %4288
      %4290 = vrot.lane.b32.xlu0 %v515, 104
      %v4291 = vpop.permute.xlu0 %4290
      %4292 = vrot.lane.b32.xlu0 %v516, 104
      %v4293 = vpop.permute.xlu0 %4292
      %4294 = vrot.lane.b32.xlu0 %v517, 104
      %v4295 = vpop.permute.xlu0 %4294
      %4296 = vrot.lane.b32.xlu0 %v518, 104
      %v4297 = vpop.permute.xlu0 %4296
      %4298 = vrot.lane.b32.xlu0 %v519, 104
      %v4299 = vpop.permute.xlu0 %4298
      %4300 = vrot.lane.b32.xlu0 %v520, 104
      %v4301 = vpop.permute.xlu0 %4300
      %4302 = vrot.lane.b32.xlu0 %v521, 104
      %v4303 = vpop.permute.xlu0 %4302
      %4304 = vrot.lane.b32.xlu0 %v522, 104
      %v4305 = vpop.permute.xlu0 %4304
      %4306 = vrot.lane.b32.xlu0 %v523, 104
      %v4307 = vpop.permute.xlu0 %4306
      %4308 = vrot.lane.b32.xlu0 %v524, 104
      %v4309 = vpop.permute.xlu0 %4308
      %4310 = vrot.lane.b32.xlu0 %v525, 104
      %v4311 = vpop.permute.xlu0 %4310
      %4312 = vrot.lane.b32.xlu0 %v526, 104
      %v4313 = vpop.permute.xlu0 %4312
      %v4346 = vsel %vm527, %v4251, 0.0
      %4347 = vadd.xlane.f32.xlu0 %v4346
      %v4348 = vpop.xlane.xlu0 %4347
      %v4349 = vsel %vm527, %v4253, 0.0
      %4350 = vadd.xlane.f32.xlu0 %v4349
      %v4351 = vpop.xlane.xlu0 %4350
      %v4352 = vsel %vm527, %v4255, 0.0
      %4353 = vadd.xlane.f32.xlu0 %v4352
      %v4354 = vpop.xlane.xlu0 %4353
      %v4355 = vsel %vm527, %v4257, 0.0
      %4356 = vadd.xlane.f32.xlu0 %v4355
      %v4357 = vpop.xlane.xlu0 %4356
      %v4358 = vsel %vm527, %v4259, 0.0
      %4359 = vadd.xlane.f32.xlu0 %v4358
      %v4360 = vpop.xlane.xlu0 %4359
      %v4361 = vsel %vm527, %v4261, 0.0
      %4362 = vadd.xlane.f32.xlu0 %v4361
      %v4363 = vpop.xlane.xlu0 %4362
      %v4364 = vsel %vm527, %v4263, 0.0
      %4365 = vadd.xlane.f32.xlu0 %v4364
      %v4366 = vpop.xlane.xlu0 %4365
      %v4367 = vsel %vm527, %v4265, 0.0
      %4368 = vadd.xlane.f32.xlu0 %v4367
      %v4369 = vpop.xlane.xlu0 %4368
      %v4370 = vsel %vm527, %v4267, 0.0
      %4371 = vadd.xlane.f32.xlu0 %v4370
      %v4372 = vpop.xlane.xlu0 %4371
      %v4373 = vsel %vm527, %v4269, 0.0
      %4374 = vadd.xlane.f32.xlu0 %v4373
      %v4375 = vpop.xlane.xlu0 %4374
      %v4376 = vsel %vm527, %v4271, 0.0
      %4377 = vadd.xlane.f32.xlu0 %v4376
      %v4378 = vpop.xlane.xlu0 %4377
      %v4379 = vsel %vm527, %v4273, 0.0
      %4380 = vadd.xlane.f32.xlu0 %v4379
      %v4381 = vpop.xlane.xlu0 %4380
      %v4382 = vsel %vm527, %v4275, 0.0
      %4383 = vadd.xlane.f32.xlu0 %v4382
      %v4384 = vpop.xlane.xlu0 %4383
      %v4385 = vsel %vm527, %v4277, 0.0
      %4386 = vadd.xlane.f32.xlu0 %v4385
      %v4387 = vpop.xlane.xlu0 %4386
      %v4388 = vsel %vm527, %v4279, 0.0
      %4389 = vadd.xlane.f32.xlu0 %v4388
      %v4390 = vpop.xlane.xlu0 %4389
      %v4391 = vsel %vm527, %v4281, 0.0
      %4392 = vadd.xlane.f32.xlu0 %v4391
      %v4393 = vpop.xlane.xlu0 %4392
      %v4394 = vsel %vm527, %v4283, 0.0
      %4395 = vadd.xlane.f32.xlu0 %v4394
      %v4396 = vpop.xlane.xlu0 %4395
      %v4397 = vsel %vm527, %v4285, 0.0
      %4398 = vadd.xlane.f32.xlu0 %v4397
      %v4399 = vpop.xlane.xlu0 %4398
      %v4400 = vsel %vm527, %v4287, 0.0
      %4401 = vadd.xlane.f32.xlu0 %v4400
      %v4402 = vpop.xlane.xlu0 %4401
      %v4403 = vsel %vm527, %v4289, 0.0
      %4404 = vadd.xlane.f32.xlu0 %v4403
      %v4405 = vpop.xlane.xlu0 %4404
      %v4406 = vsel %vm527, %v4291, 0.0
      %4407 = vadd.xlane.f32.xlu0 %v4406
      %v4408 = vpop.xlane.xlu0 %4407
      %v4409 = vsel %vm527, %v4293, 0.0
      %4410 = vadd.xlane.f32.xlu0 %v4409
      %v4411 = vpop.xlane.xlu0 %4410
      %v4412 = vsel %vm527, %v4295, 0.0
      %4413 = vadd.xlane.f32.xlu0 %v4412
      %v4414 = vpop.xlane.xlu0 %4413
      %v4415 = vsel %vm527, %v4297, 0.0
      %4416 = vadd.xlane.f32.xlu0 %v4415
      %v4417 = vpop.xlane.xlu0 %4416
      %v4418 = vsel %vm527, %v4299, 0.0
      %4419 = vadd.xlane.f32.xlu0 %v4418
      %v4420 = vpop.xlane.xlu0 %4419
      %v4421 = vsel %vm527, %v4301, 0.0
      %4422 = vadd.xlane.f32.xlu0 %v4421
      %v4423 = vpop.xlane.xlu0 %4422
      %v4424 = vsel %vm527, %v4303, 0.0
      %4425 = vadd.xlane.f32.xlu0 %v4424
      %v4426 = vpop.xlane.xlu0 %4425
      %v4427 = vsel %vm527, %v4305, 0.0
      %4428 = vadd.xlane.f32.xlu0 %v4427
      %v4429 = vpop.xlane.xlu0 %4428
      %v4430 = vsel %vm527, %v4307, 0.0
      %4431 = vadd.xlane.f32.xlu0 %v4430
      %v4432 = vpop.xlane.xlu0 %4431
      %v4433 = vsel %vm527, %v4309, 0.0
      %4434 = vadd.xlane.f32.xlu0 %v4433
      %v4435 = vpop.xlane.xlu0 %4434
      %v4436 = vsel %vm527, %v4311, 0.0
      %4437 = vadd.xlane.f32.xlu0 %v4436
      %v4438 = vpop.xlane.xlu0 %4437
      %v4439 = vsel %vm527, %v4313, 0.0
      %4440 = vadd.xlane.f32.xlu0 %v4439
      %v4441 = vpop.xlane.xlu0 %4440
      %v4442 = vmax.f32 %v4348, 1e-24
      %v4443 = vmax.f32 %v4351, 1e-24
      %v4444 = vmax.f32 %v4354, 1e-24
      %v4445 = vmax.f32 %v4357, 1e-24
      %v4446 = vmax.f32 %v4360, 1e-24
      %v4447 = vmax.f32 %v4363, 1e-24
      %v4448 = vmax.f32 %v4366, 1e-24
      %v4449 = vmax.f32 %v4369, 1e-24
      %v4450 = vmax.f32 %v4372, 1e-24
      %v4451 = vmax.f32 %v4375, 1e-24
      %v4452 = vmax.f32 %v4378, 1e-24
      %v4453 = vmax.f32 %v4381, 1e-24
      %v4454 = vmax.f32 %v4384, 1e-24
      %v4455 = vmax.f32 %v4387, 1e-24
      %v4456 = vmax.f32 %v4390, 1e-24
      %v4457 = vmax.f32 %v4393, 1e-24
      %v4458 = vmax.f32 %v4396, 1e-24
      %v4459 = vmax.f32 %v4399, 1e-24
      %v4460 = vmax.f32 %v4402, 1e-24
      %v4461 = vmax.f32 %v4405, 1e-24
      %v4462 = vmax.f32 %v4408, 1e-24
      %v4463 = vmax.f32 %v4411, 1e-24
      %v4464 = vmax.f32 %v4414, 1e-24
      %v4465 = vmax.f32 %v4417, 1e-24
      %v4466 = vmax.f32 %v4420, 1e-24
      %v4467 = vmax.f32 %v4423, 1e-24
      %v4468 = vmax.f32 %v4426, 1e-24
      %v4469 = vmax.f32 %v4429, 1e-24
      %v4470 = vmax.f32 %v4432, 1e-24
      %v4471 = vmax.f32 %v4435, 1e-24
      %v4472 = vmax.f32 %v4438, 1e-24
      %v4473 = vmax.f32 %v4441, 1e-24
      %v4474 = vrsqrt.pop %v4442
      %v4475 = vmul.f32 %v4474, %v4442
      %v4476 = vmul.f32 %v4475, %v4474
      %v4477 = vmul.f32 0.5, %v4476
      %v4478 = vsub.f32 1.5, %v4477
      %v4479 = vmul.f32 %v4474, %v4478
      %vm4480 = vweird.f32 %v4442
      %vm4481 = vweird.f32 %v4474
      %vm4482 = vmor %vm4480, %vm4481
      %v4483 = vsel %vm4482, %v4474, %v4479
      %v4484 = vrsqrt.pop %v4443
      %v4485 = vmul.f32 %v4484, %v4443
      %v4486 = vmul.f32 %v4485, %v4484
      %v4487 = vmul.f32 0.5, %v4486
      %v4488 = vsub.f32 1.5, %v4487
      %v4489 = vmul.f32 %v4484, %v4488
      %vm4490 = vweird.f32 %v4443
      %vm4491 = vweird.f32 %v4484
      %vm4492 = vmor %vm4490, %vm4491
      %v4493 = vsel %vm4492, %v4484, %v4489
      %v4494 = vrsqrt.pop %v4444
      %v4495 = vmul.f32 %v4494, %v4444
      %v4496 = vmul.f32 %v4495, %v4494
      %v4497 = vmul.f32 0.5, %v4496
      %v4498 = vsub.f32 1.5, %v4497
      %v4499 = vmul.f32 %v4494, %v4498
      %vm4500 = vweird.f32 %v4444
      %vm4501 = vweird.f32 %v4494
      %vm4502 = vmor %vm4500, %vm4501
      %v4503 = vsel %vm4502, %v4494, %v4499
      %v4504 = vrsqrt.pop %v4445
      %v4505 = vmul.f32 %v4504, %v4445
      %v4506 = vmul.f32 %v4505, %v4504
      %v4507 = vmul.f32 0.5, %v4506
      %v4508 = vsub.f32 1.5, %v4507
      %v4509 = vmul.f32 %v4504, %v4508
      %vm4510 = vweird.f32 %v4445
      %vm4511 = vweird.f32 %v4504
      %vm4512 = vmor %vm4510, %vm4511
      %v4513 = vsel %vm4512, %v4504, %v4509
      %v4514 = vrsqrt.pop %v4446
      %v4515 = vmul.f32 %v4514, %v4446
      %v4516 = vmul.f32 %v4515, %v4514
      %v4517 = vmul.f32 0.5, %v4516
      %v4518 = vsub.f32 1.5, %v4517
      %v4519 = vmul.f32 %v4514, %v4518
      %vm4520 = vweird.f32 %v4446
      %vm4521 = vweird.f32 %v4514
      %vm4522 = vmor %vm4520, %vm4521
      %v4523 = vsel %vm4522, %v4514, %v4519
      %v4524 = vrsqrt.pop %v4447
      %v4525 = vmul.f32 %v4524, %v4447
      %v4526 = vmul.f32 %v4525, %v4524
      %v4527 = vmul.f32 0.5, %v4526
      %v4528 = vsub.f32 1.5, %v4527
      %v4529 = vmul.f32 %v4524, %v4528
      %vm4530 = vweird.f32 %v4447
      %vm4531 = vweird.f32 %v4524
      %vm4532 = vmor %vm4530, %vm4531
      %v4533 = vsel %vm4532, %v4524, %v4529
      %v4534 = vrsqrt.pop %v4448
      %v4535 = vmul.f32 %v4534, %v4448
      %v4536 = vmul.f32 %v4535, %v4534
      %v4537 = vmul.f32 0.5, %v4536
      %v4538 = vsub.f32 1.5, %v4537
      %v4539 = vmul.f32 %v4534, %v4538
      %vm4540 = vweird.f32 %v4448
      %vm4541 = vweird.f32 %v4534
      %vm4542 = vmor %vm4540, %vm4541
      %v4543 = vsel %vm4542, %v4534, %v4539
      %v4544 = vrsqrt.pop %v4449
      %v4545 = vmul.f32 %v4544, %v4449
      %v4546 = vmul.f32 %v4545, %v4544
      %v4547 = vmul.f32 0.5, %v4546
      %v4548 = vsub.f32 1.5, %v4547
      %v4549 = vmul.f32 %v4544, %v4548
      %vm4550 = vweird.f32 %v4449
      %vm4551 = vweird.f32 %v4544
      %vm4552 = vmor %vm4550, %vm4551
      %v4553 = vsel %vm4552, %v4544, %v4549
      %v4554 = vrsqrt.pop %v4450
      %v4555 = vmul.f32 %v4554, %v4450
      %v4556 = vmul.f32 %v4555, %v4554
      %v4557 = vmul.f32 0.5, %v4556
      %v4558 = vsub.f32 1.5, %v4557
      %v4559 = vmul.f32 %v4554, %v4558
      %vm4560 = vweird.f32 %v4450
      %vm4561 = vweird.f32 %v4554
      %vm4562 = vmor %vm4560, %vm4561
      %v4563 = vsel %vm4562, %v4554, %v4559
      %v4564 = vrsqrt.pop %v4451
      %v4565 = vmul.f32 %v4564, %v4451
      %v4566 = vmul.f32 %v4565, %v4564
      %v4567 = vmul.f32 0.5, %v4566
      %v4568 = vsub.f32 1.5, %v4567
      %v4569 = vmul.f32 %v4564, %v4568
      %vm4570 = vweird.f32 %v4451
      %vm4571 = vweird.f32 %v4564
      %vm4572 = vmor %vm4570, %vm4571
      %v4573 = vsel %vm4572, %v4564, %v4569
      %v4574 = vrsqrt.pop %v4452
      %v4575 = vmul.f32 %v4574, %v4452
      %v4576 = vmul.f32 %v4575, %v4574
      %v4577 = vmul.f32 0.5, %v4576
      %v4578 = vsub.f32 1.5, %v4577
      %v4579 = vmul.f32 %v4574, %v4578
      %vm4580 = vweird.f32 %v4452
      %vm4581 = vweird.f32 %v4574
      %vm4582 = vmor %vm4580, %vm4581
      %v4583 = vsel %vm4582, %v4574, %v4579
      %v4584 = vrsqrt.pop %v4453
      %v4585 = vmul.f32 %v4584, %v4453
      %v4586 = vmul.f32 %v4585, %v4584
      %v4587 = vmul.f32 0.5, %v4586
      %v4588 = vsub.f32 1.5, %v4587
      %v4589 = vmul.f32 %v4584, %v4588
      %vm4590 = vweird.f32 %v4453
      %vm4591 = vweird.f32 %v4584
      %vm4592 = vmor %vm4590, %vm4591
      %v4593 = vsel %vm4592, %v4584, %v4589
      %v4594 = vrsqrt.pop %v4454
      %v4595 = vmul.f32 %v4594, %v4454
      %v4596 = vmul.f32 %v4595, %v4594
      %v4597 = vmul.f32 0.5, %v4596
      %v4598 = vsub.f32 1.5, %v4597
      %v4599 = vmul.f32 %v4594, %v4598
      %vm4600 = vweird.f32 %v4454
      %vm4601 = vweird.f32 %v4594
      %vm4602 = vmor %vm4600, %vm4601
      %v4603 = vsel %vm4602, %v4594, %v4599
      %v4604 = vrsqrt.pop %v4455
      %v4605 = vmul.f32 %v4604, %v4455
      %v4606 = vmul.f32 %v4605, %v4604
      %v4607 = vmul.f32 0.5, %v4606
      %v4608 = vsub.f32 1.5, %v4607
      %v4609 = vmul.f32 %v4604, %v4608
      %vm4610 = vweird.f32 %v4455
      %vm4611 = vweird.f32 %v4604
      %vm4612 = vmor %vm4610, %vm4611
      %v4613 = vsel %vm4612, %v4604, %v4609
      %v4614 = vrsqrt.pop %v4456
      %v4615 = vmul.f32 %v4614, %v4456
      %v4616 = vmul.f32 %v4615, %v4614
      %v4617 = vmul.f32 0.5, %v4616
      %v4618 = vsub.f32 1.5, %v4617
      %v4619 = vmul.f32 %v4614, %v4618
      %vm4620 = vweird.f32 %v4456
      %vm4621 = vweird.f32 %v4614
      %vm4622 = vmor %vm4620, %vm4621
      %v4623 = vsel %vm4622, %v4614, %v4619
      %v4624 = vrsqrt.pop %v4457
      %v4625 = vmul.f32 %v4624, %v4457
      %v4626 = vmul.f32 %v4625, %v4624
      %v4627 = vmul.f32 0.5, %v4626
      %v4628 = vsub.f32 1.5, %v4627
      %v4629 = vmul.f32 %v4624, %v4628
      %vm4630 = vweird.f32 %v4457
      %vm4631 = vweird.f32 %v4624
      %vm4632 = vmor %vm4630, %vm4631
      %v4633 = vsel %vm4632, %v4624, %v4629
      %v4634 = vrsqrt.pop %v4458
      %v4635 = vmul.f32 %v4634, %v4458
      %v4636 = vmul.f32 %v4635, %v4634
      %v4637 = vmul.f32 0.5, %v4636
      %v4638 = vsub.f32 1.5, %v4637
      %v4639 = vmul.f32 %v4634, %v4638
      %vm4640 = vweird.f32 %v4458
      %vm4641 = vweird.f32 %v4634
      %vm4642 = vmor %vm4640, %vm4641
      %v4643 = vsel %vm4642, %v4634, %v4639
      %v4644 = vrsqrt.pop %v4459
      %v4645 = vmul.f32 %v4644, %v4459
      %v4646 = vmul.f32 %v4645, %v4644
      %v4647 = vmul.f32 0.5, %v4646
      %v4648 = vsub.f32 1.5, %v4647
      %v4649 = vmul.f32 %v4644, %v4648
      %vm4650 = vweird.f32 %v4459
      %vm4651 = vweird.f32 %v4644
      %vm4652 = vmor %vm4650, %vm4651
      %v4653 = vsel %vm4652, %v4644, %v4649
      %v4654 = vrsqrt.pop %v4460
      %v4655 = vmul.f32 %v4654, %v4460
      %v4656 = vmul.f32 %v4655, %v4654
      %v4657 = vmul.f32 0.5, %v4656
      %v4658 = vsub.f32 1.5, %v4657
      %v4659 = vmul.f32 %v4654, %v4658
      %vm4660 = vweird.f32 %v4460
      %vm4661 = vweird.f32 %v4654
      %vm4662 = vmor %vm4660, %vm4661
      %v4663 = vsel %vm4662, %v4654, %v4659
      %v4664 = vrsqrt.pop %v4461
      %v4665 = vmul.f32 %v4664, %v4461
      %v4666 = vmul.f32 %v4665, %v4664
      %v4667 = vmul.f32 0.5, %v4666
      %v4668 = vsub.f32 1.5, %v4667
      %v4669 = vmul.f32 %v4664, %v4668
      %vm4670 = vweird.f32 %v4461
      %vm4671 = vweird.f32 %v4664
      %vm4672 = vmor %vm4670, %vm4671
      %v4673 = vsel %vm4672, %v4664, %v4669
      %v4674 = vrsqrt.pop %v4462
      %v4675 = vmul.f32 %v4674, %v4462
      %v4676 = vmul.f32 %v4675, %v4674
      %v4677 = vmul.f32 0.5, %v4676
      %v4678 = vsub.f32 1.5, %v4677
      %v4679 = vmul.f32 %v4674, %v4678
      %vm4680 = vweird.f32 %v4462
      %vm4681 = vweird.f32 %v4674
      %vm4682 = vmor %vm4680, %vm4681
      %v4683 = vsel %vm4682, %v4674, %v4679
      %v4684 = vrsqrt.pop %v4463
      %v4685 = vmul.f32 %v4684, %v4463
      %v4686 = vmul.f32 %v4685, %v4684
      %v4687 = vmul.f32 0.5, %v4686
      %v4688 = vsub.f32 1.5, %v4687
      %v4689 = vmul.f32 %v4684, %v4688
      %vm4690 = vweird.f32 %v4463
      %vm4691 = vweird.f32 %v4684
      %vm4692 = vmor %vm4690, %vm4691
      %v4693 = vsel %vm4692, %v4684, %v4689
      %v4694 = vrsqrt.pop %v4464
      %v4695 = vmul.f32 %v4694, %v4464
      %v4696 = vmul.f32 %v4695, %v4694
      %v4697 = vmul.f32 0.5, %v4696
      %v4698 = vsub.f32 1.5, %v4697
      %v4699 = vmul.f32 %v4694, %v4698
      %vm4700 = vweird.f32 %v4464
      %vm4701 = vweird.f32 %v4694
      %vm4702 = vmor %vm4700, %vm4701
      %v4703 = vsel %vm4702, %v4694, %v4699
      %v4704 = vrsqrt.pop %v4465
      %v4705 = vmul.f32 %v4704, %v4465
      %v4706 = vmul.f32 %v4705, %v4704
      %v4707 = vmul.f32 0.5, %v4706
      %v4708 = vsub.f32 1.5, %v4707
      %v4709 = vmul.f32 %v4704, %v4708
      %vm4710 = vweird.f32 %v4465
      %vm4711 = vweird.f32 %v4704
      %vm4712 = vmor %vm4710, %vm4711
      %v4713 = vsel %vm4712, %v4704, %v4709
      %v4714 = vrsqrt.pop %v4466
      %v4715 = vmul.f32 %v4714, %v4466
      %v4716 = vmul.f32 %v4715, %v4714
      %v4717 = vmul.f32 0.5, %v4716
      %v4718 = vsub.f32 1.5, %v4717
      %v4719 = vmul.f32 %v4714, %v4718
      %vm4720 = vweird.f32 %v4466
      %vm4721 = vweird.f32 %v4714
      %vm4722 = vmor %vm4720, %vm4721
      %v4723 = vsel %vm4722, %v4714, %v4719
      %v4724 = vrsqrt.pop %v4467
      %v4725 = vmul.f32 %v4724, %v4467
      %v4726 = vmul.f32 %v4725, %v4724
      %v4727 = vmul.f32 0.5, %v4726
      %v4728 = vsub.f32 1.5, %v4727
      %v4729 = vmul.f32 %v4724, %v4728
      %vm4730 = vweird.f32 %v4467
      %vm4731 = vweird.f32 %v4724
      %vm4732 = vmor %vm4730, %vm4731
      %v4733 = vsel %vm4732, %v4724, %v4729
      %v4734 = vrsqrt.pop %v4468
      %v4735 = vmul.f32 %v4734, %v4468
      %v4736 = vmul.f32 %v4735, %v4734
      %v4737 = vmul.f32 0.5, %v4736
      %v4738 = vsub.f32 1.5, %v4737
      %v4739 = vmul.f32 %v4734, %v4738
      %vm4740 = vweird.f32 %v4468
      %vm4741 = vweird.f32 %v4734
      %vm4742 = vmor %vm4740, %vm4741
      %v4743 = vsel %vm4742, %v4734, %v4739
      %v4744 = vrsqrt.pop %v4469
      %v4745 = vmul.f32 %v4744, %v4469
      %v4746 = vmul.f32 %v4745, %v4744
      %v4747 = vmul.f32 0.5, %v4746
      %v4748 = vsub.f32 1.5, %v4747
      %v4749 = vmul.f32 %v4744, %v4748
      %vm4750 = vweird.f32 %v4469
      %vm4751 = vweird.f32 %v4744
      %vm4752 = vmor %vm4750, %vm4751
      %v4753 = vsel %vm4752, %v4744, %v4749
      %v4754 = vrsqrt.pop %v4470
      %v4755 = vmul.f32 %v4754, %v4470
      %v4756 = vmul.f32 %v4755, %v4754
      %v4757 = vmul.f32 0.5, %v4756
      %v4758 = vsub.f32 1.5, %v4757
      %v4759 = vmul.f32 %v4754, %v4758
      %vm4760 = vweird.f32 %v4470
      %vm4761 = vweird.f32 %v4754
      %vm4762 = vmor %vm4760, %vm4761
      %v4763 = vsel %vm4762, %v4754, %v4759
      %v4764 = vrsqrt.pop %v4471
      %v4765 = vmul.f32 %v4764, %v4471
      %v4766 = vmul.f32 %v4765, %v4764
      %v4767 = vmul.f32 0.5, %v4766
      %v4768 = vsub.f32 1.5, %v4767
      %v4769 = vmul.f32 %v4764, %v4768
      %vm4770 = vweird.f32 %v4471
      %vm4771 = vweird.f32 %v4764
      %vm4772 = vmor %vm4770, %vm4771
      %v4773 = vsel %vm4772, %v4764, %v4769
      %v4774 = vrsqrt.pop %v4472
      %v4775 = vmul.f32 %v4774, %v4472
      %v4776 = vmul.f32 %v4775, %v4774
      %v4777 = vmul.f32 0.5, %v4776
      %v4778 = vsub.f32 1.5, %v4777
      %v4779 = vmul.f32 %v4774, %v4778
      %vm4780 = vweird.f32 %v4472
      %vm4781 = vweird.f32 %v4774
      %vm4782 = vmor %vm4780, %vm4781
      %v4783 = vsel %vm4782, %v4774, %v4779
      %v4784 = vrsqrt.pop %v4473
      %v4785 = vmul.f32 %v4784, %v4473
      %v4786 = vmul.f32 %v4785, %v4784
      %v4787 = vmul.f32 0.5, %v4786
      %v4788 = vsub.f32 1.5, %v4787
      %v4789 = vmul.f32 %v4784, %v4788
      %vm4790 = vweird.f32 %v4473
      %vm4791 = vweird.f32 %v4784
      %vm4792 = vmor %vm4790, %vm4791
      %v4793 = vsel %vm4792, %v4784, %v4789
      %4794 = vrot.lane.b32.xlu0 %v494, 125
      %v4795 = vpop.permute.xlu0 %4794
      %s4796 = vtos %v4795
      %v4797 = vstv %s4796
      %v4798 = vmul.f32 %v4483, %v4797
      %v4799 = vmul.f32 %v4493, %v4797
      %v4800 = vmul.f32 %v4503, %v4797
      %v4801 = vmul.f32 %v4513, %v4797
      %v4802 = vmul.f32 %v4523, %v4797
      %v4803 = vmul.f32 %v4533, %v4797
      %v4804 = vmul.f32 %v4543, %v4797
      %v4805 = vmul.f32 %v4553, %v4797
      %v4806 = vmul.f32 %v4563, %v4797
      %v4807 = vmul.f32 %v4573, %v4797
      %v4808 = vmul.f32 %v4583, %v4797
      %v4809 = vmul.f32 %v4593, %v4797
      %v4810 = vmul.f32 %v4603, %v4797
      %v4811 = vmul.f32 %v4613, %v4797
      %v4812 = vmul.f32 %v4623, %v4797
      %v4813 = vmul.f32 %v4633, %v4797
      %v4814 = vmul.f32 %v4643, %v4797
      %v4815 = vmul.f32 %v4653, %v4797
      %v4816 = vmul.f32 %v4663, %v4797
      %v4817 = vmul.f32 %v4673, %v4797
      %v4818 = vmul.f32 %v4683, %v4797
      %v4819 = vmul.f32 %v4693, %v4797
      %v4820 = vmul.f32 %v4703, %v4797
      %v4821 = vmul.f32 %v4713, %v4797
      %v4822 = vmul.f32 %v4723, %v4797
      %v4823 = vmul.f32 %v4733, %v4797
      %v4824 = vmul.f32 %v4743, %v4797
      %v4825 = vmul.f32 %v4753, %v4797
      %v4826 = vmul.f32 %v4763, %v4797
      %v4827 = vmul.f32 %v4773, %v4797
      %v4828 = vmul.f32 %v4783, %v4797
      %v4829 = vmul.f32 %v4793, %v4797
      %v4830 = vmul.f32 %v415, %v4798
      %v4831 = vmul.f32 %v417, %v4799
      %v4832 = vmul.f32 %v420, %v4800
      %v4833 = vmul.f32 %v422, %v4801
      %v4834 = vmul.f32 %v425, %v4802
      %v4835 = vmul.f32 %v427, %v4803
      %v4836 = vmul.f32 %v430, %v4804
      %v4837 = vmul.f32 %v432, %v4805
      %v4838 = vmul.f32 %v435, %v4806
      %v4839 = vmul.f32 %v437, %v4807
      %v4840 = vmul.f32 %v440, %v4808
      %v4841 = vmul.f32 %v442, %v4809
      %v4842 = vmul.f32 %v445, %v4810
      %v4843 = vmul.f32 %v447, %v4811
      %v4844 = vmul.f32 %v450, %v4812
      %v4845 = vmul.f32 %v452, %v4813
      %v4846 = vmul.f32 %v455, %v4814
      %v4847 = vmul.f32 %v457, %v4815
      %v4848 = vmul.f32 %v460, %v4816
      %v4849 = vmul.f32 %v462, %v4817
      %v4850 = vmul.f32 %v465, %v4818
      %v4851 = vmul.f32 %v467, %v4819
      %v4852 = vmul.f32 %v470, %v4820
      %v4853 = vmul.f32 %v472, %v4821
      %v4854 = vmul.f32 %v475, %v4822
      %v4855 = vmul.f32 %v477, %v4823
      %v4856 = vmul.f32 %v480, %v4824
      %v4857 = vmul.f32 %v482, %v4825
      %v4858 = vmul.f32 %v485, %v4826
      %v4859 = vmul.f32 %v487, %v4827
      %v4860 = vmul.f32 %v490, %v4828
      %v4861 = vmul.f32 %v492, %v4829
      %4862 = vrot.lane.b32.xlu0 %v495, 72
      %v4863 = vpop.permute.xlu0 %4862
      %4864 = vrot.lane.b32.xlu0 %v496, 72
      %v4865 = vpop.permute.xlu0 %4864
      %4866 = vrot.lane.b32.xlu0 %v497, 72
      %v4867 = vpop.permute.xlu0 %4866
      %4868 = vrot.lane.b32.xlu0 %v498, 72
      %v4869 = vpop.permute.xlu0 %4868
      %4870 = vrot.lane.b32.xlu0 %v499, 72
      %v4871 = vpop.permute.xlu0 %4870
      %4872 = vrot.lane.b32.xlu0 %v500, 72
      %v4873 = vpop.permute.xlu0 %4872
      %4874 = vrot.lane.b32.xlu0 %v501, 72
      %v4875 = vpop.permute.xlu0 %4874
      %4876 = vrot.lane.b32.xlu0 %v502, 72
      %v4877 = vpop.permute.xlu0 %4876
      %4878 = vrot.lane.b32.xlu0 %v503, 72
      %v4879 = vpop.permute.xlu0 %4878
      %4880 = vrot.lane.b32.xlu0 %v504, 72
      %v4881 = vpop.permute.xlu0 %4880
      %4882 = vrot.lane.b32.xlu0 %v505, 72
      %v4883 = vpop.permute.xlu0 %4882
      %4884 = vrot.lane.b32.xlu0 %v506, 72
      %v4885 = vpop.permute.xlu0 %4884
      %4886 = vrot.lane.b32.xlu0 %v507, 72
      %v4887 = vpop.permute.xlu0 %4886
      %4888 = vrot.lane.b32.xlu0 %v508, 72
      %v4889 = vpop.permute.xlu0 %4888
      %4890 = vrot.lane.b32.xlu0 %v509, 72
      %v4891 = vpop.permute.xlu0 %4890
      %4892 = vrot.lane.b32.xlu0 %v510, 72
      %v4893 = vpop.permute.xlu0 %4892
      %4894 = vrot.lane.b32.xlu0 %v511, 72
      %v4895 = vpop.permute.xlu0 %4894
      %4896 = vrot.lane.b32.xlu0 %v512, 72
      %v4897 = vpop.permute.xlu0 %4896
      %4898 = vrot.lane.b32.xlu0 %v513, 72
      %v4899 = vpop.permute.xlu0 %4898
      %4900 = vrot.lane.b32.xlu0 %v514, 72
      %v4901 = vpop.permute.xlu0 %4900
      %4902 = vrot.lane.b32.xlu0 %v515, 72
      %v4903 = vpop.permute.xlu0 %4902
      %4904 = vrot.lane.b32.xlu0 %v516, 72
      %v4905 = vpop.permute.xlu0 %4904
      %4906 = vrot.lane.b32.xlu0 %v517, 72
      %v4907 = vpop.permute.xlu0 %4906
      %4908 = vrot.lane.b32.xlu0 %v518, 72
      %v4909 = vpop.permute.xlu0 %4908
      %4910 = vrot.lane.b32.xlu0 %v519, 72
      %v4911 = vpop.permute.xlu0 %4910
      %4912 = vrot.lane.b32.xlu0 %v520, 72
      %v4913 = vpop.permute.xlu0 %4912
      %4914 = vrot.lane.b32.xlu0 %v521, 72
      %v4915 = vpop.permute.xlu0 %4914
      %4916 = vrot.lane.b32.xlu0 %v522, 72
      %v4917 = vpop.permute.xlu0 %4916
      %4918 = vrot.lane.b32.xlu0 %v523, 72
      %v4919 = vpop.permute.xlu0 %4918
      %4920 = vrot.lane.b32.xlu0 %v524, 72
      %v4921 = vpop.permute.xlu0 %4920
      %4922 = vrot.lane.b32.xlu0 %v525, 72
      %v4923 = vpop.permute.xlu0 %4922
      %4924 = vrot.lane.b32.xlu0 %v526, 72
      %v4925 = vpop.permute.xlu0 %4924
      %v4958 = vsel %vm527, %v4863, 0.0
      %4959 = vadd.xlane.f32.xlu0 %v4958
      %v4960 = vpop.xlane.xlu0 %4959
      %v4961 = vsel %vm527, %v4865, 0.0
      %4962 = vadd.xlane.f32.xlu0 %v4961
      %v4963 = vpop.xlane.xlu0 %4962
      %v4964 = vsel %vm527, %v4867, 0.0
      %4965 = vadd.xlane.f32.xlu0 %v4964
      %v4966 = vpop.xlane.xlu0 %4965
      %v4967 = vsel %vm527, %v4869, 0.0
      %4968 = vadd.xlane.f32.xlu0 %v4967
      %v4969 = vpop.xlane.xlu0 %4968
      %v4970 = vsel %vm527, %v4871, 0.0
      %4971 = vadd.xlane.f32.xlu0 %v4970
      %v4972 = vpop.xlane.xlu0 %4971
      %v4973 = vsel %vm527, %v4873, 0.0
      %4974 = vadd.xlane.f32.xlu0 %v4973
      %v4975 = vpop.xlane.xlu0 %4974
      %v4976 = vsel %vm527, %v4875, 0.0
      %4977 = vadd.xlane.f32.xlu0 %v4976
      %v4978 = vpop.xlane.xlu0 %4977
      %v4979 = vsel %vm527, %v4877, 0.0
      %4980 = vadd.xlane.f32.xlu0 %v4979
      %v4981 = vpop.xlane.xlu0 %4980
      %v4982 = vsel %vm527, %v4879, 0.0
      %4983 = vadd.xlane.f32.xlu0 %v4982
      %v4984 = vpop.xlane.xlu0 %4983
      %v4985 = vsel %vm527, %v4881, 0.0
      %4986 = vadd.xlane.f32.xlu0 %v4985
      %v4987 = vpop.xlane.xlu0 %4986
      %v4988 = vsel %vm527, %v4883, 0.0
      %4989 = vadd.xlane.f32.xlu0 %v4988
      %v4990 = vpop.xlane.xlu0 %4989
      %v4991 = vsel %vm527, %v4885, 0.0
      %4992 = vadd.xlane.f32.xlu0 %v4991
      %v4993 = vpop.xlane.xlu0 %4992
      %v4994 = vsel %vm527, %v4887, 0.0
      %4995 = vadd.xlane.f32.xlu0 %v4994
      %v4996 = vpop.xlane.xlu0 %4995
      %v4997 = vsel %vm527, %v4889, 0.0
      %4998 = vadd.xlane.f32.xlu0 %v4997
      %v4999 = vpop.xlane.xlu0 %4998
      %v5000 = vsel %vm527, %v4891, 0.0
      %5001 = vadd.xlane.f32.xlu0 %v5000
      %v5002 = vpop.xlane.xlu0 %5001
      %v5003 = vsel %vm527, %v4893, 0.0
      %5004 = vadd.xlane.f32.xlu0 %v5003
      %v5005 = vpop.xlane.xlu0 %5004
      %v5006 = vsel %vm527, %v4895, 0.0
      %5007 = vadd.xlane.f32.xlu0 %v5006
      %v5008 = vpop.xlane.xlu0 %5007
      %v5009 = vsel %vm527, %v4897, 0.0
      %5010 = vadd.xlane.f32.xlu0 %v5009
      %v5011 = vpop.xlane.xlu0 %5010
      %v5012 = vsel %vm527, %v4899, 0.0
      %5013 = vadd.xlane.f32.xlu0 %v5012
      %v5014 = vpop.xlane.xlu0 %5013
      %v5015 = vsel %vm527, %v4901, 0.0
      %5016 = vadd.xlane.f32.xlu0 %v5015
      %v5017 = vpop.xlane.xlu0 %5016
      %v5018 = vsel %vm527, %v4903, 0.0
      %5019 = vadd.xlane.f32.xlu0 %v5018
      %v5020 = vpop.xlane.xlu0 %5019
      %v5021 = vsel %vm527, %v4905, 0.0
      %5022 = vadd.xlane.f32.xlu0 %v5021
      %v5023 = vpop.xlane.xlu0 %5022
      %v5024 = vsel %vm527, %v4907, 0.0
      %5025 = vadd.xlane.f32.xlu0 %v5024
      %v5026 = vpop.xlane.xlu0 %5025
      %v5027 = vsel %vm527, %v4909, 0.0
      %5028 = vadd.xlane.f32.xlu0 %v5027
      %v5029 = vpop.xlane.xlu0 %5028
      %v5030 = vsel %vm527, %v4911, 0.0
      %5031 = vadd.xlane.f32.xlu0 %v5030
      %v5032 = vpop.xlane.xlu0 %5031
      %v5033 = vsel %vm527, %v4913, 0.0
      %5034 = vadd.xlane.f32.xlu0 %v5033
      %v5035 = vpop.xlane.xlu0 %5034
      %v5036 = vsel %vm527, %v4915, 0.0
      %5037 = vadd.xlane.f32.xlu0 %v5036
      %v5038 = vpop.xlane.xlu0 %5037
      %v5039 = vsel %vm527, %v4917, 0.0
      %5040 = vadd.xlane.f32.xlu0 %v5039
      %v5041 = vpop.xlane.xlu0 %5040
      %v5042 = vsel %vm527, %v4919, 0.0
      %5043 = vadd.xlane.f32.xlu0 %v5042
      %v5044 = vpop.xlane.xlu0 %5043
      %v5045 = vsel %vm527, %v4921, 0.0
      %5046 = vadd.xlane.f32.xlu0 %v5045
      %v5047 = vpop.xlane.xlu0 %5046
      %v5048 = vsel %vm527, %v4923, 0.0
      %5049 = vadd.xlane.f32.xlu0 %v5048
      %v5050 = vpop.xlane.xlu0 %5049
      %v5051 = vsel %vm527, %v4925, 0.0
      %5052 = vadd.xlane.f32.xlu0 %v5051
      %v5053 = vpop.xlane.xlu0 %5052
      %v5054 = vmax.f32 %v4960, 1e-24
      %v5055 = vmax.f32 %v4963, 1e-24
      %v5056 = vmax.f32 %v4966, 1e-24
      %v5057 = vmax.f32 %v4969, 1e-24
      %v5058 = vmax.f32 %v4972, 1e-24
      %v5059 = vmax.f32 %v4975, 1e-24
      %v5060 = vmax.f32 %v4978, 1e-24
      %v5061 = vmax.f32 %v4981, 1e-24
      %v5062 = vmax.f32 %v4984, 1e-24
      %v5063 = vmax.f32 %v4987, 1e-24
      %v5064 = vmax.f32 %v4990, 1e-24
      %v5065 = vmax.f32 %v4993, 1e-24
      %v5066 = vmax.f32 %v4996, 1e-24
      %v5067 = vmax.f32 %v4999, 1e-24
      %v5068 = vmax.f32 %v5002, 1e-24
      %v5069 = vmax.f32 %v5005, 1e-24
      %v5070 = vmax.f32 %v5008, 1e-24
      %v5071 = vmax.f32 %v5011, 1e-24
      %v5072 = vmax.f32 %v5014, 1e-24
      %v5073 = vmax.f32 %v5017, 1e-24
      %v5074 = vmax.f32 %v5020, 1e-24
      %v5075 = vmax.f32 %v5023, 1e-24
      %v5076 = vmax.f32 %v5026, 1e-24
      %v5077 = vmax.f32 %v5029, 1e-24
      %v5078 = vmax.f32 %v5032, 1e-24
      %v5079 = vmax.f32 %v5035, 1e-24
      %v5080 = vmax.f32 %v5038, 1e-24
      %v5081 = vmax.f32 %v5041, 1e-24
      %v5082 = vmax.f32 %v5044, 1e-24
      %v5083 = vmax.f32 %v5047, 1e-24
      %v5084 = vmax.f32 %v5050, 1e-24
      %v5085 = vmax.f32 %v5053, 1e-24
      %v5086 = vrsqrt.pop %v5054
      %v5087 = vmul.f32 %v5086, %v5054
      %v5088 = vmul.f32 %v5087, %v5086
      %v5089 = vmul.f32 0.5, %v5088
      %v5090 = vsub.f32 1.5, %v5089
      %v5091 = vmul.f32 %v5086, %v5090
      %vm5092 = vweird.f32 %v5054
      %vm5093 = vweird.f32 %v5086
      %vm5094 = vmor %vm5092, %vm5093
      %v5095 = vsel %vm5094, %v5086, %v5091
      %v5096 = vrsqrt.pop %v5055
      %v5097 = vmul.f32 %v5096, %v5055
      %v5098 = vmul.f32 %v5097, %v5096
      %v5099 = vmul.f32 0.5, %v5098
      %v5100 = vsub.f32 1.5, %v5099
      %v5101 = vmul.f32 %v5096, %v5100
      %vm5102 = vweird.f32 %v5055
      %vm5103 = vweird.f32 %v5096
      %vm5104 = vmor %vm5102, %vm5103
      %v5105 = vsel %vm5104, %v5096, %v5101
      %v5106 = vrsqrt.pop %v5056
      %v5107 = vmul.f32 %v5106, %v5056
      %v5108 = vmul.f32 %v5107, %v5106
      %v5109 = vmul.f32 0.5, %v5108
      %v5110 = vsub.f32 1.5, %v5109
      %v5111 = vmul.f32 %v5106, %v5110
      %vm5112 = vweird.f32 %v5056
      %vm5113 = vweird.f32 %v5106
      %vm5114 = vmor %vm5112, %vm5113
      %v5115 = vsel %vm5114, %v5106, %v5111
      %v5116 = vrsqrt.pop %v5057
      %v5117 = vmul.f32 %v5116, %v5057
      %v5118 = vmul.f32 %v5117, %v5116
      %v5119 = vmul.f32 0.5, %v5118
      %v5120 = vsub.f32 1.5, %v5119
      %v5121 = vmul.f32 %v5116, %v5120
      %vm5122 = vweird.f32 %v5057
      %vm5123 = vweird.f32 %v5116
      %vm5124 = vmor %vm5122, %vm5123
      %v5125 = vsel %vm5124, %v5116, %v5121
      %v5126 = vrsqrt.pop %v5058
      %v5127 = vmul.f32 %v5126, %v5058
      %v5128 = vmul.f32 %v5127, %v5126
      %v5129 = vmul.f32 0.5, %v5128
      %v5130 = vsub.f32 1.5, %v5129
      %v5131 = vmul.f32 %v5126, %v5130
      %vm5132 = vweird.f32 %v5058
      %vm5133 = vweird.f32 %v5126
      %vm5134 = vmor %vm5132, %vm5133
      %v5135 = vsel %vm5134, %v5126, %v5131
      %v5136 = vrsqrt.pop %v5059
      %v5137 = vmul.f32 %v5136, %v5059
      %v5138 = vmul.f32 %v5137, %v5136
      %v5139 = vmul.f32 0.5, %v5138
      %v5140 = vsub.f32 1.5, %v5139
      %v5141 = vmul.f32 %v5136, %v5140
      %vm5142 = vweird.f32 %v5059
      %vm5143 = vweird.f32 %v5136
      %vm5144 = vmor %vm5142, %vm5143
      %v5145 = vsel %vm5144, %v5136, %v5141
      %v5146 = vrsqrt.pop %v5060
      %v5147 = vmul.f32 %v5146, %v5060
      %v5148 = vmul.f32 %v5147, %v5146
      %v5149 = vmul.f32 0.5, %v5148
      %v5150 = vsub.f32 1.5, %v5149
      %v5151 = vmul.f32 %v5146, %v5150
      %vm5152 = vweird.f32 %v5060
      %vm5153 = vweird.f32 %v5146
      %vm5154 = vmor %vm5152, %vm5153
      %v5155 = vsel %vm5154, %v5146, %v5151
      %v5156 = vrsqrt.pop %v5061
      %v5157 = vmul.f32 %v5156, %v5061
      %v5158 = vmul.f32 %v5157, %v5156
      %v5159 = vmul.f32 0.5, %v5158
      %v5160 = vsub.f32 1.5, %v5159
      %v5161 = vmul.f32 %v5156, %v5160
      %vm5162 = vweird.f32 %v5061
      %vm5163 = vweird.f32 %v5156
      %vm5164 = vmor %vm5162, %vm5163
      %v5165 = vsel %vm5164, %v5156, %v5161
      %v5166 = vrsqrt.pop %v5062
      %v5167 = vmul.f32 %v5166, %v5062
      %v5168 = vmul.f32 %v5167, %v5166
      %v5169 = vmul.f32 0.5, %v5168
      %v5170 = vsub.f32 1.5, %v5169
      %v5171 = vmul.f32 %v5166, %v5170
      %vm5172 = vweird.f32 %v5062
      %vm5173 = vweird.f32 %v5166
      %vm5174 = vmor %vm5172, %vm5173
      %v5175 = vsel %vm5174, %v5166, %v5171
      %v5176 = vrsqrt.pop %v5063
      %v5177 = vmul.f32 %v5176, %v5063
      %v5178 = vmul.f32 %v5177, %v5176
      %v5179 = vmul.f32 0.5, %v5178
      %v5180 = vsub.f32 1.5, %v5179
      %v5181 = vmul.f32 %v5176, %v5180
      %vm5182 = vweird.f32 %v5063
      %vm5183 = vweird.f32 %v5176
      %vm5184 = vmor %vm5182, %vm5183
      %v5185 = vsel %vm5184, %v5176, %v5181
      %v5186 = vrsqrt.pop %v5064
      %v5187 = vmul.f32 %v5186, %v5064
      %v5188 = vmul.f32 %v5187, %v5186
      %v5189 = vmul.f32 0.5, %v5188
      %v5190 = vsub.f32 1.5, %v5189
      %v5191 = vmul.f32 %v5186, %v5190
      %vm5192 = vweird.f32 %v5064
      %vm5193 = vweird.f32 %v5186
      %vm5194 = vmor %vm5192, %vm5193
      %v5195 = vsel %vm5194, %v5186, %v5191
      %v5196 = vrsqrt.pop %v5065
      %v5197 = vmul.f32 %v5196, %v5065
      %v5198 = vmul.f32 %v5197, %v5196
      %v5199 = vmul.f32 0.5, %v5198
      %v5200 = vsub.f32 1.5, %v5199
      %v5201 = vmul.f32 %v5196, %v5200
      %vm5202 = vweird.f32 %v5065
      %vm5203 = vweird.f32 %v5196
      %vm5204 = vmor %vm5202, %vm5203
      %v5205 = vsel %vm5204, %v5196, %v5201
      %v5206 = vrsqrt.pop %v5066
      %v5207 = vmul.f32 %v5206, %v5066
      %v5208 = vmul.f32 %v5207, %v5206
      %v5209 = vmul.f32 0.5, %v5208
      %v5210 = vsub.f32 1.5, %v5209
      %v5211 = vmul.f32 %v5206, %v5210
      %vm5212 = vweird.f32 %v5066
      %vm5213 = vweird.f32 %v5206
      %vm5214 = vmor %vm5212, %vm5213
      %v5215 = vsel %vm5214, %v5206, %v5211
      %v5216 = vrsqrt.pop %v5067
      %v5217 = vmul.f32 %v5216, %v5067
      %v5218 = vmul.f32 %v5217, %v5216
      %v5219 = vmul.f32 0.5, %v5218
      %v5220 = vsub.f32 1.5, %v5219
      %v5221 = vmul.f32 %v5216, %v5220
      %vm5222 = vweird.f32 %v5067
      %vm5223 = vweird.f32 %v5216
      %vm5224 = vmor %vm5222, %vm5223
      %v5225 = vsel %vm5224, %v5216, %v5221
      %v5226 = vrsqrt.pop %v5068
      %v5227 = vmul.f32 %v5226, %v5068
      %v5228 = vmul.f32 %v5227, %v5226
      %v5229 = vmul.f32 0.5, %v5228
      %v5230 = vsub.f32 1.5, %v5229
      %v5231 = vmul.f32 %v5226, %v5230
      %vm5232 = vweird.f32 %v5068
      %vm5233 = vweird.f32 %v5226
      %vm5234 = vmor %vm5232, %vm5233
      %v5235 = vsel %vm5234, %v5226, %v5231
      %v5236 = vrsqrt.pop %v5069
      %v5237 = vmul.f32 %v5236, %v5069
      %v5238 = vmul.f32 %v5237, %v5236
      %v5239 = vmul.f32 0.5, %v5238
      %v5240 = vsub.f32 1.5, %v5239
      %v5241 = vmul.f32 %v5236, %v5240
      %vm5242 = vweird.f32 %v5069
      %vm5243 = vweird.f32 %v5236
      %vm5244 = vmor %vm5242, %vm5243
      %v5245 = vsel %vm5244, %v5236, %v5241
      %v5246 = vrsqrt.pop %v5070
      %v5247 = vmul.f32 %v5246, %v5070
      %v5248 = vmul.f32 %v5247, %v5246
      %v5249 = vmul.f32 0.5, %v5248
      %v5250 = vsub.f32 1.5, %v5249
      %v5251 = vmul.f32 %v5246, %v5250
      %vm5252 = vweird.f32 %v5070
      %vm5253 = vweird.f32 %v5246
      %vm5254 = vmor %vm5252, %vm5253
      %v5255 = vsel %vm5254, %v5246, %v5251
      %v5256 = vrsqrt.pop %v5071
      %v5257 = vmul.f32 %v5256, %v5071
      %v5258 = vmul.f32 %v5257, %v5256
      %v5259 = vmul.f32 0.5, %v5258
      %v5260 = vsub.f32 1.5, %v5259
      %v5261 = vmul.f32 %v5256, %v5260
      %vm5262 = vweird.f32 %v5071
      %vm5263 = vweird.f32 %v5256
      %vm5264 = vmor %vm5262, %vm5263
      %v5265 = vsel %vm5264, %v5256, %v5261
      %v5266 = vrsqrt.pop %v5072
      %v5267 = vmul.f32 %v5266, %v5072
      %v5268 = vmul.f32 %v5267, %v5266
      %v5269 = vmul.f32 0.5, %v5268
      %v5270 = vsub.f32 1.5, %v5269
      %v5271 = vmul.f32 %v5266, %v5270
      %vm5272 = vweird.f32 %v5072
      %vm5273 = vweird.f32 %v5266
      %vm5274 = vmor %vm5272, %vm5273
      %v5275 = vsel %vm5274, %v5266, %v5271
      %v5276 = vrsqrt.pop %v5073
      %v5277 = vmul.f32 %v5276, %v5073
      %v5278 = vmul.f32 %v5277, %v5276
      %v5279 = vmul.f32 0.5, %v5278
      %v5280 = vsub.f32 1.5, %v5279
      %v5281 = vmul.f32 %v5276, %v5280
      %vm5282 = vweird.f32 %v5073
      %vm5283 = vweird.f32 %v5276
      %vm5284 = vmor %vm5282, %vm5283
      %v5285 = vsel %vm5284, %v5276, %v5281
      %v5286 = vrsqrt.pop %v5074
      %v5287 = vmul.f32 %v5286, %v5074
      %v5288 = vmul.f32 %v5287, %v5286
      %v5289 = vmul.f32 0.5, %v5288
      %v5290 = vsub.f32 1.5, %v5289
      %v5291 = vmul.f32 %v5286, %v5290
      %vm5292 = vweird.f32 %v5074
      %vm5293 = vweird.f32 %v5286
      %vm5294 = vmor %vm5292, %vm5293
      %v5295 = vsel %vm5294, %v5286, %v5291
      %v5296 = vrsqrt.pop %v5075
      %v5297 = vmul.f32 %v5296, %v5075
      %v5298 = vmul.f32 %v5297, %v5296
      %v5299 = vmul.f32 0.5, %v5298
      %v5300 = vsub.f32 1.5, %v5299
      %v5301 = vmul.f32 %v5296, %v5300
      %vm5302 = vweird.f32 %v5075
      %vm5303 = vweird.f32 %v5296
      %vm5304 = vmor %vm5302, %vm5303
      %v5305 = vsel %vm5304, %v5296, %v5301
      %v5306 = vrsqrt.pop %v5076
      %v5307 = vmul.f32 %v5306, %v5076
      %v5308 = vmul.f32 %v5307, %v5306
      %v5309 = vmul.f32 0.5, %v5308
      %v5310 = vsub.f32 1.5, %v5309
      %v5311 = vmul.f32 %v5306, %v5310
      %vm5312 = vweird.f32 %v5076
      %vm5313 = vweird.f32 %v5306
      %vm5314 = vmor %vm5312, %vm5313
      %v5315 = vsel %vm5314, %v5306, %v5311
      %v5316 = vrsqrt.pop %v5077
      %v5317 = vmul.f32 %v5316, %v5077
      %v5318 = vmul.f32 %v5317, %v5316
      %v5319 = vmul.f32 0.5, %v5318
      %v5320 = vsub.f32 1.5, %v5319
      %v5321 = vmul.f32 %v5316, %v5320
      %vm5322 = vweird.f32 %v5077
      %vm5323 = vweird.f32 %v5316
      %vm5324 = vmor %vm5322, %vm5323
      %v5325 = vsel %vm5324, %v5316, %v5321
      %v5326 = vrsqrt.pop %v5078
      %v5327 = vmul.f32 %v5326, %v5078
      %v5328 = vmul.f32 %v5327, %v5326
      %v5329 = vmul.f32 0.5, %v5328
      %v5330 = vsub.f32 1.5, %v5329
      %v5331 = vmul.f32 %v5326, %v5330
      %vm5332 = vweird.f32 %v5078
      %vm5333 = vweird.f32 %v5326
      %vm5334 = vmor %vm5332, %vm5333
      %v5335 = vsel %vm5334, %v5326, %v5331
      %v5336 = vrsqrt.pop %v5079
      %v5337 = vmul.f32 %v5336, %v5079
      %v5338 = vmul.f32 %v5337, %v5336
      %v5339 = vmul.f32 0.5, %v5338
      %v5340 = vsub.f32 1.5, %v5339
      %v5341 = vmul.f32 %v5336, %v5340
      %vm5342 = vweird.f32 %v5079
      %vm5343 = vweird.f32 %v5336
      %vm5344 = vmor %vm5342, %vm5343
      %v5345 = vsel %vm5344, %v5336, %v5341
      %v5346 = vrsqrt.pop %v5080
      %v5347 = vmul.f32 %v5346, %v5080
      %v5348 = vmul.f32 %v5347, %v5346
      %v5349 = vmul.f32 0.5, %v5348
      %v5350 = vsub.f32 1.5, %v5349
      %v5351 = vmul.f32 %v5346, %v5350
      %vm5352 = vweird.f32 %v5080
      %vm5353 = vweird.f32 %v5346
      %vm5354 = vmor %vm5352, %vm5353
      %v5355 = vsel %vm5354, %v5346, %v5351
      %v5356 = vrsqrt.pop %v5081
      %v5357 = vmul.f32 %v5356, %v5081
      %v5358 = vmul.f32 %v5357, %v5356
      %v5359 = vmul.f32 0.5, %v5358
      %v5360 = vsub.f32 1.5, %v5359
      %v5361 = vmul.f32 %v5356, %v5360
      %vm5362 = vweird.f32 %v5081
      %vm5363 = vweird.f32 %v5356
      %vm5364 = vmor %vm5362, %vm5363
      %v5365 = vsel %vm5364, %v5356, %v5361
      %v5366 = vrsqrt.pop %v5082
      %v5367 = vmul.f32 %v5366, %v5082
      %v5368 = vmul.f32 %v5367, %v5366
      %v5369 = vmul.f32 0.5, %v5368
      %v5370 = vsub.f32 1.5, %v5369
      %v5371 = vmul.f32 %v5366, %v5370
      %vm5372 = vweird.f32 %v5082
      %vm5373 = vweird.f32 %v5366
      %vm5374 = vmor %vm5372, %vm5373
      %v5375 = vsel %vm5374, %v5366, %v5371
      %v5376 = vrsqrt.pop %v5083
      %v5377 = vmul.f32 %v5376, %v5083
      %v5378 = vmul.f32 %v5377, %v5376
      %v5379 = vmul.f32 0.5, %v5378
      %v5380 = vsub.f32 1.5, %v5379
      %v5381 = vmul.f32 %v5376, %v5380
      %vm5382 = vweird.f32 %v5083
      %vm5383 = vweird.f32 %v5376
      %vm5384 = vmor %vm5382, %vm5383
      %v5385 = vsel %vm5384, %v5376, %v5381
      %v5386 = vrsqrt.pop %v5084
      %v5387 = vmul.f32 %v5386, %v5084
      %v5388 = vmul.f32 %v5387, %v5386
      %v5389 = vmul.f32 0.5, %v5388
      %v5390 = vsub.f32 1.5, %v5389
      %v5391 = vmul.f32 %v5386, %v5390
      %vm5392 = vweird.f32 %v5084
      %vm5393 = vweird.f32 %v5386
      %vm5394 = vmor %vm5392, %vm5393
      %v5395 = vsel %vm5394, %v5386, %v5391
      %v5396 = vrsqrt.pop %v5085
      %v5397 = vmul.f32 %v5396, %v5085
      %v5398 = vmul.f32 %v5397, %v5396
      %v5399 = vmul.f32 0.5, %v5398
      %v5400 = vsub.f32 1.5, %v5399
      %v5401 = vmul.f32 %v5396, %v5400
      %vm5402 = vweird.f32 %v5085
      %vm5403 = vweird.f32 %v5396
      %vm5404 = vmor %vm5402, %vm5403
      %v5405 = vsel %vm5404, %v5396, %v5401
      %v5406 = vmul.f32 %v415, %v5095
      %v5407 = vmul.f32 %v417, %v5105
      %v5408 = vmul.f32 %v420, %v5115
      %v5409 = vmul.f32 %v422, %v5125
      %v5410 = vmul.f32 %v425, %v5135
      %v5411 = vmul.f32 %v427, %v5145
      %v5412 = vmul.f32 %v430, %v5155
      %v5413 = vmul.f32 %v432, %v5165
      %v5414 = vmul.f32 %v435, %v5175
      %v5415 = vmul.f32 %v437, %v5185
      %v5416 = vmul.f32 %v440, %v5195
      %v5417 = vmul.f32 %v442, %v5205
      %v5418 = vmul.f32 %v445, %v5215
      %v5419 = vmul.f32 %v447, %v5225
      %v5420 = vmul.f32 %v450, %v5235
      %v5421 = vmul.f32 %v452, %v5245
      %v5422 = vmul.f32 %v455, %v5255
      %v5423 = vmul.f32 %v457, %v5265
      %v5424 = vmul.f32 %v460, %v5275
      %v5425 = vmul.f32 %v462, %v5285
      %v5426 = vmul.f32 %v465, %v5295
      %v5427 = vmul.f32 %v467, %v5305
      %v5428 = vmul.f32 %v470, %v5315
      %v5429 = vmul.f32 %v472, %v5325
      %v5430 = vmul.f32 %v475, %v5335
      %v5431 = vmul.f32 %v477, %v5345
      %v5432 = vmul.f32 %v480, %v5355
      %v5433 = vmul.f32 %v482, %v5365
      %v5434 = vmul.f32 %v485, %v5375
      %v5435 = vmul.f32 %v487, %v5385
      %v5436 = vmul.f32 %v490, %v5395
      %v5437 = vmul.f32 %v492, %v5405
      %v5438 = vpack.c.bf16 %v4830, %v4830
      %v5439 = vpack.c.bf16 %v4831, %v4831
      %v5440 = vpack.c.bf16 %v4832, %v4832
      %v5441 = vpack.c.bf16 %v4833, %v4833
      %v5442 = vpack.c.bf16 %v4834, %v4834
      %v5443 = vpack.c.bf16 %v4835, %v4835
      %v5444 = vpack.c.bf16 %v4836, %v4836
      %v5445 = vpack.c.bf16 %v4837, %v4837
      %v5446 = vpack.c.bf16 %v4838, %v4838
      %v5447 = vpack.c.bf16 %v4839, %v4839
      %v5448 = vpack.c.bf16 %v4840, %v4840
      %v5449 = vpack.c.bf16 %v4841, %v4841
      %v5450 = vpack.c.bf16 %v4842, %v4842
      %v5451 = vpack.c.bf16 %v4843, %v4843
      %v5452 = vpack.c.bf16 %v4844, %v4844
      %v5453 = vpack.c.bf16 %v4845, %v4845
      %v5454 = vpack.c.bf16 %v4846, %v4846
      %v5455 = vpack.c.bf16 %v4847, %v4847
      %v5456 = vpack.c.bf16 %v4848, %v4848
      %v5457 = vpack.c.bf16 %v4849, %v4849
      %v5458 = vpack.c.bf16 %v4850, %v4850
      %v5459 = vpack.c.bf16 %v4851, %v4851
      %v5460 = vpack.c.bf16 %v4852, %v4852
      %v5461 = vpack.c.bf16 %v4853, %v4853
      %v5462 = vpack.c.bf16 %v4854, %v4854
      %v5463 = vpack.c.bf16 %v4855, %v4855
      %v5464 = vpack.c.bf16 %v4856, %v4856
      %v5465 = vpack.c.bf16 %v4857, %v4857
      %v5466 = vpack.c.bf16 %v4858, %v4858
      %v5467 = vpack.c.bf16 %v4859, %v4859
      %v5468 = vpack.c.bf16 %v4860, %v4860
      %v5469 = vpack.c.bf16 %v4861, %v4861
      %v5470 = vpack.c.bf16 %v5406, %v5406
      %v5471 = vpack.c.bf16 %v5407, %v5407
      %v5472 = vpack.c.bf16 %v5408, %v5408
      %v5473 = vpack.c.bf16 %v5409, %v5409
      %v5474 = vpack.c.bf16 %v5410, %v5410
      %v5475 = vpack.c.bf16 %v5411, %v5411
      %v5476 = vpack.c.bf16 %v5412, %v5412
      %v5477 = vpack.c.bf16 %v5413, %v5413
      %v5478 = vpack.c.bf16 %v5414, %v5414
      %v5479 = vpack.c.bf16 %v5415, %v5415
      %v5480 = vpack.c.bf16 %v5416, %v5416
      %v5481 = vpack.c.bf16 %v5417, %v5417
      %v5482 = vpack.c.bf16 %v5418, %v5418
      %v5483 = vpack.c.bf16 %v5419, %v5419
      %v5484 = vpack.c.bf16 %v5420, %v5420
      %v5485 = vpack.c.bf16 %v5421, %v5421
      %v5486 = vpack.c.bf16 %v5422, %v5422
      %v5487 = vpack.c.bf16 %v5423, %v5423
      %v5488 = vpack.c.bf16 %v5424, %v5424
      %v5489 = vpack.c.bf16 %v5425, %v5425
      %v5490 = vpack.c.bf16 %v5426, %v5426
      %v5491 = vpack.c.bf16 %v5427, %v5427
      %v5492 = vpack.c.bf16 %v5428, %v5428
      %v5493 = vpack.c.bf16 %v5429, %v5429
      %v5494 = vpack.c.bf16 %v5430, %v5430
      %v5495 = vpack.c.bf16 %v5431, %v5431
      %v5496 = vpack.c.bf16 %v5432, %v5432
      %v5497 = vpack.c.bf16 %v5433, %v5433
      %v5498 = vpack.c.bf16 %v5434, %v5434
      %v5499 = vpack.c.bf16 %v5435, %v5435
      %v5500 = vpack.c.bf16 %v5436, %v5436
      %v5501 = vpack.c.bf16 %v5437, %v5437
      %5534 = vrot.lane.b32.xlu0 %v2934, 120
      %v5535 = vpop.permute.xlu0 %5534
      %5536 = vrot.lane.b32.xlu0 %v2935, 120
      %v5537 = vpop.permute.xlu0 %5536
      %5538 = vrot.lane.b32.xlu0 %v2936, 120
      %v5539 = vpop.permute.xlu0 %5538
      %5540 = vrot.lane.b32.xlu0 %v2937, 120
      %v5541 = vpop.permute.xlu0 %5540
      %5542 = vrot.lane.b32.xlu0 %v2938, 120
      %v5543 = vpop.permute.xlu0 %5542
      %5544 = vrot.lane.b32.xlu0 %v2939, 120
      %v5545 = vpop.permute.xlu0 %5544
      %5546 = vrot.lane.b32.xlu0 %v2940, 120
      %v5547 = vpop.permute.xlu0 %5546
      %5548 = vrot.lane.b32.xlu0 %v2941, 120
      %v5549 = vpop.permute.xlu0 %5548
      %5550 = vrot.lane.b32.xlu0 %v2942, 120
      %v5551 = vpop.permute.xlu0 %5550
      %5552 = vrot.lane.b32.xlu0 %v2943, 120
      %v5553 = vpop.permute.xlu0 %5552
      %5554 = vrot.lane.b32.xlu0 %v2944, 120
      %v5555 = vpop.permute.xlu0 %5554
      %5556 = vrot.lane.b32.xlu0 %v2945, 120
      %v5557 = vpop.permute.xlu0 %5556
      %5558 = vrot.lane.b32.xlu0 %v2946, 120
      %v5559 = vpop.permute.xlu0 %5558
      %5560 = vrot.lane.b32.xlu0 %v2947, 120
      %v5561 = vpop.permute.xlu0 %5560
      %5562 = vrot.lane.b32.xlu0 %v2948, 120
      %v5563 = vpop.permute.xlu0 %5562
      %5564 = vrot.lane.b32.xlu0 %v2949, 120
      %v5565 = vpop.permute.xlu0 %5564
      %5566 = vrot.lane.b32.xlu0 %v2950, 120
      %v5567 = vpop.permute.xlu0 %5566
      %5568 = vrot.lane.b32.xlu0 %v2951, 120
      %v5569 = vpop.permute.xlu0 %5568
      %5570 = vrot.lane.b32.xlu0 %v2952, 120
      %v5571 = vpop.permute.xlu0 %5570
      %5572 = vrot.lane.b32.xlu0 %v2953, 120
      %v5573 = vpop.permute.xlu0 %5572
      %5574 = vrot.lane.b32.xlu0 %v2954, 120
      %v5575 = vpop.permute.xlu0 %5574
      %5576 = vrot.lane.b32.xlu0 %v2955, 120
      %v5577 = vpop.permute.xlu0 %5576
      %5578 = vrot.lane.b32.xlu0 %v2956, 120
      %v5579 = vpop.permute.xlu0 %5578
      %5580 = vrot.lane.b32.xlu0 %v2957, 120
      %v5581 = vpop.permute.xlu0 %5580
      %5582 = vrot.lane.b32.xlu0 %v2958, 120
      %v5583 = vpop.permute.xlu0 %5582
      %5584 = vrot.lane.b32.xlu0 %v2959, 120
      %v5585 = vpop.permute.xlu0 %5584
      %5586 = vrot.lane.b32.xlu0 %v2960, 120
      %v5587 = vpop.permute.xlu0 %5586
      %5588 = vrot.lane.b32.xlu0 %v2961, 120
      %v5589 = vpop.permute.xlu0 %5588
      %5590 = vrot.lane.b32.xlu0 %v2962, 120
      %v5591 = vpop.permute.xlu0 %5590
      %5592 = vrot.lane.b32.xlu0 %v2963, 120
      %v5593 = vpop.permute.xlu0 %5592
      %5594 = vrot.lane.b32.xlu0 %v2964, 120
      %v5595 = vpop.permute.xlu0 %5594
      %5596 = vrot.lane.b32.xlu0 %v2965, 120
      %v5597 = vpop.permute.xlu0 %5596
      %5630 = vrot.lane.b32.xlu0 %v4186, 112
      %v5631 = vpop.permute.xlu0 %5630
      %5632 = vrot.lane.b32.xlu0 %v4187, 112
      %v5633 = vpop.permute.xlu0 %5632
      %5634 = vrot.lane.b32.xlu0 %v4188, 112
      %v5635 = vpop.permute.xlu0 %5634
      %5636 = vrot.lane.b32.xlu0 %v4189, 112
      %v5637 = vpop.permute.xlu0 %5636
      %5638 = vrot.lane.b32.xlu0 %v4190, 112
      %v5639 = vpop.permute.xlu0 %5638
      %5640 = vrot.lane.b32.xlu0 %v4191, 112
      %v5641 = vpop.permute.xlu0 %5640
      %5642 = vrot.lane.b32.xlu0 %v4192, 112
      %v5643 = vpop.permute.xlu0 %5642
      %5644 = vrot.lane.b32.xlu0 %v4193, 112
      %v5645 = vpop.permute.xlu0 %5644
      %5646 = vrot.lane.b32.xlu0 %v4194, 112
      %v5647 = vpop.permute.xlu0 %5646
      %5648 = vrot.lane.b32.xlu0 %v4195, 112
      %v5649 = vpop.permute.xlu0 %5648
      %5650 = vrot.lane.b32.xlu0 %v4196, 112
      %v5651 = vpop.permute.xlu0 %5650
      %5652 = vrot.lane.b32.xlu0 %v4197, 112
      %v5653 = vpop.permute.xlu0 %5652
      %5654 = vrot.lane.b32.xlu0 %v4198, 112
      %v5655 = vpop.permute.xlu0 %5654
      %5656 = vrot.lane.b32.xlu0 %v4199, 112
      %v5657 = vpop.permute.xlu0 %5656
      %5658 = vrot.lane.b32.xlu0 %v4200, 112
      %v5659 = vpop.permute.xlu0 %5658
      %5660 = vrot.lane.b32.xlu0 %v4201, 112
      %v5661 = vpop.permute.xlu0 %5660
      %5662 = vrot.lane.b32.xlu0 %v4202, 112
      %v5663 = vpop.permute.xlu0 %5662
      %5664 = vrot.lane.b32.xlu0 %v4203, 112
      %v5665 = vpop.permute.xlu0 %5664
      %5666 = vrot.lane.b32.xlu0 %v4204, 112
      %v5667 = vpop.permute.xlu0 %5666
      %5668 = vrot.lane.b32.xlu0 %v4205, 112
      %v5669 = vpop.permute.xlu0 %5668
      %5670 = vrot.lane.b32.xlu0 %v4206, 112
      %v5671 = vpop.permute.xlu0 %5670
      %5672 = vrot.lane.b32.xlu0 %v4207, 112
      %v5673 = vpop.permute.xlu0 %5672
      %5674 = vrot.lane.b32.xlu0 %v4208, 112
      %v5675 = vpop.permute.xlu0 %5674
      %5676 = vrot.lane.b32.xlu0 %v4209, 112
      %v5677 = vpop.permute.xlu0 %5676
      %5678 = vrot.lane.b32.xlu0 %v4210, 112
      %v5679 = vpop.permute.xlu0 %5678
      %5680 = vrot.lane.b32.xlu0 %v4211, 112
      %v5681 = vpop.permute.xlu0 %5680
      %5682 = vrot.lane.b32.xlu0 %v4212, 112
      %v5683 = vpop.permute.xlu0 %5682
      %5684 = vrot.lane.b32.xlu0 %v4213, 112
      %v5685 = vpop.permute.xlu0 %5684
      %5686 = vrot.lane.b32.xlu0 %v4214, 112
      %v5687 = vpop.permute.xlu0 %5686
      %5688 = vrot.lane.b32.xlu0 %v4215, 112
      %v5689 = vpop.permute.xlu0 %5688
      %5690 = vrot.lane.b32.xlu0 %v4216, 112
      %v5691 = vpop.permute.xlu0 %5690
      %5692 = vrot.lane.b32.xlu0 %v4217, 112
      %v5693 = vpop.permute.xlu0 %5692
      %5726 = vrot.lane.b32.xlu0 %v5438, 104
      %v5727 = vpop.permute.xlu0 %5726
      %5728 = vrot.lane.b32.xlu0 %v5439, 104
      %v5729 = vpop.permute.xlu0 %5728
      %5730 = vrot.lane.b32.xlu0 %v5440, 104
      %v5731 = vpop.permute.xlu0 %5730
      %5732 = vrot.lane.b32.xlu0 %v5441, 104
      %v5733 = vpop.permute.xlu0 %5732
      %5734 = vrot.lane.b32.xlu0 %v5442, 104
      %v5735 = vpop.permute.xlu0 %5734
      %5736 = vrot.lane.b32.xlu0 %v5443, 104
      %v5737 = vpop.permute.xlu0 %5736
      %5738 = vrot.lane.b32.xlu0 %v5444, 104
      %v5739 = vpop.permute.xlu0 %5738
      %5740 = vrot.lane.b32.xlu0 %v5445, 104
      %v5741 = vpop.permute.xlu0 %5740
      %5742 = vrot.lane.b32.xlu0 %v5446, 104
      %v5743 = vpop.permute.xlu0 %5742
      %5744 = vrot.lane.b32.xlu0 %v5447, 104
      %v5745 = vpop.permute.xlu0 %5744
      %5746 = vrot.lane.b32.xlu0 %v5448, 104
      %v5747 = vpop.permute.xlu0 %5746
      %5748 = vrot.lane.b32.xlu0 %v5449, 104
      %v5749 = vpop.permute.xlu0 %5748
      %5750 = vrot.lane.b32.xlu0 %v5450, 104
      %v5751 = vpop.permute.xlu0 %5750
      %5752 = vrot.lane.b32.xlu0 %v5451, 104
      %v5753 = vpop.permute.xlu0 %5752
      %5754 = vrot.lane.b32.xlu0 %v5452, 104
      %v5755 = vpop.permute.xlu0 %5754
      %5756 = vrot.lane.b32.xlu0 %v5453, 104
      %v5757 = vpop.permute.xlu0 %5756
      %5758 = vrot.lane.b32.xlu0 %v5454, 104
      %v5759 = vpop.permute.xlu0 %5758
      %5760 = vrot.lane.b32.xlu0 %v5455, 104
      %v5761 = vpop.permute.xlu0 %5760
      %5762 = vrot.lane.b32.xlu0 %v5456, 104
      %v5763 = vpop.permute.xlu0 %5762
      %5764 = vrot.lane.b32.xlu0 %v5457, 104
      %v5765 = vpop.permute.xlu0 %5764
      %5766 = vrot.lane.b32.xlu0 %v5458, 104
      %v5767 = vpop.permute.xlu0 %5766
      %5768 = vrot.lane.b32.xlu0 %v5459, 104
      %v5769 = vpop.permute.xlu0 %5768
      %5770 = vrot.lane.b32.xlu0 %v5460, 104
      %v5771 = vpop.permute.xlu0 %5770
      %5772 = vrot.lane.b32.xlu0 %v5461, 104
      %v5773 = vpop.permute.xlu0 %5772
      %5774 = vrot.lane.b32.xlu0 %v5462, 104
      %v5775 = vpop.permute.xlu0 %5774
      %5776 = vrot.lane.b32.xlu0 %v5463, 104
      %v5777 = vpop.permute.xlu0 %5776
      %5778 = vrot.lane.b32.xlu0 %v5464, 104
      %v5779 = vpop.permute.xlu0 %5778
      %5780 = vrot.lane.b32.xlu0 %v5465, 104
      %v5781 = vpop.permute.xlu0 %5780
      %5782 = vrot.lane.b32.xlu0 %v5466, 104
      %v5783 = vpop.permute.xlu0 %5782
      %5784 = vrot.lane.b32.xlu0 %v5467, 104
      %v5785 = vpop.permute.xlu0 %5784
      %5786 = vrot.lane.b32.xlu0 %v5468, 104
      %v5787 = vpop.permute.xlu0 %5786
      %5788 = vrot.lane.b32.xlu0 %v5469, 104
      %v5789 = vpop.permute.xlu0 %5788
      %5822 = vrot.lane.b32.xlu0 %v2966, 120
      %v5823 = vpop.permute.xlu0 %5822
      %5824 = vrot.lane.b32.xlu0 %v2967, 120
      %v5825 = vpop.permute.xlu0 %5824
      %5826 = vrot.lane.b32.xlu0 %v2968, 120
      %v5827 = vpop.permute.xlu0 %5826
      %5828 = vrot.lane.b32.xlu0 %v2969, 120
      %v5829 = vpop.permute.xlu0 %5828
      %5830 = vrot.lane.b32.xlu0 %v2970, 120
      %v5831 = vpop.permute.xlu0 %5830
      %5832 = vrot.lane.b32.xlu0 %v2971, 120
      %v5833 = vpop.permute.xlu0 %5832
      %5834 = vrot.lane.b32.xlu0 %v2972, 120
      %v5835 = vpop.permute.xlu0 %5834
      %5836 = vrot.lane.b32.xlu0 %v2973, 120
      %v5837 = vpop.permute.xlu0 %5836
      %5838 = vrot.lane.b32.xlu0 %v2974, 120
      %v5839 = vpop.permute.xlu0 %5838
      %5840 = vrot.lane.b32.xlu0 %v2975, 120
      %v5841 = vpop.permute.xlu0 %5840
      %5842 = vrot.lane.b32.xlu0 %v2976, 120
      %v5843 = vpop.permute.xlu0 %5842
      %5844 = vrot.lane.b32.xlu0 %v2977, 120
      %v5845 = vpop.permute.xlu0 %5844
      %5846 = vrot.lane.b32.xlu0 %v2978, 120
      %v5847 = vpop.permute.xlu0 %5846
      %5848 = vrot.lane.b32.xlu0 %v2979, 120
      %v5849 = vpop.permute.xlu0 %5848
      %5850 = vrot.lane.b32.xlu0 %v2980, 120
      %v5851 = vpop.permute.xlu0 %5850
      %5852 = vrot.lane.b32.xlu0 %v2981, 120
      %v5853 = vpop.permute.xlu0 %5852
      %5854 = vrot.lane.b32.xlu0 %v2982, 120
      %v5855 = vpop.permute.xlu0 %5854
      %5856 = vrot.lane.b32.xlu0 %v2983, 120
      %v5857 = vpop.permute.xlu0 %5856
      %5858 = vrot.lane.b32.xlu0 %v2984, 120
      %v5859 = vpop.permute.xlu0 %5858
      %5860 = vrot.lane.b32.xlu0 %v2985, 120
      %v5861 = vpop.permute.xlu0 %5860
      %5862 = vrot.lane.b32.xlu0 %v2986, 120
      %v5863 = vpop.permute.xlu0 %5862
      %5864 = vrot.lane.b32.xlu0 %v2987, 120
      %v5865 = vpop.permute.xlu0 %5864
      %5866 = vrot.lane.b32.xlu0 %v2988, 120
      %v5867 = vpop.permute.xlu0 %5866
      %5868 = vrot.lane.b32.xlu0 %v2989, 120
      %v5869 = vpop.permute.xlu0 %5868
      %5870 = vrot.lane.b32.xlu0 %v2990, 120
      %v5871 = vpop.permute.xlu0 %5870
      %5872 = vrot.lane.b32.xlu0 %v2991, 120
      %v5873 = vpop.permute.xlu0 %5872
      %5874 = vrot.lane.b32.xlu0 %v2992, 120
      %v5875 = vpop.permute.xlu0 %5874
      %5876 = vrot.lane.b32.xlu0 %v2993, 120
      %v5877 = vpop.permute.xlu0 %5876
      %5878 = vrot.lane.b32.xlu0 %v2994, 120
      %v5879 = vpop.permute.xlu0 %5878
      %5880 = vrot.lane.b32.xlu0 %v2995, 120
      %v5881 = vpop.permute.xlu0 %5880
      %5882 = vrot.lane.b32.xlu0 %v2996, 120
      %v5883 = vpop.permute.xlu0 %5882
      %5884 = vrot.lane.b32.xlu0 %v2997, 120
      %v5885 = vpop.permute.xlu0 %5884
      %5918 = vrot.lane.b32.xlu0 %v4218, 112
      %v5919 = vpop.permute.xlu0 %5918
      %5920 = vrot.lane.b32.xlu0 %v4219, 112
      %v5921 = vpop.permute.xlu0 %5920
      %5922 = vrot.lane.b32.xlu0 %v4220, 112
      %v5923 = vpop.permute.xlu0 %5922
      %5924 = vrot.lane.b32.xlu0 %v4221, 112
      %v5925 = vpop.permute.xlu0 %5924
      %5926 = vrot.lane.b32.xlu0 %v4222, 112
      %v5927 = vpop.permute.xlu0 %5926
      %5928 = vrot.lane.b32.xlu0 %v4223, 112
      %v5929 = vpop.permute.xlu0 %5928
      %5930 = vrot.lane.b32.xlu0 %v4224, 112
      %v5931 = vpop.permute.xlu0 %5930
      %5932 = vrot.lane.b32.xlu0 %v4225, 112
      %v5933 = vpop.permute.xlu0 %5932
      %5934 = vrot.lane.b32.xlu0 %v4226, 112
      %v5935 = vpop.permute.xlu0 %5934
      %5936 = vrot.lane.b32.xlu0 %v4227, 112
      %v5937 = vpop.permute.xlu0 %5936
      %5938 = vrot.lane.b32.xlu0 %v4228, 112
      %v5939 = vpop.permute.xlu0 %5938
      %5940 = vrot.lane.b32.xlu0 %v4229, 112
      %v5941 = vpop.permute.xlu0 %5940
      %5942 = vrot.lane.b32.xlu0 %v4230, 112
      %v5943 = vpop.permute.xlu0 %5942
      %5944 = vrot.lane.b32.xlu0 %v4231, 112
      %v5945 = vpop.permute.xlu0 %5944
      %5946 = vrot.lane.b32.xlu0 %v4232, 112
      %v5947 = vpop.permute.xlu0 %5946
      %5948 = vrot.lane.b32.xlu0 %v4233, 112
      %v5949 = vpop.permute.xlu0 %5948
      %5950 = vrot.lane.b32.xlu0 %v4234, 112
      %v5951 = vpop.permute.xlu0 %5950
      %5952 = vrot.lane.b32.xlu0 %v4235, 112
      %v5953 = vpop.permute.xlu0 %5952
      %5954 = vrot.lane.b32.xlu0 %v4236, 112
      %v5955 = vpop.permute.xlu0 %5954
      %5956 = vrot.lane.b32.xlu0 %v4237, 112
      %v5957 = vpop.permute.xlu0 %5956
      %5958 = vrot.lane.b32.xlu0 %v4238, 112
      %v5959 = vpop.permute.xlu0 %5958
      %5960 = vrot.lane.b32.xlu0 %v4239, 112
      %v5961 = vpop.permute.xlu0 %5960
      %5962 = vrot.lane.b32.xlu0 %v4240, 112
      %v5963 = vpop.permute.xlu0 %5962
      %5964 = vrot.lane.b32.xlu0 %v4241, 112
      %v5965 = vpop.permute.xlu0 %5964
      %5966 = vrot.lane.b32.xlu0 %v4242, 112
      %v5967 = vpop.permute.xlu0 %5966
      %5968 = vrot.lane.b32.xlu0 %v4243, 112
      %v5969 = vpop.permute.xlu0 %5968
      %5970 = vrot.lane.b32.xlu0 %v4244, 112
      %v5971 = vpop.permute.xlu0 %5970
      %5972 = vrot.lane.b32.xlu0 %v4245, 112
      %v5973 = vpop.permute.xlu0 %5972
      %5974 = vrot.lane.b32.xlu0 %v4246, 112
      %v5975 = vpop.permute.xlu0 %5974
      %5976 = vrot.lane.b32.xlu0 %v4247, 112
      %v5977 = vpop.permute.xlu0 %5976
      %5978 = vrot.lane.b32.xlu0 %v4248, 112
      %v5979 = vpop.permute.xlu0 %5978
      %5980 = vrot.lane.b32.xlu0 %v4249, 112
      %v5981 = vpop.permute.xlu0 %5980
      %6014 = vrot.lane.b32.xlu0 %v5470, 104
      %v6015 = vpop.permute.xlu0 %6014
      %6016 = vrot.lane.b32.xlu0 %v5471, 104
      %v6017 = vpop.permute.xlu0 %6016
      %6018 = vrot.lane.b32.xlu0 %v5472, 104
      %v6019 = vpop.permute.xlu0 %6018
      %6020 = vrot.lane.b32.xlu0 %v5473, 104
      %v6021 = vpop.permute.xlu0 %6020
      %6022 = vrot.lane.b32.xlu0 %v5474, 104
      %v6023 = vpop.permute.xlu0 %6022
      %6024 = vrot.lane.b32.xlu0 %v5475, 104
      %v6025 = vpop.permute.xlu0 %6024
      %6026 = vrot.lane.b32.xlu0 %v5476, 104
      %v6027 = vpop.permute.xlu0 %6026
      %6028 = vrot.lane.b32.xlu0 %v5477, 104
      %v6029 = vpop.permute.xlu0 %6028
      %6030 = vrot.lane.b32.xlu0 %v5478, 104
      %v6031 = vpop.permute.xlu0 %6030
      %6032 = vrot.lane.b32.xlu0 %v5479, 104
      %v6033 = vpop.permute.xlu0 %6032
      %6034 = vrot.lane.b32.xlu0 %v5480, 104
      %v6035 = vpop.permute.xlu0 %6034
      %6036 = vrot.lane.b32.xlu0 %v5481, 104
      %v6037 = vpop.permute.xlu0 %6036
      %6038 = vrot.lane.b32.xlu0 %v5482, 104
      %v6039 = vpop.permute.xlu0 %6038
      %6040 = vrot.lane.b32.xlu0 %v5483, 104
      %v6041 = vpop.permute.xlu0 %6040
      %6042 = vrot.lane.b32.xlu0 %v5484, 104
      %v6043 = vpop.permute.xlu0 %6042
      %6044 = vrot.lane.b32.xlu0 %v5485, 104
      %v6045 = vpop.permute.xlu0 %6044
      %6046 = vrot.lane.b32.xlu0 %v5486, 104
      %v6047 = vpop.permute.xlu0 %6046
      %6048 = vrot.lane.b32.xlu0 %v5487, 104
      %v6049 = vpop.permute.xlu0 %6048
      %6050 = vrot.lane.b32.xlu0 %v5488, 104
      %v6051 = vpop.permute.xlu0 %6050
      %6052 = vrot.lane.b32.xlu0 %v5489, 104
      %v6053 = vpop.permute.xlu0 %6052
      %6054 = vrot.lane.b32.xlu0 %v5490, 104
      %v6055 = vpop.permute.xlu0 %6054
      %6056 = vrot.lane.b32.xlu0 %v5491, 104
      %v6057 = vpop.permute.xlu0 %6056
      %6058 = vrot.lane.b32.xlu0 %v5492, 104
      %v6059 = vpop.permute.xlu0 %6058
      %6060 = vrot.lane.b32.xlu0 %v5493, 104
      %v6061 = vpop.permute.xlu0 %6060
      %6062 = vrot.lane.b32.xlu0 %v5494, 104
      %v6063 = vpop.permute.xlu0 %6062
      %6064 = vrot.lane.b32.xlu0 %v5495, 104
      %v6065 = vpop.permute.xlu0 %6064
      %6066 = vrot.lane.b32.xlu0 %v5496, 104
      %v6067 = vpop.permute.xlu0 %6066
      %6068 = vrot.lane.b32.xlu0 %v5497, 104
      %v6069 = vpop.permute.xlu0 %6068
      %6070 = vrot.lane.b32.xlu0 %v5498, 104
      %v6071 = vpop.permute.xlu0 %6070
      %6072 = vrot.lane.b32.xlu0 %v5499, 104
      %v6073 = vpop.permute.xlu0 %6072
      %6074 = vrot.lane.b32.xlu0 %v5500, 104
      %v6075 = vpop.permute.xlu0 %6074
      %6076 = vrot.lane.b32.xlu0 %v5501, 104
      %v6077 = vpop.permute.xlu0 %6076
      %6110 = vrot.lane.b32.xlu0 %v1714, 120
      %v6111 = vpop.permute.xlu0 %6110
      %6112 = vrot.lane.b32.xlu0 %v1715, 120
      %v6113 = vpop.permute.xlu0 %6112
      %6114 = vrot.lane.b32.xlu0 %v1716, 120
      %v6115 = vpop.permute.xlu0 %6114
      %6116 = vrot.lane.b32.xlu0 %v1717, 120
      %v6117 = vpop.permute.xlu0 %6116
      %6118 = vrot.lane.b32.xlu0 %v1718, 120
      %v6119 = vpop.permute.xlu0 %6118
      %6120 = vrot.lane.b32.xlu0 %v1719, 120
      %v6121 = vpop.permute.xlu0 %6120
      %6122 = vrot.lane.b32.xlu0 %v1720, 120
      %v6123 = vpop.permute.xlu0 %6122
      %6124 = vrot.lane.b32.xlu0 %v1721, 120
      %v6125 = vpop.permute.xlu0 %6124
      %6126 = vrot.lane.b32.xlu0 %v1722, 120
      %v6127 = vpop.permute.xlu0 %6126
      %6128 = vrot.lane.b32.xlu0 %v1723, 120
      %v6129 = vpop.permute.xlu0 %6128
      %6130 = vrot.lane.b32.xlu0 %v1724, 120
      %v6131 = vpop.permute.xlu0 %6130
      %6132 = vrot.lane.b32.xlu0 %v1725, 120
      %v6133 = vpop.permute.xlu0 %6132
      %6134 = vrot.lane.b32.xlu0 %v1726, 120
      %v6135 = vpop.permute.xlu0 %6134
      %6136 = vrot.lane.b32.xlu0 %v1727, 120
      %v6137 = vpop.permute.xlu0 %6136
      %6138 = vrot.lane.b32.xlu0 %v1728, 120
      %v6139 = vpop.permute.xlu0 %6138
      %6140 = vrot.lane.b32.xlu0 %v1729, 120
      %v6141 = vpop.permute.xlu0 %6140
      %6142 = vrot.lane.b32.xlu0 %v1730, 120
      %v6143 = vpop.permute.xlu0 %6142
      %6144 = vrot.lane.b32.xlu0 %v1731, 120
      %v6145 = vpop.permute.xlu0 %6144
      %6146 = vrot.lane.b32.xlu0 %v1732, 120
      %v6147 = vpop.permute.xlu0 %6146
      %6148 = vrot.lane.b32.xlu0 %v1733, 120
      %v6149 = vpop.permute.xlu0 %6148
      %6150 = vrot.lane.b32.xlu0 %v1734, 120
      %v6151 = vpop.permute.xlu0 %6150
      %6152 = vrot.lane.b32.xlu0 %v1735, 120
      %v6153 = vpop.permute.xlu0 %6152
      %6154 = vrot.lane.b32.xlu0 %v1736, 120
      %v6155 = vpop.permute.xlu0 %6154
      %6156 = vrot.lane.b32.xlu0 %v1737, 120
      %v6157 = vpop.permute.xlu0 %6156
      %6158 = vrot.lane.b32.xlu0 %v1738, 120
      %v6159 = vpop.permute.xlu0 %6158
      %6160 = vrot.lane.b32.xlu0 %v1739, 120
      %v6161 = vpop.permute.xlu0 %6160
      %6162 = vrot.lane.b32.xlu0 %v1740, 120
      %v6163 = vpop.permute.xlu0 %6162
      %6164 = vrot.lane.b32.xlu0 %v1741, 120
      %v6165 = vpop.permute.xlu0 %6164
      %6166 = vrot.lane.b32.xlu0 %v1742, 120
      %v6167 = vpop.permute.xlu0 %6166
      %6168 = vrot.lane.b32.xlu0 %v1743, 120
      %v6169 = vpop.permute.xlu0 %6168
      %6170 = vrot.lane.b32.xlu0 %v1744, 120
      %v6171 = vpop.permute.xlu0 %6170
      %6172 = vrot.lane.b32.xlu0 %v1745, 120
      %v6173 = vpop.permute.xlu0 %6172
      %6174 = vrot.lane.b32.xlu0 %v1714, 112
      %v6175 = vpop.permute.xlu0 %6174
      %6176 = vrot.lane.b32.xlu0 %v1715, 112
      %v6177 = vpop.permute.xlu0 %6176
      %6178 = vrot.lane.b32.xlu0 %v1716, 112
      %v6179 = vpop.permute.xlu0 %6178
      %6180 = vrot.lane.b32.xlu0 %v1717, 112
      %v6181 = vpop.permute.xlu0 %6180
      %6182 = vrot.lane.b32.xlu0 %v1718, 112
      %v6183 = vpop.permute.xlu0 %6182
      %6184 = vrot.lane.b32.xlu0 %v1719, 112
      %v6185 = vpop.permute.xlu0 %6184
      %6186 = vrot.lane.b32.xlu0 %v1720, 112
      %v6187 = vpop.permute.xlu0 %6186
      %6188 = vrot.lane.b32.xlu0 %v1721, 112
      %v6189 = vpop.permute.xlu0 %6188
      %6190 = vrot.lane.b32.xlu0 %v1722, 112
      %v6191 = vpop.permute.xlu0 %6190
      %6192 = vrot.lane.b32.xlu0 %v1723, 112
      %v6193 = vpop.permute.xlu0 %6192
      %6194 = vrot.lane.b32.xlu0 %v1724, 112
      %v6195 = vpop.permute.xlu0 %6194
      %6196 = vrot.lane.b32.xlu0 %v1725, 112
      %v6197 = vpop.permute.xlu0 %6196
      %6198 = vrot.lane.b32.xlu0 %v1726, 112
      %v6199 = vpop.permute.xlu0 %6198
      %6200 = vrot.lane.b32.xlu0 %v1727, 112
      %v6201 = vpop.permute.xlu0 %6200
      %6202 = vrot.lane.b32.xlu0 %v1728, 112
      %v6203 = vpop.permute.xlu0 %6202
      %6204 = vrot.lane.b32.xlu0 %v1729, 112
      %v6205 = vpop.permute.xlu0 %6204
      %6206 = vrot.lane.b32.xlu0 %v1730, 112
      %v6207 = vpop.permute.xlu0 %6206
      %6208 = vrot.lane.b32.xlu0 %v1731, 112
      %v6209 = vpop.permute.xlu0 %6208
      %6210 = vrot.lane.b32.xlu0 %v1732, 112
      %v6211 = vpop.permute.xlu0 %6210
      %6212 = vrot.lane.b32.xlu0 %v1733, 112
      %v6213 = vpop.permute.xlu0 %6212
      %6214 = vrot.lane.b32.xlu0 %v1734, 112
      %v6215 = vpop.permute.xlu0 %6214
      %6216 = vrot.lane.b32.xlu0 %v1735, 112
      %v6217 = vpop.permute.xlu0 %6216
      %6218 = vrot.lane.b32.xlu0 %v1736, 112
      %v6219 = vpop.permute.xlu0 %6218
      %6220 = vrot.lane.b32.xlu0 %v1737, 112
      %v6221 = vpop.permute.xlu0 %6220
      %6222 = vrot.lane.b32.xlu0 %v1738, 112
      %v6223 = vpop.permute.xlu0 %6222
      %6224 = vrot.lane.b32.xlu0 %v1739, 112
      %v6225 = vpop.permute.xlu0 %6224
      %6226 = vrot.lane.b32.xlu0 %v1740, 112
      %v6227 = vpop.permute.xlu0 %6226
      %6228 = vrot.lane.b32.xlu0 %v1741, 112
      %v6229 = vpop.permute.xlu0 %6228
      %6230 = vrot.lane.b32.xlu0 %v1742, 112
      %v6231 = vpop.permute.xlu0 %6230
      %6232 = vrot.lane.b32.xlu0 %v1743, 112
      %v6233 = vpop.permute.xlu0 %6232
      %6234 = vrot.lane.b32.xlu0 %v1744, 112
      %v6235 = vpop.permute.xlu0 %6234
      %6236 = vrot.lane.b32.xlu0 %v1745, 112
      %v6237 = vpop.permute.xlu0 %6236
      %6238 = vrot.lane.b32.xlu0 %v1714, 104
      %v6239 = vpop.permute.xlu0 %6238
      %6240 = vrot.lane.b32.xlu0 %v1715, 104
      %v6241 = vpop.permute.xlu0 %6240
      %6242 = vrot.lane.b32.xlu0 %v1716, 104
      %v6243 = vpop.permute.xlu0 %6242
      %6244 = vrot.lane.b32.xlu0 %v1717, 104
      %v6245 = vpop.permute.xlu0 %6244
      %6246 = vrot.lane.b32.xlu0 %v1718, 104
      %v6247 = vpop.permute.xlu0 %6246
      %6248 = vrot.lane.b32.xlu0 %v1719, 104
      %v6249 = vpop.permute.xlu0 %6248
      %6250 = vrot.lane.b32.xlu0 %v1720, 104
      %v6251 = vpop.permute.xlu0 %6250
      %6252 = vrot.lane.b32.xlu0 %v1721, 104
      %v6253 = vpop.permute.xlu0 %6252
      %6254 = vrot.lane.b32.xlu0 %v1722, 104
      %v6255 = vpop.permute.xlu0 %6254
      %6256 = vrot.lane.b32.xlu0 %v1723, 104
      %v6257 = vpop.permute.xlu0 %6256
      %6258 = vrot.lane.b32.xlu0 %v1724, 104
      %v6259 = vpop.permute.xlu0 %6258
      %6260 = vrot.lane.b32.xlu0 %v1725, 104
      %v6261 = vpop.permute.xlu0 %6260
      %6262 = vrot.lane.b32.xlu0 %v1726, 104
      %v6263 = vpop.permute.xlu0 %6262
      %6264 = vrot.lane.b32.xlu0 %v1727, 104
      %v6265 = vpop.permute.xlu0 %6264
      %6266 = vrot.lane.b32.xlu0 %v1728, 104
      %v6267 = vpop.permute.xlu0 %6266
      %6268 = vrot.lane.b32.xlu0 %v1729, 104
      %v6269 = vpop.permute.xlu0 %6268
      %6270 = vrot.lane.b32.xlu0 %v1730, 104
      %v6271 = vpop.permute.xlu0 %6270
      %6272 = vrot.lane.b32.xlu0 %v1731, 104
      %v6273 = vpop.permute.xlu0 %6272
      %6274 = vrot.lane.b32.xlu0 %v1732, 104
      %v6275 = vpop.permute.xlu0 %6274
      %6276 = vrot.lane.b32.xlu0 %v1733, 104
      %v6277 = vpop.permute.xlu0 %6276
      %6278 = vrot.lane.b32.xlu0 %v1734, 104
      %v6279 = vpop.permute.xlu0 %6278
      %6280 = vrot.lane.b32.xlu0 %v1735, 104
      %v6281 = vpop.permute.xlu0 %6280
      %6282 = vrot.lane.b32.xlu0 %v1736, 104
      %v6283 = vpop.permute.xlu0 %6282
      %6284 = vrot.lane.b32.xlu0 %v1737, 104
      %v6285 = vpop.permute.xlu0 %6284
      %6286 = vrot.lane.b32.xlu0 %v1738, 104
      %v6287 = vpop.permute.xlu0 %6286
      %6288 = vrot.lane.b32.xlu0 %v1739, 104
      %v6289 = vpop.permute.xlu0 %6288
      %6290 = vrot.lane.b32.xlu0 %v1740, 104
      %v6291 = vpop.permute.xlu0 %6290
      %6292 = vrot.lane.b32.xlu0 %v1741, 104
      %v6293 = vpop.permute.xlu0 %6292
      %6294 = vrot.lane.b32.xlu0 %v1742, 104
      %v6295 = vpop.permute.xlu0 %6294
      %6296 = vrot.lane.b32.xlu0 %v1743, 104
      %v6297 = vpop.permute.xlu0 %6296
      %6298 = vrot.lane.b32.xlu0 %v1744, 104
      %v6299 = vpop.permute.xlu0 %6298
      %6300 = vrot.lane.b32.xlu0 %v1745, 104
      %v6301 = vpop.permute.xlu0 %6300
      %v6310 = vunpack.c.l.b16 %v1650
      %v6311 = vunpack.c.l.b16 %v1651
      %v6312 = vunpack.c.l.b16 %v1652
      %v6313 = vunpack.c.l.b16 %v1653
      %v6314 = vunpack.c.l.b16 %v1654
      %v6315 = vunpack.c.l.b16 %v1655
      %v6316 = vunpack.c.l.b16 %v1656
      %v6317 = vunpack.c.l.b16 %v1657
      %v6318 = vpack.c.b16 %v6311, %v6310
      %v6319 = vpack.c.b16 %v6313, %v6312
      %v6320 = vpack.c.b16 %v6315, %v6314
      %v6321 = vpack.c.b16 %v6317, %v6316
      %v6330 = vunpack.c.l.b16 %v1682
      %v6331 = vunpack.c.l.b16 %v1683
      %v6332 = vunpack.c.l.b16 %v1684
      %v6333 = vunpack.c.l.b16 %v1685
      %v6334 = vunpack.c.l.b16 %v1686
      %v6335 = vunpack.c.l.b16 %v1687
      %v6336 = vunpack.c.l.b16 %v1688
      %v6337 = vunpack.c.l.b16 %v1689
      %v6338 = vpack.c.b16 %v6331, %v6330
      %v6339 = vpack.c.b16 %v6333, %v6332
      %v6340 = vpack.c.b16 %v6335, %v6334
      %v6341 = vpack.c.b16 %v6337, %v6336
      %6342 = vrot.lane.b32.xlu0 %v6338, 96
      %v6343 = vpop.permute.xlu0 %6342
      %6344 = vrot.lane.b32.xlu0 %v6339, 96
      %v6345 = vpop.permute.xlu0 %6344
      %6346 = vrot.lane.b32.xlu0 %v6340, 96
      %v6347 = vpop.permute.xlu0 %6346
      %6348 = vrot.lane.b32.xlu0 %v6341, 96
      %v6349 = vpop.permute.xlu0 %6348
      %v6351 = vsel %vm527, %v6318, 0
      %v6354 = vsel %vm527, %v6319, 0
      %v6357 = vsel %vm527, %v6320, 0
      %v6360 = vsel %vm527, %v6321, 0
      %v6363 = vsel %vm527, %v6343, 0
      %v6366 = vsel %vm527, %v6345, 0
      %v6369 = vsel %vm527, %v6347, 0
      %v6372 = vsel %vm527, %v6349, 0
      %6374 = vmatpush.bf16.xpose.msra.mxu0 0
      %6375 = vmatpush.bf16.xpose.msra.mxu0 0
      %6376 = vmatpush.bf16.xpose.msra.mxu0 0
      %6377 = vmatpush.bf16.xpose.msra.mxu0 0
      %6378 = vmatpush.bf16.xpose.msra.mxu0 %v6372
      %6379 = vmatpush.bf16.xpose.msra.mxu0 %v6369
      %6380 = vmatpush.bf16.xpose.msra.mxu0 %v6366
      %6381 = vmatpush.bf16.xpose.msra.mxu0 %v6363
      %6382 = vmatmul.bf16.gmra.mxu0 %v6351
      %v6383 = vpop.f32.mrf.mxu0
      %v6384 = vadd.f32 0.0, %v6383
      %v6385 = vpop.f32.mrf.mxu0
      %v6386 = vadd.f32 0.0, %v6385
      %6387 = vmatmul.bf16.gmra.mxu0 %v6354
      %v6388 = vpop.f32.mrf.mxu0
      %v6389 = vadd.f32 0.0, %v6388
      %v6390 = vpop.f32.mrf.mxu0
      %v6391 = vadd.f32 0.0, %v6390
      %6392 = vmatmul.bf16.gmra.mxu0 %v6357
      %v6393 = vpop.f32.mrf.mxu0
      %v6394 = vadd.f32 0.0, %v6393
      %v6395 = vpop.f32.mrf.mxu0
      %v6396 = vadd.f32 0.0, %v6395
      %6397 = vmatmul.bf16.gmra.mxu0 %v6360
      %v6398 = vpop.f32.mrf.mxu0
      %v6399 = vadd.f32 0.0, %v6398
      %v6400 = vpop.f32.mrf.mxu0
      %v6401 = vadd.f32 0.0, %v6400
      %6402 = vdwg.mxu0
      %v6411 = vunpack.c.l.b16 %v1658
      %v6412 = vunpack.c.l.b16 %v1659
      %v6413 = vunpack.c.l.b16 %v1660
      %v6414 = vunpack.c.l.b16 %v1661
      %v6415 = vunpack.c.l.b16 %v1662
      %v6416 = vunpack.c.l.b16 %v1663
      %v6417 = vunpack.c.l.b16 %v1664
      %v6418 = vunpack.c.l.b16 %v1665
      %v6419 = vpack.c.b16 %v6412, %v6411
      %v6420 = vpack.c.b16 %v6414, %v6413
      %v6421 = vpack.c.b16 %v6416, %v6415
      %v6422 = vpack.c.b16 %v6418, %v6417
      %v6431 = vunpack.c.l.b16 %v1690
      %v6432 = vunpack.c.l.b16 %v1691
      %v6433 = vunpack.c.l.b16 %v1692
      %v6434 = vunpack.c.l.b16 %v1693
      %v6435 = vunpack.c.l.b16 %v1694
      %v6436 = vunpack.c.l.b16 %v1695
      %v6437 = vunpack.c.l.b16 %v1696
      %v6438 = vunpack.c.l.b16 %v1697
      %v6439 = vpack.c.b16 %v6432, %v6431
      %v6440 = vpack.c.b16 %v6434, %v6433
      %v6441 = vpack.c.b16 %v6436, %v6435
      %v6442 = vpack.c.b16 %v6438, %v6437
      %6443 = vrot.lane.b32.xlu0 %v6439, 96
      %v6444 = vpop.permute.xlu0 %6443
      %6445 = vrot.lane.b32.xlu0 %v6440, 96
      %v6446 = vpop.permute.xlu0 %6445
      %6447 = vrot.lane.b32.xlu0 %v6441, 96
      %v6448 = vpop.permute.xlu0 %6447
      %6449 = vrot.lane.b32.xlu0 %v6442, 96
      %v6450 = vpop.permute.xlu0 %6449
      %v6452 = vsel %vm527, %v6419, 0
      %v6455 = vsel %vm527, %v6420, 0
      %v6458 = vsel %vm527, %v6421, 0
      %v6461 = vsel %vm527, %v6422, 0
      %v6464 = vsel %vm527, %v6444, 0
      %v6467 = vsel %vm527, %v6446, 0
      %v6470 = vsel %vm527, %v6448, 0
      %v6473 = vsel %vm527, %v6450, 0
      %6475 = vmatpush.bf16.xpose.msra.mxu0 0
      %6476 = vmatpush.bf16.xpose.msra.mxu0 0
      %6477 = vmatpush.bf16.xpose.msra.mxu0 0
      %6478 = vmatpush.bf16.xpose.msra.mxu0 0
      %6479 = vmatpush.bf16.xpose.msra.mxu0 %v6473
      %6480 = vmatpush.bf16.xpose.msra.mxu0 %v6470
      %6481 = vmatpush.bf16.xpose.msra.mxu0 %v6467
      %6482 = vmatpush.bf16.xpose.msra.mxu0 %v6464
      %6483 = vmatmul.bf16.gmra.mxu0 %v6452
      %v6484 = vpop.f32.mrf.mxu0
      %v6485 = vadd.f32 0.0, %v6484
      %v6486 = vpop.f32.mrf.mxu0
      %v6487 = vadd.f32 0.0, %v6486
      %6488 = vmatmul.bf16.gmra.mxu0 %v6455
      %v6489 = vpop.f32.mrf.mxu0
      %v6490 = vadd.f32 0.0, %v6489
      %v6491 = vpop.f32.mrf.mxu0
      %v6492 = vadd.f32 0.0, %v6491
      %6493 = vmatmul.bf16.gmra.mxu0 %v6458
      %v6494 = vpop.f32.mrf.mxu0
      %v6495 = vadd.f32 0.0, %v6494
      %v6496 = vpop.f32.mrf.mxu0
      %v6497 = vadd.f32 0.0, %v6496
      %6498 = vmatmul.bf16.gmra.mxu0 %v6461
      %v6499 = vpop.f32.mrf.mxu0
      %v6500 = vadd.f32 0.0, %v6499
      %v6501 = vpop.f32.mrf.mxu0
      %v6502 = vadd.f32 0.0, %v6501
      %6503 = vdwg.mxu0
      %v6512 = vunpack.c.l.b16 %v1666
      %v6513 = vunpack.c.l.b16 %v1667
      %v6514 = vunpack.c.l.b16 %v1668
      %v6515 = vunpack.c.l.b16 %v1669
      %v6516 = vunpack.c.l.b16 %v1670
      %v6517 = vunpack.c.l.b16 %v1671
      %v6518 = vunpack.c.l.b16 %v1672
      %v6519 = vunpack.c.l.b16 %v1673
      %v6520 = vpack.c.b16 %v6513, %v6512
      %v6521 = vpack.c.b16 %v6515, %v6514
      %v6522 = vpack.c.b16 %v6517, %v6516
      %v6523 = vpack.c.b16 %v6519, %v6518
      %v6532 = vunpack.c.l.b16 %v1698
      %v6533 = vunpack.c.l.b16 %v1699
      %v6534 = vunpack.c.l.b16 %v1700
      %v6535 = vunpack.c.l.b16 %v1701
      %v6536 = vunpack.c.l.b16 %v1702
      %v6537 = vunpack.c.l.b16 %v1703
      %v6538 = vunpack.c.l.b16 %v1704
      %v6539 = vunpack.c.l.b16 %v1705
      %v6540 = vpack.c.b16 %v6533, %v6532
      %v6541 = vpack.c.b16 %v6535, %v6534
      %v6542 = vpack.c.b16 %v6537, %v6536
      %v6543 = vpack.c.b16 %v6539, %v6538
      %6544 = vrot.lane.b32.xlu0 %v6540, 96
      %v6545 = vpop.permute.xlu0 %6544
      %6546 = vrot.lane.b32.xlu0 %v6541, 96
      %v6547 = vpop.permute.xlu0 %6546
      %6548 = vrot.lane.b32.xlu0 %v6542, 96
      %v6549 = vpop.permute.xlu0 %6548
      %6550 = vrot.lane.b32.xlu0 %v6543, 96
      %v6551 = vpop.permute.xlu0 %6550
      %v6553 = vsel %vm527, %v6520, 0
      %v6556 = vsel %vm527, %v6521, 0
      %v6559 = vsel %vm527, %v6522, 0
      %v6562 = vsel %vm527, %v6523, 0
      %v6565 = vsel %vm527, %v6545, 0
      %v6568 = vsel %vm527, %v6547, 0
      %v6571 = vsel %vm527, %v6549, 0
      %v6574 = vsel %vm527, %v6551, 0
      %6576 = vmatpush.bf16.xpose.msra.mxu0 0
      %6577 = vmatpush.bf16.xpose.msra.mxu0 0
      %6578 = vmatpush.bf16.xpose.msra.mxu0 0
      %6579 = vmatpush.bf16.xpose.msra.mxu0 0
      %6580 = vmatpush.bf16.xpose.msra.mxu0 %v6574
      %6581 = vmatpush.bf16.xpose.msra.mxu0 %v6571
      %6582 = vmatpush.bf16.xpose.msra.mxu0 %v6568
      %6583 = vmatpush.bf16.xpose.msra.mxu0 %v6565
      %6584 = vmatmul.bf16.gmra.mxu0 %v6553
      %v6585 = vpop.f32.mrf.mxu0
      %v6586 = vadd.f32 0.0, %v6585
      %v6587 = vpop.f32.mrf.mxu0
      %v6588 = vadd.f32 0.0, %v6587
      %6589 = vmatmul.bf16.gmra.mxu0 %v6556
      %v6590 = vpop.f32.mrf.mxu0
      %v6591 = vadd.f32 0.0, %v6590
      %v6592 = vpop.f32.mrf.mxu0
      %v6593 = vadd.f32 0.0, %v6592
      %6594 = vmatmul.bf16.gmra.mxu0 %v6559
      %v6595 = vpop.f32.mrf.mxu0
      %v6596 = vadd.f32 0.0, %v6595
      %v6597 = vpop.f32.mrf.mxu0
      %v6598 = vadd.f32 0.0, %v6597
      %6599 = vmatmul.bf16.gmra.mxu0 %v6562
      %v6600 = vpop.f32.mrf.mxu0
      %v6601 = vadd.f32 0.0, %v6600
      %v6602 = vpop.f32.mrf.mxu0
      %v6603 = vadd.f32 0.0, %v6602
      %6604 = vdwg.mxu0
      %v6613 = vunpack.c.l.b16 %v1674
      %v6614 = vunpack.c.l.b16 %v1675
      %v6615 = vunpack.c.l.b16 %v1676
      %v6616 = vunpack.c.l.b16 %v1677
      %v6617 = vunpack.c.l.b16 %v1678
      %v6618 = vunpack.c.l.b16 %v1679
      %v6619 = vunpack.c.l.b16 %v1680
      %v6620 = vunpack.c.l.b16 %v1681
      %v6621 = vpack.c.b16 %v6614, %v6613
      %v6622 = vpack.c.b16 %v6616, %v6615
      %v6623 = vpack.c.b16 %v6618, %v6617
      %v6624 = vpack.c.b16 %v6620, %v6619
      %v6633 = vunpack.c.l.b16 %v1706
      %v6634 = vunpack.c.l.b16 %v1707
      %v6635 = vunpack.c.l.b16 %v1708
      %v6636 = vunpack.c.l.b16 %v1709
      %v6637 = vunpack.c.l.b16 %v1710
      %v6638 = vunpack.c.l.b16 %v1711
      %v6639 = vunpack.c.l.b16 %v1712
      %v6640 = vunpack.c.l.b16 %v1713
      %v6641 = vpack.c.b16 %v6634, %v6633
      %v6642 = vpack.c.b16 %v6636, %v6635
      %v6643 = vpack.c.b16 %v6638, %v6637
      %v6644 = vpack.c.b16 %v6640, %v6639
      %6645 = vrot.lane.b32.xlu0 %v6641, 96
      %v6646 = vpop.permute.xlu0 %6645
      %6647 = vrot.lane.b32.xlu0 %v6642, 96
      %v6648 = vpop.permute.xlu0 %6647
      %6649 = vrot.lane.b32.xlu0 %v6643, 96
      %v6650 = vpop.permute.xlu0 %6649
      %6651 = vrot.lane.b32.xlu0 %v6644, 96
      %v6652 = vpop.permute.xlu0 %6651
      %v6654 = vsel %vm527, %v6621, 0
      %v6657 = vsel %vm527, %v6622, 0
      %v6660 = vsel %vm527, %v6623, 0
      %v6663 = vsel %vm527, %v6624, 0
      %v6666 = vsel %vm527, %v6646, 0
      %v6669 = vsel %vm527, %v6648, 0
      %v6672 = vsel %vm527, %v6650, 0
      %v6675 = vsel %vm527, %v6652, 0
      %6677 = vmatpush.bf16.xpose.msra.mxu0 0
      %6678 = vmatpush.bf16.xpose.msra.mxu0 0
      %6679 = vmatpush.bf16.xpose.msra.mxu0 0
      %6680 = vmatpush.bf16.xpose.msra.mxu0 0
      %6681 = vmatpush.bf16.xpose.msra.mxu0 %v6675
      %6682 = vmatpush.bf16.xpose.msra.mxu0 %v6672
      %6683 = vmatpush.bf16.xpose.msra.mxu0 %v6669
      %6684 = vmatpush.bf16.xpose.msra.mxu0 %v6666
      %6685 = vmatmul.bf16.gmra.mxu0 %v6654
      %v6686 = vpop.f32.mrf.mxu0
      %v6687 = vadd.f32 0.0, %v6686
      %v6688 = vpop.f32.mrf.mxu0
      %v6689 = vadd.f32 0.0, %v6688
      %6690 = vmatmul.bf16.gmra.mxu0 %v6657
      %v6691 = vpop.f32.mrf.mxu0
      %v6692 = vadd.f32 0.0, %v6691
      %v6693 = vpop.f32.mrf.mxu0
      %v6694 = vadd.f32 0.0, %v6693
      %6695 = vmatmul.bf16.gmra.mxu0 %v6660
      %v6696 = vpop.f32.mrf.mxu0
      %v6697 = vadd.f32 0.0, %v6696
      %v6698 = vpop.f32.mrf.mxu0
      %v6699 = vadd.f32 0.0, %v6698
      %6700 = vmatmul.bf16.gmra.mxu0 %v6663
      %v6701 = vpop.f32.mrf.mxu0
      %v6702 = vadd.f32 0.0, %v6701
      %v6703 = vpop.f32.mrf.mxu0
      %v6704 = vadd.f32 0.0, %v6703
      %6705 = vdwg.mxu0
      %v6706 = vunpack.c.l.b16 %v5535
      %v6707 = vunpack.c.l.b16 %v5537
      %v6708 = vunpack.c.l.b16 %v5539
      %v6709 = vunpack.c.l.b16 %v5541
      %v6710 = vunpack.c.l.b16 %v5543
      %v6711 = vunpack.c.l.b16 %v5545
      %v6712 = vunpack.c.l.b16 %v5547
      %v6713 = vunpack.c.l.b16 %v5549
      %v6714 = vpack.c.b16 %v6707, %v6706
      %v6715 = vpack.c.b16 %v6709, %v6708
      %v6716 = vpack.c.b16 %v6711, %v6710
      %v6717 = vpack.c.b16 %v6713, %v6712
      %v6718 = vunpack.c.l.b16 %v5823
      %v6719 = vunpack.c.l.b16 %v5825
      %v6720 = vunpack.c.l.b16 %v5827
      %v6721 = vunpack.c.l.b16 %v5829
      %v6722 = vunpack.c.l.b16 %v5831
      %v6723 = vunpack.c.l.b16 %v5833
      %v6724 = vunpack.c.l.b16 %v5835
      %v6725 = vunpack.c.l.b16 %v5837
      %v6726 = vpack.c.b16 %v6719, %v6718
      %v6727 = vpack.c.b16 %v6721, %v6720
      %v6728 = vpack.c.b16 %v6723, %v6722
      %v6729 = vpack.c.b16 %v6725, %v6724
      %6730 = vrot.lane.b32.xlu0 %v6726, 96
      %v6731 = vpop.permute.xlu0 %6730
      %6732 = vrot.lane.b32.xlu0 %v6727, 96
      %v6733 = vpop.permute.xlu0 %6732
      %6734 = vrot.lane.b32.xlu0 %v6728, 96
      %v6735 = vpop.permute.xlu0 %6734
      %6736 = vrot.lane.b32.xlu0 %v6729, 96
      %v6737 = vpop.permute.xlu0 %6736
      %v6739 = vsel %vm527, %v6714, 0
      %v6742 = vsel %vm527, %v6715, 0
      %v6745 = vsel %vm527, %v6716, 0
      %v6748 = vsel %vm527, %v6717, 0
      %v6751 = vsel %vm527, %v6731, 0
      %v6754 = vsel %vm527, %v6733, 0
      %v6757 = vsel %vm527, %v6735, 0
      %v6760 = vsel %vm527, %v6737, 0
      %6762 = vmatpush.bf16.xpose.msra.mxu0 0
      %6763 = vmatpush.bf16.xpose.msra.mxu0 0
      %6764 = vmatpush.bf16.xpose.msra.mxu0 0
      %6765 = vmatpush.bf16.xpose.msra.mxu0 0
      %6766 = vmatpush.bf16.xpose.msra.mxu0 %v6760
      %6767 = vmatpush.bf16.xpose.msra.mxu0 %v6757
      %6768 = vmatpush.bf16.xpose.msra.mxu0 %v6754
      %6769 = vmatpush.bf16.xpose.msra.mxu0 %v6751
      %6770 = vmatmul.bf16.gmra.mxu0 %v6739
      %v6771 = vpop.f32.mrf.mxu0
      %v6772 = vadd.f32 0.0, %v6771
      %v6773 = vpop.f32.mrf.mxu0
      %v6774 = vadd.f32 0.0, %v6773
      %6775 = vmatmul.bf16.gmra.mxu0 %v6742
      %v6776 = vpop.f32.mrf.mxu0
      %v6777 = vadd.f32 0.0, %v6776
      %v6778 = vpop.f32.mrf.mxu0
      %v6779 = vadd.f32 0.0, %v6778
      %6780 = vmatmul.bf16.gmra.mxu0 %v6745
      %v6781 = vpop.f32.mrf.mxu0
      %v6782 = vadd.f32 0.0, %v6781
      %v6783 = vpop.f32.mrf.mxu0
      %v6784 = vadd.f32 0.0, %v6783
      %6785 = vmatmul.bf16.gmra.mxu0 %v6748
      %v6786 = vpop.f32.mrf.mxu0
      %v6787 = vadd.f32 0.0, %v6786
      %v6788 = vpop.f32.mrf.mxu0
      %v6789 = vadd.f32 0.0, %v6788
      %6790 = vdwg.mxu0
      %v6791 = vunpack.c.l.b16 %v5551
      %v6792 = vunpack.c.l.b16 %v5553
      %v6793 = vunpack.c.l.b16 %v5555
      %v6794 = vunpack.c.l.b16 %v5557
      %v6795 = vunpack.c.l.b16 %v5559
      %v6796 = vunpack.c.l.b16 %v5561
      %v6797 = vunpack.c.l.b16 %v5563
      %v6798 = vunpack.c.l.b16 %v5565
      %v6799 = vpack.c.b16 %v6792, %v6791
      %v6800 = vpack.c.b16 %v6794, %v6793
      %v6801 = vpack.c.b16 %v6796, %v6795
      %v6802 = vpack.c.b16 %v6798, %v6797
      %v6803 = vunpack.c.l.b16 %v5839
      %v6804 = vunpack.c.l.b16 %v5841
      %v6805 = vunpack.c.l.b16 %v5843
      %v6806 = vunpack.c.l.b16 %v5845
      %v6807 = vunpack.c.l.b16 %v5847
      %v6808 = vunpack.c.l.b16 %v5849
      %v6809 = vunpack.c.l.b16 %v5851
      %v6810 = vunpack.c.l.b16 %v5853
      %v6811 = vpack.c.b16 %v6804, %v6803
      %v6812 = vpack.c.b16 %v6806, %v6805
      %v6813 = vpack.c.b16 %v6808, %v6807
      %v6814 = vpack.c.b16 %v6810, %v6809
      %6815 = vrot.lane.b32.xlu0 %v6811, 96
      %v6816 = vpop.permute.xlu0 %6815
      %6817 = vrot.lane.b32.xlu0 %v6812, 96
      %v6818 = vpop.permute.xlu0 %6817
      %6819 = vrot.lane.b32.xlu0 %v6813, 96
      %v6820 = vpop.permute.xlu0 %6819
      %6821 = vrot.lane.b32.xlu0 %v6814, 96
      %v6822 = vpop.permute.xlu0 %6821
      %v6824 = vsel %vm527, %v6799, 0
      %v6827 = vsel %vm527, %v6800, 0
      %v6830 = vsel %vm527, %v6801, 0
      %v6833 = vsel %vm527, %v6802, 0
      %v6836 = vsel %vm527, %v6816, 0
      %v6839 = vsel %vm527, %v6818, 0
      %v6842 = vsel %vm527, %v6820, 0
      %v6845 = vsel %vm527, %v6822, 0
      %6847 = vmatpush.bf16.xpose.msra.mxu0 0
      %6848 = vmatpush.bf16.xpose.msra.mxu0 0
      %6849 = vmatpush.bf16.xpose.msra.mxu0 0
      %6850 = vmatpush.bf16.xpose.msra.mxu0 0
      %6851 = vmatpush.bf16.xpose.msra.mxu0 %v6845
      %6852 = vmatpush.bf16.xpose.msra.mxu0 %v6842
      %6853 = vmatpush.bf16.xpose.msra.mxu0 %v6839
      %6854 = vmatpush.bf16.xpose.msra.mxu0 %v6836
      %6855 = vmatmul.bf16.gmra.mxu0 %v6824
      %v6856 = vpop.f32.mrf.mxu0
      %v6857 = vadd.f32 0.0, %v6856
      %v6858 = vpop.f32.mrf.mxu0
      %v6859 = vadd.f32 0.0, %v6858
      %6860 = vmatmul.bf16.gmra.mxu0 %v6827
      %v6861 = vpop.f32.mrf.mxu0
      %v6862 = vadd.f32 0.0, %v6861
      %v6863 = vpop.f32.mrf.mxu0
      %v6864 = vadd.f32 0.0, %v6863
      %6865 = vmatmul.bf16.gmra.mxu0 %v6830
      %v6866 = vpop.f32.mrf.mxu0
      %v6867 = vadd.f32 0.0, %v6866
      %v6868 = vpop.f32.mrf.mxu0
      %v6869 = vadd.f32 0.0, %v6868
      %6870 = vmatmul.bf16.gmra.mxu0 %v6833
      %v6871 = vpop.f32.mrf.mxu0
      %v6872 = vadd.f32 0.0, %v6871
      %v6873 = vpop.f32.mrf.mxu0
      %v6874 = vadd.f32 0.0, %v6873
      %6875 = vdwg.mxu0
      %v6876 = vunpack.c.l.b16 %v5567
      %v6877 = vunpack.c.l.b16 %v5569
      %v6878 = vunpack.c.l.b16 %v5571
      %v6879 = vunpack.c.l.b16 %v5573
      %v6880 = vunpack.c.l.b16 %v5575
      %v6881 = vunpack.c.l.b16 %v5577
      %v6882 = vunpack.c.l.b16 %v5579
      %v6883 = vunpack.c.l.b16 %v5581
      %v6884 = vpack.c.b16 %v6877, %v6876
      %v6885 = vpack.c.b16 %v6879, %v6878
      %v6886 = vpack.c.b16 %v6881, %v6880
      %v6887 = vpack.c.b16 %v6883, %v6882
      %v6888 = vunpack.c.l.b16 %v5855
      %v6889 = vunpack.c.l.b16 %v5857
      %v6890 = vunpack.c.l.b16 %v5859
      %v6891 = vunpack.c.l.b16 %v5861
      %v6892 = vunpack.c.l.b16 %v5863
      %v6893 = vunpack.c.l.b16 %v5865
      %v6894 = vunpack.c.l.b16 %v5867
      %v6895 = vunpack.c.l.b16 %v5869
      %v6896 = vpack.c.b16 %v6889, %v6888
      %v6897 = vpack.c.b16 %v6891, %v6890
      %v6898 = vpack.c.b16 %v6893, %v6892
      %v6899 = vpack.c.b16 %v6895, %v6894
      %6900 = vrot.lane.b32.xlu0 %v6896, 96
      %v6901 = vpop.permute.xlu0 %6900
      %6902 = vrot.lane.b32.xlu0 %v6897, 96
      %v6903 = vpop.permute.xlu0 %6902
      %6904 = vrot.lane.b32.xlu0 %v6898, 96
      %v6905 = vpop.permute.xlu0 %6904
      %6906 = vrot.lane.b32.xlu0 %v6899, 96
      %v6907 = vpop.permute.xlu0 %6906
      %v6909 = vsel %vm527, %v6884, 0
      %v6912 = vsel %vm527, %v6885, 0
      %v6915 = vsel %vm527, %v6886, 0
      %v6918 = vsel %vm527, %v6887, 0
      %v6921 = vsel %vm527, %v6901, 0
      %v6924 = vsel %vm527, %v6903, 0
      %v6927 = vsel %vm527, %v6905, 0
      %v6930 = vsel %vm527, %v6907, 0
      %6932 = vmatpush.bf16.xpose.msra.mxu0 0
      %6933 = vmatpush.bf16.xpose.msra.mxu0 0
      %6934 = vmatpush.bf16.xpose.msra.mxu0 0
      %6935 = vmatpush.bf16.xpose.msra.mxu0 0
      %6936 = vmatpush.bf16.xpose.msra.mxu0 %v6930
      %6937 = vmatpush.bf16.xpose.msra.mxu0 %v6927
      %6938 = vmatpush.bf16.xpose.msra.mxu0 %v6924
      %6939 = vmatpush.bf16.xpose.msra.mxu0 %v6921
      %6940 = vmatmul.bf16.gmra.mxu0 %v6909
      %v6941 = vpop.f32.mrf.mxu0
      %v6942 = vadd.f32 0.0, %v6941
      %v6943 = vpop.f32.mrf.mxu0
      %v6944 = vadd.f32 0.0, %v6943
      %6945 = vmatmul.bf16.gmra.mxu0 %v6912
      %v6946 = vpop.f32.mrf.mxu0
      %v6947 = vadd.f32 0.0, %v6946
      %v6948 = vpop.f32.mrf.mxu0
      %v6949 = vadd.f32 0.0, %v6948
      %6950 = vmatmul.bf16.gmra.mxu0 %v6915
      %v6951 = vpop.f32.mrf.mxu0
      %v6952 = vadd.f32 0.0, %v6951
      %v6953 = vpop.f32.mrf.mxu0
      %v6954 = vadd.f32 0.0, %v6953
      %6955 = vmatmul.bf16.gmra.mxu0 %v6918
      %v6956 = vpop.f32.mrf.mxu0
      %v6957 = vadd.f32 0.0, %v6956
      %v6958 = vpop.f32.mrf.mxu0
      %v6959 = vadd.f32 0.0, %v6958
      %6960 = vdwg.mxu0
      %v6961 = vunpack.c.l.b16 %v5583
      %v6962 = vunpack.c.l.b16 %v5585
      %v6963 = vunpack.c.l.b16 %v5587
      %v6964 = vunpack.c.l.b16 %v5589
      %v6965 = vunpack.c.l.b16 %v5591
      %v6966 = vunpack.c.l.b16 %v5593
      %v6967 = vunpack.c.l.b16 %v5595
      %v6968 = vunpack.c.l.b16 %v5597
      %v6969 = vpack.c.b16 %v6962, %v6961
      %v6970 = vpack.c.b16 %v6964, %v6963
      %v6971 = vpack.c.b16 %v6966, %v6965
      %v6972 = vpack.c.b16 %v6968, %v6967
      %v6973 = vunpack.c.l.b16 %v5871
      %v6974 = vunpack.c.l.b16 %v5873
      %v6975 = vunpack.c.l.b16 %v5875
      %v6976 = vunpack.c.l.b16 %v5877
      %v6977 = vunpack.c.l.b16 %v5879
      %v6978 = vunpack.c.l.b16 %v5881
      %v6979 = vunpack.c.l.b16 %v5883
      %v6980 = vunpack.c.l.b16 %v5885
      %v6981 = vpack.c.b16 %v6974, %v6973
      %v6982 = vpack.c.b16 %v6976, %v6975
      %v6983 = vpack.c.b16 %v6978, %v6977
      %v6984 = vpack.c.b16 %v6980, %v6979
      %6985 = vrot.lane.b32.xlu0 %v6981, 96
      %v6986 = vpop.permute.xlu0 %6985
      %6987 = vrot.lane.b32.xlu0 %v6982, 96
      %v6988 = vpop.permute.xlu0 %6987
      %6989 = vrot.lane.b32.xlu0 %v6983, 96
      %v6990 = vpop.permute.xlu0 %6989
      %6991 = vrot.lane.b32.xlu0 %v6984, 96
      %v6992 = vpop.permute.xlu0 %6991
      %v6994 = vsel %vm527, %v6969, 0
      %v6997 = vsel %vm527, %v6970, 0
      %v7000 = vsel %vm527, %v6971, 0
      %v7003 = vsel %vm527, %v6972, 0
      %v7006 = vsel %vm527, %v6986, 0
      %v7009 = vsel %vm527, %v6988, 0
      %v7012 = vsel %vm527, %v6990, 0
      %v7015 = vsel %vm527, %v6992, 0
      %7017 = vmatpush.bf16.xpose.msra.mxu0 0
      %7018 = vmatpush.bf16.xpose.msra.mxu0 0
      %7019 = vmatpush.bf16.xpose.msra.mxu0 0
      %7020 = vmatpush.bf16.xpose.msra.mxu0 0
      %7021 = vmatpush.bf16.xpose.msra.mxu0 %v7015
      %7022 = vmatpush.bf16.xpose.msra.mxu0 %v7012
      %7023 = vmatpush.bf16.xpose.msra.mxu0 %v7009
      %7024 = vmatpush.bf16.xpose.msra.mxu0 %v7006
      %7025 = vmatmul.bf16.gmra.mxu0 %v6994
      %v7026 = vpop.f32.mrf.mxu0
      %v7027 = vadd.f32 0.0, %v7026
      %v7028 = vpop.f32.mrf.mxu0
      %v7029 = vadd.f32 0.0, %v7028
      %7030 = vmatmul.bf16.gmra.mxu0 %v6997
      %v7031 = vpop.f32.mrf.mxu0
      %v7032 = vadd.f32 0.0, %v7031
      %v7033 = vpop.f32.mrf.mxu0
      %v7034 = vadd.f32 0.0, %v7033
      %7035 = vmatmul.bf16.gmra.mxu0 %v7000
      %v7036 = vpop.f32.mrf.mxu0
      %v7037 = vadd.f32 0.0, %v7036
      %v7038 = vpop.f32.mrf.mxu0
      %v7039 = vadd.f32 0.0, %v7038
      %7040 = vmatmul.bf16.gmra.mxu0 %v7003
      %v7041 = vpop.f32.mrf.mxu0
      %v7042 = vadd.f32 0.0, %v7041
      %v7043 = vpop.f32.mrf.mxu0
      %v7044 = vadd.f32 0.0, %v7043
      %7045 = vdwg.mxu0
      %v7046 = vunpack.c.l.b16 %v5631
      %v7047 = vunpack.c.l.b16 %v5633
      %v7048 = vunpack.c.l.b16 %v5635
      %v7049 = vunpack.c.l.b16 %v5637
      %v7050 = vunpack.c.l.b16 %v5639
      %v7051 = vunpack.c.l.b16 %v5641
      %v7052 = vunpack.c.l.b16 %v5643
      %v7053 = vunpack.c.l.b16 %v5645
      %v7054 = vpack.c.b16 %v7047, %v7046
      %v7055 = vpack.c.b16 %v7049, %v7048
      %v7056 = vpack.c.b16 %v7051, %v7050
      %v7057 = vpack.c.b16 %v7053, %v7052
      %v7058 = vunpack.c.l.b16 %v5919
      %v7059 = vunpack.c.l.b16 %v5921
      %v7060 = vunpack.c.l.b16 %v5923
      %v7061 = vunpack.c.l.b16 %v5925
      %v7062 = vunpack.c.l.b16 %v5927
      %v7063 = vunpack.c.l.b16 %v5929
      %v7064 = vunpack.c.l.b16 %v5931
      %v7065 = vunpack.c.l.b16 %v5933
      %v7066 = vpack.c.b16 %v7059, %v7058
      %v7067 = vpack.c.b16 %v7061, %v7060
      %v7068 = vpack.c.b16 %v7063, %v7062
      %v7069 = vpack.c.b16 %v7065, %v7064
      %7070 = vrot.lane.b32.xlu0 %v7066, 96
      %v7071 = vpop.permute.xlu0 %7070
      %7072 = vrot.lane.b32.xlu0 %v7067, 96
      %v7073 = vpop.permute.xlu0 %7072
      %7074 = vrot.lane.b32.xlu0 %v7068, 96
      %v7075 = vpop.permute.xlu0 %7074
      %7076 = vrot.lane.b32.xlu0 %v7069, 96
      %v7077 = vpop.permute.xlu0 %7076
      %v7079 = vsel %vm527, %v7054, 0
      %v7082 = vsel %vm527, %v7055, 0
      %v7085 = vsel %vm527, %v7056, 0
      %v7088 = vsel %vm527, %v7057, 0
      %v7091 = vsel %vm527, %v7071, 0
      %v7094 = vsel %vm527, %v7073, 0
      %v7097 = vsel %vm527, %v7075, 0
      %v7100 = vsel %vm527, %v7077, 0
      %7102 = vmatpush.bf16.xpose.msra.mxu0 0
      %7103 = vmatpush.bf16.xpose.msra.mxu0 0
      %7104 = vmatpush.bf16.xpose.msra.mxu0 0
      %7105 = vmatpush.bf16.xpose.msra.mxu0 0
      %7106 = vmatpush.bf16.xpose.msra.mxu0 %v7100
      %7107 = vmatpush.bf16.xpose.msra.mxu0 %v7097
      %7108 = vmatpush.bf16.xpose.msra.mxu0 %v7094
      %7109 = vmatpush.bf16.xpose.msra.mxu0 %v7091
      %7110 = vmatmul.bf16.gmra.mxu0 %v7079
      %v7111 = vpop.f32.mrf.mxu0
      %v7112 = vadd.f32 0.0, %v7111
      %v7113 = vpop.f32.mrf.mxu0
      %v7114 = vadd.f32 0.0, %v7113
      %7115 = vmatmul.bf16.gmra.mxu0 %v7082
      %v7116 = vpop.f32.mrf.mxu0
      %v7117 = vadd.f32 0.0, %v7116
      %v7118 = vpop.f32.mrf.mxu0
      %v7119 = vadd.f32 0.0, %v7118
      %7120 = vmatmul.bf16.gmra.mxu0 %v7085
      %v7121 = vpop.f32.mrf.mxu0
      %v7122 = vadd.f32 0.0, %v7121
      %v7123 = vpop.f32.mrf.mxu0
      %v7124 = vadd.f32 0.0, %v7123
      %7125 = vmatmul.bf16.gmra.mxu0 %v7088
      %v7126 = vpop.f32.mrf.mxu0
      %v7127 = vadd.f32 0.0, %v7126
      %v7128 = vpop.f32.mrf.mxu0
      %v7129 = vadd.f32 0.0, %v7128
      %7130 = vdwg.mxu0
      %v7131 = vunpack.c.l.b16 %v5647
      %v7132 = vunpack.c.l.b16 %v5649
      %v7133 = vunpack.c.l.b16 %v5651
      %v7134 = vunpack.c.l.b16 %v5653
      %v7135 = vunpack.c.l.b16 %v5655
      %v7136 = vunpack.c.l.b16 %v5657
      %v7137 = vunpack.c.l.b16 %v5659
      %v7138 = vunpack.c.l.b16 %v5661
      %v7139 = vpack.c.b16 %v7132, %v7131
      %v7140 = vpack.c.b16 %v7134, %v7133
      %v7141 = vpack.c.b16 %v7136, %v7135
      %v7142 = vpack.c.b16 %v7138, %v7137
      %v7143 = vunpack.c.l.b16 %v5935
      %v7144 = vunpack.c.l.b16 %v5937
      %v7145 = vunpack.c.l.b16 %v5939
      %v7146 = vunpack.c.l.b16 %v5941
      %v7147 = vunpack.c.l.b16 %v5943
      %v7148 = vunpack.c.l.b16 %v5945
      %v7149 = vunpack.c.l.b16 %v5947
      %v7150 = vunpack.c.l.b16 %v5949
      %v7151 = vpack.c.b16 %v7144, %v7143
      %v7152 = vpack.c.b16 %v7146, %v7145
      %v7153 = vpack.c.b16 %v7148, %v7147
      %v7154 = vpack.c.b16 %v7150, %v7149
      %7155 = vrot.lane.b32.xlu0 %v7151, 96
      %v7156 = vpop.permute.xlu0 %7155
      %7157 = vrot.lane.b32.xlu0 %v7152, 96
      %v7158 = vpop.permute.xlu0 %7157
      %7159 = vrot.lane.b32.xlu0 %v7153, 96
      %v7160 = vpop.permute.xlu0 %7159
      %7161 = vrot.lane.b32.xlu0 %v7154, 96
      %v7162 = vpop.permute.xlu0 %7161
      %v7164 = vsel %vm527, %v7139, 0
      %v7167 = vsel %vm527, %v7140, 0
      %v7170 = vsel %vm527, %v7141, 0
      %v7173 = vsel %vm527, %v7142, 0
      %v7176 = vsel %vm527, %v7156, 0
      %v7179 = vsel %vm527, %v7158, 0
      %v7182 = vsel %vm527, %v7160, 0
      %v7185 = vsel %vm527, %v7162, 0
      %7187 = vmatpush.bf16.xpose.msra.mxu0 0
      %7188 = vmatpush.bf16.xpose.msra.mxu0 0
      %7189 = vmatpush.bf16.xpose.msra.mxu0 0
      %7190 = vmatpush.bf16.xpose.msra.mxu0 0
      %7191 = vmatpush.bf16.xpose.msra.mxu0 %v7185
      %7192 = vmatpush.bf16.xpose.msra.mxu0 %v7182
      %7193 = vmatpush.bf16.xpose.msra.mxu0 %v7179
      %7194 = vmatpush.bf16.xpose.msra.mxu0 %v7176
      %7195 = vmatmul.bf16.gmra.mxu0 %v7164
      %v7196 = vpop.f32.mrf.mxu0
      %v7197 = vadd.f32 0.0, %v7196
      %v7198 = vpop.f32.mrf.mxu0
      %v7199 = vadd.f32 0.0, %v7198
      %7200 = vmatmul.bf16.gmra.mxu0 %v7167
      %v7201 = vpop.f32.mrf.mxu0
      %v7202 = vadd.f32 0.0, %v7201
      %v7203 = vpop.f32.mrf.mxu0
      %v7204 = vadd.f32 0.0, %v7203
      %7205 = vmatmul.bf16.gmra.mxu0 %v7170
      %v7206 = vpop.f32.mrf.mxu0
      %v7207 = vadd.f32 0.0, %v7206
      %v7208 = vpop.f32.mrf.mxu0
      %v7209 = vadd.f32 0.0, %v7208
      %7210 = vmatmul.bf16.gmra.mxu0 %v7173
      %v7211 = vpop.f32.mrf.mxu0
      %v7212 = vadd.f32 0.0, %v7211
      %v7213 = vpop.f32.mrf.mxu0
      %v7214 = vadd.f32 0.0, %v7213
      %7215 = vdwg.mxu0
      %v7216 = vunpack.c.l.b16 %v5663
      %v7217 = vunpack.c.l.b16 %v5665
      %v7218 = vunpack.c.l.b16 %v5667
      %v7219 = vunpack.c.l.b16 %v5669
      %v7220 = vunpack.c.l.b16 %v5671
      %v7221 = vunpack.c.l.b16 %v5673
      %v7222 = vunpack.c.l.b16 %v5675
      %v7223 = vunpack.c.l.b16 %v5677
      %v7224 = vpack.c.b16 %v7217, %v7216
      %v7225 = vpack.c.b16 %v7219, %v7218
      %v7226 = vpack.c.b16 %v7221, %v7220
      %v7227 = vpack.c.b16 %v7223, %v7222
      %v7228 = vunpack.c.l.b16 %v5951
      %v7229 = vunpack.c.l.b16 %v5953
      %v7230 = vunpack.c.l.b16 %v5955
      %v7231 = vunpack.c.l.b16 %v5957
      %v7232 = vunpack.c.l.b16 %v5959
      %v7233 = vunpack.c.l.b16 %v5961
      %v7234 = vunpack.c.l.b16 %v5963
      %v7235 = vunpack.c.l.b16 %v5965
      %v7236 = vpack.c.b16 %v7229, %v7228
      %v7237 = vpack.c.b16 %v7231, %v7230
      %v7238 = vpack.c.b16 %v7233, %v7232
      %v7239 = vpack.c.b16 %v7235, %v7234
      %7240 = vrot.lane.b32.xlu0 %v7236, 96
      %v7241 = vpop.permute.xlu0 %7240
      %7242 = vrot.lane.b32.xlu0 %v7237, 96
      %v7243 = vpop.permute.xlu0 %7242
      %7244 = vrot.lane.b32.xlu0 %v7238, 96
      %v7245 = vpop.permute.xlu0 %7244
      %7246 = vrot.lane.b32.xlu0 %v7239, 96
      %v7247 = vpop.permute.xlu0 %7246
      %v7249 = vsel %vm527, %v7224, 0
      %v7252 = vsel %vm527, %v7225, 0
      %v7255 = vsel %vm527, %v7226, 0
      %v7258 = vsel %vm527, %v7227, 0
      %v7261 = vsel %vm527, %v7241, 0
      %v7264 = vsel %vm527, %v7243, 0
      %v7267 = vsel %vm527, %v7245, 0
      %v7270 = vsel %vm527, %v7247, 0
      %7272 = vmatpush.bf16.xpose.msra.mxu0 0
      %7273 = vmatpush.bf16.xpose.msra.mxu0 0
      %7274 = vmatpush.bf16.xpose.msra.mxu0 0
      %7275 = vmatpush.bf16.xpose.msra.mxu0 0
      %7276 = vmatpush.bf16.xpose.msra.mxu0 %v7270
      %7277 = vmatpush.bf16.xpose.msra.mxu0 %v7267
      %7278 = vmatpush.bf16.xpose.msra.mxu0 %v7264
      %7279 = vmatpush.bf16.xpose.msra.mxu0 %v7261
      %7280 = vmatmul.bf16.gmra.mxu0 %v7249
      %v7281 = vpop.f32.mrf.mxu0
      %v7282 = vadd.f32 0.0, %v7281
      %v7283 = vpop.f32.mrf.mxu0
      %v7284 = vadd.f32 0.0, %v7283
      %7285 = vmatmul.bf16.gmra.mxu0 %v7252
      %v7286 = vpop.f32.mrf.mxu0
      %v7287 = vadd.f32 0.0, %v7286
      %v7288 = vpop.f32.mrf.mxu0
      %v7289 = vadd.f32 0.0, %v7288
      %7290 = vmatmul.bf16.gmra.mxu0 %v7255
      %v7291 = vpop.f32.mrf.mxu0
      %v7292 = vadd.f32 0.0, %v7291
      %v7293 = vpop.f32.mrf.mxu0
      %v7294 = vadd.f32 0.0, %v7293
      %7295 = vmatmul.bf16.gmra.mxu0 %v7258
      %v7296 = vpop.f32.mrf.mxu0
      %v7297 = vadd.f32 0.0, %v7296
      %v7298 = vpop.f32.mrf.mxu0
      %v7299 = vadd.f32 0.0, %v7298
      %7300 = vdwg.mxu0
      %v7301 = vunpack.c.l.b16 %v5679
      %v7302 = vunpack.c.l.b16 %v5681
      %v7303 = vunpack.c.l.b16 %v5683
      %v7304 = vunpack.c.l.b16 %v5685
      %v7305 = vunpack.c.l.b16 %v5687
      %v7306 = vunpack.c.l.b16 %v5689
      %v7307 = vunpack.c.l.b16 %v5691
      %v7308 = vunpack.c.l.b16 %v5693
      %v7309 = vpack.c.b16 %v7302, %v7301
      %v7310 = vpack.c.b16 %v7304, %v7303
      %v7311 = vpack.c.b16 %v7306, %v7305
      %v7312 = vpack.c.b16 %v7308, %v7307
      %v7313 = vunpack.c.l.b16 %v5967
      %v7314 = vunpack.c.l.b16 %v5969
      %v7315 = vunpack.c.l.b16 %v5971
      %v7316 = vunpack.c.l.b16 %v5973
      %v7317 = vunpack.c.l.b16 %v5975
      %v7318 = vunpack.c.l.b16 %v5977
      %v7319 = vunpack.c.l.b16 %v5979
      %v7320 = vunpack.c.l.b16 %v5981
      %v7321 = vpack.c.b16 %v7314, %v7313
      %v7322 = vpack.c.b16 %v7316, %v7315
      %v7323 = vpack.c.b16 %v7318, %v7317
      %v7324 = vpack.c.b16 %v7320, %v7319
      %7325 = vrot.lane.b32.xlu0 %v7321, 96
      %v7326 = vpop.permute.xlu0 %7325
      %7327 = vrot.lane.b32.xlu0 %v7322, 96
      %v7328 = vpop.permute.xlu0 %7327
      %7329 = vrot.lane.b32.xlu0 %v7323, 96
      %v7330 = vpop.permute.xlu0 %7329
      %7331 = vrot.lane.b32.xlu0 %v7324, 96
      %v7332 = vpop.permute.xlu0 %7331
      %v7334 = vsel %vm527, %v7309, 0
      %v7337 = vsel %vm527, %v7310, 0
      %v7340 = vsel %vm527, %v7311, 0
      %v7343 = vsel %vm527, %v7312, 0
      %v7346 = vsel %vm527, %v7326, 0
      %v7349 = vsel %vm527, %v7328, 0
      %v7352 = vsel %vm527, %v7330, 0
      %v7355 = vsel %vm527, %v7332, 0
      %7357 = vmatpush.bf16.xpose.msra.mxu0 0
      %7358 = vmatpush.bf16.xpose.msra.mxu0 0
      %7359 = vmatpush.bf16.xpose.msra.mxu0 0
      %7360 = vmatpush.bf16.xpose.msra.mxu0 0
      %7361 = vmatpush.bf16.xpose.msra.mxu0 %v7355
      %7362 = vmatpush.bf16.xpose.msra.mxu0 %v7352
      %7363 = vmatpush.bf16.xpose.msra.mxu0 %v7349
      %7364 = vmatpush.bf16.xpose.msra.mxu0 %v7346
      %7365 = vmatmul.bf16.gmra.mxu0 %v7334
      %v7366 = vpop.f32.mrf.mxu0
      %v7367 = vadd.f32 0.0, %v7366
      %v7368 = vpop.f32.mrf.mxu0
      %v7369 = vadd.f32 0.0, %v7368
      %7370 = vmatmul.bf16.gmra.mxu0 %v7337
      %v7371 = vpop.f32.mrf.mxu0
      %v7372 = vadd.f32 0.0, %v7371
      %v7373 = vpop.f32.mrf.mxu0
      %v7374 = vadd.f32 0.0, %v7373
      %7375 = vmatmul.bf16.gmra.mxu0 %v7340
      %v7376 = vpop.f32.mrf.mxu0
      %v7377 = vadd.f32 0.0, %v7376
      %v7378 = vpop.f32.mrf.mxu0
      %v7379 = vadd.f32 0.0, %v7378
      %7380 = vmatmul.bf16.gmra.mxu0 %v7343
      %v7381 = vpop.f32.mrf.mxu0
      %v7382 = vadd.f32 0.0, %v7381
      %v7383 = vpop.f32.mrf.mxu0
      %v7384 = vadd.f32 0.0, %v7383
      %7385 = vdwg.mxu0
      %v7386 = vunpack.c.l.b16 %v5727
      %v7387 = vunpack.c.l.b16 %v5729
      %v7388 = vunpack.c.l.b16 %v5731
      %v7389 = vunpack.c.l.b16 %v5733
      %v7390 = vunpack.c.l.b16 %v5735
      %v7391 = vunpack.c.l.b16 %v5737
      %v7392 = vunpack.c.l.b16 %v5739
      %v7393 = vunpack.c.l.b16 %v5741
      %v7394 = vpack.c.b16 %v7387, %v7386
      %v7395 = vpack.c.b16 %v7389, %v7388
      %v7396 = vpack.c.b16 %v7391, %v7390
      %v7397 = vpack.c.b16 %v7393, %v7392
      %v7398 = vunpack.c.l.b16 %v6015
      %v7399 = vunpack.c.l.b16 %v6017
      %v7400 = vunpack.c.l.b16 %v6019
      %v7401 = vunpack.c.l.b16 %v6021
      %v7402 = vunpack.c.l.b16 %v6023
      %v7403 = vunpack.c.l.b16 %v6025
      %v7404 = vunpack.c.l.b16 %v6027
      %v7405 = vunpack.c.l.b16 %v6029
      %v7406 = vpack.c.b16 %v7399, %v7398
      %v7407 = vpack.c.b16 %v7401, %v7400
      %v7408 = vpack.c.b16 %v7403, %v7402
      %v7409 = vpack.c.b16 %v7405, %v7404
      %7410 = vrot.lane.b32.xlu0 %v7406, 96
      %v7411 = vpop.permute.xlu0 %7410
      %7412 = vrot.lane.b32.xlu0 %v7407, 96
      %v7413 = vpop.permute.xlu0 %7412
      %7414 = vrot.lane.b32.xlu0 %v7408, 96
      %v7415 = vpop.permute.xlu0 %7414
      %7416 = vrot.lane.b32.xlu0 %v7409, 96
      %v7417 = vpop.permute.xlu0 %7416
      %v7419 = vsel %vm527, %v7394, 0
      %v7422 = vsel %vm527, %v7395, 0
      %v7425 = vsel %vm527, %v7396, 0
      %v7428 = vsel %vm527, %v7397, 0
      %v7431 = vsel %vm527, %v7411, 0
      %v7434 = vsel %vm527, %v7413, 0
      %v7437 = vsel %vm527, %v7415, 0
      %v7440 = vsel %vm527, %v7417, 0
      %7442 = vmatpush.bf16.xpose.msra.mxu0 0
      %7443 = vmatpush.bf16.xpose.msra.mxu0 0
      %7444 = vmatpush.bf16.xpose.msra.mxu0 0
      %7445 = vmatpush.bf16.xpose.msra.mxu0 0
      %7446 = vmatpush.bf16.xpose.msra.mxu0 %v7440
      %7447 = vmatpush.bf16.xpose.msra.mxu0 %v7437
      %7448 = vmatpush.bf16.xpose.msra.mxu0 %v7434
      %7449 = vmatpush.bf16.xpose.msra.mxu0 %v7431
      %7450 = vmatmul.bf16.gmra.mxu0 %v7419
      %v7451 = vpop.f32.mrf.mxu0
      %v7452 = vadd.f32 0.0, %v7451
      %v7453 = vpop.f32.mrf.mxu0
      %v7454 = vadd.f32 0.0, %v7453
      %7455 = vmatmul.bf16.gmra.mxu0 %v7422
      %v7456 = vpop.f32.mrf.mxu0
      %v7457 = vadd.f32 0.0, %v7456
      %v7458 = vpop.f32.mrf.mxu0
      %v7459 = vadd.f32 0.0, %v7458
      %7460 = vmatmul.bf16.gmra.mxu0 %v7425
      %v7461 = vpop.f32.mrf.mxu0
      %v7462 = vadd.f32 0.0, %v7461
      %v7463 = vpop.f32.mrf.mxu0
      %v7464 = vadd.f32 0.0, %v7463
      %7465 = vmatmul.bf16.gmra.mxu0 %v7428
      %v7466 = vpop.f32.mrf.mxu0
      %v7467 = vadd.f32 0.0, %v7466
      %v7468 = vpop.f32.mrf.mxu0
      %v7469 = vadd.f32 0.0, %v7468
      %7470 = vdwg.mxu0
      %v7471 = vunpack.c.l.b16 %v5743
      %v7472 = vunpack.c.l.b16 %v5745
      %v7473 = vunpack.c.l.b16 %v5747
      %v7474 = vunpack.c.l.b16 %v5749
      %v7475 = vunpack.c.l.b16 %v5751
      %v7476 = vunpack.c.l.b16 %v5753
      %v7477 = vunpack.c.l.b16 %v5755
      %v7478 = vunpack.c.l.b16 %v5757
      %v7479 = vpack.c.b16 %v7472, %v7471
      %v7480 = vpack.c.b16 %v7474, %v7473
      %v7481 = vpack.c.b16 %v7476, %v7475
      %v7482 = vpack.c.b16 %v7478, %v7477
      %v7483 = vunpack.c.l.b16 %v6031
      %v7484 = vunpack.c.l.b16 %v6033
      %v7485 = vunpack.c.l.b16 %v6035
      %v7486 = vunpack.c.l.b16 %v6037
      %v7487 = vunpack.c.l.b16 %v6039
      %v7488 = vunpack.c.l.b16 %v6041
      %v7489 = vunpack.c.l.b16 %v6043
      %v7490 = vunpack.c.l.b16 %v6045
      %v7491 = vpack.c.b16 %v7484, %v7483
      %v7492 = vpack.c.b16 %v7486, %v7485
      %v7493 = vpack.c.b16 %v7488, %v7487
      %v7494 = vpack.c.b16 %v7490, %v7489
      %7495 = vrot.lane.b32.xlu0 %v7491, 96
      %v7496 = vpop.permute.xlu0 %7495
      %7497 = vrot.lane.b32.xlu0 %v7492, 96
      %v7498 = vpop.permute.xlu0 %7497
      %7499 = vrot.lane.b32.xlu0 %v7493, 96
      %v7500 = vpop.permute.xlu0 %7499
      %7501 = vrot.lane.b32.xlu0 %v7494, 96
      %v7502 = vpop.permute.xlu0 %7501
      %v7504 = vsel %vm527, %v7479, 0
      %v7507 = vsel %vm527, %v7480, 0
      %v7510 = vsel %vm527, %v7481, 0
      %v7513 = vsel %vm527, %v7482, 0
      %v7516 = vsel %vm527, %v7496, 0
      %v7519 = vsel %vm527, %v7498, 0
      %v7522 = vsel %vm527, %v7500, 0
      %v7525 = vsel %vm527, %v7502, 0
      %7527 = vmatpush.bf16.xpose.msra.mxu0 0
      %7528 = vmatpush.bf16.xpose.msra.mxu0 0
      %7529 = vmatpush.bf16.xpose.msra.mxu0 0
      %7530 = vmatpush.bf16.xpose.msra.mxu0 0
      %7531 = vmatpush.bf16.xpose.msra.mxu0 %v7525
      %7532 = vmatpush.bf16.xpose.msra.mxu0 %v7522
      %7533 = vmatpush.bf16.xpose.msra.mxu0 %v7519
      %7534 = vmatpush.bf16.xpose.msra.mxu0 %v7516
      %7535 = vmatmul.bf16.gmra.mxu0 %v7504
      %v7536 = vpop.f32.mrf.mxu0
      %v7537 = vadd.f32 0.0, %v7536
      %v7538 = vpop.f32.mrf.mxu0
      %v7539 = vadd.f32 0.0, %v7538
      %7540 = vmatmul.bf16.gmra.mxu0 %v7507
      %v7541 = vpop.f32.mrf.mxu0
      %v7542 = vadd.f32 0.0, %v7541
      %v7543 = vpop.f32.mrf.mxu0
      %v7544 = vadd.f32 0.0, %v7543
      %7545 = vmatmul.bf16.gmra.mxu0 %v7510
      %v7546 = vpop.f32.mrf.mxu0
      %v7547 = vadd.f32 0.0, %v7546
      %v7548 = vpop.f32.mrf.mxu0
      %v7549 = vadd.f32 0.0, %v7548
      %7550 = vmatmul.bf16.gmra.mxu0 %v7513
      %v7551 = vpop.f32.mrf.mxu0
      %v7552 = vadd.f32 0.0, %v7551
      %v7553 = vpop.f32.mrf.mxu0
      %v7554 = vadd.f32 0.0, %v7553
      %7555 = vdwg.mxu0
      %v7556 = vunpack.c.l.b16 %v5759
      %v7557 = vunpack.c.l.b16 %v5761
      %v7558 = vunpack.c.l.b16 %v5763
      %v7559 = vunpack.c.l.b16 %v5765
      %v7560 = vunpack.c.l.b16 %v5767
      %v7561 = vunpack.c.l.b16 %v5769
      %v7562 = vunpack.c.l.b16 %v5771
      %v7563 = vunpack.c.l.b16 %v5773
      %v7564 = vpack.c.b16 %v7557, %v7556
      %v7565 = vpack.c.b16 %v7559, %v7558
      %v7566 = vpack.c.b16 %v7561, %v7560
      %v7567 = vpack.c.b16 %v7563, %v7562
      %v7568 = vunpack.c.l.b16 %v6047
      %v7569 = vunpack.c.l.b16 %v6049
      %v7570 = vunpack.c.l.b16 %v6051
      %v7571 = vunpack.c.l.b16 %v6053
      %v7572 = vunpack.c.l.b16 %v6055
      %v7573 = vunpack.c.l.b16 %v6057
      %v7574 = vunpack.c.l.b16 %v6059
      %v7575 = vunpack.c.l.b16 %v6061
      %v7576 = vpack.c.b16 %v7569, %v7568
      %v7577 = vpack.c.b16 %v7571, %v7570
      %v7578 = vpack.c.b16 %v7573, %v7572
      %v7579 = vpack.c.b16 %v7575, %v7574
      %7580 = vrot.lane.b32.xlu0 %v7576, 96
      %v7581 = vpop.permute.xlu0 %7580
      %7582 = vrot.lane.b32.xlu0 %v7577, 96
      %v7583 = vpop.permute.xlu0 %7582
      %7584 = vrot.lane.b32.xlu0 %v7578, 96
      %v7585 = vpop.permute.xlu0 %7584
      %7586 = vrot.lane.b32.xlu0 %v7579, 96
      %v7587 = vpop.permute.xlu0 %7586
      %v7589 = vsel %vm527, %v7564, 0
      %v7592 = vsel %vm527, %v7565, 0
      %v7595 = vsel %vm527, %v7566, 0
      %v7598 = vsel %vm527, %v7567, 0
      %v7601 = vsel %vm527, %v7581, 0
      %v7604 = vsel %vm527, %v7583, 0
      %v7607 = vsel %vm527, %v7585, 0
      %v7610 = vsel %vm527, %v7587, 0
      %7612 = vmatpush.bf16.xpose.msra.mxu0 0
      %7613 = vmatpush.bf16.xpose.msra.mxu0 0
      %7614 = vmatpush.bf16.xpose.msra.mxu0 0
      %7615 = vmatpush.bf16.xpose.msra.mxu0 0
      %7616 = vmatpush.bf16.xpose.msra.mxu0 %v7610
      %7617 = vmatpush.bf16.xpose.msra.mxu0 %v7607
      %7618 = vmatpush.bf16.xpose.msra.mxu0 %v7604
      %7619 = vmatpush.bf16.xpose.msra.mxu0 %v7601
      %7620 = vmatmul.bf16.gmra.mxu0 %v7589
      %v7621 = vpop.f32.mrf.mxu0
      %v7622 = vadd.f32 0.0, %v7621
      %v7623 = vpop.f32.mrf.mxu0
      %v7624 = vadd.f32 0.0, %v7623
      %7625 = vmatmul.bf16.gmra.mxu0 %v7592
      %v7626 = vpop.f32.mrf.mxu0
      %v7627 = vadd.f32 0.0, %v7626
      %v7628 = vpop.f32.mrf.mxu0
      %v7629 = vadd.f32 0.0, %v7628
      %7630 = vmatmul.bf16.gmra.mxu0 %v7595
      %v7631 = vpop.f32.mrf.mxu0
      %v7632 = vadd.f32 0.0, %v7631
      %v7633 = vpop.f32.mrf.mxu0
      %v7634 = vadd.f32 0.0, %v7633
      %7635 = vmatmul.bf16.gmra.mxu0 %v7598
      %v7636 = vpop.f32.mrf.mxu0
      %v7637 = vadd.f32 0.0, %v7636
      %v7638 = vpop.f32.mrf.mxu0
      %v7639 = vadd.f32 0.0, %v7638
      %7640 = vdwg.mxu0
      %v7641 = vunpack.c.l.b16 %v5775
      %v7642 = vunpack.c.l.b16 %v5777
      %v7643 = vunpack.c.l.b16 %v5779
      %v7644 = vunpack.c.l.b16 %v5781
      %v7645 = vunpack.c.l.b16 %v5783
      %v7646 = vunpack.c.l.b16 %v5785
      %v7647 = vunpack.c.l.b16 %v5787
      %v7648 = vunpack.c.l.b16 %v5789
      %v7649 = vpack.c.b16 %v7642, %v7641
      %v7650 = vpack.c.b16 %v7644, %v7643
      %v7651 = vpack.c.b16 %v7646, %v7645
      %v7652 = vpack.c.b16 %v7648, %v7647
      %v7653 = vunpack.c.l.b16 %v6063
      %v7654 = vunpack.c.l.b16 %v6065
      %v7655 = vunpack.c.l.b16 %v6067
      %v7656 = vunpack.c.l.b16 %v6069
      %v7657 = vunpack.c.l.b16 %v6071
      %v7658 = vunpack.c.l.b16 %v6073
      %v7659 = vunpack.c.l.b16 %v6075
      %v7660 = vunpack.c.l.b16 %v6077
      %v7661 = vpack.c.b16 %v7654, %v7653
      %v7662 = vpack.c.b16 %v7656, %v7655
      %v7663 = vpack.c.b16 %v7658, %v7657
      %v7664 = vpack.c.b16 %v7660, %v7659
      %7665 = vrot.lane.b32.xlu0 %v7661, 96
      %v7666 = vpop.permute.xlu0 %7665
      %7667 = vrot.lane.b32.xlu0 %v7662, 96
      %v7668 = vpop.permute.xlu0 %7667
      %7669 = vrot.lane.b32.xlu0 %v7663, 96
      %v7670 = vpop.permute.xlu0 %7669
      %7671 = vrot.lane.b32.xlu0 %v7664, 96
      %v7672 = vpop.permute.xlu0 %7671
      %v7674 = vsel %vm527, %v7649, 0
      %v7677 = vsel %vm527, %v7650, 0
      %v7680 = vsel %vm527, %v7651, 0
      %v7683 = vsel %vm527, %v7652, 0
      %v7686 = vsel %vm527, %v7666, 0
      %v7689 = vsel %vm527, %v7668, 0
      %v7692 = vsel %vm527, %v7670, 0
      %v7695 = vsel %vm527, %v7672, 0
      %7697 = vmatpush.bf16.xpose.msra.mxu0 0
      %7698 = vmatpush.bf16.xpose.msra.mxu0 0
      %7699 = vmatpush.bf16.xpose.msra.mxu0 0
      %7700 = vmatpush.bf16.xpose.msra.mxu0 0
      %7701 = vmatpush.bf16.xpose.msra.mxu0 %v7695
      %7702 = vmatpush.bf16.xpose.msra.mxu0 %v7692
      %7703 = vmatpush.bf16.xpose.msra.mxu0 %v7689
      %7704 = vmatpush.bf16.xpose.msra.mxu0 %v7686
      %7705 = vmatmul.bf16.gmra.mxu0 %v7674
      %v7706 = vpop.f32.mrf.mxu0
      %v7707 = vadd.f32 0.0, %v7706
      %v7708 = vpop.f32.mrf.mxu0
      %v7709 = vadd.f32 0.0, %v7708
      %7710 = vmatmul.bf16.gmra.mxu0 %v7677
      %v7711 = vpop.f32.mrf.mxu0
      %v7712 = vadd.f32 0.0, %v7711
      %v7713 = vpop.f32.mrf.mxu0
      %v7714 = vadd.f32 0.0, %v7713
      %7715 = vmatmul.bf16.gmra.mxu0 %v7680
      %v7716 = vpop.f32.mrf.mxu0
      %v7717 = vadd.f32 0.0, %v7716
      %v7718 = vpop.f32.mrf.mxu0
      %v7719 = vadd.f32 0.0, %v7718
      %7720 = vmatmul.bf16.gmra.mxu0 %v7683
      %v7721 = vpop.f32.mrf.mxu0
      %v7722 = vadd.f32 0.0, %v7721
      %v7723 = vpop.f32.mrf.mxu0
      %v7724 = vadd.f32 0.0, %v7723
      %7725 = vdwg.mxu0
      %v7726 = vld [vmem:[%s4] sm:$0xff]
      %v7727 = vld [vmem:[%s4 + $0x8] sm:$0xff]
      %v7728 = vld [vmem:[%s4 + $0x10] sm:$0xff]
      %v7729 = vld [vmem:[%s4 + $0x18] sm:$0xff]
      %v7730 = vld [vmem:[%s4 + $0x20] sm:$0xff]
      %v7731 = vld [vmem:[%s4 + $0x28] sm:$0xff]
      %v7732 = vld [vmem:[%s4 + $0x30] sm:$0xff]
      %v7733 = vld [vmem:[%s4 + $0x38] sm:$0xff]
      %v7734 = vld [vmem:[%s4 + $0x40] sm:$0xff]
      %v7735 = vld [vmem:[%s4 + $0x48] sm:$0xff]
      %v7736 = vld [vmem:[%s4 + $0x50] sm:$0xff]
      %v7737 = vld [vmem:[%s4 + $0x58] sm:$0xff]
      %v7738 = vld [vmem:[%s4 + $0x60] sm:$0xff]
      %v7739 = vld [vmem:[%s4 + $0x68] sm:$0xff]
      %v7740 = vld [vmem:[%s4 + $0x70] sm:$0xff]
      %v7741 = vld [vmem:[%s4 + $0x78] sm:$0xff]
      %v7742 = vld [vmem:[%s4 + $0x80] sm:$0xff]
      %v7743 = vld [vmem:[%s4 + $0x88] sm:$0xff]
      %v7744 = vld [vmem:[%s4 + $0x90] sm:$0xff]
      %v7745 = vld [vmem:[%s4 + $0x98] sm:$0xff]
      %v7746 = vld [vmem:[%s4 + $0xa0] sm:$0xff]
      %v7747 = vld [vmem:[%s4 + $0xa8] sm:$0xff]
      %v7748 = vld [vmem:[%s4 + $0xb0] sm:$0xff]
      %v7749 = vld [vmem:[%s4 + $0xb8] sm:$0xff]
      %v7750 = vld [vmem:[%s4 + $0xc0] sm:$0xff]
      %v7751 = vld [vmem:[%s4 + $0xc8] sm:$0xff]
      %v7752 = vld [vmem:[%s4 + $0xd0] sm:$0xff]
      %v7753 = vld [vmem:[%s4 + $0xd8] sm:$0xff]
      %v7754 = vld [vmem:[%s4 + $0xe0] sm:$0xff]
      %v7755 = vld [vmem:[%s4 + $0xe8] sm:$0xff]
      %v7756 = vld [vmem:[%s4 + $0xf0] sm:$0xff]
      %v7757 = vld [vmem:[%s4 + $0xf8] sm:$0xff]
      %v7758 = vadd.f32 %v6384, %v7726
      %v7759 = vadd.f32 %v6386, %v7727
      %v7760 = vadd.f32 %v6389, %v7728
      %v7761 = vadd.f32 %v6391, %v7729
      %v7762 = vadd.f32 %v6394, %v7730
      %v7763 = vadd.f32 %v6396, %v7731
      %v7764 = vadd.f32 %v6399, %v7732
      %v7765 = vadd.f32 %v6401, %v7733
      %v7766 = vadd.f32 %v6485, %v7726
      %v7767 = vadd.f32 %v6487, %v7727
      %v7768 = vadd.f32 %v6490, %v7728
      %v7769 = vadd.f32 %v6492, %v7729
      %v7770 = vadd.f32 %v6495, %v7730
      %v7771 = vadd.f32 %v6497, %v7731
      %v7772 = vadd.f32 %v6500, %v7732
      %v7773 = vadd.f32 %v6502, %v7733
      %v7774 = vadd.f32 %v6586, %v7726
      %v7775 = vadd.f32 %v6588, %v7727
      %v7776 = vadd.f32 %v6591, %v7728
      %v7777 = vadd.f32 %v6593, %v7729
      %v7778 = vadd.f32 %v6596, %v7730
      %v7779 = vadd.f32 %v6598, %v7731
      %v7780 = vadd.f32 %v6601, %v7732
      %v7781 = vadd.f32 %v6603, %v7733
      %v7782 = vadd.f32 %v6687, %v7726
      %v7783 = vadd.f32 %v6689, %v7727
      %v7784 = vadd.f32 %v6692, %v7728
      %v7785 = vadd.f32 %v6694, %v7729
      %v7786 = vadd.f32 %v6697, %v7730
      %v7787 = vadd.f32 %v6699, %v7731
      %v7788 = vadd.f32 %v6702, %v7732
      %v7789 = vadd.f32 %v6704, %v7733
      %v7790 = vadd.f32 %v6772, %v7734
      %v7791 = vadd.f32 %v6774, %v7735
      %v7792 = vadd.f32 %v6777, %v7736
      %v7793 = vadd.f32 %v6779, %v7737
      %v7794 = vadd.f32 %v6782, %v7738
      %v7795 = vadd.f32 %v6784, %v7739
      %v7796 = vadd.f32 %v6787, %v7740
      %v7797 = vadd.f32 %v6789, %v7741
      %v7798 = vadd.f32 %v6857, %v7734
      %v7799 = vadd.f32 %v6859, %v7735
      %v7800 = vadd.f32 %v6862, %v7736
      %v7801 = vadd.f32 %v6864, %v7737
      %v7802 = vadd.f32 %v6867, %v7738
      %v7803 = vadd.f32 %v6869, %v7739
      %v7804 = vadd.f32 %v6872, %v7740
      %v7805 = vadd.f32 %v6874, %v7741
      %v7806 = vadd.f32 %v6942, %v7734
      %v7807 = vadd.f32 %v6944, %v7735
      %v7808 = vadd.f32 %v6947, %v7736
      %v7809 = vadd.f32 %v6949, %v7737
      %v7810 = vadd.f32 %v6952, %v7738
      %v7811 = vadd.f32 %v6954, %v7739
      %v7812 = vadd.f32 %v6957, %v7740
      %v7813 = vadd.f32 %v6959, %v7741
      %v7814 = vadd.f32 %v7027, %v7734
      %v7815 = vadd.f32 %v7029, %v7735
      %v7816 = vadd.f32 %v7032, %v7736
      %v7817 = vadd.f32 %v7034, %v7737
      %v7818 = vadd.f32 %v7037, %v7738
      %v7819 = vadd.f32 %v7039, %v7739
      %v7820 = vadd.f32 %v7042, %v7740
      %v7821 = vadd.f32 %v7044, %v7741
      %v7822 = vadd.f32 %v7112, %v7742
      %v7823 = vadd.f32 %v7114, %v7743
      %v7824 = vadd.f32 %v7117, %v7744
      %v7825 = vadd.f32 %v7119, %v7745
      %v7826 = vadd.f32 %v7122, %v7746
      %v7827 = vadd.f32 %v7124, %v7747
      %v7828 = vadd.f32 %v7127, %v7748
      %v7829 = vadd.f32 %v7129, %v7749
      %v7830 = vadd.f32 %v7197, %v7742
      %v7831 = vadd.f32 %v7199, %v7743
      %v7832 = vadd.f32 %v7202, %v7744
      %v7833 = vadd.f32 %v7204, %v7745
      %v7834 = vadd.f32 %v7207, %v7746
      %v7835 = vadd.f32 %v7209, %v7747
      %v7836 = vadd.f32 %v7212, %v7748
      %v7837 = vadd.f32 %v7214, %v7749
      %v7838 = vadd.f32 %v7282, %v7742
      %v7839 = vadd.f32 %v7284, %v7743
      %v7840 = vadd.f32 %v7287, %v7744
      %v7841 = vadd.f32 %v7289, %v7745
      %v7842 = vadd.f32 %v7292, %v7746
      %v7843 = vadd.f32 %v7294, %v7747
      %v7844 = vadd.f32 %v7297, %v7748
      %v7845 = vadd.f32 %v7299, %v7749
      %v7846 = vadd.f32 %v7367, %v7742
      %v7847 = vadd.f32 %v7369, %v7743
      %v7848 = vadd.f32 %v7372, %v7744
      %v7849 = vadd.f32 %v7374, %v7745
      %v7850 = vadd.f32 %v7377, %v7746
      %v7851 = vadd.f32 %v7379, %v7747
      %v7852 = vadd.f32 %v7382, %v7748
      %v7853 = vadd.f32 %v7384, %v7749
      %v7854 = vadd.f32 %v7452, %v7750
      %v7855 = vadd.f32 %v7454, %v7751
      %v7856 = vadd.f32 %v7457, %v7752
      %v7857 = vadd.f32 %v7459, %v7753
      %v7858 = vadd.f32 %v7462, %v7754
      %v7859 = vadd.f32 %v7464, %v7755
      %v7860 = vadd.f32 %v7467, %v7756
      %v7861 = vadd.f32 %v7469, %v7757
      %v7862 = vadd.f32 %v7537, %v7750
      %v7863 = vadd.f32 %v7539, %v7751
      %v7864 = vadd.f32 %v7542, %v7752
      %v7865 = vadd.f32 %v7544, %v7753
      %v7866 = vadd.f32 %v7547, %v7754
      %v7867 = vadd.f32 %v7549, %v7755
      %v7868 = vadd.f32 %v7552, %v7756
      %v7869 = vadd.f32 %v7554, %v7757
      %v7870 = vadd.f32 %v7622, %v7750
      %v7871 = vadd.f32 %v7624, %v7751
      %v7872 = vadd.f32 %v7627, %v7752
      %v7873 = vadd.f32 %v7629, %v7753
      %v7874 = vadd.f32 %v7632, %v7754
      %v7875 = vadd.f32 %v7634, %v7755
      %v7876 = vadd.f32 %v7637, %v7756
      %v7877 = vadd.f32 %v7639, %v7757
      %v7878 = vadd.f32 %v7707, %v7750
      %v7879 = vadd.f32 %v7709, %v7751
      %v7880 = vadd.f32 %v7712, %v7752
      %v7881 = vadd.f32 %v7714, %v7753
      %v7882 = vadd.f32 %v7717, %v7754
      %v7883 = vadd.f32 %v7719, %v7755
      %v7884 = vadd.f32 %v7722, %v7756
      %v7885 = vadd.f32 %v7724, %v7757
      %vm7886 = vcmask 523264
      %v7887 = vsel %vm7886, %v7758, -inf
      %7888 = vmax.xlane.f32.xlu0 %v7887
      %v7889 = vpop.xlane.xlu0 %7888
      %v7890 = vsel %vm7886, %v7759, -inf
      %7891 = vmax.xlane.f32.xlu0 %v7890
      %v7892 = vpop.xlane.xlu0 %7891
      %v7893 = vsel %vm7886, %v7760, -inf
      %7894 = vmax.xlane.f32.xlu0 %v7893
      %v7895 = vpop.xlane.xlu0 %7894
      %v7896 = vsel %vm7886, %v7761, -inf
      %7897 = vmax.xlane.f32.xlu0 %v7896
      %v7898 = vpop.xlane.xlu0 %7897
      %v7899 = vsel %vm7886, %v7762, -inf
      %7900 = vmax.xlane.f32.xlu0 %v7899
      %v7901 = vpop.xlane.xlu0 %7900
      %v7902 = vsel %vm7886, %v7763, -inf
      %7903 = vmax.xlane.f32.xlu0 %v7902
      %v7904 = vpop.xlane.xlu0 %7903
      %v7905 = vsel %vm7886, %v7764, -inf
      %7906 = vmax.xlane.f32.xlu0 %v7905
      %v7907 = vpop.xlane.xlu0 %7906
      %v7908 = vsel %vm7886, %v7765, -inf
      %7909 = vmax.xlane.f32.xlu0 %v7908
      %v7910 = vpop.xlane.xlu0 %7909
      %v7911 = vsel %vm7886, %v7766, -inf
      %7912 = vmax.xlane.f32.xlu0 %v7911
      %v7913 = vpop.xlane.xlu0 %7912
      %v7914 = vsel %vm7886, %v7767, -inf
      %7915 = vmax.xlane.f32.xlu0 %v7914
      %v7916 = vpop.xlane.xlu0 %7915
      %v7917 = vsel %vm7886, %v7768, -inf
      %7918 = vmax.xlane.f32.xlu0 %v7917
      %v7919 = vpop.xlane.xlu0 %7918
      %v7920 = vsel %vm7886, %v7769, -inf
      %7921 = vmax.xlane.f32.xlu0 %v7920
      %v7922 = vpop.xlane.xlu0 %7921
      %v7923 = vsel %vm7886, %v7770, -inf
      %7924 = vmax.xlane.f32.xlu0 %v7923
      %v7925 = vpop.xlane.xlu0 %7924
      %v7926 = vsel %vm7886, %v7771, -inf
      %7927 = vmax.xlane.f32.xlu0 %v7926
      %v7928 = vpop.xlane.xlu0 %7927
      %v7929 = vsel %vm7886, %v7772, -inf
      %7930 = vmax.xlane.f32.xlu0 %v7929
      %v7931 = vpop.xlane.xlu0 %7930
      %v7932 = vsel %vm7886, %v7773, -inf
      %7933 = vmax.xlane.f32.xlu0 %v7932
      %v7934 = vpop.xlane.xlu0 %7933
      %v7935 = vsel %vm7886, %v7774, -inf
      %7936 = vmax.xlane.f32.xlu0 %v7935
      %v7937 = vpop.xlane.xlu0 %7936
      %v7938 = vsel %vm7886, %v7775, -inf
      %7939 = vmax.xlane.f32.xlu0 %v7938
      %v7940 = vpop.xlane.xlu0 %7939
      %v7941 = vsel %vm7886, %v7776, -inf
      %7942 = vmax.xlane.f32.xlu0 %v7941
      %v7943 = vpop.xlane.xlu0 %7942
      %v7944 = vsel %vm7886, %v7777, -inf
      %7945 = vmax.xlane.f32.xlu0 %v7944
      %v7946 = vpop.xlane.xlu0 %7945
      %v7947 = vsel %vm7886, %v7778, -inf
      %7948 = vmax.xlane.f32.xlu0 %v7947
      %v7949 = vpop.xlane.xlu0 %7948
      %v7950 = vsel %vm7886, %v7779, -inf
      %7951 = vmax.xlane.f32.xlu0 %v7950
      %v7952 = vpop.xlane.xlu0 %7951
      %v7953 = vsel %vm7886, %v7780, -inf
      %7954 = vmax.xlane.f32.xlu0 %v7953
      %v7955 = vpop.xlane.xlu0 %7954
      %v7956 = vsel %vm7886, %v7781, -inf
      %7957 = vmax.xlane.f32.xlu0 %v7956
      %v7958 = vpop.xlane.xlu0 %7957
      %v7959 = vsel %vm7886, %v7782, -inf
      %7960 = vmax.xlane.f32.xlu0 %v7959
      %v7961 = vpop.xlane.xlu0 %7960
      %v7962 = vsel %vm7886, %v7783, -inf
      %7963 = vmax.xlane.f32.xlu0 %v7962
      %v7964 = vpop.xlane.xlu0 %7963
      %v7965 = vsel %vm7886, %v7784, -inf
      %7966 = vmax.xlane.f32.xlu0 %v7965
      %v7967 = vpop.xlane.xlu0 %7966
      %v7968 = vsel %vm7886, %v7785, -inf
      %7969 = vmax.xlane.f32.xlu0 %v7968
      %v7970 = vpop.xlane.xlu0 %7969
      %v7971 = vsel %vm7886, %v7786, -inf
      %7972 = vmax.xlane.f32.xlu0 %v7971
      %v7973 = vpop.xlane.xlu0 %7972
      %v7974 = vsel %vm7886, %v7787, -inf
      %7975 = vmax.xlane.f32.xlu0 %v7974
      %v7976 = vpop.xlane.xlu0 %7975
      %v7977 = vsel %vm7886, %v7788, -inf
      %7978 = vmax.xlane.f32.xlu0 %v7977
      %v7979 = vpop.xlane.xlu0 %7978
      %v7980 = vsel %vm7886, %v7789, -inf
      %7981 = vmax.xlane.f32.xlu0 %v7980
      %v7982 = vpop.xlane.xlu0 %7981
      %v7983 = vsel %vm7886, %v7790, -inf
      %7984 = vmax.xlane.f32.xlu0 %v7983
      %v7985 = vpop.xlane.xlu0 %7984
      %v7986 = vsel %vm7886, %v7791, -inf
      %7987 = vmax.xlane.f32.xlu0 %v7986
      %v7988 = vpop.xlane.xlu0 %7987
      %v7989 = vsel %vm7886, %v7792, -inf
      %7990 = vmax.xlane.f32.xlu0 %v7989
      %v7991 = vpop.xlane.xlu0 %7990
      %v7992 = vsel %vm7886, %v7793, -inf
      %7993 = vmax.xlane.f32.xlu0 %v7992
      %v7994 = vpop.xlane.xlu0 %7993
      %v7995 = vsel %vm7886, %v7794, -inf
      %7996 = vmax.xlane.f32.xlu0 %v7995
      %v7997 = vpop.xlane.xlu0 %7996
      %v7998 = vsel %vm7886, %v7795, -inf
      %7999 = vmax.xlane.f32.xlu0 %v7998
      %v8000 = vpop.xlane.xlu0 %7999
      %v8001 = vsel %vm7886, %v7796, -inf
      %8002 = vmax.xlane.f32.xlu0 %v8001
      %v8003 = vpop.xlane.xlu0 %8002
      %v8004 = vsel %vm7886, %v7797, -inf
      %8005 = vmax.xlane.f32.xlu0 %v8004
      %v8006 = vpop.xlane.xlu0 %8005
      %v8007 = vsel %vm7886, %v7798, -inf
      %8008 = vmax.xlane.f32.xlu0 %v8007
      %v8009 = vpop.xlane.xlu0 %8008
      %v8010 = vsel %vm7886, %v7799, -inf
      %8011 = vmax.xlane.f32.xlu0 %v8010
      %v8012 = vpop.xlane.xlu0 %8011
      %v8013 = vsel %vm7886, %v7800, -inf
      %8014 = vmax.xlane.f32.xlu0 %v8013
      %v8015 = vpop.xlane.xlu0 %8014
      %v8016 = vsel %vm7886, %v7801, -inf
      %8017 = vmax.xlane.f32.xlu0 %v8016
      %v8018 = vpop.xlane.xlu0 %8017
      %v8019 = vsel %vm7886, %v7802, -inf
      %8020 = vmax.xlane.f32.xlu0 %v8019
      %v8021 = vpop.xlane.xlu0 %8020
      %v8022 = vsel %vm7886, %v7803, -inf
      %8023 = vmax.xlane.f32.xlu0 %v8022
      %v8024 = vpop.xlane.xlu0 %8023
      %v8025 = vsel %vm7886, %v7804, -inf
      %8026 = vmax.xlane.f32.xlu0 %v8025
      %v8027 = vpop.xlane.xlu0 %8026
      %v8028 = vsel %vm7886, %v7805, -inf
      %8029 = vmax.xlane.f32.xlu0 %v8028
      %v8030 = vpop.xlane.xlu0 %8029
      %v8031 = vsel %vm7886, %v7806, -inf
      %8032 = vmax.xlane.f32.xlu0 %v8031
      %v8033 = vpop.xlane.xlu0 %8032
      %v8034 = vsel %vm7886, %v7807, -inf
      %8035 = vmax.xlane.f32.xlu0 %v8034
      %v8036 = vpop.xlane.xlu0 %8035
      %v8037 = vsel %vm7886, %v7808, -inf
      %8038 = vmax.xlane.f32.xlu0 %v8037
      %v8039 = vpop.xlane.xlu0 %8038
      %v8040 = vsel %vm7886, %v7809, -inf
      %8041 = vmax.xlane.f32.xlu0 %v8040
      %v8042 = vpop.xlane.xlu0 %8041
      %v8043 = vsel %vm7886, %v7810, -inf
      %8044 = vmax.xlane.f32.xlu0 %v8043
      %v8045 = vpop.xlane.xlu0 %8044
      %v8046 = vsel %vm7886, %v7811, -inf
      %8047 = vmax.xlane.f32.xlu0 %v8046
      %v8048 = vpop.xlane.xlu0 %8047
      %v8049 = vsel %vm7886, %v7812, -inf
      %8050 = vmax.xlane.f32.xlu0 %v8049
      %v8051 = vpop.xlane.xlu0 %8050
      %v8052 = vsel %vm7886, %v7813, -inf
      %8053 = vmax.xlane.f32.xlu0 %v8052
      %v8054 = vpop.xlane.xlu0 %8053
      %v8055 = vsel %vm7886, %v7814, -inf
      %8056 = vmax.xlane.f32.xlu0 %v8055
      %v8057 = vpop.xlane.xlu0 %8056
      %v8058 = vsel %vm7886, %v7815, -inf
      %8059 = vmax.xlane.f32.xlu0 %v8058
      %v8060 = vpop.xlane.xlu0 %8059
      %v8061 = vsel %vm7886, %v7816, -inf
      %8062 = vmax.xlane.f32.xlu0 %v8061
      %v8063 = vpop.xlane.xlu0 %8062
      %v8064 = vsel %vm7886, %v7817, -inf
      %8065 = vmax.xlane.f32.xlu0 %v8064
      %v8066 = vpop.xlane.xlu0 %8065
      %v8067 = vsel %vm7886, %v7818, -inf
      %8068 = vmax.xlane.f32.xlu0 %v8067
      %v8069 = vpop.xlane.xlu0 %8068
      %v8070 = vsel %vm7886, %v7819, -inf
      %8071 = vmax.xlane.f32.xlu0 %v8070
      %v8072 = vpop.xlane.xlu0 %8071
      %v8073 = vsel %vm7886, %v7820, -inf
      %8074 = vmax.xlane.f32.xlu0 %v8073
      %v8075 = vpop.xlane.xlu0 %8074
      %v8076 = vsel %vm7886, %v7821, -inf
      %8077 = vmax.xlane.f32.xlu0 %v8076
      %v8078 = vpop.xlane.xlu0 %8077
      %v8079 = vsel %vm7886, %v7822, -inf
      %8080 = vmax.xlane.f32.xlu0 %v8079
      %v8081 = vpop.xlane.xlu0 %8080
      %v8082 = vsel %vm7886, %v7823, -inf
      %8083 = vmax.xlane.f32.xlu0 %v8082
      %v8084 = vpop.xlane.xlu0 %8083
      %v8085 = vsel %vm7886, %v7824, -inf
      %8086 = vmax.xlane.f32.xlu0 %v8085
      %v8087 = vpop.xlane.xlu0 %8086
      %v8088 = vsel %vm7886, %v7825, -inf
      %8089 = vmax.xlane.f32.xlu0 %v8088
      %v8090 = vpop.xlane.xlu0 %8089
      %v8091 = vsel %vm7886, %v7826, -inf
      %8092 = vmax.xlane.f32.xlu0 %v8091
      %v8093 = vpop.xlane.xlu0 %8092
      %v8094 = vsel %vm7886, %v7827, -inf
      %8095 = vmax.xlane.f32.xlu0 %v8094
      %v8096 = vpop.xlane.xlu0 %8095
      %v8097 = vsel %vm7886, %v7828, -inf
      %8098 = vmax.xlane.f32.xlu0 %v8097
      %v8099 = vpop.xlane.xlu0 %8098
      %v8100 = vsel %vm7886, %v7829, -inf
      %8101 = vmax.xlane.f32.xlu0 %v8100
      %v8102 = vpop.xlane.xlu0 %8101
      %v8103 = vsel %vm7886, %v7830, -inf
      %8104 = vmax.xlane.f32.xlu0 %v8103
      %v8105 = vpop.xlane.xlu0 %8104
      %v8106 = vsel %vm7886, %v7831, -inf
      %8107 = vmax.xlane.f32.xlu0 %v8106
      %v8108 = vpop.xlane.xlu0 %8107
      %v8109 = vsel %vm7886, %v7832, -inf
      %8110 = vmax.xlane.f32.xlu0 %v8109
      %v8111 = vpop.xlane.xlu0 %8110
      %v8112 = vsel %vm7886, %v7833, -inf
      %8113 = vmax.xlane.f32.xlu0 %v8112
      %v8114 = vpop.xlane.xlu0 %8113
      %v8115 = vsel %vm7886, %v7834, -inf
      %8116 = vmax.xlane.f32.xlu0 %v8115
      %v8117 = vpop.xlane.xlu0 %8116
      %v8118 = vsel %vm7886, %v7835, -inf
      %8119 = vmax.xlane.f32.xlu0 %v8118
      %v8120 = vpop.xlane.xlu0 %8119
      %v8121 = vsel %vm7886, %v7836, -inf
      %8122 = vmax.xlane.f32.xlu0 %v8121
      %v8123 = vpop.xlane.xlu0 %8122
      %v8124 = vsel %vm7886, %v7837, -inf
      %8125 = vmax.xlane.f32.xlu0 %v8124
      %v8126 = vpop.xlane.xlu0 %8125
      %v8127 = vsel %vm7886, %v7838, -inf
      %8128 = vmax.xlane.f32.xlu0 %v8127
      %v8129 = vpop.xlane.xlu0 %8128
      %v8130 = vsel %vm7886, %v7839, -inf
      %8131 = vmax.xlane.f32.xlu0 %v8130
      %v8132 = vpop.xlane.xlu0 %8131
      %v8133 = vsel %vm7886, %v7840, -inf
      %8134 = vmax.xlane.f32.xlu0 %v8133
      %v8135 = vpop.xlane.xlu0 %8134
      %v8136 = vsel %vm7886, %v7841, -inf
      %8137 = vmax.xlane.f32.xlu0 %v8136
      %v8138 = vpop.xlane.xlu0 %8137
      %v8139 = vsel %vm7886, %v7842, -inf
      %8140 = vmax.xlane.f32.xlu0 %v8139
      %v8141 = vpop.xlane.xlu0 %8140
      %v8142 = vsel %vm7886, %v7843, -inf
      %8143 = vmax.xlane.f32.xlu0 %v8142
      %v8144 = vpop.xlane.xlu0 %8143
      %v8145 = vsel %vm7886, %v7844, -inf
      %8146 = vmax.xlane.f32.xlu0 %v8145
      %v8147 = vpop.xlane.xlu0 %8146
      %v8148 = vsel %vm7886, %v7845, -inf
      %8149 = vmax.xlane.f32.xlu0 %v8148
      %v8150 = vpop.xlane.xlu0 %8149
      %v8151 = vsel %vm7886, %v7846, -inf
      %8152 = vmax.xlane.f32.xlu0 %v8151
      %v8153 = vpop.xlane.xlu0 %8152
      %v8154 = vsel %vm7886, %v7847, -inf
      %8155 = vmax.xlane.f32.xlu0 %v8154
      %v8156 = vpop.xlane.xlu0 %8155
      %v8157 = vsel %vm7886, %v7848, -inf
      %8158 = vmax.xlane.f32.xlu0 %v8157
      %v8159 = vpop.xlane.xlu0 %8158
      %v8160 = vsel %vm7886, %v7849, -inf
      %8161 = vmax.xlane.f32.xlu0 %v8160
      %v8162 = vpop.xlane.xlu0 %8161
      %v8163 = vsel %vm7886, %v7850, -inf
      %8164 = vmax.xlane.f32.xlu0 %v8163
      %v8165 = vpop.xlane.xlu0 %8164
      %v8166 = vsel %vm7886, %v7851, -inf
      %8167 = vmax.xlane.f32.xlu0 %v8166
      %v8168 = vpop.xlane.xlu0 %8167
      %v8169 = vsel %vm7886, %v7852, -inf
      %8170 = vmax.xlane.f32.xlu0 %v8169
      %v8171 = vpop.xlane.xlu0 %8170
      %v8172 = vsel %vm7886, %v7853, -inf
      %8173 = vmax.xlane.f32.xlu0 %v8172
      %v8174 = vpop.xlane.xlu0 %8173
      %v8175 = vsel %vm7886, %v7854, -inf
      %8176 = vmax.xlane.f32.xlu0 %v8175
      %v8177 = vpop.xlane.xlu0 %8176
      %v8178 = vsel %vm7886, %v7855, -inf
      %8179 = vmax.xlane.f32.xlu0 %v8178
      %v8180 = vpop.xlane.xlu0 %8179
      %v8181 = vsel %vm7886, %v7856, -inf
      %8182 = vmax.xlane.f32.xlu0 %v8181
      %v8183 = vpop.xlane.xlu0 %8182
      %v8184 = vsel %vm7886, %v7857, -inf
      %8185 = vmax.xlane.f32.xlu0 %v8184
      %v8186 = vpop.xlane.xlu0 %8185
      %v8187 = vsel %vm7886, %v7858, -inf
      %8188 = vmax.xlane.f32.xlu0 %v8187
      %v8189 = vpop.xlane.xlu0 %8188
      %v8190 = vsel %vm7886, %v7859, -inf
      %8191 = vmax.xlane.f32.xlu0 %v8190
      %v8192 = vpop.xlane.xlu0 %8191
      %v8193 = vsel %vm7886, %v7860, -inf
      %8194 = vmax.xlane.f32.xlu0 %v8193
      %v8195 = vpop.xlane.xlu0 %8194
      %v8196 = vsel %vm7886, %v7861, -inf
      %8197 = vmax.xlane.f32.xlu0 %v8196
      %v8198 = vpop.xlane.xlu0 %8197
      %v8199 = vsel %vm7886, %v7862, -inf
      %8200 = vmax.xlane.f32.xlu0 %v8199
      %v8201 = vpop.xlane.xlu0 %8200
      %v8202 = vsel %vm7886, %v7863, -inf
      %8203 = vmax.xlane.f32.xlu0 %v8202
      %v8204 = vpop.xlane.xlu0 %8203
      %v8205 = vsel %vm7886, %v7864, -inf
      %8206 = vmax.xlane.f32.xlu0 %v8205
      %v8207 = vpop.xlane.xlu0 %8206
      %v8208 = vsel %vm7886, %v7865, -inf
      %8209 = vmax.xlane.f32.xlu0 %v8208
      %v8210 = vpop.xlane.xlu0 %8209
      %v8211 = vsel %vm7886, %v7866, -inf
      %8212 = vmax.xlane.f32.xlu0 %v8211
      %v8213 = vpop.xlane.xlu0 %8212
      %v8214 = vsel %vm7886, %v7867, -inf
      %8215 = vmax.xlane.f32.xlu0 %v8214
      %v8216 = vpop.xlane.xlu0 %8215
      %v8217 = vsel %vm7886, %v7868, -inf
      %8218 = vmax.xlane.f32.xlu0 %v8217
      %v8219 = vpop.xlane.xlu0 %8218
      %v8220 = vsel %vm7886, %v7869, -inf
      %8221 = vmax.xlane.f32.xlu0 %v8220
      %v8222 = vpop.xlane.xlu0 %8221
      %v8223 = vsel %vm7886, %v7870, -inf
      %8224 = vmax.xlane.f32.xlu0 %v8223
      %v8225 = vpop.xlane.xlu0 %8224
      %v8226 = vsel %vm7886, %v7871, -inf
      %8227 = vmax.xlane.f32.xlu0 %v8226
      %v8228 = vpop.xlane.xlu0 %8227
      %v8229 = vsel %vm7886, %v7872, -inf
      %8230 = vmax.xlane.f32.xlu0 %v8229
      %v8231 = vpop.xlane.xlu0 %8230
      %v8232 = vsel %vm7886, %v7873, -inf
      %8233 = vmax.xlane.f32.xlu0 %v8232
      %v8234 = vpop.xlane.xlu0 %8233
      %v8235 = vsel %vm7886, %v7874, -inf
      %8236 = vmax.xlane.f32.xlu0 %v8235
      %v8237 = vpop.xlane.xlu0 %8236
      %v8238 = vsel %vm7886, %v7875, -inf
      %8239 = vmax.xlane.f32.xlu0 %v8238
      %v8240 = vpop.xlane.xlu0 %8239
      %v8241 = vsel %vm7886, %v7876, -inf
      %8242 = vmax.xlane.f32.xlu0 %v8241
      %v8243 = vpop.xlane.xlu0 %8242
      %v8244 = vsel %vm7886, %v7877, -inf
      %8245 = vmax.xlane.f32.xlu0 %v8244
      %v8246 = vpop.xlane.xlu0 %8245
      %v8247 = vsel %vm7886, %v7878, -inf
      %8248 = vmax.xlane.f32.xlu0 %v8247
      %v8249 = vpop.xlane.xlu0 %8248
      %v8250 = vsel %vm7886, %v7879, -inf
      %8251 = vmax.xlane.f32.xlu0 %v8250
      %v8252 = vpop.xlane.xlu0 %8251
      %v8253 = vsel %vm7886, %v7880, -inf
      %8254 = vmax.xlane.f32.xlu0 %v8253
      %v8255 = vpop.xlane.xlu0 %8254
      %v8256 = vsel %vm7886, %v7881, -inf
      %8257 = vmax.xlane.f32.xlu0 %v8256
      %v8258 = vpop.xlane.xlu0 %8257
      %v8259 = vsel %vm7886, %v7882, -inf
      %8260 = vmax.xlane.f32.xlu0 %v8259
      %v8261 = vpop.xlane.xlu0 %8260
      %v8262 = vsel %vm7886, %v7883, -inf
      %8263 = vmax.xlane.f32.xlu0 %v8262
      %v8264 = vpop.xlane.xlu0 %8263
      %v8265 = vsel %vm7886, %v7884, -inf
      %8266 = vmax.xlane.f32.xlu0 %v8265
      %v8267 = vpop.xlane.xlu0 %8266
      %v8268 = vsel %vm7886, %v7885, -inf
      %8269 = vmax.xlane.f32.xlu0 %v8268
      %v8270 = vpop.xlane.xlu0 %8269
      %v8271 = vsub.f32 %v7758, %v7889
      %v8272 = vsub.f32 %v7759, %v7892
      %v8273 = vsub.f32 %v7760, %v7895
      %v8274 = vsub.f32 %v7761, %v7898
      %v8275 = vsub.f32 %v7762, %v7901
      %v8276 = vsub.f32 %v7763, %v7904
      %v8277 = vsub.f32 %v7764, %v7907
      %v8278 = vsub.f32 %v7765, %v7910
      %v8279 = vsub.f32 %v7766, %v7913
      %v8280 = vsub.f32 %v7767, %v7916
      %v8281 = vsub.f32 %v7768, %v7919
      %v8282 = vsub.f32 %v7769, %v7922
      %v8283 = vsub.f32 %v7770, %v7925
      %v8284 = vsub.f32 %v7771, %v7928
      %v8285 = vsub.f32 %v7772, %v7931
      %v8286 = vsub.f32 %v7773, %v7934
      %v8287 = vsub.f32 %v7774, %v7937
      %v8288 = vsub.f32 %v7775, %v7940
      %v8289 = vsub.f32 %v7776, %v7943
      %v8290 = vsub.f32 %v7777, %v7946
      %v8291 = vsub.f32 %v7778, %v7949
      %v8292 = vsub.f32 %v7779, %v7952
      %v8293 = vsub.f32 %v7780, %v7955
      %v8294 = vsub.f32 %v7781, %v7958
      %v8295 = vsub.f32 %v7782, %v7961
      %v8296 = vsub.f32 %v7783, %v7964
      %v8297 = vsub.f32 %v7784, %v7967
      %v8298 = vsub.f32 %v7785, %v7970
      %v8299 = vsub.f32 %v7786, %v7973
      %v8300 = vsub.f32 %v7787, %v7976
      %v8301 = vsub.f32 %v7788, %v7979
      %v8302 = vsub.f32 %v7789, %v7982
      %v8303 = vsub.f32 %v7790, %v7985
      %v8304 = vsub.f32 %v7791, %v7988
      %v8305 = vsub.f32 %v7792, %v7991
      %v8306 = vsub.f32 %v7793, %v7994
      %v8307 = vsub.f32 %v7794, %v7997
      %v8308 = vsub.f32 %v7795, %v8000
      %v8309 = vsub.f32 %v7796, %v8003
      %v8310 = vsub.f32 %v7797, %v8006
      %v8311 = vsub.f32 %v7798, %v8009
      %v8312 = vsub.f32 %v7799, %v8012
      %v8313 = vsub.f32 %v7800, %v8015
      %v8314 = vsub.f32 %v7801, %v8018
      %v8315 = vsub.f32 %v7802, %v8021
      %v8316 = vsub.f32 %v7803, %v8024
      %v8317 = vsub.f32 %v7804, %v8027
      %v8318 = vsub.f32 %v7805, %v8030
      %v8319 = vsub.f32 %v7806, %v8033
      %v8320 = vsub.f32 %v7807, %v8036
      %v8321 = vsub.f32 %v7808, %v8039
      %v8322 = vsub.f32 %v7809, %v8042
      %v8323 = vsub.f32 %v7810, %v8045
      %v8324 = vsub.f32 %v7811, %v8048
      %v8325 = vsub.f32 %v7812, %v8051
      %v8326 = vsub.f32 %v7813, %v8054
      %v8327 = vsub.f32 %v7814, %v8057
      %v8328 = vsub.f32 %v7815, %v8060
      %v8329 = vsub.f32 %v7816, %v8063
      %v8330 = vsub.f32 %v7817, %v8066
      %v8331 = vsub.f32 %v7818, %v8069
      %v8332 = vsub.f32 %v7819, %v8072
      %v8333 = vsub.f32 %v7820, %v8075
      %v8334 = vsub.f32 %v7821, %v8078
      %v8335 = vsub.f32 %v7822, %v8081
      %v8336 = vsub.f32 %v7823, %v8084
      %v8337 = vsub.f32 %v7824, %v8087
      %v8338 = vsub.f32 %v7825, %v8090
      %v8339 = vsub.f32 %v7826, %v8093
      %v8340 = vsub.f32 %v7827, %v8096
      %v8341 = vsub.f32 %v7828, %v8099
      %v8342 = vsub.f32 %v7829, %v8102
      %v8343 = vsub.f32 %v7830, %v8105
      %v8344 = vsub.f32 %v7831, %v8108
      %v8345 = vsub.f32 %v7832, %v8111
      %v8346 = vsub.f32 %v7833, %v8114
      %v8347 = vsub.f32 %v7834, %v8117
      %v8348 = vsub.f32 %v7835, %v8120
      %v8349 = vsub.f32 %v7836, %v8123
      %v8350 = vsub.f32 %v7837, %v8126
      %v8351 = vsub.f32 %v7838, %v8129
      %v8352 = vsub.f32 %v7839, %v8132
      %v8353 = vsub.f32 %v7840, %v8135
      %v8354 = vsub.f32 %v7841, %v8138
      %v8355 = vsub.f32 %v7842, %v8141
      %v8356 = vsub.f32 %v7843, %v8144
      %v8357 = vsub.f32 %v7844, %v8147
      %v8358 = vsub.f32 %v7845, %v8150
      %v8359 = vsub.f32 %v7846, %v8153
      %v8360 = vsub.f32 %v7847, %v8156
      %v8361 = vsub.f32 %v7848, %v8159
      %v8362 = vsub.f32 %v7849, %v8162
      %v8363 = vsub.f32 %v7850, %v8165
      %v8364 = vsub.f32 %v7851, %v8168
      %v8365 = vsub.f32 %v7852, %v8171
      %v8366 = vsub.f32 %v7853, %v8174
      %v8367 = vsub.f32 %v7854, %v8177
      %v8368 = vsub.f32 %v7855, %v8180
      %v8369 = vsub.f32 %v7856, %v8183
      %v8370 = vsub.f32 %v7857, %v8186
      %v8371 = vsub.f32 %v7858, %v8189
      %v8372 = vsub.f32 %v7859, %v8192
      %v8373 = vsub.f32 %v7860, %v8195
      %v8374 = vsub.f32 %v7861, %v8198
      %v8375 = vsub.f32 %v7862, %v8201
      %v8376 = vsub.f32 %v7863, %v8204
      %v8377 = vsub.f32 %v7864, %v8207
      %v8378 = vsub.f32 %v7865, %v8210
      %v8379 = vsub.f32 %v7866, %v8213
      %v8380 = vsub.f32 %v7867, %v8216
      %v8381 = vsub.f32 %v7868, %v8219
      %v8382 = vsub.f32 %v7869, %v8222
      %v8383 = vsub.f32 %v7870, %v8225
      %v8384 = vsub.f32 %v7871, %v8228
      %v8385 = vsub.f32 %v7872, %v8231
      %v8386 = vsub.f32 %v7873, %v8234
      %v8387 = vsub.f32 %v7874, %v8237
      %v8388 = vsub.f32 %v7875, %v8240
      %v8389 = vsub.f32 %v7876, %v8243
      %v8390 = vsub.f32 %v7877, %v8246
      %v8391 = vsub.f32 %v7878, %v8249
      %v8392 = vsub.f32 %v7879, %v8252
      %v8393 = vsub.f32 %v7880, %v8255
      %v8394 = vsub.f32 %v7881, %v8258
      %v8395 = vsub.f32 %v7882, %v8261
      %v8396 = vsub.f32 %v7883, %v8264
      %v8397 = vsub.f32 %v7884, %v8267
      %v8398 = vsub.f32 %v7885, %v8270
      %v8399 = vmul.f32 %v8271, 1.442695
      %v8400 = vpow.pop %v8399
      %v8401 = vmul.f32 %v8272, 1.442695
      %v8402 = vpow.pop %v8401
      %v8403 = vmul.f32 %v8273, 1.442695
      %v8404 = vpow.pop %v8403
      %v8405 = vmul.f32 %v8274, 1.442695
      %v8406 = vpow.pop %v8405
      %v8407 = vmul.f32 %v8275, 1.442695
      %v8408 = vpow.pop %v8407
      %v8409 = vmul.f32 %v8276, 1.442695
      %v8410 = vpow.pop %v8409
      %v8411 = vmul.f32 %v8277, 1.442695
      %v8412 = vpow.pop %v8411
      %v8413 = vmul.f32 %v8278, 1.442695
      %v8414 = vpow.pop %v8413
      %v8415 = vmul.f32 %v8279, 1.442695
      %v8416 = vpow.pop %v8415
      %v8417 = vmul.f32 %v8280, 1.442695
      %v8418 = vpow.pop %v8417
      %v8419 = vmul.f32 %v8281, 1.442695
      %v8420 = vpow.pop %v8419
      %v8421 = vmul.f32 %v8282, 1.442695
      %v8422 = vpow.pop %v8421
      %v8423 = vmul.f32 %v8283, 1.442695
      %v8424 = vpow.pop %v8423
      %v8425 = vmul.f32 %v8284, 1.442695
      %v8426 = vpow.pop %v8425
      %v8427 = vmul.f32 %v8285, 1.442695
      %v8428 = vpow.pop %v8427
      %v8429 = vmul.f32 %v8286, 1.442695
      %v8430 = vpow.pop %v8429
      %v8431 = vmul.f32 %v8287, 1.442695
      %v8432 = vpow.pop %v8431
      %v8433 = vmul.f32 %v8288, 1.442695
      %v8434 = vpow.pop %v8433
      %v8435 = vmul.f32 %v8289, 1.442695
      %v8436 = vpow.pop %v8435
      %v8437 = vmul.f32 %v8290, 1.442695
      %v8438 = vpow.pop %v8437
      %v8439 = vmul.f32 %v8291, 1.442695
      %v8440 = vpow.pop %v8439
      %v8441 = vmul.f32 %v8292, 1.442695
      %v8442 = vpow.pop %v8441
      %v8443 = vmul.f32 %v8293, 1.442695
      %v8444 = vpow.pop %v8443
      %v8445 = vmul.f32 %v8294, 1.442695
      %v8446 = vpow.pop %v8445
      %v8447 = vmul.f32 %v8295, 1.442695
      %v8448 = vpow.pop %v8447
      %v8449 = vmul.f32 %v8296, 1.442695
      %v8450 = vpow.pop %v8449
      %v8451 = vmul.f32 %v8297, 1.442695
      %v8452 = vpow.pop %v8451
      %v8453 = vmul.f32 %v8298, 1.442695
      %v8454 = vpow.pop %v8453
      %v8455 = vmul.f32 %v8299, 1.442695
      %v8456 = vpow.pop %v8455
      %v8457 = vmul.f32 %v8300, 1.442695
      %v8458 = vpow.pop %v8457
      %v8459 = vmul.f32 %v8301, 1.442695
      %v8460 = vpow.pop %v8459
      %v8461 = vmul.f32 %v8302, 1.442695
      %v8462 = vpow.pop %v8461
      %v8463 = vmul.f32 %v8303, 1.442695
      %v8464 = vpow.pop %v8463
      %v8465 = vmul.f32 %v8304, 1.442695
      %v8466 = vpow.pop %v8465
      %v8467 = vmul.f32 %v8305, 1.442695
      %v8468 = vpow.pop %v8467
      %v8469 = vmul.f32 %v8306, 1.442695
      %v8470 = vpow.pop %v8469
      %v8471 = vmul.f32 %v8307, 1.442695
      %v8472 = vpow.pop %v8471
      %v8473 = vmul.f32 %v8308, 1.442695
      %v8474 = vpow.pop %v8473
      %v8475 = vmul.f32 %v8309, 1.442695
      %v8476 = vpow.pop %v8475
      %v8477 = vmul.f32 %v8310, 1.442695
      %v8478 = vpow.pop %v8477
      %v8479 = vmul.f32 %v8311, 1.442695
      %v8480 = vpow.pop %v8479
      %v8481 = vmul.f32 %v8312, 1.442695
      %v8482 = vpow.pop %v8481
      %v8483 = vmul.f32 %v8313, 1.442695
      %v8484 = vpow.pop %v8483
      %v8485 = vmul.f32 %v8314, 1.442695
      %v8486 = vpow.pop %v8485
      %v8487 = vmul.f32 %v8315, 1.442695
      %v8488 = vpow.pop %v8487
      %v8489 = vmul.f32 %v8316, 1.442695
      %v8490 = vpow.pop %v8489
      %v8491 = vmul.f32 %v8317, 1.442695
      %v8492 = vpow.pop %v8491
      %v8493 = vmul.f32 %v8318, 1.442695
      %v8494 = vpow.pop %v8493
      %v8495 = vmul.f32 %v8319, 1.442695
      %v8496 = vpow.pop %v8495
      %v8497 = vmul.f32 %v8320, 1.442695
      %v8498 = vpow.pop %v8497
      %v8499 = vmul.f32 %v8321, 1.442695
      %v8500 = vpow.pop %v8499
      %v8501 = vmul.f32 %v8322, 1.442695
      %v8502 = vpow.pop %v8501
      %v8503 = vmul.f32 %v8323, 1.442695
      %v8504 = vpow.pop %v8503
      %v8505 = vmul.f32 %v8324, 1.442695
      %v8506 = vpow.pop %v8505
      %v8507 = vmul.f32 %v8325, 1.442695
      %v8508 = vpow.pop %v8507
      %v8509 = vmul.f32 %v8326, 1.442695
      %v8510 = vpow.pop %v8509
      %v8511 = vmul.f32 %v8327, 1.442695
      %v8512 = vpow.pop %v8511
      %v8513 = vmul.f32 %v8328, 1.442695
      %v8514 = vpow.pop %v8513
      %v8515 = vmul.f32 %v8329, 1.442695
      %v8516 = vpow.pop %v8515
      %v8517 = vmul.f32 %v8330, 1.442695
      %v8518 = vpow.pop %v8517
      %v8519 = vmul.f32 %v8331, 1.442695
      %v8520 = vpow.pop %v8519
      %v8521 = vmul.f32 %v8332, 1.442695
      %v8522 = vpow.pop %v8521
      %v8523 = vmul.f32 %v8333, 1.442695
      %v8524 = vpow.pop %v8523
      %v8525 = vmul.f32 %v8334, 1.442695
      %v8526 = vpow.pop %v8525
      %v8527 = vmul.f32 %v8335, 1.442695
      %v8528 = vpow.pop %v8527
      %v8529 = vmul.f32 %v8336, 1.442695
      %v8530 = vpow.pop %v8529
      %v8531 = vmul.f32 %v8337, 1.442695
      %v8532 = vpow.pop %v8531
      %v8533 = vmul.f32 %v8338, 1.442695
      %v8534 = vpow.pop %v8533
      %v8535 = vmul.f32 %v8339, 1.442695
      %v8536 = vpow.pop %v8535
      %v8537 = vmul.f32 %v8340, 1.442695
      %v8538 = vpow.pop %v8537
      %v8539 = vmul.f32 %v8341, 1.442695
      %v8540 = vpow.pop %v8539
      %v8541 = vmul.f32 %v8342, 1.442695
      %v8542 = vpow.pop %v8541
      %v8543 = vmul.f32 %v8343, 1.442695
      %v8544 = vpow.pop %v8543
      %v8545 = vmul.f32 %v8344, 1.442695
      %v8546 = vpow.pop %v8545
      %v8547 = vmul.f32 %v8345, 1.442695
      %v8548 = vpow.pop %v8547
      %v8549 = vmul.f32 %v8346, 1.442695
      %v8550 = vpow.pop %v8549
      %v8551 = vmul.f32 %v8347, 1.442695
      %v8552 = vpow.pop %v8551
      %v8553 = vmul.f32 %v8348, 1.442695
      %v8554 = vpow.pop %v8553
      %v8555 = vmul.f32 %v8349, 1.442695
      %v8556 = vpow.pop %v8555
      %v8557 = vmul.f32 %v8350, 1.442695
      %v8558 = vpow.pop %v8557
      %v8559 = vmul.f32 %v8351, 1.442695
      %v8560 = vpow.pop %v8559
      %v8561 = vmul.f32 %v8352, 1.442695
      %v8562 = vpow.pop %v8561
      %v8563 = vmul.f32 %v8353, 1.442695
      %v8564 = vpow.pop %v8563
      %v8565 = vmul.f32 %v8354, 1.442695
      %v8566 = vpow.pop %v8565
      %v8567 = vmul.f32 %v8355, 1.442695
      %v8568 = vpow.pop %v8567
      %v8569 = vmul.f32 %v8356, 1.442695
      %v8570 = vpow.pop %v8569
      %v8571 = vmul.f32 %v8357, 1.442695
      %v8572 = vpow.pop %v8571
      %v8573 = vmul.f32 %v8358, 1.442695
      %v8574 = vpow.pop %v8573
      %v8575 = vmul.f32 %v8359, 1.442695
      %v8576 = vpow.pop %v8575
      %v8577 = vmul.f32 %v8360, 1.442695
      %v8578 = vpow.pop %v8577
      %v8579 = vmul.f32 %v8361, 1.442695
      %v8580 = vpow.pop %v8579
      %v8581 = vmul.f32 %v8362, 1.442695
      %v8582 = vpow.pop %v8581
      %v8583 = vmul.f32 %v8363, 1.442695
      %v8584 = vpow.pop %v8583
      %v8585 = vmul.f32 %v8364, 1.442695
      %v8586 = vpow.pop %v8585
      %v8587 = vmul.f32 %v8365, 1.442695
      %v8588 = vpow.pop %v8587
      %v8589 = vmul.f32 %v8366, 1.442695
      %v8590 = vpow.pop %v8589
      %v8591 = vmul.f32 %v8367, 1.442695
      %v8592 = vpow.pop %v8591
      %v8593 = vmul.f32 %v8368, 1.442695
      %v8594 = vpow.pop %v8593
      %v8595 = vmul.f32 %v8369, 1.442695
      %v8596 = vpow.pop %v8595
      %v8597 = vmul.f32 %v8370, 1.442695
      %v8598 = vpow.pop %v8597
      %v8599 = vmul.f32 %v8371, 1.442695
      %v8600 = vpow.pop %v8599
      %v8601 = vmul.f32 %v8372, 1.442695
      %v8602 = vpow.pop %v8601
      %v8603 = vmul.f32 %v8373, 1.442695
      %v8604 = vpow.pop %v8603
      %v8605 = vmul.f32 %v8374, 1.442695
      %v8606 = vpow.pop %v8605
      %v8607 = vmul.f32 %v8375, 1.442695
      %v8608 = vpow.pop %v8607
      %v8609 = vmul.f32 %v8376, 1.442695
      %v8610 = vpow.pop %v8609
      %v8611 = vmul.f32 %v8377, 1.442695
      %v8612 = vpow.pop %v8611
      %v8613 = vmul.f32 %v8378, 1.442695
      %v8614 = vpow.pop %v8613
      %v8615 = vmul.f32 %v8379, 1.442695
      %v8616 = vpow.pop %v8615
      %v8617 = vmul.f32 %v8380, 1.442695
      %v8618 = vpow.pop %v8617
      %v8619 = vmul.f32 %v8381, 1.442695
      %v8620 = vpow.pop %v8619
      %v8621 = vmul.f32 %v8382, 1.442695
      %v8622 = vpow.pop %v8621
      %v8623 = vmul.f32 %v8383, 1.442695
      %v8624 = vpow.pop %v8623
      %v8625 = vmul.f32 %v8384, 1.442695
      %v8626 = vpow.pop %v8625
      %v8627 = vmul.f32 %v8385, 1.442695
      %v8628 = vpow.pop %v8627
      %v8629 = vmul.f32 %v8386, 1.442695
      %v8630 = vpow.pop %v8629
      %v8631 = vmul.f32 %v8387, 1.442695
      %v8632 = vpow.pop %v8631
      %v8633 = vmul.f32 %v8388, 1.442695
      %v8634 = vpow.pop %v8633
      %v8635 = vmul.f32 %v8389, 1.442695
      %v8636 = vpow.pop %v8635
      %v8637 = vmul.f32 %v8390, 1.442695
      %v8638 = vpow.pop %v8637
      %v8639 = vmul.f32 %v8391, 1.442695
      %v8640 = vpow.pop %v8639
      %v8641 = vmul.f32 %v8392, 1.442695
      %v8642 = vpow.pop %v8641
      %v8643 = vmul.f32 %v8393, 1.442695
      %v8644 = vpow.pop %v8643
      %v8645 = vmul.f32 %v8394, 1.442695
      %v8646 = vpow.pop %v8645
      %v8647 = vmul.f32 %v8395, 1.442695
      %v8648 = vpow.pop %v8647
      %v8649 = vmul.f32 %v8396, 1.442695
      %v8650 = vpow.pop %v8649
      %v8651 = vmul.f32 %v8397, 1.442695
      %v8652 = vpow.pop %v8651
      %v8653 = vmul.f32 %v8398, 1.442695
      %v8654 = vpow.pop %v8653
      %v8655 = vsel %vm7886, %v8400, 0.0
      %8656 = vadd.xlane.f32.xlu0 %v8655
      %v8657 = vpop.xlane.xlu0 %8656
      %v8658 = vsel %vm7886, %v8402, 0.0
      %8659 = vadd.xlane.f32.xlu0 %v8658
      %v8660 = vpop.xlane.xlu0 %8659
      %v8661 = vsel %vm7886, %v8404, 0.0
      %8662 = vadd.xlane.f32.xlu0 %v8661
      %v8663 = vpop.xlane.xlu0 %8662
      %v8664 = vsel %vm7886, %v8406, 0.0
      %8665 = vadd.xlane.f32.xlu0 %v8664
      %v8666 = vpop.xlane.xlu0 %8665
      %v8667 = vsel %vm7886, %v8408, 0.0
      %8668 = vadd.xlane.f32.xlu0 %v8667
      %v8669 = vpop.xlane.xlu0 %8668
      %v8670 = vsel %vm7886, %v8410, 0.0
      %8671 = vadd.xlane.f32.xlu0 %v8670
      %v8672 = vpop.xlane.xlu0 %8671
      %v8673 = vsel %vm7886, %v8412, 0.0
      %8674 = vadd.xlane.f32.xlu0 %v8673
      %v8675 = vpop.xlane.xlu0 %8674
      %v8676 = vsel %vm7886, %v8414, 0.0
      %8677 = vadd.xlane.f32.xlu0 %v8676
      %v8678 = vpop.xlane.xlu0 %8677
      %v8679 = vsel %vm7886, %v8416, 0.0
      %8680 = vadd.xlane.f32.xlu0 %v8679
      %v8681 = vpop.xlane.xlu0 %8680
      %v8682 = vsel %vm7886, %v8418, 0.0
      %8683 = vadd.xlane.f32.xlu0 %v8682
      %v8684 = vpop.xlane.xlu0 %8683
      %v8685 = vsel %vm7886, %v8420, 0.0
      %8686 = vadd.xlane.f32.xlu0 %v8685
      %v8687 = vpop.xlane.xlu0 %8686
      %v8688 = vsel %vm7886, %v8422, 0.0
      %8689 = vadd.xlane.f32.xlu0 %v8688
      %v8690 = vpop.xlane.xlu0 %8689
      %v8691 = vsel %vm7886, %v8424, 0.0
      %8692 = vadd.xlane.f32.xlu0 %v8691
      %v8693 = vpop.xlane.xlu0 %8692
      %v8694 = vsel %vm7886, %v8426, 0.0
      %8695 = vadd.xlane.f32.xlu0 %v8694
      %v8696 = vpop.xlane.xlu0 %8695
      %v8697 = vsel %vm7886, %v8428, 0.0
      %8698 = vadd.xlane.f32.xlu0 %v8697
      %v8699 = vpop.xlane.xlu0 %8698
      %v8700 = vsel %vm7886, %v8430, 0.0
      %8701 = vadd.xlane.f32.xlu0 %v8700
      %v8702 = vpop.xlane.xlu0 %8701
      %v8703 = vsel %vm7886, %v8432, 0.0
      %8704 = vadd.xlane.f32.xlu0 %v8703
      %v8705 = vpop.xlane.xlu0 %8704
      %v8706 = vsel %vm7886, %v8434, 0.0
      %8707 = vadd.xlane.f32.xlu0 %v8706
      %v8708 = vpop.xlane.xlu0 %8707
      %v8709 = vsel %vm7886, %v8436, 0.0
      %8710 = vadd.xlane.f32.xlu0 %v8709
      %v8711 = vpop.xlane.xlu0 %8710
      %v8712 = vsel %vm7886, %v8438, 0.0
      %8713 = vadd.xlane.f32.xlu0 %v8712
      %v8714 = vpop.xlane.xlu0 %8713
      %v8715 = vsel %vm7886, %v8440, 0.0
      %8716 = vadd.xlane.f32.xlu0 %v8715
      %v8717 = vpop.xlane.xlu0 %8716
      %v8718 = vsel %vm7886, %v8442, 0.0
      %8719 = vadd.xlane.f32.xlu0 %v8718
      %v8720 = vpop.xlane.xlu0 %8719
      %v8721 = vsel %vm7886, %v8444, 0.0
      %8722 = vadd.xlane.f32.xlu0 %v8721
      %v8723 = vpop.xlane.xlu0 %8722
      %v8724 = vsel %vm7886, %v8446, 0.0
      %8725 = vadd.xlane.f32.xlu0 %v8724
      %v8726 = vpop.xlane.xlu0 %8725
      %v8727 = vsel %vm7886, %v8448, 0.0
      %8728 = vadd.xlane.f32.xlu0 %v8727
      %v8729 = vpop.xlane.xlu0 %8728
      %v8730 = vsel %vm7886, %v8450, 0.0
      %8731 = vadd.xlane.f32.xlu0 %v8730
      %v8732 = vpop.xlane.xlu0 %8731
      %v8733 = vsel %vm7886, %v8452, 0.0
      %8734 = vadd.xlane.f32.xlu0 %v8733
      %v8735 = vpop.xlane.xlu0 %8734
      %v8736 = vsel %vm7886, %v8454, 0.0
      %8737 = vadd.xlane.f32.xlu0 %v8736
      %v8738 = vpop.xlane.xlu0 %8737
      %v8739 = vsel %vm7886, %v8456, 0.0
      %8740 = vadd.xlane.f32.xlu0 %v8739
      %v8741 = vpop.xlane.xlu0 %8740
      %v8742 = vsel %vm7886, %v8458, 0.0
      %8743 = vadd.xlane.f32.xlu0 %v8742
      %v8744 = vpop.xlane.xlu0 %8743
      %v8745 = vsel %vm7886, %v8460, 0.0
      %8746 = vadd.xlane.f32.xlu0 %v8745
      %v8747 = vpop.xlane.xlu0 %8746
      %v8748 = vsel %vm7886, %v8462, 0.0
      %8749 = vadd.xlane.f32.xlu0 %v8748
      %v8750 = vpop.xlane.xlu0 %8749
      %v8751 = vsel %vm7886, %v8464, 0.0
      %8752 = vadd.xlane.f32.xlu0 %v8751
      %v8753 = vpop.xlane.xlu0 %8752
      %v8754 = vsel %vm7886, %v8466, 0.0
      %8755 = vadd.xlane.f32.xlu0 %v8754
      %v8756 = vpop.xlane.xlu0 %8755
      %v8757 = vsel %vm7886, %v8468, 0.0
      %8758 = vadd.xlane.f32.xlu0 %v8757
      %v8759 = vpop.xlane.xlu0 %8758
      %v8760 = vsel %vm7886, %v8470, 0.0
      %8761 = vadd.xlane.f32.xlu0 %v8760
      %v8762 = vpop.xlane.xlu0 %8761
      %v8763 = vsel %vm7886, %v8472, 0.0
      %8764 = vadd.xlane.f32.xlu0 %v8763
      %v8765 = vpop.xlane.xlu0 %8764
      %v8766 = vsel %vm7886, %v8474, 0.0
      %8767 = vadd.xlane.f32.xlu0 %v8766
      %v8768 = vpop.xlane.xlu0 %8767
      %v8769 = vsel %vm7886, %v8476, 0.0
      %8770 = vadd.xlane.f32.xlu0 %v8769
      %v8771 = vpop.xlane.xlu0 %8770
      %v8772 = vsel %vm7886, %v8478, 0.0
      %8773 = vadd.xlane.f32.xlu0 %v8772
      %v8774 = vpop.xlane.xlu0 %8773
      %v8775 = vsel %vm7886, %v8480, 0.0
      %8776 = vadd.xlane.f32.xlu0 %v8775
      %v8777 = vpop.xlane.xlu0 %8776
      %v8778 = vsel %vm7886, %v8482, 0.0
      %8779 = vadd.xlane.f32.xlu0 %v8778
      %v8780 = vpop.xlane.xlu0 %8779
      %v8781 = vsel %vm7886, %v8484, 0.0
      %8782 = vadd.xlane.f32.xlu0 %v8781
      %v8783 = vpop.xlane.xlu0 %8782
      %v8784 = vsel %vm7886, %v8486, 0.0
      %8785 = vadd.xlane.f32.xlu0 %v8784
      %v8786 = vpop.xlane.xlu0 %8785
      %v8787 = vsel %vm7886, %v8488, 0.0
      %8788 = vadd.xlane.f32.xlu0 %v8787
      %v8789 = vpop.xlane.xlu0 %8788
      %v8790 = vsel %vm7886, %v8490, 0.0
      %8791 = vadd.xlane.f32.xlu0 %v8790
      %v8792 = vpop.xlane.xlu0 %8791
      %v8793 = vsel %vm7886, %v8492, 0.0
      %8794 = vadd.xlane.f32.xlu0 %v8793
      %v8795 = vpop.xlane.xlu0 %8794
      %v8796 = vsel %vm7886, %v8494, 0.0
      %8797 = vadd.xlane.f32.xlu0 %v8796
      %v8798 = vpop.xlane.xlu0 %8797
      %v8799 = vsel %vm7886, %v8496, 0.0
      %8800 = vadd.xlane.f32.xlu0 %v8799
      %v8801 = vpop.xlane.xlu0 %8800
      %v8802 = vsel %vm7886, %v8498, 0.0
      %8803 = vadd.xlane.f32.xlu0 %v8802
      %v8804 = vpop.xlane.xlu0 %8803
      %v8805 = vsel %vm7886, %v8500, 0.0
      %8806 = vadd.xlane.f32.xlu0 %v8805
      %v8807 = vpop.xlane.xlu0 %8806
      %v8808 = vsel %vm7886, %v8502, 0.0
      %8809 = vadd.xlane.f32.xlu0 %v8808
      %v8810 = vpop.xlane.xlu0 %8809
      %v8811 = vsel %vm7886, %v8504, 0.0
      %8812 = vadd.xlane.f32.xlu0 %v8811
      %v8813 = vpop.xlane.xlu0 %8812
      %v8814 = vsel %vm7886, %v8506, 0.0
      %8815 = vadd.xlane.f32.xlu0 %v8814
      %v8816 = vpop.xlane.xlu0 %8815
      %v8817 = vsel %vm7886, %v8508, 0.0
      %8818 = vadd.xlane.f32.xlu0 %v8817
      %v8819 = vpop.xlane.xlu0 %8818
      %v8820 = vsel %vm7886, %v8510, 0.0
      %8821 = vadd.xlane.f32.xlu0 %v8820
      %v8822 = vpop.xlane.xlu0 %8821
      %v8823 = vsel %vm7886, %v8512, 0.0
      %8824 = vadd.xlane.f32.xlu0 %v8823
      %v8825 = vpop.xlane.xlu0 %8824
      %v8826 = vsel %vm7886, %v8514, 0.0
      %8827 = vadd.xlane.f32.xlu0 %v8826
      %v8828 = vpop.xlane.xlu0 %8827
      %v8829 = vsel %vm7886, %v8516, 0.0
      %8830 = vadd.xlane.f32.xlu0 %v8829
      %v8831 = vpop.xlane.xlu0 %8830
      %v8832 = vsel %vm7886, %v8518, 0.0
      %8833 = vadd.xlane.f32.xlu0 %v8832
      %v8834 = vpop.xlane.xlu0 %8833
      %v8835 = vsel %vm7886, %v8520, 0.0
      %8836 = vadd.xlane.f32.xlu0 %v8835
      %v8837 = vpop.xlane.xlu0 %8836
      %v8838 = vsel %vm7886, %v8522, 0.0
      %8839 = vadd.xlane.f32.xlu0 %v8838
      %v8840 = vpop.xlane.xlu0 %8839
      %v8841 = vsel %vm7886, %v8524, 0.0
      %8842 = vadd.xlane.f32.xlu0 %v8841
      %v8843 = vpop.xlane.xlu0 %8842
      %v8844 = vsel %vm7886, %v8526, 0.0
      %8845 = vadd.xlane.f32.xlu0 %v8844
      %v8846 = vpop.xlane.xlu0 %8845
      %v8847 = vsel %vm7886, %v8528, 0.0
      %8848 = vadd.xlane.f32.xlu0 %v8847
      %v8849 = vpop.xlane.xlu0 %8848
      %v8850 = vsel %vm7886, %v8530, 0.0
      %8851 = vadd.xlane.f32.xlu0 %v8850
      %v8852 = vpop.xlane.xlu0 %8851
      %v8853 = vsel %vm7886, %v8532, 0.0
      %8854 = vadd.xlane.f32.xlu0 %v8853
      %v8855 = vpop.xlane.xlu0 %8854
      %v8856 = vsel %vm7886, %v8534, 0.0
      %8857 = vadd.xlane.f32.xlu0 %v8856
      %v8858 = vpop.xlane.xlu0 %8857
      %v8859 = vsel %vm7886, %v8536, 0.0
      %8860 = vadd.xlane.f32.xlu0 %v8859
      %v8861 = vpop.xlane.xlu0 %8860
      %v8862 = vsel %vm7886, %v8538, 0.0
      %8863 = vadd.xlane.f32.xlu0 %v8862
      %v8864 = vpop.xlane.xlu0 %8863
      %v8865 = vsel %vm7886, %v8540, 0.0
      %8866 = vadd.xlane.f32.xlu0 %v8865
      %v8867 = vpop.xlane.xlu0 %8866
      %v8868 = vsel %vm7886, %v8542, 0.0
      %8869 = vadd.xlane.f32.xlu0 %v8868
      %v8870 = vpop.xlane.xlu0 %8869
      %v8871 = vsel %vm7886, %v8544, 0.0
      %8872 = vadd.xlane.f32.xlu0 %v8871
      %v8873 = vpop.xlane.xlu0 %8872
      %v8874 = vsel %vm7886, %v8546, 0.0
      %8875 = vadd.xlane.f32.xlu0 %v8874
      %v8876 = vpop.xlane.xlu0 %8875
      %v8877 = vsel %vm7886, %v8548, 0.0
      %8878 = vadd.xlane.f32.xlu0 %v8877
      %v8879 = vpop.xlane.xlu0 %8878
      %v8880 = vsel %vm7886, %v8550, 0.0
      %8881 = vadd.xlane.f32.xlu0 %v8880
      %v8882 = vpop.xlane.xlu0 %8881
      %v8883 = vsel %vm7886, %v8552, 0.0
      %8884 = vadd.xlane.f32.xlu0 %v8883
      %v8885 = vpop.xlane.xlu0 %8884
      %v8886 = vsel %vm7886, %v8554, 0.0
      %8887 = vadd.xlane.f32.xlu0 %v8886
      %v8888 = vpop.xlane.xlu0 %8887
      %v8889 = vsel %vm7886, %v8556, 0.0
      %8890 = vadd.xlane.f32.xlu0 %v8889
      %v8891 = vpop.xlane.xlu0 %8890
      %v8892 = vsel %vm7886, %v8558, 0.0
      %8893 = vadd.xlane.f32.xlu0 %v8892
      %v8894 = vpop.xlane.xlu0 %8893
      %v8895 = vsel %vm7886, %v8560, 0.0
      %8896 = vadd.xlane.f32.xlu0 %v8895
      %v8897 = vpop.xlane.xlu0 %8896
      %v8898 = vsel %vm7886, %v8562, 0.0
      %8899 = vadd.xlane.f32.xlu0 %v8898
      %v8900 = vpop.xlane.xlu0 %8899
      %v8901 = vsel %vm7886, %v8564, 0.0
      %8902 = vadd.xlane.f32.xlu0 %v8901
      %v8903 = vpop.xlane.xlu0 %8902
      %v8904 = vsel %vm7886, %v8566, 0.0
      %8905 = vadd.xlane.f32.xlu0 %v8904
      %v8906 = vpop.xlane.xlu0 %8905
      %v8907 = vsel %vm7886, %v8568, 0.0
      %8908 = vadd.xlane.f32.xlu0 %v8907
      %v8909 = vpop.xlane.xlu0 %8908
      %v8910 = vsel %vm7886, %v8570, 0.0
      %8911 = vadd.xlane.f32.xlu0 %v8910
      %v8912 = vpop.xlane.xlu0 %8911
      %v8913 = vsel %vm7886, %v8572, 0.0
      %8914 = vadd.xlane.f32.xlu0 %v8913
      %v8915 = vpop.xlane.xlu0 %8914
      %v8916 = vsel %vm7886, %v8574, 0.0
      %8917 = vadd.xlane.f32.xlu0 %v8916
      %v8918 = vpop.xlane.xlu0 %8917
      %v8919 = vsel %vm7886, %v8576, 0.0
      %8920 = vadd.xlane.f32.xlu0 %v8919
      %v8921 = vpop.xlane.xlu0 %8920
      %v8922 = vsel %vm7886, %v8578, 0.0
      %8923 = vadd.xlane.f32.xlu0 %v8922
      %v8924 = vpop.xlane.xlu0 %8923
      %v8925 = vsel %vm7886, %v8580, 0.0
      %8926 = vadd.xlane.f32.xlu0 %v8925
      %v8927 = vpop.xlane.xlu0 %8926
      %v8928 = vsel %vm7886, %v8582, 0.0
      %8929 = vadd.xlane.f32.xlu0 %v8928
      %v8930 = vpop.xlane.xlu0 %8929
      %v8931 = vsel %vm7886, %v8584, 0.0
      %8932 = vadd.xlane.f32.xlu0 %v8931
      %v8933 = vpop.xlane.xlu0 %8932
      %v8934 = vsel %vm7886, %v8586, 0.0
      %8935 = vadd.xlane.f32.xlu0 %v8934
      %v8936 = vpop.xlane.xlu0 %8935
      %v8937 = vsel %vm7886, %v8588, 0.0
      %8938 = vadd.xlane.f32.xlu0 %v8937
      %v8939 = vpop.xlane.xlu0 %8938
      %v8940 = vsel %vm7886, %v8590, 0.0
      %8941 = vadd.xlane.f32.xlu0 %v8940
      %v8942 = vpop.xlane.xlu0 %8941
      %v8943 = vsel %vm7886, %v8592, 0.0
      %8944 = vadd.xlane.f32.xlu0 %v8943
      %v8945 = vpop.xlane.xlu0 %8944
      %v8946 = vsel %vm7886, %v8594, 0.0
      %8947 = vadd.xlane.f32.xlu0 %v8946
      %v8948 = vpop.xlane.xlu0 %8947
      %v8949 = vsel %vm7886, %v8596, 0.0
      %8950 = vadd.xlane.f32.xlu0 %v8949
      %v8951 = vpop.xlane.xlu0 %8950
      %v8952 = vsel %vm7886, %v8598, 0.0
      %8953 = vadd.xlane.f32.xlu0 %v8952
      %v8954 = vpop.xlane.xlu0 %8953
      %v8955 = vsel %vm7886, %v8600, 0.0
      %8956 = vadd.xlane.f32.xlu0 %v8955
      %v8957 = vpop.xlane.xlu0 %8956
      %v8958 = vsel %vm7886, %v8602, 0.0
      %8959 = vadd.xlane.f32.xlu0 %v8958
      %v8960 = vpop.xlane.xlu0 %8959
      %v8961 = vsel %vm7886, %v8604, 0.0
      %8962 = vadd.xlane.f32.xlu0 %v8961
      %v8963 = vpop.xlane.xlu0 %8962
      %v8964 = vsel %vm7886, %v8606, 0.0
      %8965 = vadd.xlane.f32.xlu0 %v8964
      %v8966 = vpop.xlane.xlu0 %8965
      %v8967 = vsel %vm7886, %v8608, 0.0
      %8968 = vadd.xlane.f32.xlu0 %v8967
      %v8969 = vpop.xlane.xlu0 %8968
      %v8970 = vsel %vm7886, %v8610, 0.0
      %8971 = vadd.xlane.f32.xlu0 %v8970
      %v8972 = vpop.xlane.xlu0 %8971
      %v8973 = vsel %vm7886, %v8612, 0.0
      %8974 = vadd.xlane.f32.xlu0 %v8973
      %v8975 = vpop.xlane.xlu0 %8974
      %v8976 = vsel %vm7886, %v8614, 0.0
      %8977 = vadd.xlane.f32.xlu0 %v8976
      %v8978 = vpop.xlane.xlu0 %8977
      %v8979 = vsel %vm7886, %v8616, 0.0
      %8980 = vadd.xlane.f32.xlu0 %v8979
      %v8981 = vpop.xlane.xlu0 %8980
      %v8982 = vsel %vm7886, %v8618, 0.0
      %8983 = vadd.xlane.f32.xlu0 %v8982
      %v8984 = vpop.xlane.xlu0 %8983
      %v8985 = vsel %vm7886, %v8620, 0.0
      %8986 = vadd.xlane.f32.xlu0 %v8985
      %v8987 = vpop.xlane.xlu0 %8986
      %v8988 = vsel %vm7886, %v8622, 0.0
      %8989 = vadd.xlane.f32.xlu0 %v8988
      %v8990 = vpop.xlane.xlu0 %8989
      %v8991 = vsel %vm7886, %v8624, 0.0
      %8992 = vadd.xlane.f32.xlu0 %v8991
      %v8993 = vpop.xlane.xlu0 %8992
      %v8994 = vsel %vm7886, %v8626, 0.0
      %8995 = vadd.xlane.f32.xlu0 %v8994
      %v8996 = vpop.xlane.xlu0 %8995
      %v8997 = vsel %vm7886, %v8628, 0.0
      %8998 = vadd.xlane.f32.xlu0 %v8997
      %v8999 = vpop.xlane.xlu0 %8998
      %v9000 = vsel %vm7886, %v8630, 0.0
      %9001 = vadd.xlane.f32.xlu0 %v9000
      %v9002 = vpop.xlane.xlu0 %9001
      %v9003 = vsel %vm7886, %v8632, 0.0
      %9004 = vadd.xlane.f32.xlu0 %v9003
      %v9005 = vpop.xlane.xlu0 %9004
      %v9006 = vsel %vm7886, %v8634, 0.0
      %9007 = vadd.xlane.f32.xlu0 %v9006
      %v9008 = vpop.xlane.xlu0 %9007
      %v9009 = vsel %vm7886, %v8636, 0.0
      %9010 = vadd.xlane.f32.xlu0 %v9009
      %v9011 = vpop.xlane.xlu0 %9010
      %v9012 = vsel %vm7886, %v8638, 0.0
      %9013 = vadd.xlane.f32.xlu0 %v9012
      %v9014 = vpop.xlane.xlu0 %9013
      %v9015 = vsel %vm7886, %v8640, 0.0
      %9016 = vadd.xlane.f32.xlu0 %v9015
      %v9017 = vpop.xlane.xlu0 %9016
      %v9018 = vsel %vm7886, %v8642, 0.0
      %9019 = vadd.xlane.f32.xlu0 %v9018
      %v9020 = vpop.xlane.xlu0 %9019
      %v9021 = vsel %vm7886, %v8644, 0.0
      %9022 = vadd.xlane.f32.xlu0 %v9021
      %v9023 = vpop.xlane.xlu0 %9022
      %v9024 = vsel %vm7886, %v8646, 0.0
      %9025 = vadd.xlane.f32.xlu0 %v9024
      %v9026 = vpop.xlane.xlu0 %9025
      %v9027 = vsel %vm7886, %v8648, 0.0
      %9028 = vadd.xlane.f32.xlu0 %v9027
      %v9029 = vpop.xlane.xlu0 %9028
      %v9030 = vsel %vm7886, %v8650, 0.0
      %9031 = vadd.xlane.f32.xlu0 %v9030
      %v9032 = vpop.xlane.xlu0 %9031
      %v9033 = vsel %vm7886, %v8652, 0.0
      %9034 = vadd.xlane.f32.xlu0 %v9033
      %v9035 = vpop.xlane.xlu0 %9034
      %v9036 = vsel %vm7886, %v8654, 0.0
      %9037 = vadd.xlane.f32.xlu0 %v9036
      %v9038 = vpop.xlane.xlu0 %9037
      %v9039 = vrcp.pop %v8657
      %v9040 = vrcp.pop %v8660
      %v9041 = vrcp.pop %v8663
      %v9042 = vrcp.pop %v8666
      %v9043 = vrcp.pop %v8669
      %v9044 = vrcp.pop %v8672
      %v9045 = vrcp.pop %v8675
      %v9046 = vrcp.pop %v8678
      %v9047 = vrcp.pop %v8681
      %v9048 = vrcp.pop %v8684
      %v9049 = vrcp.pop %v8687
      %v9050 = vrcp.pop %v8690
      %v9051 = vrcp.pop %v8693
      %v9052 = vrcp.pop %v8696
      %v9053 = vrcp.pop %v8699
      %v9054 = vrcp.pop %v8702
      %v9055 = vrcp.pop %v8705
      %v9056 = vrcp.pop %v8708
      %v9057 = vrcp.pop %v8711
      %v9058 = vrcp.pop %v8714
      %v9059 = vrcp.pop %v8717
      %v9060 = vrcp.pop %v8720
      %v9061 = vrcp.pop %v8723
      %v9062 = vrcp.pop %v8726
      %v9063 = vrcp.pop %v8729
      %v9064 = vrcp.pop %v8732
      %v9065 = vrcp.pop %v8735
      %v9066 = vrcp.pop %v8738
      %v9067 = vrcp.pop %v8741
      %v9068 = vrcp.pop %v8744
      %v9069 = vrcp.pop %v8747
      %v9070 = vrcp.pop %v8750
      %v9071 = vrcp.pop %v8753
      %v9072 = vrcp.pop %v8756
      %v9073 = vrcp.pop %v8759
      %v9074 = vrcp.pop %v8762
      %v9075 = vrcp.pop %v8765
      %v9076 = vrcp.pop %v8768
      %v9077 = vrcp.pop %v8771
      %v9078 = vrcp.pop %v8774
      %v9079 = vrcp.pop %v8777
      %v9080 = vrcp.pop %v8780
      %v9081 = vrcp.pop %v8783
      %v9082 = vrcp.pop %v8786
      %v9083 = vrcp.pop %v8789
      %v9084 = vrcp.pop %v8792
      %v9085 = vrcp.pop %v8795
      %v9086 = vrcp.pop %v8798
      %v9087 = vrcp.pop %v8801
      %v9088 = vrcp.pop %v8804
      %v9089 = vrcp.pop %v8807
      %v9090 = vrcp.pop %v8810
      %v9091 = vrcp.pop %v8813
      %v9092 = vrcp.pop %v8816
      %v9093 = vrcp.pop %v8819
      %v9094 = vrcp.pop %v8822
      %v9095 = vrcp.pop %v8825
      %v9096 = vrcp.pop %v8828
      %v9097 = vrcp.pop %v8831
      %v9098 = vrcp.pop %v8834
      %v9099 = vrcp.pop %v8837
      %v9100 = vrcp.pop %v8840
      %v9101 = vrcp.pop %v8843
      %v9102 = vrcp.pop %v8846
      %v9103 = vrcp.pop %v8849
      %v9104 = vrcp.pop %v8852
      %v9105 = vrcp.pop %v8855
      %v9106 = vrcp.pop %v8858
      %v9107 = vrcp.pop %v8861
      %v9108 = vrcp.pop %v8864
      %v9109 = vrcp.pop %v8867
      %v9110 = vrcp.pop %v8870
      %v9111 = vrcp.pop %v8873
      %v9112 = vrcp.pop %v8876
      %v9113 = vrcp.pop %v8879
      %v9114 = vrcp.pop %v8882
      %v9115 = vrcp.pop %v8885
      %v9116 = vrcp.pop %v8888
      %v9117 = vrcp.pop %v8891
      %v9118 = vrcp.pop %v8894
      %v9119 = vrcp.pop %v8897
      %v9120 = vrcp.pop %v8900
      %v9121 = vrcp.pop %v8903
      %v9122 = vrcp.pop %v8906
      %v9123 = vrcp.pop %v8909
      %v9124 = vrcp.pop %v8912
      %v9125 = vrcp.pop %v8915
      %v9126 = vrcp.pop %v8918
      %v9127 = vrcp.pop %v8921
      %v9128 = vrcp.pop %v8924
      %v9129 = vrcp.pop %v8927
      %v9130 = vrcp.pop %v8930
      %v9131 = vrcp.pop %v8933
      %v9132 = vrcp.pop %v8936
      %v9133 = vrcp.pop %v8939
      %v9134 = vrcp.pop %v8942
      %v9135 = vrcp.pop %v8945
      %v9136 = vrcp.pop %v8948
      %v9137 = vrcp.pop %v8951
      %v9138 = vrcp.pop %v8954
      %v9139 = vrcp.pop %v8957
      %v9140 = vrcp.pop %v8960
      %v9141 = vrcp.pop %v8963
      %v9142 = vrcp.pop %v8966
      %v9143 = vrcp.pop %v8969
      %v9144 = vrcp.pop %v8972
      %v9145 = vrcp.pop %v8975
      %v9146 = vrcp.pop %v8978
      %v9147 = vrcp.pop %v8981
      %v9148 = vrcp.pop %v8984
      %v9149 = vrcp.pop %v8987
      %v9150 = vrcp.pop %v8990
      %v9151 = vrcp.pop %v8993
      %v9152 = vrcp.pop %v8996
      %v9153 = vrcp.pop %v8999
      %v9154 = vrcp.pop %v9002
      %v9155 = vrcp.pop %v9005
      %v9156 = vrcp.pop %v9008
      %v9157 = vrcp.pop %v9011
      %v9158 = vrcp.pop %v9014
      %v9159 = vrcp.pop %v9017
      %v9160 = vrcp.pop %v9020
      %v9161 = vrcp.pop %v9023
      %v9162 = vrcp.pop %v9026
      %v9163 = vrcp.pop %v9029
      %v9164 = vrcp.pop %v9032
      %v9165 = vrcp.pop %v9035
      %v9166 = vrcp.pop %v9038
      %v9167 = vmul.f32 %v8400, %v9039
      %v9168 = vmul.f32 %v8402, %v9040
      %v9169 = vmul.f32 %v8404, %v9041
      %v9170 = vmul.f32 %v8406, %v9042
      %v9171 = vmul.f32 %v8408, %v9043
      %v9172 = vmul.f32 %v8410, %v9044
      %v9173 = vmul.f32 %v8412, %v9045
      %v9174 = vmul.f32 %v8414, %v9046
      %v9175 = vmul.f32 %v8416, %v9047
      %v9176 = vmul.f32 %v8418, %v9048
      %v9177 = vmul.f32 %v8420, %v9049
      %v9178 = vmul.f32 %v8422, %v9050
      %v9179 = vmul.f32 %v8424, %v9051
      %v9180 = vmul.f32 %v8426, %v9052
      %v9181 = vmul.f32 %v8428, %v9053
      %v9182 = vmul.f32 %v8430, %v9054
      %v9183 = vmul.f32 %v8432, %v9055
      %v9184 = vmul.f32 %v8434, %v9056
      %v9185 = vmul.f32 %v8436, %v9057
      %v9186 = vmul.f32 %v8438, %v9058
      %v9187 = vmul.f32 %v8440, %v9059
      %v9188 = vmul.f32 %v8442, %v9060
      %v9189 = vmul.f32 %v8444, %v9061
      %v9190 = vmul.f32 %v8446, %v9062
      %v9191 = vmul.f32 %v8448, %v9063
      %v9192 = vmul.f32 %v8450, %v9064
      %v9193 = vmul.f32 %v8452, %v9065
      %v9194 = vmul.f32 %v8454, %v9066
      %v9195 = vmul.f32 %v8456, %v9067
      %v9196 = vmul.f32 %v8458, %v9068
      %v9197 = vmul.f32 %v8460, %v9069
      %v9198 = vmul.f32 %v8462, %v9070
      %v9199 = vmul.f32 %v8464, %v9071
      %v9200 = vmul.f32 %v8466, %v9072
      %v9201 = vmul.f32 %v8468, %v9073
      %v9202 = vmul.f32 %v8470, %v9074
      %v9203 = vmul.f32 %v8472, %v9075
      %v9204 = vmul.f32 %v8474, %v9076
      %v9205 = vmul.f32 %v8476, %v9077
      %v9206 = vmul.f32 %v8478, %v9078
      %v9207 = vmul.f32 %v8480, %v9079
      %v9208 = vmul.f32 %v8482, %v9080
      %v9209 = vmul.f32 %v8484, %v9081
      %v9210 = vmul.f32 %v8486, %v9082
      %v9211 = vmul.f32 %v8488, %v9083
      %v9212 = vmul.f32 %v8490, %v9084
      %v9213 = vmul.f32 %v8492, %v9085
      %v9214 = vmul.f32 %v8494, %v9086
      %v9215 = vmul.f32 %v8496, %v9087
      %v9216 = vmul.f32 %v8498, %v9088
      %v9217 = vmul.f32 %v8500, %v9089
      %v9218 = vmul.f32 %v8502, %v9090
      %v9219 = vmul.f32 %v8504, %v9091
      %v9220 = vmul.f32 %v8506, %v9092
      %v9221 = vmul.f32 %v8508, %v9093
      %v9222 = vmul.f32 %v8510, %v9094
      %v9223 = vmul.f32 %v8512, %v9095
      %v9224 = vmul.f32 %v8514, %v9096
      %v9225 = vmul.f32 %v8516, %v9097
      %v9226 = vmul.f32 %v8518, %v9098
      %v9227 = vmul.f32 %v8520, %v9099
      %v9228 = vmul.f32 %v8522, %v9100
      %v9229 = vmul.f32 %v8524, %v9101
      %v9230 = vmul.f32 %v8526, %v9102
      %v9231 = vmul.f32 %v8528, %v9103
      %v9232 = vmul.f32 %v8530, %v9104
      %v9233 = vmul.f32 %v8532, %v9105
      %v9234 = vmul.f32 %v8534, %v9106
      %v9235 = vmul.f32 %v8536, %v9107
      %v9236 = vmul.f32 %v8538, %v9108
      %v9237 = vmul.f32 %v8540, %v9109
      %v9238 = vmul.f32 %v8542, %v9110
      %v9239 = vmul.f32 %v8544, %v9111
      %v9240 = vmul.f32 %v8546, %v9112
      %v9241 = vmul.f32 %v8548, %v9113
      %v9242 = vmul.f32 %v8550, %v9114
      %v9243 = vmul.f32 %v8552, %v9115
      %v9244 = vmul.f32 %v8554, %v9116
      %v9245 = vmul.f32 %v8556, %v9117
      %v9246 = vmul.f32 %v8558, %v9118
      %v9247 = vmul.f32 %v8560, %v9119
      %v9248 = vmul.f32 %v8562, %v9120
      %v9249 = vmul.f32 %v8564, %v9121
      %v9250 = vmul.f32 %v8566, %v9122
      %v9251 = vmul.f32 %v8568, %v9123
      %v9252 = vmul.f32 %v8570, %v9124
      %v9253 = vmul.f32 %v8572, %v9125
      %v9254 = vmul.f32 %v8574, %v9126
      %v9255 = vmul.f32 %v8576, %v9127
      %v9256 = vmul.f32 %v8578, %v9128
      %v9257 = vmul.f32 %v8580, %v9129
      %v9258 = vmul.f32 %v8582, %v9130
      %v9259 = vmul.f32 %v8584, %v9131
      %v9260 = vmul.f32 %v8586, %v9132
      %v9261 = vmul.f32 %v8588, %v9133
      %v9262 = vmul.f32 %v8590, %v9134
      %v9263 = vmul.f32 %v8592, %v9135
      %v9264 = vmul.f32 %v8594, %v9136
      %v9265 = vmul.f32 %v8596, %v9137
      %v9266 = vmul.f32 %v8598, %v9138
      %v9267 = vmul.f32 %v8600, %v9139
      %v9268 = vmul.f32 %v8602, %v9140
      %v9269 = vmul.f32 %v8604, %v9141
      %v9270 = vmul.f32 %v8606, %v9142
      %v9271 = vmul.f32 %v8608, %v9143
      %v9272 = vmul.f32 %v8610, %v9144
      %v9273 = vmul.f32 %v8612, %v9145
      %v9274 = vmul.f32 %v8614, %v9146
      %v9275 = vmul.f32 %v8616, %v9147
      %v9276 = vmul.f32 %v8618, %v9148
      %v9277 = vmul.f32 %v8620, %v9149
      %v9278 = vmul.f32 %v8622, %v9150
      %v9279 = vmul.f32 %v8624, %v9151
      %v9280 = vmul.f32 %v8626, %v9152
      %v9281 = vmul.f32 %v8628, %v9153
      %v9282 = vmul.f32 %v8630, %v9154
      %v9283 = vmul.f32 %v8632, %v9155
      %v9284 = vmul.f32 %v8634, %v9156
      %v9285 = vmul.f32 %v8636, %v9157
      %v9286 = vmul.f32 %v8638, %v9158
      %v9287 = vmul.f32 %v8640, %v9159
      %v9288 = vmul.f32 %v8642, %v9160
      %v9289 = vmul.f32 %v8644, %v9161
      %v9290 = vmul.f32 %v8646, %v9162
      %v9291 = vmul.f32 %v8648, %v9163
      %v9292 = vmul.f32 %v8650, %v9164
      %v9293 = vmul.f32 %v8652, %v9165
      %v9294 = vmul.f32 %v8654, %v9166
      %v9295 = vpack.c.bf16 %v9167, %v9167
      %v9296 = vpack.c.bf16 %v9168, %v9168
      %v9297 = vpack.c.bf16 %v9169, %v9169
      %v9298 = vpack.c.bf16 %v9170, %v9170
      %v9299 = vpack.c.bf16 %v9171, %v9171
      %v9300 = vpack.c.bf16 %v9172, %v9172
      %v9301 = vpack.c.bf16 %v9173, %v9173
      %v9302 = vpack.c.bf16 %v9174, %v9174
      %v9303 = vpack.c.bf16 %v9175, %v9175
      %v9304 = vpack.c.bf16 %v9176, %v9176
      %v9305 = vpack.c.bf16 %v9177, %v9177
      %v9306 = vpack.c.bf16 %v9178, %v9178
      %v9307 = vpack.c.bf16 %v9179, %v9179
      %v9308 = vpack.c.bf16 %v9180, %v9180
      %v9309 = vpack.c.bf16 %v9181, %v9181
      %v9310 = vpack.c.bf16 %v9182, %v9182
      %v9311 = vpack.c.bf16 %v9183, %v9183
      %v9312 = vpack.c.bf16 %v9184, %v9184
      %v9313 = vpack.c.bf16 %v9185, %v9185
      %v9314 = vpack.c.bf16 %v9186, %v9186
      %v9315 = vpack.c.bf16 %v9187, %v9187
      %v9316 = vpack.c.bf16 %v9188, %v9188
      %v9317 = vpack.c.bf16 %v9189, %v9189
      %v9318 = vpack.c.bf16 %v9190, %v9190
      %v9319 = vpack.c.bf16 %v9191, %v9191
      %v9320 = vpack.c.bf16 %v9192, %v9192
      %v9321 = vpack.c.bf16 %v9193, %v9193
      %v9322 = vpack.c.bf16 %v9194, %v9194
      %v9323 = vpack.c.bf16 %v9195, %v9195
      %v9324 = vpack.c.bf16 %v9196, %v9196
      %v9325 = vpack.c.bf16 %v9197, %v9197
      %v9326 = vpack.c.bf16 %v9198, %v9198
      %v9327 = vpack.c.bf16 %v9199, %v9199
      %v9328 = vpack.c.bf16 %v9200, %v9200
      %v9329 = vpack.c.bf16 %v9201, %v9201
      %v9330 = vpack.c.bf16 %v9202, %v9202
      %v9331 = vpack.c.bf16 %v9203, %v9203
      %v9332 = vpack.c.bf16 %v9204, %v9204
      %v9333 = vpack.c.bf16 %v9205, %v9205
      %v9334 = vpack.c.bf16 %v9206, %v9206
      %v9335 = vpack.c.bf16 %v9207, %v9207
      %v9336 = vpack.c.bf16 %v9208, %v9208
      %v9337 = vpack.c.bf16 %v9209, %v9209
      %v9338 = vpack.c.bf16 %v9210, %v9210
      %v9339 = vpack.c.bf16 %v9211, %v9211
      %v9340 = vpack.c.bf16 %v9212, %v9212
      %v9341 = vpack.c.bf16 %v9213, %v9213
      %v9342 = vpack.c.bf16 %v9214, %v9214
      %v9343 = vpack.c.bf16 %v9215, %v9215
      %v9344 = vpack.c.bf16 %v9216, %v9216
      %v9345 = vpack.c.bf16 %v9217, %v9217
      %v9346 = vpack.c.bf16 %v9218, %v9218
      %v9347 = vpack.c.bf16 %v9219, %v9219
      %v9348 = vpack.c.bf16 %v9220, %v9220
      %v9349 = vpack.c.bf16 %v9221, %v9221
      %v9350 = vpack.c.bf16 %v9222, %v9222
      %v9351 = vpack.c.bf16 %v9223, %v9223
      %v9352 = vpack.c.bf16 %v9224, %v9224
      %v9353 = vpack.c.bf16 %v9225, %v9225
      %v9354 = vpack.c.bf16 %v9226, %v9226
      %v9355 = vpack.c.bf16 %v9227, %v9227
      %v9356 = vpack.c.bf16 %v9228, %v9228
      %v9357 = vpack.c.bf16 %v9229, %v9229
      %v9358 = vpack.c.bf16 %v9230, %v9230
      %v9359 = vpack.c.bf16 %v9231, %v9231
      %v9360 = vpack.c.bf16 %v9232, %v9232
      %v9361 = vpack.c.bf16 %v9233, %v9233
      %v9362 = vpack.c.bf16 %v9234, %v9234
      %v9363 = vpack.c.bf16 %v9235, %v9235
      %v9364 = vpack.c.bf16 %v9236, %v9236
      %v9365 = vpack.c.bf16 %v9237, %v9237
      %v9366 = vpack.c.bf16 %v9238, %v9238
      %v9367 = vpack.c.bf16 %v9239, %v9239
      %v9368 = vpack.c.bf16 %v9240, %v9240
      %v9369 = vpack.c.bf16 %v9241, %v9241
      %v9370 = vpack.c.bf16 %v9242, %v9242
      %v9371 = vpack.c.bf16 %v9243, %v9243
      %v9372 = vpack.c.bf16 %v9244, %v9244
      %v9373 = vpack.c.bf16 %v9245, %v9245
      %v9374 = vpack.c.bf16 %v9246, %v9246
      %v9375 = vpack.c.bf16 %v9247, %v9247
      %v9376 = vpack.c.bf16 %v9248, %v9248
      %v9377 = vpack.c.bf16 %v9249, %v9249
      %v9378 = vpack.c.bf16 %v9250, %v9250
      %v9379 = vpack.c.bf16 %v9251, %v9251
      %v9380 = vpack.c.bf16 %v9252, %v9252
      %v9381 = vpack.c.bf16 %v9253, %v9253
      %v9382 = vpack.c.bf16 %v9254, %v9254
      %v9383 = vpack.c.bf16 %v9255, %v9255
      %v9384 = vpack.c.bf16 %v9256, %v9256
      %v9385 = vpack.c.bf16 %v9257, %v9257
      %v9386 = vpack.c.bf16 %v9258, %v9258
      %v9387 = vpack.c.bf16 %v9259, %v9259
      %v9388 = vpack.c.bf16 %v9260, %v9260
      %v9389 = vpack.c.bf16 %v9261, %v9261
      %v9390 = vpack.c.bf16 %v9262, %v9262
      %v9391 = vpack.c.bf16 %v9263, %v9263
      %v9392 = vpack.c.bf16 %v9264, %v9264
      %v9393 = vpack.c.bf16 %v9265, %v9265
      %v9394 = vpack.c.bf16 %v9266, %v9266
      %v9395 = vpack.c.bf16 %v9267, %v9267
      %v9396 = vpack.c.bf16 %v9268, %v9268
      %v9397 = vpack.c.bf16 %v9269, %v9269
      %v9398 = vpack.c.bf16 %v9270, %v9270
      %v9399 = vpack.c.bf16 %v9271, %v9271
      %v9400 = vpack.c.bf16 %v9272, %v9272
      %v9401 = vpack.c.bf16 %v9273, %v9273
      %v9402 = vpack.c.bf16 %v9274, %v9274
      %v9403 = vpack.c.bf16 %v9275, %v9275
      %v9404 = vpack.c.bf16 %v9276, %v9276
      %v9405 = vpack.c.bf16 %v9277, %v9277
      %v9406 = vpack.c.bf16 %v9278, %v9278
      %v9407 = vpack.c.bf16 %v9279, %v9279
      %v9408 = vpack.c.bf16 %v9280, %v9280
      %v9409 = vpack.c.bf16 %v9281, %v9281
      %v9410 = vpack.c.bf16 %v9282, %v9282
      %v9411 = vpack.c.bf16 %v9283, %v9283
      %v9412 = vpack.c.bf16 %v9284, %v9284
      %v9413 = vpack.c.bf16 %v9285, %v9285
      %v9414 = vpack.c.bf16 %v9286, %v9286
      %v9415 = vpack.c.bf16 %v9287, %v9287
      %v9416 = vpack.c.bf16 %v9288, %v9288
      %v9417 = vpack.c.bf16 %v9289, %v9289
      %v9418 = vpack.c.bf16 %v9290, %v9290
      %v9419 = vpack.c.bf16 %v9291, %v9291
      %v9420 = vpack.c.bf16 %v9292, %v9292
      %v9421 = vpack.c.bf16 %v9293, %v9293
      %v9422 = vpack.c.bf16 %v9294, %v9294
      %v9431 = vunpack.c.l.b16 %v9295
      %v9432 = vunpack.c.l.b16 %v9296
      %v9433 = vunpack.c.l.b16 %v9297
      %v9434 = vunpack.c.l.b16 %v9298
      %v9435 = vunpack.c.l.b16 %v9299
      %v9436 = vunpack.c.l.b16 %v9300
      %v9437 = vunpack.c.l.b16 %v9301
      %v9438 = vunpack.c.l.b16 %v9302
      %v9439 = vpack.c.b16 %v9432, %v9431
      %v9440 = vpack.c.b16 %v9434, %v9433
      %v9441 = vpack.c.b16 %v9436, %v9435
      %v9442 = vpack.c.b16 %v9438, %v9437
      %v9443 = vunpack.c.l.b16 %v1714
      %v9444 = vunpack.c.l.b16 %v1715
      %v9445 = vunpack.c.l.b16 %v1716
      %v9446 = vunpack.c.l.b16 %v1717
      %v9447 = vunpack.c.l.b16 %v1718
      %v9448 = vunpack.c.l.b16 %v1719
      %v9449 = vunpack.c.l.b16 %v1720
      %v9450 = vunpack.c.l.b16 %v1721
      %v9451 = vpack.c.b16 %v9444, %v9443
      %v9452 = vpack.c.b16 %v9446, %v9445
      %v9453 = vpack.c.b16 %v9448, %v9447
      %v9454 = vpack.c.b16 %v9450, %v9449
      %9455 = vrot.lane.b32.xlu0 %v9451, 64
      %v9456 = vpop.permute.xlu0 %9455
      %9457 = vrot.lane.b32.xlu0 %v9452, 64
      %v9458 = vpop.permute.xlu0 %9457
      %9459 = vrot.lane.b32.xlu0 %v9453, 64
      %v9460 = vpop.permute.xlu0 %9459
      %9461 = vrot.lane.b32.xlu0 %v9454, 64
      %v9462 = vpop.permute.xlu0 %9461
      %v9468 = vsel %vm7886, %v9439, 0
      %v9471 = vsel %vm7886, %v9440, 0
      %v9474 = vsel %vm7886, %v9441, 0
      %v9477 = vsel %vm7886, %v9442, 0
      %9479 = vmatpush.bf16.msra.mxu0 0
      %9480 = vmatpush.bf16.msra.mxu0 0
      %9481 = vmatpush.bf16.msra.mxu0 0
      %9482 = vmatpush.bf16.msra.mxu0 0
      %9483 = vmatpush.bf16.msra.mxu0 %v9462
      %9484 = vmatpush.bf16.msra.mxu0 %v9460
      %9485 = vmatpush.bf16.msra.mxu0 %v9458
      %9486 = vmatpush.bf16.msra.mxu0 %v9456
      %9487 = vmatmul.bf16.gmra.mxu0 %v9468
      %v9488 = vpop.f32.mrf.mxu0
      %v9489 = vadd.f32 0.0, %v9488
      %v9490 = vpop.f32.mrf.mxu0
      %v9491 = vadd.f32 0.0, %v9490
      %9492 = vmatmul.bf16.gmra.mxu0 %v9471
      %v9493 = vpop.f32.mrf.mxu0
      %v9494 = vadd.f32 0.0, %v9493
      %v9495 = vpop.f32.mrf.mxu0
      %v9496 = vadd.f32 0.0, %v9495
      %9497 = vmatmul.bf16.gmra.mxu0 %v9474
      %v9498 = vpop.f32.mrf.mxu0
      %v9499 = vadd.f32 0.0, %v9498
      %v9500 = vpop.f32.mrf.mxu0
      %v9501 = vadd.f32 0.0, %v9500
      %9502 = vmatmul.bf16.gmra.mxu0 %v9477
      %v9503 = vpop.f32.mrf.mxu0
      %v9504 = vadd.f32 0.0, %v9503
      %v9505 = vpop.f32.mrf.mxu0
      %v9506 = vadd.f32 0.0, %v9505
      %9507 = vdwg.mxu0
      %v9516 = vunpack.c.l.b16 %v9303
      %v9517 = vunpack.c.l.b16 %v9304
      %v9518 = vunpack.c.l.b16 %v9305
      %v9519 = vunpack.c.l.b16 %v9306
      %v9520 = vunpack.c.l.b16 %v9307
      %v9521 = vunpack.c.l.b16 %v9308
      %v9522 = vunpack.c.l.b16 %v9309
      %v9523 = vunpack.c.l.b16 %v9310
      %v9524 = vpack.c.b16 %v9517, %v9516
      %v9525 = vpack.c.b16 %v9519, %v9518
      %v9526 = vpack.c.b16 %v9521, %v9520
      %v9527 = vpack.c.b16 %v9523, %v9522
      %v9528 = vunpack.c.l.b16 %v1722
      %v9529 = vunpack.c.l.b16 %v1723
      %v9530 = vunpack.c.l.b16 %v1724
      %v9531 = vunpack.c.l.b16 %v1725
      %v9532 = vunpack.c.l.b16 %v1726
      %v9533 = vunpack.c.l.b16 %v1727
      %v9534 = vunpack.c.l.b16 %v1728
      %v9535 = vunpack.c.l.b16 %v1729
      %v9536 = vpack.c.b16 %v9529, %v9528
      %v9537 = vpack.c.b16 %v9531, %v9530
      %v9538 = vpack.c.b16 %v9533, %v9532
      %v9539 = vpack.c.b16 %v9535, %v9534
      %9540 = vrot.lane.b32.xlu0 %v9536, 64
      %v9541 = vpop.permute.xlu0 %9540
      %9542 = vrot.lane.b32.xlu0 %v9537, 64
      %v9543 = vpop.permute.xlu0 %9542
      %9544 = vrot.lane.b32.xlu0 %v9538, 64
      %v9545 = vpop.permute.xlu0 %9544
      %9546 = vrot.lane.b32.xlu0 %v9539, 64
      %v9547 = vpop.permute.xlu0 %9546
      %v9553 = vsel %vm7886, %v9524, 0
      %v9556 = vsel %vm7886, %v9525, 0
      %v9559 = vsel %vm7886, %v9526, 0
      %v9562 = vsel %vm7886, %v9527, 0
      %9564 = vmatpush.bf16.msra.mxu0 0
      %9565 = vmatpush.bf16.msra.mxu0 0
      %9566 = vmatpush.bf16.msra.mxu0 0
      %9567 = vmatpush.bf16.msra.mxu0 0
      %9568 = vmatpush.bf16.msra.mxu0 %v9547
      %9569 = vmatpush.bf16.msra.mxu0 %v9545
      %9570 = vmatpush.bf16.msra.mxu0 %v9543
      %9571 = vmatpush.bf16.msra.mxu0 %v9541
      %9572 = vmatmul.bf16.gmra.mxu0 %v9553
      %v9573 = vpop.f32.mrf.mxu0
      %v9574 = vadd.f32 0.0, %v9573
      %v9575 = vpop.f32.mrf.mxu0
      %v9576 = vadd.f32 0.0, %v9575
      %9577 = vmatmul.bf16.gmra.mxu0 %v9556
      %v9578 = vpop.f32.mrf.mxu0
      %v9579 = vadd.f32 0.0, %v9578
      %v9580 = vpop.f32.mrf.mxu0
      %v9581 = vadd.f32 0.0, %v9580
      %9582 = vmatmul.bf16.gmra.mxu0 %v9559
      %v9583 = vpop.f32.mrf.mxu0
      %v9584 = vadd.f32 0.0, %v9583
      %v9585 = vpop.f32.mrf.mxu0
      %v9586 = vadd.f32 0.0, %v9585
      %9587 = vmatmul.bf16.gmra.mxu0 %v9562
      %v9588 = vpop.f32.mrf.mxu0
      %v9589 = vadd.f32 0.0, %v9588
      %v9590 = vpop.f32.mrf.mxu0
      %v9591 = vadd.f32 0.0, %v9590
      %9592 = vdwg.mxu0
      %v9601 = vunpack.c.l.b16 %v9311
      %v9602 = vunpack.c.l.b16 %v9312
      %v9603 = vunpack.c.l.b16 %v9313
      %v9604 = vunpack.c.l.b16 %v9314
      %v9605 = vunpack.c.l.b16 %v9315
      %v9606 = vunpack.c.l.b16 %v9316
      %v9607 = vunpack.c.l.b16 %v9317
      %v9608 = vunpack.c.l.b16 %v9318
      %v9609 = vpack.c.b16 %v9602, %v9601
      %v9610 = vpack.c.b16 %v9604, %v9603
      %v9611 = vpack.c.b16 %v9606, %v9605
      %v9612 = vpack.c.b16 %v9608, %v9607
      %v9613 = vunpack.c.l.b16 %v1730
      %v9614 = vunpack.c.l.b16 %v1731
      %v9615 = vunpack.c.l.b16 %v1732
      %v9616 = vunpack.c.l.b16 %v1733
      %v9617 = vunpack.c.l.b16 %v1734
      %v9618 = vunpack.c.l.b16 %v1735
      %v9619 = vunpack.c.l.b16 %v1736
      %v9620 = vunpack.c.l.b16 %v1737
      %v9621 = vpack.c.b16 %v9614, %v9613
      %v9622 = vpack.c.b16 %v9616, %v9615
      %v9623 = vpack.c.b16 %v9618, %v9617
      %v9624 = vpack.c.b16 %v9620, %v9619
      %9625 = vrot.lane.b32.xlu0 %v9621, 64
      %v9626 = vpop.permute.xlu0 %9625
      %9627 = vrot.lane.b32.xlu0 %v9622, 64
      %v9628 = vpop.permute.xlu0 %9627
      %9629 = vrot.lane.b32.xlu0 %v9623, 64
      %v9630 = vpop.permute.xlu0 %9629
      %9631 = vrot.lane.b32.xlu0 %v9624, 64
      %v9632 = vpop.permute.xlu0 %9631
      %v9638 = vsel %vm7886, %v9609, 0
      %v9641 = vsel %vm7886, %v9610, 0
      %v9644 = vsel %vm7886, %v9611, 0
      %v9647 = vsel %vm7886, %v9612, 0
      %9649 = vmatpush.bf16.msra.mxu0 0
      %9650 = vmatpush.bf16.msra.mxu0 0
      %9651 = vmatpush.bf16.msra.mxu0 0
      %9652 = vmatpush.bf16.msra.mxu0 0
      %9653 = vmatpush.bf16.msra.mxu0 %v9632
      %9654 = vmatpush.bf16.msra.mxu0 %v9630
      %9655 = vmatpush.bf16.msra.mxu0 %v9628
      %9656 = vmatpush.bf16.msra.mxu0 %v9626
      %9657 = vmatmul.bf16.gmra.mxu0 %v9638
      %v9658 = vpop.f32.mrf.mxu0
      %v9659 = vadd.f32 0.0, %v9658
      %v9660 = vpop.f32.mrf.mxu0
      %v9661 = vadd.f32 0.0, %v9660
      %9662 = vmatmul.bf16.gmra.mxu0 %v9641
      %v9663 = vpop.f32.mrf.mxu0
      %v9664 = vadd.f32 0.0, %v9663
      %v9665 = vpop.f32.mrf.mxu0
      %v9666 = vadd.f32 0.0, %v9665
      %9667 = vmatmul.bf16.gmra.mxu0 %v9644
      %v9668 = vpop.f32.mrf.mxu0
      %v9669 = vadd.f32 0.0, %v9668
      %v9670 = vpop.f32.mrf.mxu0
      %v9671 = vadd.f32 0.0, %v9670
      %9672 = vmatmul.bf16.gmra.mxu0 %v9647
      %v9673 = vpop.f32.mrf.mxu0
      %v9674 = vadd.f32 0.0, %v9673
      %v9675 = vpop.f32.mrf.mxu0
      %v9676 = vadd.f32 0.0, %v9675
      %9677 = vdwg.mxu0
      %v9686 = vunpack.c.l.b16 %v9319
      %v9687 = vunpack.c.l.b16 %v9320
      %v9688 = vunpack.c.l.b16 %v9321
      %v9689 = vunpack.c.l.b16 %v9322
      %v9690 = vunpack.c.l.b16 %v9323
      %v9691 = vunpack.c.l.b16 %v9324
      %v9692 = vunpack.c.l.b16 %v9325
      %v9693 = vunpack.c.l.b16 %v9326
      %v9694 = vpack.c.b16 %v9687, %v9686
      %v9695 = vpack.c.b16 %v9689, %v9688
      %v9696 = vpack.c.b16 %v9691, %v9690
      %v9697 = vpack.c.b16 %v9693, %v9692
      %v9698 = vunpack.c.l.b16 %v1738
      %v9699 = vunpack.c.l.b16 %v1739
      %v9700 = vunpack.c.l.b16 %v1740
      %v9701 = vunpack.c.l.b16 %v1741
      %v9702 = vunpack.c.l.b16 %v1742
      %v9703 = vunpack.c.l.b16 %v1743
      %v9704 = vunpack.c.l.b16 %v1744
      %v9705 = vunpack.c.l.b16 %v1745
      %v9706 = vpack.c.b16 %v9699, %v9698
      %v9707 = vpack.c.b16 %v9701, %v9700
      %v9708 = vpack.c.b16 %v9703, %v9702
      %v9709 = vpack.c.b16 %v9705, %v9704
      %9710 = vrot.lane.b32.xlu0 %v9706, 64
      %v9711 = vpop.permute.xlu0 %9710
      %9712 = vrot.lane.b32.xlu0 %v9707, 64
      %v9713 = vpop.permute.xlu0 %9712
      %9714 = vrot.lane.b32.xlu0 %v9708, 64
      %v9715 = vpop.permute.xlu0 %9714
      %9716 = vrot.lane.b32.xlu0 %v9709, 64
      %v9717 = vpop.permute.xlu0 %9716
      %v9723 = vsel %vm7886, %v9694, 0
      %v9726 = vsel %vm7886, %v9695, 0
      %v9729 = vsel %vm7886, %v9696, 0
      %v9732 = vsel %vm7886, %v9697, 0
      %9734 = vmatpush.bf16.msra.mxu0 0
      %9735 = vmatpush.bf16.msra.mxu0 0
      %9736 = vmatpush.bf16.msra.mxu0 0
      %9737 = vmatpush.bf16.msra.mxu0 0
      %9738 = vmatpush.bf16.msra.mxu0 %v9717
      %9739 = vmatpush.bf16.msra.mxu0 %v9715
      %9740 = vmatpush.bf16.msra.mxu0 %v9713
      %9741 = vmatpush.bf16.msra.mxu0 %v9711
      %9742 = vmatmul.bf16.gmra.mxu0 %v9723
      %v9743 = vpop.f32.mrf.mxu0
      %v9744 = vadd.f32 0.0, %v9743
      %v9745 = vpop.f32.mrf.mxu0
      %v9746 = vadd.f32 0.0, %v9745
      %9747 = vmatmul.bf16.gmra.mxu0 %v9726
      %v9748 = vpop.f32.mrf.mxu0
      %v9749 = vadd.f32 0.0, %v9748
      %v9750 = vpop.f32.mrf.mxu0
      %v9751 = vadd.f32 0.0, %v9750
      %9752 = vmatmul.bf16.gmra.mxu0 %v9729
      %v9753 = vpop.f32.mrf.mxu0
      %v9754 = vadd.f32 0.0, %v9753
      %v9755 = vpop.f32.mrf.mxu0
      %v9756 = vadd.f32 0.0, %v9755
      %9757 = vmatmul.bf16.gmra.mxu0 %v9732
      %v9758 = vpop.f32.mrf.mxu0
      %v9759 = vadd.f32 0.0, %v9758
      %v9760 = vpop.f32.mrf.mxu0
      %v9761 = vadd.f32 0.0, %v9760
      %9762 = vdwg.mxu0
      %v9771 = vunpack.c.l.b16 %v9327
      %v9772 = vunpack.c.l.b16 %v9328
      %v9773 = vunpack.c.l.b16 %v9329
      %v9774 = vunpack.c.l.b16 %v9330
      %v9775 = vunpack.c.l.b16 %v9331
      %v9776 = vunpack.c.l.b16 %v9332
      %v9777 = vunpack.c.l.b16 %v9333
      %v9778 = vunpack.c.l.b16 %v9334
      %v9779 = vpack.c.b16 %v9772, %v9771
      %v9780 = vpack.c.b16 %v9774, %v9773
      %v9781 = vpack.c.b16 %v9776, %v9775
      %v9782 = vpack.c.b16 %v9778, %v9777
      %v9783 = vunpack.c.l.b16 %v6111
      %v9784 = vunpack.c.l.b16 %v6113
      %v9785 = vunpack.c.l.b16 %v6115
      %v9786 = vunpack.c.l.b16 %v6117
      %v9787 = vunpack.c.l.b16 %v6119
      %v9788 = vunpack.c.l.b16 %v6121
      %v9789 = vunpack.c.l.b16 %v6123
      %v9790 = vunpack.c.l.b16 %v6125
      %v9791 = vpack.c.b16 %v9784, %v9783
      %v9792 = vpack.c.b16 %v9786, %v9785
      %v9793 = vpack.c.b16 %v9788, %v9787
      %v9794 = vpack.c.b16 %v9790, %v9789
      %9795 = vrot.lane.b32.xlu0 %v9791, 64
      %v9796 = vpop.permute.xlu0 %9795
      %9797 = vrot.lane.b32.xlu0 %v9792, 64
      %v9798 = vpop.permute.xlu0 %9797
      %9799 = vrot.lane.b32.xlu0 %v9793, 64
      %v9800 = vpop.permute.xlu0 %9799
      %9801 = vrot.lane.b32.xlu0 %v9794, 64
      %v9802 = vpop.permute.xlu0 %9801
      %v9808 = vsel %vm7886, %v9779, 0
      %v9811 = vsel %vm7886, %v9780, 0
      %v9814 = vsel %vm7886, %v9781, 0
      %v9817 = vsel %vm7886, %v9782, 0
      %9819 = vmatpush.bf16.msra.mxu0 0
      %9820 = vmatpush.bf16.msra.mxu0 0
      %9821 = vmatpush.bf16.msra.mxu0 0
      %9822 = vmatpush.bf16.msra.mxu0 0
      %9823 = vmatpush.bf16.msra.mxu0 %v9802
      %9824 = vmatpush.bf16.msra.mxu0 %v9800
      %9825 = vmatpush.bf16.msra.mxu0 %v9798
      %9826 = vmatpush.bf16.msra.mxu0 %v9796
      %9827 = vmatmul.bf16.gmra.mxu0 %v9808
      %v9828 = vpop.f32.mrf.mxu0
      %v9829 = vadd.f32 0.0, %v9828
      %v9830 = vpop.f32.mrf.mxu0
      %v9831 = vadd.f32 0.0, %v9830
      %9832 = vmatmul.bf16.gmra.mxu0 %v9811
      %v9833 = vpop.f32.mrf.mxu0
      %v9834 = vadd.f32 0.0, %v9833
      %v9835 = vpop.f32.mrf.mxu0
      %v9836 = vadd.f32 0.0, %v9835
      %9837 = vmatmul.bf16.gmra.mxu0 %v9814
      %v9838 = vpop.f32.mrf.mxu0
      %v9839 = vadd.f32 0.0, %v9838
      %v9840 = vpop.f32.mrf.mxu0
      %v9841 = vadd.f32 0.0, %v9840
      %9842 = vmatmul.bf16.gmra.mxu0 %v9817
      %v9843 = vpop.f32.mrf.mxu0
      %v9844 = vadd.f32 0.0, %v9843
      %v9845 = vpop.f32.mrf.mxu0
      %v9846 = vadd.f32 0.0, %v9845
      %9847 = vdwg.mxu0
      %v9856 = vunpack.c.l.b16 %v9335
      %v9857 = vunpack.c.l.b16 %v9336
      %v9858 = vunpack.c.l.b16 %v9337
      %v9859 = vunpack.c.l.b16 %v9338
      %v9860 = vunpack.c.l.b16 %v9339
      %v9861 = vunpack.c.l.b16 %v9340
      %v9862 = vunpack.c.l.b16 %v9341
      %v9863 = vunpack.c.l.b16 %v9342
      %v9864 = vpack.c.b16 %v9857, %v9856
      %v9865 = vpack.c.b16 %v9859, %v9858
      %v9866 = vpack.c.b16 %v9861, %v9860
      %v9867 = vpack.c.b16 %v9863, %v9862
      %v9868 = vunpack.c.l.b16 %v6127
      %v9869 = vunpack.c.l.b16 %v6129
      %v9870 = vunpack.c.l.b16 %v6131
      %v9871 = vunpack.c.l.b16 %v6133
      %v9872 = vunpack.c.l.b16 %v6135
      %v9873 = vunpack.c.l.b16 %v6137
      %v9874 = vunpack.c.l.b16 %v6139
      %v9875 = vunpack.c.l.b16 %v6141
      %v9876 = vpack.c.b16 %v9869, %v9868
      %v9877 = vpack.c.b16 %v9871, %v9870
      %v9878 = vpack.c.b16 %v9873, %v9872
      %v9879 = vpack.c.b16 %v9875, %v9874
      %9880 = vrot.lane.b32.xlu0 %v9876, 64
      %v9881 = vpop.permute.xlu0 %9880
      %9882 = vrot.lane.b32.xlu0 %v9877, 64
      %v9883 = vpop.permute.xlu0 %9882
      %9884 = vrot.lane.b32.xlu0 %v9878, 64
      %v9885 = vpop.permute.xlu0 %9884
      %9886 = vrot.lane.b32.xlu0 %v9879, 64
      %v9887 = vpop.permute.xlu0 %9886
      %v9893 = vsel %vm7886, %v9864, 0
      %v9896 = vsel %vm7886, %v9865, 0
      %v9899 = vsel %vm7886, %v9866, 0
      %v9902 = vsel %vm7886, %v9867, 0
      %9904 = vmatpush.bf16.msra.mxu0 0
      %9905 = vmatpush.bf16.msra.mxu0 0
      %9906 = vmatpush.bf16.msra.mxu0 0
      %9907 = vmatpush.bf16.msra.mxu0 0
      %9908 = vmatpush.bf16.msra.mxu0 %v9887
      %9909 = vmatpush.bf16.msra.mxu0 %v9885
      %9910 = vmatpush.bf16.msra.mxu0 %v9883
      %9911 = vmatpush.bf16.msra.mxu0 %v9881
      %9912 = vmatmul.bf16.gmra.mxu0 %v9893
      %v9913 = vpop.f32.mrf.mxu0
      %v9914 = vadd.f32 0.0, %v9913
      %v9915 = vpop.f32.mrf.mxu0
      %v9916 = vadd.f32 0.0, %v9915
      %9917 = vmatmul.bf16.gmra.mxu0 %v9896
      %v9918 = vpop.f32.mrf.mxu0
      %v9919 = vadd.f32 0.0, %v9918
      %v9920 = vpop.f32.mrf.mxu0
      %v9921 = vadd.f32 0.0, %v9920
      %9922 = vmatmul.bf16.gmra.mxu0 %v9899
      %v9923 = vpop.f32.mrf.mxu0
      %v9924 = vadd.f32 0.0, %v9923
      %v9925 = vpop.f32.mrf.mxu0
      %v9926 = vadd.f32 0.0, %v9925
      %9927 = vmatmul.bf16.gmra.mxu0 %v9902
      %v9928 = vpop.f32.mrf.mxu0
      %v9929 = vadd.f32 0.0, %v9928
      %v9930 = vpop.f32.mrf.mxu0
      %v9931 = vadd.f32 0.0, %v9930
      %9932 = vdwg.mxu0
      %v9941 = vunpack.c.l.b16 %v9343
      %v9942 = vunpack.c.l.b16 %v9344
      %v9943 = vunpack.c.l.b16 %v9345
      %v9944 = vunpack.c.l.b16 %v9346
      %v9945 = vunpack.c.l.b16 %v9347
      %v9946 = vunpack.c.l.b16 %v9348
      %v9947 = vunpack.c.l.b16 %v9349
      %v9948 = vunpack.c.l.b16 %v9350
      %v9949 = vpack.c.b16 %v9942, %v9941
      %v9950 = vpack.c.b16 %v9944, %v9943
      %v9951 = vpack.c.b16 %v9946, %v9945
      %v9952 = vpack.c.b16 %v9948, %v9947
      %v9953 = vunpack.c.l.b16 %v6143
      %v9954 = vunpack.c.l.b16 %v6145
      %v9955 = vunpack.c.l.b16 %v6147
      %v9956 = vunpack.c.l.b16 %v6149
      %v9957 = vunpack.c.l.b16 %v6151
      %v9958 = vunpack.c.l.b16 %v6153
      %v9959 = vunpack.c.l.b16 %v6155
      %v9960 = vunpack.c.l.b16 %v6157
      %v9961 = vpack.c.b16 %v9954, %v9953
      %v9962 = vpack.c.b16 %v9956, %v9955
      %v9963 = vpack.c.b16 %v9958, %v9957
      %v9964 = vpack.c.b16 %v9960, %v9959
      %9965 = vrot.lane.b32.xlu0 %v9961, 64
      %v9966 = vpop.permute.xlu0 %9965
      %9967 = vrot.lane.b32.xlu0 %v9962, 64
      %v9968 = vpop.permute.xlu0 %9967
      %9969 = vrot.lane.b32.xlu0 %v9963, 64
      %v9970 = vpop.permute.xlu0 %9969
      %9971 = vrot.lane.b32.xlu0 %v9964, 64
      %v9972 = vpop.permute.xlu0 %9971
      %v9978 = vsel %vm7886, %v9949, 0
      %v9981 = vsel %vm7886, %v9950, 0
      %v9984 = vsel %vm7886, %v9951, 0
      %v9987 = vsel %vm7886, %v9952, 0
      %9989 = vmatpush.bf16.msra.mxu0 0
      %9990 = vmatpush.bf16.msra.mxu0 0
      %9991 = vmatpush.bf16.msra.mxu0 0
      %9992 = vmatpush.bf16.msra.mxu0 0
      %9993 = vmatpush.bf16.msra.mxu0 %v9972
      %9994 = vmatpush.bf16.msra.mxu0 %v9970
      %9995 = vmatpush.bf16.msra.mxu0 %v9968
      %9996 = vmatpush.bf16.msra.mxu0 %v9966
      %9997 = vmatmul.bf16.gmra.mxu0 %v9978
      %v9998 = vpop.f32.mrf.mxu0
      %v9999 = vadd.f32 0.0, %v9998
      %v10000 = vpop.f32.mrf.mxu0
      %v10001 = vadd.f32 0.0, %v10000
      %10002 = vmatmul.bf16.gmra.mxu0 %v9981
      %v10003 = vpop.f32.mrf.mxu0
      %v10004 = vadd.f32 0.0, %v10003
      %v10005 = vpop.f32.mrf.mxu0
      %v10006 = vadd.f32 0.0, %v10005
      %10007 = vmatmul.bf16.gmra.mxu0 %v9984
      %v10008 = vpop.f32.mrf.mxu0
      %v10009 = vadd.f32 0.0, %v10008
      %v10010 = vpop.f32.mrf.mxu0
      %v10011 = vadd.f32 0.0, %v10010
      %10012 = vmatmul.bf16.gmra.mxu0 %v9987
      %v10013 = vpop.f32.mrf.mxu0
      %v10014 = vadd.f32 0.0, %v10013
      %v10015 = vpop.f32.mrf.mxu0
      %v10016 = vadd.f32 0.0, %v10015
      %10017 = vdwg.mxu0
      %v10026 = vunpack.c.l.b16 %v9351
      %v10027 = vunpack.c.l.b16 %v9352
      %v10028 = vunpack.c.l.b16 %v9353
      %v10029 = vunpack.c.l.b16 %v9354
      %v10030 = vunpack.c.l.b16 %v9355
      %v10031 = vunpack.c.l.b16 %v9356
      %v10032 = vunpack.c.l.b16 %v9357
      %v10033 = vunpack.c.l.b16 %v9358
      %v10034 = vpack.c.b16 %v10027, %v10026
      %v10035 = vpack.c.b16 %v10029, %v10028
      %v10036 = vpack.c.b16 %v10031, %v10030
      %v10037 = vpack.c.b16 %v10033, %v10032
      %v10038 = vunpack.c.l.b16 %v6159
      %v10039 = vunpack.c.l.b16 %v6161
      %v10040 = vunpack.c.l.b16 %v6163
      %v10041 = vunpack.c.l.b16 %v6165
      %v10042 = vunpack.c.l.b16 %v6167
      %v10043 = vunpack.c.l.b16 %v6169
      %v10044 = vunpack.c.l.b16 %v6171
      %v10045 = vunpack.c.l.b16 %v6173
      %v10046 = vpack.c.b16 %v10039, %v10038
      %v10047 = vpack.c.b16 %v10041, %v10040
      %v10048 = vpack.c.b16 %v10043, %v10042
      %v10049 = vpack.c.b16 %v10045, %v10044
      %10050 = vrot.lane.b32.xlu0 %v10046, 64
      %v10051 = vpop.permute.xlu0 %10050
      %10052 = vrot.lane.b32.xlu0 %v10047, 64
      %v10053 = vpop.permute.xlu0 %10052
      %10054 = vrot.lane.b32.xlu0 %v10048, 64
      %v10055 = vpop.permute.xlu0 %10054
      %10056 = vrot.lane.b32.xlu0 %v10049, 64
      %v10057 = vpop.permute.xlu0 %10056
      %v10063 = vsel %vm7886, %v10034, 0
      %v10066 = vsel %vm7886, %v10035, 0
      %v10069 = vsel %vm7886, %v10036, 0
      %v10072 = vsel %vm7886, %v10037, 0
      %10074 = vmatpush.bf16.msra.mxu0 0
      %10075 = vmatpush.bf16.msra.mxu0 0
      %10076 = vmatpush.bf16.msra.mxu0 0
      %10077 = vmatpush.bf16.msra.mxu0 0
      %10078 = vmatpush.bf16.msra.mxu0 %v10057
      %10079 = vmatpush.bf16.msra.mxu0 %v10055
      %10080 = vmatpush.bf16.msra.mxu0 %v10053
      %10081 = vmatpush.bf16.msra.mxu0 %v10051
      %10082 = vmatmul.bf16.gmra.mxu0 %v10063
      %v10083 = vpop.f32.mrf.mxu0
      %v10084 = vadd.f32 0.0, %v10083
      %v10085 = vpop.f32.mrf.mxu0
      %v10086 = vadd.f32 0.0, %v10085
      %10087 = vmatmul.bf16.gmra.mxu0 %v10066
      %v10088 = vpop.f32.mrf.mxu0
      %v10089 = vadd.f32 0.0, %v10088
      %v10090 = vpop.f32.mrf.mxu0
      %v10091 = vadd.f32 0.0, %v10090
      %10092 = vmatmul.bf16.gmra.mxu0 %v10069
      %v10093 = vpop.f32.mrf.mxu0
      %v10094 = vadd.f32 0.0, %v10093
      %v10095 = vpop.f32.mrf.mxu0
      %v10096 = vadd.f32 0.0, %v10095
      %10097 = vmatmul.bf16.gmra.mxu0 %v10072
      %v10098 = vpop.f32.mrf.mxu0
      %v10099 = vadd.f32 0.0, %v10098
      %v10100 = vpop.f32.mrf.mxu0
      %v10101 = vadd.f32 0.0, %v10100
      %10102 = vdwg.mxu0
      %v10111 = vunpack.c.l.b16 %v9359
      %v10112 = vunpack.c.l.b16 %v9360
      %v10113 = vunpack.c.l.b16 %v9361
      %v10114 = vunpack.c.l.b16 %v9362
      %v10115 = vunpack.c.l.b16 %v9363
      %v10116 = vunpack.c.l.b16 %v9364
      %v10117 = vunpack.c.l.b16 %v9365
      %v10118 = vunpack.c.l.b16 %v9366
      %v10119 = vpack.c.b16 %v10112, %v10111
      %v10120 = vpack.c.b16 %v10114, %v10113
      %v10121 = vpack.c.b16 %v10116, %v10115
      %v10122 = vpack.c.b16 %v10118, %v10117
      %v10123 = vunpack.c.l.b16 %v6175
      %v10124 = vunpack.c.l.b16 %v6177
      %v10125 = vunpack.c.l.b16 %v6179
      %v10126 = vunpack.c.l.b16 %v6181
      %v10127 = vunpack.c.l.b16 %v6183
      %v10128 = vunpack.c.l.b16 %v6185
      %v10129 = vunpack.c.l.b16 %v6187
      %v10130 = vunpack.c.l.b16 %v6189
      %v10131 = vpack.c.b16 %v10124, %v10123
      %v10132 = vpack.c.b16 %v10126, %v10125
      %v10133 = vpack.c.b16 %v10128, %v10127
      %v10134 = vpack.c.b16 %v10130, %v10129
      %10135 = vrot.lane.b32.xlu0 %v10131, 64
      %v10136 = vpop.permute.xlu0 %10135
      %10137 = vrot.lane.b32.xlu0 %v10132, 64
      %v10138 = vpop.permute.xlu0 %10137
      %10139 = vrot.lane.b32.xlu0 %v10133, 64
      %v10140 = vpop.permute.xlu0 %10139
      %10141 = vrot.lane.b32.xlu0 %v10134, 64
      %v10142 = vpop.permute.xlu0 %10141
      %v10148 = vsel %vm7886, %v10119, 0
      %v10151 = vsel %vm7886, %v10120, 0
      %v10154 = vsel %vm7886, %v10121, 0
      %v10157 = vsel %vm7886, %v10122, 0
      %10159 = vmatpush.bf16.msra.mxu0 0
      %10160 = vmatpush.bf16.msra.mxu0 0
      %10161 = vmatpush.bf16.msra.mxu0 0
      %10162 = vmatpush.bf16.msra.mxu0 0
      %10163 = vmatpush.bf16.msra.mxu0 %v10142
      %10164 = vmatpush.bf16.msra.mxu0 %v10140
      %10165 = vmatpush.bf16.msra.mxu0 %v10138
      %10166 = vmatpush.bf16.msra.mxu0 %v10136
      %10167 = vmatmul.bf16.gmra.mxu0 %v10148
      %v10168 = vpop.f32.mrf.mxu0
      %v10169 = vadd.f32 0.0, %v10168
      %v10170 = vpop.f32.mrf.mxu0
      %v10171 = vadd.f32 0.0, %v10170
      %10172 = vmatmul.bf16.gmra.mxu0 %v10151
      %v10173 = vpop.f32.mrf.mxu0
      %v10174 = vadd.f32 0.0, %v10173
      %v10175 = vpop.f32.mrf.mxu0
      %v10176 = vadd.f32 0.0, %v10175
      %10177 = vmatmul.bf16.gmra.mxu0 %v10154
      %v10178 = vpop.f32.mrf.mxu0
      %v10179 = vadd.f32 0.0, %v10178
      %v10180 = vpop.f32.mrf.mxu0
      %v10181 = vadd.f32 0.0, %v10180
      %10182 = vmatmul.bf16.gmra.mxu0 %v10157
      %v10183 = vpop.f32.mrf.mxu0
      %v10184 = vadd.f32 0.0, %v10183
      %v10185 = vpop.f32.mrf.mxu0
      %v10186 = vadd.f32 0.0, %v10185
      %10187 = vdwg.mxu0
      %v10196 = vunpack.c.l.b16 %v9367
      %v10197 = vunpack.c.l.b16 %v9368
      %v10198 = vunpack.c.l.b16 %v9369
      %v10199 = vunpack.c.l.b16 %v9370
      %v10200 = vunpack.c.l.b16 %v9371
      %v10201 = vunpack.c.l.b16 %v9372
      %v10202 = vunpack.c.l.b16 %v9373
      %v10203 = vunpack.c.l.b16 %v9374
      %v10204 = vpack.c.b16 %v10197, %v10196
      %v10205 = vpack.c.b16 %v10199, %v10198
      %v10206 = vpack.c.b16 %v10201, %v10200
      %v10207 = vpack.c.b16 %v10203, %v10202
      %v10208 = vunpack.c.l.b16 %v6191
      %v10209 = vunpack.c.l.b16 %v6193
      %v10210 = vunpack.c.l.b16 %v6195
      %v10211 = vunpack.c.l.b16 %v6197
      %v10212 = vunpack.c.l.b16 %v6199
      %v10213 = vunpack.c.l.b16 %v6201
      %v10214 = vunpack.c.l.b16 %v6203
      %v10215 = vunpack.c.l.b16 %v6205
      %v10216 = vpack.c.b16 %v10209, %v10208
      %v10217 = vpack.c.b16 %v10211, %v10210
      %v10218 = vpack.c.b16 %v10213, %v10212
      %v10219 = vpack.c.b16 %v10215, %v10214
      %10220 = vrot.lane.b32.xlu0 %v10216, 64
      %v10221 = vpop.permute.xlu0 %10220
      %10222 = vrot.lane.b32.xlu0 %v10217, 64
      %v10223 = vpop.permute.xlu0 %10222
      %10224 = vrot.lane.b32.xlu0 %v10218, 64
      %v10225 = vpop.permute.xlu0 %10224
      %10226 = vrot.lane.b32.xlu0 %v10219, 64
      %v10227 = vpop.permute.xlu0 %10226
      %v10233 = vsel %vm7886, %v10204, 0
      %v10236 = vsel %vm7886, %v10205, 0
      %v10239 = vsel %vm7886, %v10206, 0
      %v10242 = vsel %vm7886, %v10207, 0
      %10244 = vmatpush.bf16.msra.mxu0 0
      %10245 = vmatpush.bf16.msra.mxu0 0
      %10246 = vmatpush.bf16.msra.mxu0 0
      %10247 = vmatpush.bf16.msra.mxu0 0
      %10248 = vmatpush.bf16.msra.mxu0 %v10227
      %10249 = vmatpush.bf16.msra.mxu0 %v10225
      %10250 = vmatpush.bf16.msra.mxu0 %v10223
      %10251 = vmatpush.bf16.msra.mxu0 %v10221
      %10252 = vmatmul.bf16.gmra.mxu0 %v10233
      %v10253 = vpop.f32.mrf.mxu0
      %v10254 = vadd.f32 0.0, %v10253
      %v10255 = vpop.f32.mrf.mxu0
      %v10256 = vadd.f32 0.0, %v10255
      %10257 = vmatmul.bf16.gmra.mxu0 %v10236
      %v10258 = vpop.f32.mrf.mxu0
      %v10259 = vadd.f32 0.0, %v10258
      %v10260 = vpop.f32.mrf.mxu0
      %v10261 = vadd.f32 0.0, %v10260
      %10262 = vmatmul.bf16.gmra.mxu0 %v10239
      %v10263 = vpop.f32.mrf.mxu0
      %v10264 = vadd.f32 0.0, %v10263
      %v10265 = vpop.f32.mrf.mxu0
      %v10266 = vadd.f32 0.0, %v10265
      %10267 = vmatmul.bf16.gmra.mxu0 %v10242
      %v10268 = vpop.f32.mrf.mxu0
      %v10269 = vadd.f32 0.0, %v10268
      %v10270 = vpop.f32.mrf.mxu0
      %v10271 = vadd.f32 0.0, %v10270
      %10272 = vdwg.mxu0
      %v10281 = vunpack.c.l.b16 %v9375
      %v10282 = vunpack.c.l.b16 %v9376
      %v10283 = vunpack.c.l.b16 %v9377
      %v10284 = vunpack.c.l.b16 %v9378
      %v10285 = vunpack.c.l.b16 %v9379
      %v10286 = vunpack.c.l.b16 %v9380
      %v10287 = vunpack.c.l.b16 %v9381
      %v10288 = vunpack.c.l.b16 %v9382
      %v10289 = vpack.c.b16 %v10282, %v10281
      %v10290 = vpack.c.b16 %v10284, %v10283
      %v10291 = vpack.c.b16 %v10286, %v10285
      %v10292 = vpack.c.b16 %v10288, %v10287
      %v10293 = vunpack.c.l.b16 %v6207
      %v10294 = vunpack.c.l.b16 %v6209
      %v10295 = vunpack.c.l.b16 %v6211
      %v10296 = vunpack.c.l.b16 %v6213
      %v10297 = vunpack.c.l.b16 %v6215
      %v10298 = vunpack.c.l.b16 %v6217
      %v10299 = vunpack.c.l.b16 %v6219
      %v10300 = vunpack.c.l.b16 %v6221
      %v10301 = vpack.c.b16 %v10294, %v10293
      %v10302 = vpack.c.b16 %v10296, %v10295
      %v10303 = vpack.c.b16 %v10298, %v10297
      %v10304 = vpack.c.b16 %v10300, %v10299
      %10305 = vrot.lane.b32.xlu0 %v10301, 64
      %v10306 = vpop.permute.xlu0 %10305
      %10307 = vrot.lane.b32.xlu0 %v10302, 64
      %v10308 = vpop.permute.xlu0 %10307
      %10309 = vrot.lane.b32.xlu0 %v10303, 64
      %v10310 = vpop.permute.xlu0 %10309
      %10311 = vrot.lane.b32.xlu0 %v10304, 64
      %v10312 = vpop.permute.xlu0 %10311
      %v10318 = vsel %vm7886, %v10289, 0
      %v10321 = vsel %vm7886, %v10290, 0
      %v10324 = vsel %vm7886, %v10291, 0
      %v10327 = vsel %vm7886, %v10292, 0
      %10329 = vmatpush.bf16.msra.mxu0 0
      %10330 = vmatpush.bf16.msra.mxu0 0
      %10331 = vmatpush.bf16.msra.mxu0 0
      %10332 = vmatpush.bf16.msra.mxu0 0
      %10333 = vmatpush.bf16.msra.mxu0 %v10312
      %10334 = vmatpush.bf16.msra.mxu0 %v10310
      %10335 = vmatpush.bf16.msra.mxu0 %v10308
      %10336 = vmatpush.bf16.msra.mxu0 %v10306
      %10337 = vmatmul.bf16.gmra.mxu0 %v10318
      %v10338 = vpop.f32.mrf.mxu0
      %v10339 = vadd.f32 0.0, %v10338
      %v10340 = vpop.f32.mrf.mxu0
      %v10341 = vadd.f32 0.0, %v10340
      %10342 = vmatmul.bf16.gmra.mxu0 %v10321
      %v10343 = vpop.f32.mrf.mxu0
      %v10344 = vadd.f32 0.0, %v10343
      %v10345 = vpop.f32.mrf.mxu0
      %v10346 = vadd.f32 0.0, %v10345
      %10347 = vmatmul.bf16.gmra.mxu0 %v10324
      %v10348 = vpop.f32.mrf.mxu0
      %v10349 = vadd.f32 0.0, %v10348
      %v10350 = vpop.f32.mrf.mxu0
      %v10351 = vadd.f32 0.0, %v10350
      %10352 = vmatmul.bf16.gmra.mxu0 %v10327
      %v10353 = vpop.f32.mrf.mxu0
      %v10354 = vadd.f32 0.0, %v10353
      %v10355 = vpop.f32.mrf.mxu0
      %v10356 = vadd.f32 0.0, %v10355
      %10357 = vdwg.mxu0
      %v10366 = vunpack.c.l.b16 %v9383
      %v10367 = vunpack.c.l.b16 %v9384
      %v10368 = vunpack.c.l.b16 %v9385
      %v10369 = vunpack.c.l.b16 %v9386
      %v10370 = vunpack.c.l.b16 %v9387
      %v10371 = vunpack.c.l.b16 %v9388
      %v10372 = vunpack.c.l.b16 %v9389
      %v10373 = vunpack.c.l.b16 %v9390
      %v10374 = vpack.c.b16 %v10367, %v10366
      %v10375 = vpack.c.b16 %v10369, %v10368
      %v10376 = vpack.c.b16 %v10371, %v10370
      %v10377 = vpack.c.b16 %v10373, %v10372
      %v10378 = vunpack.c.l.b16 %v6223
      %v10379 = vunpack.c.l.b16 %v6225
      %v10380 = vunpack.c.l.b16 %v6227
      %v10381 = vunpack.c.l.b16 %v6229
      %v10382 = vunpack.c.l.b16 %v6231
      %v10383 = vunpack.c.l.b16 %v6233
      %v10384 = vunpack.c.l.b16 %v6235
      %v10385 = vunpack.c.l.b16 %v6237
      %v10386 = vpack.c.b16 %v10379, %v10378
      %v10387 = vpack.c.b16 %v10381, %v10380
      %v10388 = vpack.c.b16 %v10383, %v10382
      %v10389 = vpack.c.b16 %v10385, %v10384
      %10390 = vrot.lane.b32.xlu0 %v10386, 64
      %v10391 = vpop.permute.xlu0 %10390
      %10392 = vrot.lane.b32.xlu0 %v10387, 64
      %v10393 = vpop.permute.xlu0 %10392
      %10394 = vrot.lane.b32.xlu0 %v10388, 64
      %v10395 = vpop.permute.xlu0 %10394
      %10396 = vrot.lane.b32.xlu0 %v10389, 64
      %v10397 = vpop.permute.xlu0 %10396
      %v10403 = vsel %vm7886, %v10374, 0
      %v10406 = vsel %vm7886, %v10375, 0
      %v10409 = vsel %vm7886, %v10376, 0
      %v10412 = vsel %vm7886, %v10377, 0
      %10414 = vmatpush.bf16.msra.mxu0 0
      %10415 = vmatpush.bf16.msra.mxu0 0
      %10416 = vmatpush.bf16.msra.mxu0 0
      %10417 = vmatpush.bf16.msra.mxu0 0
      %10418 = vmatpush.bf16.msra.mxu0 %v10397
      %10419 = vmatpush.bf16.msra.mxu0 %v10395
      %10420 = vmatpush.bf16.msra.mxu0 %v10393
      %10421 = vmatpush.bf16.msra.mxu0 %v10391
      %10422 = vmatmul.bf16.gmra.mxu0 %v10403
      %v10423 = vpop.f32.mrf.mxu0
      %v10424 = vadd.f32 0.0, %v10423
      %v10425 = vpop.f32.mrf.mxu0
      %v10426 = vadd.f32 0.0, %v10425
      %10427 = vmatmul.bf16.gmra.mxu0 %v10406
      %v10428 = vpop.f32.mrf.mxu0
      %v10429 = vadd.f32 0.0, %v10428
      %v10430 = vpop.f32.mrf.mxu0
      %v10431 = vadd.f32 0.0, %v10430
      %10432 = vmatmul.bf16.gmra.mxu0 %v10409
      %v10433 = vpop.f32.mrf.mxu0
      %v10434 = vadd.f32 0.0, %v10433
      %v10435 = vpop.f32.mrf.mxu0
      %v10436 = vadd.f32 0.0, %v10435
      %10437 = vmatmul.bf16.gmra.mxu0 %v10412
      %v10438 = vpop.f32.mrf.mxu0
      %v10439 = vadd.f32 0.0, %v10438
      %v10440 = vpop.f32.mrf.mxu0
      %v10441 = vadd.f32 0.0, %v10440
      %10442 = vdwg.mxu0
      %v10451 = vunpack.c.l.b16 %v9391
      %v10452 = vunpack.c.l.b16 %v9392
      %v10453 = vunpack.c.l.b16 %v9393
      %v10454 = vunpack.c.l.b16 %v9394
      %v10455 = vunpack.c.l.b16 %v9395
      %v10456 = vunpack.c.l.b16 %v9396
      %v10457 = vunpack.c.l.b16 %v9397
      %v10458 = vunpack.c.l.b16 %v9398
      %v10459 = vpack.c.b16 %v10452, %v10451
      %v10460 = vpack.c.b16 %v10454, %v10453
      %v10461 = vpack.c.b16 %v10456, %v10455
      %v10462 = vpack.c.b16 %v10458, %v10457
      %v10463 = vunpack.c.l.b16 %v6239
      %v10464 = vunpack.c.l.b16 %v6241
      %v10465 = vunpack.c.l.b16 %v6243
      %v10466 = vunpack.c.l.b16 %v6245
      %v10467 = vunpack.c.l.b16 %v6247
      %v10468 = vunpack.c.l.b16 %v6249
      %v10469 = vunpack.c.l.b16 %v6251
      %v10470 = vunpack.c.l.b16 %v6253
      %v10471 = vpack.c.b16 %v10464, %v10463
      %v10472 = vpack.c.b16 %v10466, %v10465
      %v10473 = vpack.c.b16 %v10468, %v10467
      %v10474 = vpack.c.b16 %v10470, %v10469
      %10475 = vrot.lane.b32.xlu0 %v10471, 64
      %v10476 = vpop.permute.xlu0 %10475
      %10477 = vrot.lane.b32.xlu0 %v10472, 64
      %v10478 = vpop.permute.xlu0 %10477
      %10479 = vrot.lane.b32.xlu0 %v10473, 64
      %v10480 = vpop.permute.xlu0 %10479
      %10481 = vrot.lane.b32.xlu0 %v10474, 64
      %v10482 = vpop.permute.xlu0 %10481
      %v10488 = vsel %vm7886, %v10459, 0
      %v10491 = vsel %vm7886, %v10460, 0
      %v10494 = vsel %vm7886, %v10461, 0
      %v10497 = vsel %vm7886, %v10462, 0
      %10499 = vmatpush.bf16.msra.mxu0 0
      %10500 = vmatpush.bf16.msra.mxu0 0
      %10501 = vmatpush.bf16.msra.mxu0 0
      %10502 = vmatpush.bf16.msra.mxu0 0
      %10503 = vmatpush.bf16.msra.mxu0 %v10482
      %10504 = vmatpush.bf16.msra.mxu0 %v10480
      %10505 = vmatpush.bf16.msra.mxu0 %v10478
      %10506 = vmatpush.bf16.msra.mxu0 %v10476
      %10507 = vmatmul.bf16.gmra.mxu0 %v10488
      %v10508 = vpop.f32.mrf.mxu0
      %v10509 = vadd.f32 0.0, %v10508
      %v10510 = vpop.f32.mrf.mxu0
      %v10511 = vadd.f32 0.0, %v10510
      %10512 = vmatmul.bf16.gmra.mxu0 %v10491
      %v10513 = vpop.f32.mrf.mxu0
      %v10514 = vadd.f32 0.0, %v10513
      %v10515 = vpop.f32.mrf.mxu0
      %v10516 = vadd.f32 0.0, %v10515
      %10517 = vmatmul.bf16.gmra.mxu0 %v10494
      %v10518 = vpop.f32.mrf.mxu0
      %v10519 = vadd.f32 0.0, %v10518
      %v10520 = vpop.f32.mrf.mxu0
      %v10521 = vadd.f32 0.0, %v10520
      %10522 = vmatmul.bf16.gmra.mxu0 %v10497
      %v10523 = vpop.f32.mrf.mxu0
      %v10524 = vadd.f32 0.0, %v10523
      %v10525 = vpop.f32.mrf.mxu0
      %v10526 = vadd.f32 0.0, %v10525
      %10527 = vdwg.mxu0
      %v10536 = vunpack.c.l.b16 %v9399
      %v10537 = vunpack.c.l.b16 %v9400
      %v10538 = vunpack.c.l.b16 %v9401
      %v10539 = vunpack.c.l.b16 %v9402
      %v10540 = vunpack.c.l.b16 %v9403
      %v10541 = vunpack.c.l.b16 %v9404
      %v10542 = vunpack.c.l.b16 %v9405
      %v10543 = vunpack.c.l.b16 %v9406
      %v10544 = vpack.c.b16 %v10537, %v10536
      %v10545 = vpack.c.b16 %v10539, %v10538
      %v10546 = vpack.c.b16 %v10541, %v10540
      %v10547 = vpack.c.b16 %v10543, %v10542
      %v10548 = vunpack.c.l.b16 %v6255
      %v10549 = vunpack.c.l.b16 %v6257
      %v10550 = vunpack.c.l.b16 %v6259
      %v10551 = vunpack.c.l.b16 %v6261
      %v10552 = vunpack.c.l.b16 %v6263
      %v10553 = vunpack.c.l.b16 %v6265
      %v10554 = vunpack.c.l.b16 %v6267
      %v10555 = vunpack.c.l.b16 %v6269
      %v10556 = vpack.c.b16 %v10549, %v10548
      %v10557 = vpack.c.b16 %v10551, %v10550
      %v10558 = vpack.c.b16 %v10553, %v10552
      %v10559 = vpack.c.b16 %v10555, %v10554
      %10560 = vrot.lane.b32.xlu0 %v10556, 64
      %v10561 = vpop.permute.xlu0 %10560
      %10562 = vrot.lane.b32.xlu0 %v10557, 64
      %v10563 = vpop.permute.xlu0 %10562
      %10564 = vrot.lane.b32.xlu0 %v10558, 64
      %v10565 = vpop.permute.xlu0 %10564
      %10566 = vrot.lane.b32.xlu0 %v10559, 64
      %v10567 = vpop.permute.xlu0 %10566
      %v10573 = vsel %vm7886, %v10544, 0
      %v10576 = vsel %vm7886, %v10545, 0
      %v10579 = vsel %vm7886, %v10546, 0
      %v10582 = vsel %vm7886, %v10547, 0
      %10584 = vmatpush.bf16.msra.mxu0 0
      %10585 = vmatpush.bf16.msra.mxu0 0
      %10586 = vmatpush.bf16.msra.mxu0 0
      %10587 = vmatpush.bf16.msra.mxu0 0
      %10588 = vmatpush.bf16.msra.mxu0 %v10567
      %10589 = vmatpush.bf16.msra.mxu0 %v10565
      %10590 = vmatpush.bf16.msra.mxu0 %v10563
      %10591 = vmatpush.bf16.msra.mxu0 %v10561
      %10592 = vmatmul.bf16.gmra.mxu0 %v10573
      %v10593 = vpop.f32.mrf.mxu0
      %v10594 = vadd.f32 0.0, %v10593
      %v10595 = vpop.f32.mrf.mxu0
      %v10596 = vadd.f32 0.0, %v10595
      %10597 = vmatmul.bf16.gmra.mxu0 %v10576
      %v10598 = vpop.f32.mrf.mxu0
      %v10599 = vadd.f32 0.0, %v10598
      %v10600 = vpop.f32.mrf.mxu0
      %v10601 = vadd.f32 0.0, %v10600
      %10602 = vmatmul.bf16.gmra.mxu0 %v10579
      %v10603 = vpop.f32.mrf.mxu0
      %v10604 = vadd.f32 0.0, %v10603
      %v10605 = vpop.f32.mrf.mxu0
      %v10606 = vadd.f32 0.0, %v10605
      %10607 = vmatmul.bf16.gmra.mxu0 %v10582
      %v10608 = vpop.f32.mrf.mxu0
      %v10609 = vadd.f32 0.0, %v10608
      %v10610 = vpop.f32.mrf.mxu0
      %v10611 = vadd.f32 0.0, %v10610
      %10612 = vdwg.mxu0
      %v10621 = vunpack.c.l.b16 %v9407
      %v10622 = vunpack.c.l.b16 %v9408
      %v10623 = vunpack.c.l.b16 %v9409
      %v10624 = vunpack.c.l.b16 %v9410
      %v10625 = vunpack.c.l.b16 %v9411
      %v10626 = vunpack.c.l.b16 %v9412
      %v10627 = vunpack.c.l.b16 %v9413
      %v10628 = vunpack.c.l.b16 %v9414
      %v10629 = vpack.c.b16 %v10622, %v10621
      %v10630 = vpack.c.b16 %v10624, %v10623
      %v10631 = vpack.c.b16 %v10626, %v10625
      %v10632 = vpack.c.b16 %v10628, %v10627
      %v10633 = vunpack.c.l.b16 %v6271
      %v10634 = vunpack.c.l.b16 %v6273
      %v10635 = vunpack.c.l.b16 %v6275
      %v10636 = vunpack.c.l.b16 %v6277
      %v10637 = vunpack.c.l.b16 %v6279
      %v10638 = vunpack.c.l.b16 %v6281
      %v10639 = vunpack.c.l.b16 %v6283
      %v10640 = vunpack.c.l.b16 %v6285
      %v10641 = vpack.c.b16 %v10634, %v10633
      %v10642 = vpack.c.b16 %v10636, %v10635
      %v10643 = vpack.c.b16 %v10638, %v10637
      %v10644 = vpack.c.b16 %v10640, %v10639
      %10645 = vrot.lane.b32.xlu0 %v10641, 64
      %v10646 = vpop.permute.xlu0 %10645
      %10647 = vrot.lane.b32.xlu0 %v10642, 64
      %v10648 = vpop.permute.xlu0 %10647
      %10649 = vrot.lane.b32.xlu0 %v10643, 64
      %v10650 = vpop.permute.xlu0 %10649
      %10651 = vrot.lane.b32.xlu0 %v10644, 64
      %v10652 = vpop.permute.xlu0 %10651
      %v10658 = vsel %vm7886, %v10629, 0
      %v10661 = vsel %vm7886, %v10630, 0
      %v10664 = vsel %vm7886, %v10631, 0
      %v10667 = vsel %vm7886, %v10632, 0
      %10669 = vmatpush.bf16.msra.mxu0 0
      %10670 = vmatpush.bf16.msra.mxu0 0
      %10671 = vmatpush.bf16.msra.mxu0 0
      %10672 = vmatpush.bf16.msra.mxu0 0
      %10673 = vmatpush.bf16.msra.mxu0 %v10652
      %10674 = vmatpush.bf16.msra.mxu0 %v10650
      %10675 = vmatpush.bf16.msra.mxu0 %v10648
      %10676 = vmatpush.bf16.msra.mxu0 %v10646
      %10677 = vmatmul.bf16.gmra.mxu0 %v10658
      %v10678 = vpop.f32.mrf.mxu0
      %v10679 = vadd.f32 0.0, %v10678
      %v10680 = vpop.f32.mrf.mxu0
      %v10681 = vadd.f32 0.0, %v10680
      %10682 = vmatmul.bf16.gmra.mxu0 %v10661
      %v10683 = vpop.f32.mrf.mxu0
      %v10684 = vadd.f32 0.0, %v10683
      %v10685 = vpop.f32.mrf.mxu0
      %v10686 = vadd.f32 0.0, %v10685
      %10687 = vmatmul.bf16.gmra.mxu0 %v10664
      %v10688 = vpop.f32.mrf.mxu0
      %v10689 = vadd.f32 0.0, %v10688
      %v10690 = vpop.f32.mrf.mxu0
      %v10691 = vadd.f32 0.0, %v10690
      %10692 = vmatmul.bf16.gmra.mxu0 %v10667
      %v10693 = vpop.f32.mrf.mxu0
      %v10694 = vadd.f32 0.0, %v10693
      %v10695 = vpop.f32.mrf.mxu0
      %v10696 = vadd.f32 0.0, %v10695
      %10697 = vdwg.mxu0
      %v10706 = vunpack.c.l.b16 %v9415
      %v10707 = vunpack.c.l.b16 %v9416
      %v10708 = vunpack.c.l.b16 %v9417
      %v10709 = vunpack.c.l.b16 %v9418
      %v10710 = vunpack.c.l.b16 %v9419
      %v10711 = vunpack.c.l.b16 %v9420
      %v10712 = vunpack.c.l.b16 %v9421
      %v10713 = vunpack.c.l.b16 %v9422
      %v10714 = vpack.c.b16 %v10707, %v10706
      %v10715 = vpack.c.b16 %v10709, %v10708
      %v10716 = vpack.c.b16 %v10711, %v10710
      %v10717 = vpack.c.b16 %v10713, %v10712
      %v10718 = vunpack.c.l.b16 %v6287
      %v10719 = vunpack.c.l.b16 %v6289
      %v10720 = vunpack.c.l.b16 %v6291
      %v10721 = vunpack.c.l.b16 %v6293
      %v10722 = vunpack.c.l.b16 %v6295
      %v10723 = vunpack.c.l.b16 %v6297
      %v10724 = vunpack.c.l.b16 %v6299
      %v10725 = vunpack.c.l.b16 %v6301
      %v10726 = vpack.c.b16 %v10719, %v10718
      %v10727 = vpack.c.b16 %v10721, %v10720
      %v10728 = vpack.c.b16 %v10723, %v10722
      %v10729 = vpack.c.b16 %v10725, %v10724
      %10730 = vrot.lane.b32.xlu0 %v10726, 64
      %v10731 = vpop.permute.xlu0 %10730
      %10732 = vrot.lane.b32.xlu0 %v10727, 64
      %v10733 = vpop.permute.xlu0 %10732
      %10734 = vrot.lane.b32.xlu0 %v10728, 64
      %v10735 = vpop.permute.xlu0 %10734
      %10736 = vrot.lane.b32.xlu0 %v10729, 64
      %v10737 = vpop.permute.xlu0 %10736
      %v10743 = vsel %vm7886, %v10714, 0
      %v10746 = vsel %vm7886, %v10715, 0
      %v10749 = vsel %vm7886, %v10716, 0
      %v10752 = vsel %vm7886, %v10717, 0
      %10754 = vmatpush.bf16.msra.mxu0 0
      %10755 = vmatpush.bf16.msra.mxu0 0
      %10756 = vmatpush.bf16.msra.mxu0 0
      %10757 = vmatpush.bf16.msra.mxu0 0
      %10758 = vmatpush.bf16.msra.mxu0 %v10737
      %10759 = vmatpush.bf16.msra.mxu0 %v10735
      %10760 = vmatpush.bf16.msra.mxu0 %v10733
      %10761 = vmatpush.bf16.msra.mxu0 %v10731
      %10762 = vmatmul.bf16.gmra.mxu0 %v10743
      %v10763 = vpop.f32.mrf.mxu0
      %v10764 = vadd.f32 0.0, %v10763
      %v10765 = vpop.f32.mrf.mxu0
      %v10766 = vadd.f32 0.0, %v10765
      %10767 = vmatmul.bf16.gmra.mxu0 %v10746
      %v10768 = vpop.f32.mrf.mxu0
      %v10769 = vadd.f32 0.0, %v10768
      %v10770 = vpop.f32.mrf.mxu0
      %v10771 = vadd.f32 0.0, %v10770
      %10772 = vmatmul.bf16.gmra.mxu0 %v10749
      %v10773 = vpop.f32.mrf.mxu0
      %v10774 = vadd.f32 0.0, %v10773
      %v10775 = vpop.f32.mrf.mxu0
      %v10776 = vadd.f32 0.0, %v10775
      %10777 = vmatmul.bf16.gmra.mxu0 %v10752
      %v10778 = vpop.f32.mrf.mxu0
      %v10779 = vadd.f32 0.0, %v10778
      %v10780 = vpop.f32.mrf.mxu0
      %v10781 = vadd.f32 0.0, %v10780
      %10782 = vdwg.mxu0
      %10815 = vrot.lane.b32.xlu0 %v9829, 8
      %v10816 = vpop.permute.xlu0 %10815
      %10817 = vrot.lane.b32.xlu0 %v9831, 8
      %v10818 = vpop.permute.xlu0 %10817
      %10819 = vrot.lane.b32.xlu0 %v9834, 8
      %v10820 = vpop.permute.xlu0 %10819
      %10821 = vrot.lane.b32.xlu0 %v9836, 8
      %v10822 = vpop.permute.xlu0 %10821
      %10823 = vrot.lane.b32.xlu0 %v9839, 8
      %v10824 = vpop.permute.xlu0 %10823
      %10825 = vrot.lane.b32.xlu0 %v9841, 8
      %v10826 = vpop.permute.xlu0 %10825
      %10827 = vrot.lane.b32.xlu0 %v9844, 8
      %v10828 = vpop.permute.xlu0 %10827
      %10829 = vrot.lane.b32.xlu0 %v9846, 8
      %v10830 = vpop.permute.xlu0 %10829
      %10831 = vrot.lane.b32.xlu0 %v9914, 8
      %v10832 = vpop.permute.xlu0 %10831
      %10833 = vrot.lane.b32.xlu0 %v9916, 8
      %v10834 = vpop.permute.xlu0 %10833
      %10835 = vrot.lane.b32.xlu0 %v9919, 8
      %v10836 = vpop.permute.xlu0 %10835
      %10837 = vrot.lane.b32.xlu0 %v9921, 8
      %v10838 = vpop.permute.xlu0 %10837
      %10839 = vrot.lane.b32.xlu0 %v9924, 8
      %v10840 = vpop.permute.xlu0 %10839
      %10841 = vrot.lane.b32.xlu0 %v9926, 8
      %v10842 = vpop.permute.xlu0 %10841
      %10843 = vrot.lane.b32.xlu0 %v9929, 8
      %v10844 = vpop.permute.xlu0 %10843
      %10845 = vrot.lane.b32.xlu0 %v9931, 8
      %v10846 = vpop.permute.xlu0 %10845
      %10847 = vrot.lane.b32.xlu0 %v9999, 8
      %v10848 = vpop.permute.xlu0 %10847
      %10849 = vrot.lane.b32.xlu0 %v10001, 8
      %v10850 = vpop.permute.xlu0 %10849
      %10851 = vrot.lane.b32.xlu0 %v10004, 8
      %v10852 = vpop.permute.xlu0 %10851
      %10853 = vrot.lane.b32.xlu0 %v10006, 8
      %v10854 = vpop.permute.xlu0 %10853
      %10855 = vrot.lane.b32.xlu0 %v10009, 8
      %v10856 = vpop.permute.xlu0 %10855
      %10857 = vrot.lane.b32.xlu0 %v10011, 8
      %v10858 = vpop.permute.xlu0 %10857
      %10859 = vrot.lane.b32.xlu0 %v10014, 8
      %v10860 = vpop.permute.xlu0 %10859
      %10861 = vrot.lane.b32.xlu0 %v10016, 8
      %v10862 = vpop.permute.xlu0 %10861
      %10863 = vrot.lane.b32.xlu0 %v10084, 8
      %v10864 = vpop.permute.xlu0 %10863
      %10865 = vrot.lane.b32.xlu0 %v10086, 8
      %v10866 = vpop.permute.xlu0 %10865
      %10867 = vrot.lane.b32.xlu0 %v10089, 8
      %v10868 = vpop.permute.xlu0 %10867
      %10869 = vrot.lane.b32.xlu0 %v10091, 8
      %v10870 = vpop.permute.xlu0 %10869
      %10871 = vrot.lane.b32.xlu0 %v10094, 8
      %v10872 = vpop.permute.xlu0 %10871
      %10873 = vrot.lane.b32.xlu0 %v10096, 8
      %v10874 = vpop.permute.xlu0 %10873
      %10875 = vrot.lane.b32.xlu0 %v10099, 8
      %v10876 = vpop.permute.xlu0 %10875
      %10877 = vrot.lane.b32.xlu0 %v10101, 8
      %v10878 = vpop.permute.xlu0 %10877
      %10943 = vrot.lane.b32.xlu0 %v10169, 16
      %v10944 = vpop.permute.xlu0 %10943
      %10945 = vrot.lane.b32.xlu0 %v10171, 16
      %v10946 = vpop.permute.xlu0 %10945
      %10947 = vrot.lane.b32.xlu0 %v10174, 16
      %v10948 = vpop.permute.xlu0 %10947
      %10949 = vrot.lane.b32.xlu0 %v10176, 16
      %v10950 = vpop.permute.xlu0 %10949
      %10951 = vrot.lane.b32.xlu0 %v10179, 16
      %v10952 = vpop.permute.xlu0 %10951
      %10953 = vrot.lane.b32.xlu0 %v10181, 16
      %v10954 = vpop.permute.xlu0 %10953
      %10955 = vrot.lane.b32.xlu0 %v10184, 16
      %v10956 = vpop.permute.xlu0 %10955
      %10957 = vrot.lane.b32.xlu0 %v10186, 16
      %v10958 = vpop.permute.xlu0 %10957
      %10959 = vrot.lane.b32.xlu0 %v10254, 16
      %v10960 = vpop.permute.xlu0 %10959
      %10961 = vrot.lane.b32.xlu0 %v10256, 16
      %v10962 = vpop.permute.xlu0 %10961
      %10963 = vrot.lane.b32.xlu0 %v10259, 16
      %v10964 = vpop.permute.xlu0 %10963
      %10965 = vrot.lane.b32.xlu0 %v10261, 16
      %v10966 = vpop.permute.xlu0 %10965
      %10967 = vrot.lane.b32.xlu0 %v10264, 16
      %v10968 = vpop.permute.xlu0 %10967
      %10969 = vrot.lane.b32.xlu0 %v10266, 16
      %v10970 = vpop.permute.xlu0 %10969
      %10971 = vrot.lane.b32.xlu0 %v10269, 16
      %v10972 = vpop.permute.xlu0 %10971
      %10973 = vrot.lane.b32.xlu0 %v10271, 16
      %v10974 = vpop.permute.xlu0 %10973
      %10975 = vrot.lane.b32.xlu0 %v10339, 16
      %v10976 = vpop.permute.xlu0 %10975
      %10977 = vrot.lane.b32.xlu0 %v10341, 16
      %v10978 = vpop.permute.xlu0 %10977
      %10979 = vrot.lane.b32.xlu0 %v10344, 16
      %v10980 = vpop.permute.xlu0 %10979
      %10981 = vrot.lane.b32.xlu0 %v10346, 16
      %v10982 = vpop.permute.xlu0 %10981
      %10983 = vrot.lane.b32.xlu0 %v10349, 16
      %v10984 = vpop.permute.xlu0 %10983
      %10985 = vrot.lane.b32.xlu0 %v10351, 16
      %v10986 = vpop.permute.xlu0 %10985
      %10987 = vrot.lane.b32.xlu0 %v10354, 16
      %v10988 = vpop.permute.xlu0 %10987
      %10989 = vrot.lane.b32.xlu0 %v10356, 16
      %v10990 = vpop.permute.xlu0 %10989
      %10991 = vrot.lane.b32.xlu0 %v10424, 16
      %v10992 = vpop.permute.xlu0 %10991
      %10993 = vrot.lane.b32.xlu0 %v10426, 16
      %v10994 = vpop.permute.xlu0 %10993
      %10995 = vrot.lane.b32.xlu0 %v10429, 16
      %v10996 = vpop.permute.xlu0 %10995
      %10997 = vrot.lane.b32.xlu0 %v10431, 16
      %v10998 = vpop.permute.xlu0 %10997
      %10999 = vrot.lane.b32.xlu0 %v10434, 16
      %v11000 = vpop.permute.xlu0 %10999
      %11001 = vrot.lane.b32.xlu0 %v10436, 16
      %v11002 = vpop.permute.xlu0 %11001
      %11003 = vrot.lane.b32.xlu0 %v10439, 16
      %v11004 = vpop.permute.xlu0 %11003
      %11005 = vrot.lane.b32.xlu0 %v10441, 16
      %v11006 = vpop.permute.xlu0 %11005
      %11071 = vrot.lane.b32.xlu0 %v10509, 24
      %v11072 = vpop.permute.xlu0 %11071
      %11073 = vrot.lane.b32.xlu0 %v10511, 24
      %v11074 = vpop.permute.xlu0 %11073
      %11075 = vrot.lane.b32.xlu0 %v10514, 24
      %v11076 = vpop.permute.xlu0 %11075
      %11077 = vrot.lane.b32.xlu0 %v10516, 24
      %v11078 = vpop.permute.xlu0 %11077
      %11079 = vrot.lane.b32.xlu0 %v10519, 24
      %v11080 = vpop.permute.xlu0 %11079
      %11081 = vrot.lane.b32.xlu0 %v10521, 24
      %v11082 = vpop.permute.xlu0 %11081
      %11083 = vrot.lane.b32.xlu0 %v10524, 24
      %v11084 = vpop.permute.xlu0 %11083
      %11085 = vrot.lane.b32.xlu0 %v10526, 24
      %v11086 = vpop.permute.xlu0 %11085
      %11087 = vrot.lane.b32.xlu0 %v10594, 24
      %v11088 = vpop.permute.xlu0 %11087
      %11089 = vrot.lane.b32.xlu0 %v10596, 24
      %v11090 = vpop.permute.xlu0 %11089
      %11091 = vrot.lane.b32.xlu0 %v10599, 24
      %v11092 = vpop.permute.xlu0 %11091
      %11093 = vrot.lane.b32.xlu0 %v10601, 24
      %v11094 = vpop.permute.xlu0 %11093
      %11095 = vrot.lane.b32.xlu0 %v10604, 24
      %v11096 = vpop.permute.xlu0 %11095
      %11097 = vrot.lane.b32.xlu0 %v10606, 24
      %v11098 = vpop.permute.xlu0 %11097
      %11099 = vrot.lane.b32.xlu0 %v10609, 24
      %v11100 = vpop.permute.xlu0 %11099
      %11101 = vrot.lane.b32.xlu0 %v10611, 24
      %v11102 = vpop.permute.xlu0 %11101
      %11103 = vrot.lane.b32.xlu0 %v10679, 24
      %v11104 = vpop.permute.xlu0 %11103
      %11105 = vrot.lane.b32.xlu0 %v10681, 24
      %v11106 = vpop.permute.xlu0 %11105
      %11107 = vrot.lane.b32.xlu0 %v10684, 24
      %v11108 = vpop.permute.xlu0 %11107
      %11109 = vrot.lane.b32.xlu0 %v10686, 24
      %v11110 = vpop.permute.xlu0 %11109
      %11111 = vrot.lane.b32.xlu0 %v10689, 24
      %v11112 = vpop.permute.xlu0 %11111
      %11113 = vrot.lane.b32.xlu0 %v10691, 24
      %v11114 = vpop.permute.xlu0 %11113
      %11115 = vrot.lane.b32.xlu0 %v10694, 24
      %v11116 = vpop.permute.xlu0 %11115
      %11117 = vrot.lane.b32.xlu0 %v10696, 24
      %v11118 = vpop.permute.xlu0 %11117
      %11119 = vrot.lane.b32.xlu0 %v10764, 24
      %v11120 = vpop.permute.xlu0 %11119
      %11121 = vrot.lane.b32.xlu0 %v10766, 24
      %v11122 = vpop.permute.xlu0 %11121
      %11123 = vrot.lane.b32.xlu0 %v10769, 24
      %v11124 = vpop.permute.xlu0 %11123
      %11125 = vrot.lane.b32.xlu0 %v10771, 24
      %v11126 = vpop.permute.xlu0 %11125
      %11127 = vrot.lane.b32.xlu0 %v10774, 24
      %v11128 = vpop.permute.xlu0 %11127
      %11129 = vrot.lane.b32.xlu0 %v10776, 24
      %v11130 = vpop.permute.xlu0 %11129
      %11131 = vrot.lane.b32.xlu0 %v10779, 24
      %v11132 = vpop.permute.xlu0 %11131
      %11133 = vrot.lane.b32.xlu0 %v10781, 24
      %v11134 = vpop.permute.xlu0 %11133
      %v11167 = vsel %vm527, %v9489, %v10816
      %v11168 = vsel %vm527, %v9491, %v10818
      %v11169 = vsel %vm527, %v9494, %v10820
      %v11170 = vsel %vm527, %v9496, %v10822
      %v11171 = vsel %vm527, %v9499, %v10824
      %v11172 = vsel %vm527, %v9501, %v10826
      %v11173 = vsel %vm527, %v9504, %v10828
      %v11174 = vsel %vm527, %v9506, %v10830
      %v11175 = vsel %vm527, %v9574, %v10832
      %v11176 = vsel %vm527, %v9576, %v10834
      %v11177 = vsel %vm527, %v9579, %v10836
      %v11178 = vsel %vm527, %v9581, %v10838
      %v11179 = vsel %vm527, %v9584, %v10840
      %v11180 = vsel %vm527, %v9586, %v10842
      %v11181 = vsel %vm527, %v9589, %v10844
      %v11182 = vsel %vm527, %v9591, %v10846
      %v11183 = vsel %vm527, %v9659, %v10848
      %v11184 = vsel %vm527, %v9661, %v10850
      %v11185 = vsel %vm527, %v9664, %v10852
      %v11186 = vsel %vm527, %v9666, %v10854
      %v11187 = vsel %vm527, %v9669, %v10856
      %v11188 = vsel %vm527, %v9671, %v10858
      %v11189 = vsel %vm527, %v9674, %v10860
      %v11190 = vsel %vm527, %v9676, %v10862
      %v11191 = vsel %vm527, %v9744, %v10864
      %v11192 = vsel %vm527, %v9746, %v10866
      %v11193 = vsel %vm527, %v9749, %v10868
      %v11194 = vsel %vm527, %v9751, %v10870
      %v11195 = vsel %vm527, %v9754, %v10872
      %v11196 = vsel %vm527, %v9756, %v10874
      %v11197 = vsel %vm527, %v9759, %v10876
      %v11198 = vsel %vm527, %v9761, %v10878
      %vm11199 = vcmask 130048
      %v11200 = vsel %vm11199, %v11167, %v10944
      %v11201 = vsel %vm11199, %v11168, %v10946
      %v11202 = vsel %vm11199, %v11169, %v10948
      %v11203 = vsel %vm11199, %v11170, %v10950
      %v11204 = vsel %vm11199, %v11171, %v10952
      %v11205 = vsel %vm11199, %v11172, %v10954
      %v11206 = vsel %vm11199, %v11173, %v10956
      %v11207 = vsel %vm11199, %v11174, %v10958
      %v11208 = vsel %vm11199, %v11175, %v10960
      %v11209 = vsel %vm11199, %v11176, %v10962
      %v11210 = vsel %vm11199, %v11177, %v10964
      %v11211 = vsel %vm11199, %v11178, %v10966
      %v11212 = vsel %vm11199, %v11179, %v10968
      %v11213 = vsel %vm11199, %v11180, %v10970
      %v11214 = vsel %vm11199, %v11181, %v10972
      %v11215 = vsel %vm11199, %v11182, %v10974
      %v11216 = vsel %vm11199, %v11183, %v10976
      %v11217 = vsel %vm11199, %v11184, %v10978
      %v11218 = vsel %vm11199, %v11185, %v10980
      %v11219 = vsel %vm11199, %v11186, %v10982
      %v11220 = vsel %vm11199, %v11187, %v10984
      %v11221 = vsel %vm11199, %v11188, %v10986
      %v11222 = vsel %vm11199, %v11189, %v10988
      %v11223 = vsel %vm11199, %v11190, %v10990
      %v11224 = vsel %vm11199, %v11191, %v10992
      %v11225 = vsel %vm11199, %v11192, %v10994
      %v11226 = vsel %vm11199, %v11193, %v10996
      %v11227 = vsel %vm11199, %v11194, %v10998
      %v11228 = vsel %vm11199, %v11195, %v11000
      %v11229 = vsel %vm11199, %v11196, %v11002
      %v11230 = vsel %vm11199, %v11197, %v11004
      %v11231 = vsel %vm11199, %v11198, %v11006
      %vm11232 = vcmask 195584
      %v11233 = vsel %vm11232, %v11200, %v11072
      %v11234 = vsel %vm11232, %v11201, %v11074
      %v11235 = vsel %vm11232, %v11202, %v11076
      %v11236 = vsel %vm11232, %v11203, %v11078
      %v11237 = vsel %vm11232, %v11204, %v11080
      %v11238 = vsel %vm11232, %v11205, %v11082
      %v11239 = vsel %vm11232, %v11206, %v11084
      %v11240 = vsel %vm11232, %v11207, %v11086
      %v11241 = vsel %vm11232, %v11208, %v11088
      %v11242 = vsel %vm11232, %v11209, %v11090
      %v11243 = vsel %vm11232, %v11210, %v11092
      %v11244 = vsel %vm11232, %v11211, %v11094
      %v11245 = vsel %vm11232, %v11212, %v11096
      %v11246 = vsel %vm11232, %v11213, %v11098
      %v11247 = vsel %vm11232, %v11214, %v11100
      %v11248 = vsel %vm11232, %v11215, %v11102
      %v11249 = vsel %vm11232, %v11216, %v11104
      %v11250 = vsel %vm11232, %v11217, %v11106
      %v11251 = vsel %vm11232, %v11218, %v11108
      %v11252 = vsel %vm11232, %v11219, %v11110
      %v11253 = vsel %vm11232, %v11220, %v11112
      %v11254 = vsel %vm11232, %v11221, %v11114
      %v11255 = vsel %vm11232, %v11222, %v11116
      %v11256 = vsel %vm11232, %v11223, %v11118
      %v11257 = vsel %vm11232, %v11224, %v11120
      %v11258 = vsel %vm11232, %v11225, %v11122
      %v11259 = vsel %vm11232, %v11226, %v11124
      %v11260 = vsel %vm11232, %v11227, %v11126
      %v11261 = vsel %vm11232, %v11228, %v11128
      %v11262 = vsel %vm11232, %v11229, %v11130
      %v11263 = vsel %vm11232, %v11230, %v11132
      %v11264 = vsel %vm11232, %v11231, %v11134
      %v11265 = vpack.c.bf16 %v11234, %v11233
      %v11266 = vpack.c.bf16 %v11236, %v11235
      %v11267 = vpack.c.bf16 %v11238, %v11237
      %v11268 = vpack.c.bf16 %v11240, %v11239
      %v11269 = vpack.c.bf16 %v11242, %v11241
      %v11270 = vpack.c.bf16 %v11244, %v11243
      %v11271 = vpack.c.bf16 %v11246, %v11245
      %v11272 = vpack.c.bf16 %v11248, %v11247
      %v11273 = vpack.c.bf16 %v11250, %v11249
      %v11274 = vpack.c.bf16 %v11252, %v11251
      %v11275 = vpack.c.bf16 %v11254, %v11253
      %v11276 = vpack.c.bf16 %v11256, %v11255
      %v11277 = vpack.c.bf16 %v11258, %v11257
      %v11278 = vpack.c.bf16 %v11260, %v11259
      %v11279 = vpack.c.bf16 %v11262, %v11261
      %v11280 = vpack.c.bf16 %v11264, %v11263
      %v11281 = vld [vmem:[%s5] sm:$0xf]
      %v11282 = vld [vmem:[%s5 + $0x4] sm:$0xf]
      %v11283 = vld [vmem:[%s5 + $0x8] sm:$0xf]
      %v11284 = vld [vmem:[%s5 + $0xc] sm:$0xf]
      %v11285 = vld [vmem:[%s6] sm:$0x1]
      %v11287 = vperm.slane %v11285, 0
      %v11293 = vunpack.c.l.b16 %v11281
      %v11294 = vunpack.c.l.b16 %v11282
      %v11295 = vunpack.c.l.b16 %v11283
      %v11296 = vunpack.c.l.b16 %v11284
      %v11297 = vpack.c.b16 %v11294, %v11293
      %v11298 = vpack.c.b16 %v11296, %v11295
      %v11302 = vsel %vm356, %v11265, 0
      %v11305 = vsel %vm356, %v11266, 0
      %v11308 = vsel %vm356, %v11267, 0
      %v11311 = vsel %vm356, %v11268, 0
      %v11314 = vsel %vm356, %v11269, 0
      %v11317 = vsel %vm356, %v11270, 0
      %v11320 = vsel %vm356, %v11271, 0
      %v11323 = vsel %vm356, %v11272, 0
      %v11326 = vsel %vm356, %v11273, 0
      %v11329 = vsel %vm356, %v11274, 0
      %v11332 = vsel %vm356, %v11275, 0
      %v11335 = vsel %vm356, %v11276, 0
      %v11338 = vsel %vm356, %v11277, 0
      %v11341 = vsel %vm356, %v11278, 0
      %v11344 = vsel %vm356, %v11279, 0
      %v11347 = vsel %vm356, %v11280, 0
      %11349 = vmatpush.bf16.msra.mxu0 0
      %11350 = vmatpush.bf16.msra.mxu0 0
      %11351 = vmatpush.bf16.msra.mxu0 0
      %11352 = vmatpush.bf16.msra.mxu0 0
      %11353 = vmatpush.bf16.msra.mxu0 0
      %11354 = vmatpush.bf16.msra.mxu0 0
      %11355 = vmatpush.bf16.msra.mxu0 %v11298
      %11356 = vmatpush.bf16.msra.mxu0 %v11297
      %11357 = vmatmul.bf16.gmra.mxu0 %v11302
      %v11358 = vpop.f32.mrf.mxu0
      %v11359 = vadd.f32 %v11287, %v11358
      %v11360 = vpop.f32.mrf.mxu0
      %v11361 = vadd.f32 %v11287, %v11360
      %11362 = vmatmul.bf16.gmra.mxu0 %v11305
      %v11363 = vpop.f32.mrf.mxu0
      %v11364 = vadd.f32 %v11287, %v11363
      %v11365 = vpop.f32.mrf.mxu0
      %v11366 = vadd.f32 %v11287, %v11365
      %11367 = vmatmul.bf16.gmra.mxu0 %v11308
      %v11368 = vpop.f32.mrf.mxu0
      %v11369 = vadd.f32 %v11287, %v11368
      %v11370 = vpop.f32.mrf.mxu0
      %v11371 = vadd.f32 %v11287, %v11370
      %11372 = vmatmul.bf16.gmra.mxu0 %v11311
      %v11373 = vpop.f32.mrf.mxu0
      %v11374 = vadd.f32 %v11287, %v11373
      %v11375 = vpop.f32.mrf.mxu0
      %v11376 = vadd.f32 %v11287, %v11375
      %11377 = vmatmul.bf16.gmra.mxu0 %v11314
      %v11378 = vpop.f32.mrf.mxu0
      %v11379 = vadd.f32 %v11287, %v11378
      %v11380 = vpop.f32.mrf.mxu0
      %v11381 = vadd.f32 %v11287, %v11380
      %11382 = vmatmul.bf16.gmra.mxu0 %v11317
      %v11383 = vpop.f32.mrf.mxu0
      %v11384 = vadd.f32 %v11287, %v11383
      %v11385 = vpop.f32.mrf.mxu0
      %v11386 = vadd.f32 %v11287, %v11385
      %11387 = vmatmul.bf16.gmra.mxu0 %v11320
      %v11388 = vpop.f32.mrf.mxu0
      %v11389 = vadd.f32 %v11287, %v11388
      %v11390 = vpop.f32.mrf.mxu0
      %v11391 = vadd.f32 %v11287, %v11390
      %11392 = vmatmul.bf16.gmra.mxu0 %v11323
      %v11393 = vpop.f32.mrf.mxu0
      %v11394 = vadd.f32 %v11287, %v11393
      %v11395 = vpop.f32.mrf.mxu0
      %v11396 = vadd.f32 %v11287, %v11395
      %11397 = vmatmul.bf16.gmra.mxu0 %v11326
      %v11398 = vpop.f32.mrf.mxu0
      %v11399 = vadd.f32 %v11287, %v11398
      %v11400 = vpop.f32.mrf.mxu0
      %v11401 = vadd.f32 %v11287, %v11400
      %11402 = vmatmul.bf16.gmra.mxu0 %v11329
      %v11403 = vpop.f32.mrf.mxu0
      %v11404 = vadd.f32 %v11287, %v11403
      %v11405 = vpop.f32.mrf.mxu0
      %v11406 = vadd.f32 %v11287, %v11405
      %11407 = vmatmul.bf16.gmra.mxu0 %v11332
      %v11408 = vpop.f32.mrf.mxu0
      %v11409 = vadd.f32 %v11287, %v11408
      %v11410 = vpop.f32.mrf.mxu0
      %v11411 = vadd.f32 %v11287, %v11410
      %11412 = vmatmul.bf16.gmra.mxu0 %v11335
      %v11413 = vpop.f32.mrf.mxu0
      %v11414 = vadd.f32 %v11287, %v11413
      %v11415 = vpop.f32.mrf.mxu0
      %v11416 = vadd.f32 %v11287, %v11415
      %11417 = vmatmul.bf16.gmra.mxu0 %v11338
      %v11418 = vpop.f32.mrf.mxu0
      %v11419 = vadd.f32 %v11287, %v11418
      %v11420 = vpop.f32.mrf.mxu0
      %v11421 = vadd.f32 %v11287, %v11420
      %11422 = vmatmul.bf16.gmra.mxu0 %v11341
      %v11423 = vpop.f32.mrf.mxu0
      %v11424 = vadd.f32 %v11287, %v11423
      %v11425 = vpop.f32.mrf.mxu0
      %v11426 = vadd.f32 %v11287, %v11425
      %11427 = vmatmul.bf16.gmra.mxu0 %v11344
      %v11428 = vpop.f32.mrf.mxu0
      %v11429 = vadd.f32 %v11287, %v11428
      %v11430 = vpop.f32.mrf.mxu0
      %v11431 = vadd.f32 %v11287, %v11430
      %11432 = vmatmul.bf16.gmra.mxu0 %v11347
      %v11433 = vpop.f32.mrf.mxu0
      %v11434 = vadd.f32 %v11287, %v11433
      %v11435 = vpop.f32.mrf.mxu0
      %v11436 = vadd.f32 %v11287, %v11435
      %11437 = vdwg.mxu0
      %11438 = vst.msk [vmem:[%s285] sm:$0xff] %vm356, %v11359
      %11439 = vst.msk [vmem:[%s285 + $0x8] sm:$0xff] %vm356, %v11361
      %11440 = vst.msk [vmem:[%s285 + $0x10] sm:$0xff] %vm356, %v11364
      %11441 = vst.msk [vmem:[%s285 + $0x18] sm:$0xff] %vm356, %v11366
      %11442 = vst.msk [vmem:[%s285 + $0x20] sm:$0xff] %vm356, %v11369
      %11443 = vst.msk [vmem:[%s285 + $0x28] sm:$0xff] %vm356, %v11371
      %11444 = vst.msk [vmem:[%s285 + $0x30] sm:$0xff] %vm356, %v11374
      %11445 = vst.msk [vmem:[%s285 + $0x38] sm:$0xff] %vm356, %v11376
      %11446 = vst.msk [vmem:[%s285 + $0x40] sm:$0xff] %vm356, %v11379
      %11447 = vst.msk [vmem:[%s285 + $0x48] sm:$0xff] %vm356, %v11381
      %11448 = vst.msk [vmem:[%s285 + $0x50] sm:$0xff] %vm356, %v11384
      %11449 = vst.msk [vmem:[%s285 + $0x58] sm:$0xff] %vm356, %v11386
      %11450 = vst.msk [vmem:[%s285 + $0x60] sm:$0xff] %vm356, %v11389
      %11451 = vst.msk [vmem:[%s285 + $0x68] sm:$0xff] %vm356, %v11391
      %11452 = vst.msk [vmem:[%s285 + $0x70] sm:$0xff] %vm356, %v11394
      %11453 = vst.msk [vmem:[%s285 + $0x78] sm:$0xff] %vm356, %v11396
      %11454 = vst.msk [vmem:[%s285 + $0x80] sm:$0xff] %vm356, %v11399
      %11455 = vst.msk [vmem:[%s285 + $0x88] sm:$0xff] %vm356, %v11401
      %11456 = vst.msk [vmem:[%s285 + $0x90] sm:$0xff] %vm356, %v11404
      %11457 = vst.msk [vmem:[%s285 + $0x98] sm:$0xff] %vm356, %v11406
      %11458 = vst.msk [vmem:[%s285 + $0xa0] sm:$0xff] %vm356, %v11409
      %11459 = vst.msk [vmem:[%s285 + $0xa8] sm:$0xff] %vm356, %v11411
      %11460 = vst.msk [vmem:[%s285 + $0xb0] sm:$0xff] %vm356, %v11414
      %11461 = vst.msk [vmem:[%s285 + $0xb8] sm:$0xff] %vm356, %v11416
      %11462 = vst.msk [vmem:[%s285 + $0xc0] sm:$0xff] %vm356, %v11419
      %11463 = vst.msk [vmem:[%s285 + $0xc8] sm:$0xff] %vm356, %v11421
      %11464 = vst.msk [vmem:[%s285 + $0xd0] sm:$0xff] %vm356, %v11424
      %11465 = vst.msk [vmem:[%s285 + $0xd8] sm:$0xff] %vm356, %v11426
      %11466 = vst.msk [vmem:[%s285 + $0xe0] sm:$0xff] %vm356, %v11429
      %11467 = vst.msk [vmem:[%s285 + $0xe8] sm:$0xff] %vm356, %v11431
      %11468 = vst.msk [vmem:[%s285 + $0xf0] sm:$0xff] %vm356, %v11434
      %11469 = vst.msk [vmem:[%s285 + $0xf8] sm:$0xff] %vm356, %v11436
      %s11470 = smul.u32 4, %s18
      %p11471 = scmp.lt.s32.totalorder %s11470, 7
      %s11472 = scalar_select %p11471, %s11470, 7
      %s11473 = smul.addr %s11472, 8
      %s11474 = smul.addr %s11473, 8
      %s11475 = scalar_lea.vmem %s7, %s11474
      // Predicated region
      $region49: #{_lambda_.1} parent=47 // pred_check
        %p11476 = pneg %p188
      $region50: #{_lambda_.1} parent=47 // pred_check_branch
        %11478 = sbr.rel (%p11476) target = $region52
      $region51: #{_lambda_.1} parent=47 // pred_region
        %s11479 = smul.u32 4, %s18
      $region52: #{_lambda_.1} parent=47 // pred_fallthru
        _
    $region48: #{_lambda_.1} parent=5 // pred_fallthru
      _
    %p11480 = scmp.le.s32.totalorder 2, %s13
    // Predicated region
    $region53: #{_lambda_.1} parent=5 // pred_check
      %p11481 = pneg %p11480
    $region54: #{_lambda_.1} parent=5 // pred_check_branch
      %11483 = sbr.rel (%p11481) target = $region56
    $region55: #{_lambda_.1} parent=5 // pred_region
      %s11484 = ssub.s32 %s13, 2
      // Predicated region
      $region57: #{_lambda_.1} parent=55 // pred_check
        %p11485 = pneg %p194
      $region58: #{_lambda_.1} parent=55 // pred_check_branch
        %11487 = sbr.rel (%p11485) target = $region60
      $region59: #{_lambda_.1} parent=55 // pred_region
        %s11488 = smul.u32 4, %s19
        %p11489 = scmp.lt.s32.totalorder %s11488, 7
        %s11490 = scalar_select %p11489, %s11488, 7
        %s11491 = smul.addr %s11490, 8
        %s11492 = smul.addr %s11491, 8
        %s11493 = scalar_lea.vmem %s7, %s11492
      $region60: #{_lambda_.1} parent=55 // pred_fallthru
        _
    $region56: #{_lambda_.1} parent=5 // pred_fallthru
      _
  $region6: #{_lambda_.1} parent=0 // loop_footer
    %s17 = sadd.s32 1, %s13
  $region7: #{_lambda_.1} parent=0 // loop_footer_branch
    %12 = sbr.rel target = $region3
  $region8: #{_lambda_.1} parent=0 // loop_exit
    _

</llo_original>
